<compile_context>
chip_gen: v6e
topology: v6e:2x2x1
jax: 0.10.0
libtpu: 0.0.40
codegen_flags: <defaults>
</compile_context>

<pallas_src>
import jax
import jax.numpy as jnp
from jax.experimental import pallas as pl
from jax.experimental.pallas import tpu as pltpu

LEAKY_SLOPE = 0.01
K_NEIGHBORS = 8          # graphnet DynEdgeConv default nb_neighbors
NUM_FEATURES = 6         # implied by Linear(774, ...) = 6 + 3*256
BN_EPS = 1e-5
DEFAULT_TM = 1024        # edge/node row tile (amortizes ~0.35us/step; fits VMEM easily)


# ----------------------------------------------------------------------------
# Pallas kernels
# ----------------------------------------------------------------------------
def _leaky(v):
    return jnp.where(v >= 0, v, LEAKY_SLOPE * v)


def _make_edge_conv_kernel(tm, e_valid):
    """Fused EdgeConv tile kernel (gather-folded message MLP + k-max epilogue).

    xn_ref : (tm/K, F)  destination-node features (node-major)
    xj_ref : (tm,  F)   gathered neighbor features (edge-major, K per node)
    out    : (tm/K, D)  max over each node's K messages
    """
    k = K_NEIGHBORS
    tn = tm // k
    need_mask = (e_valid % tm) != 0

    def kernel(xn_ref, xj_ref, w1s_ref, w1n_ref, b1_ref, w2_ref, b2_ref, o_ref):
        # x_i @ (W1a - W1b) + b1  : one row per node (8x fewer MACs than edge-major)
        hi = jnp.dot(xn_ref[...], w1s_ref[...],
                     preferred_element_type=jnp.float32) + b1_ref[...]      # (tn, H)
        # x_j @ W1b : edge-major
        hj = jnp.dot(xj_ref[...], w1n_ref[...],
                     preferred_element_type=jnp.float32)                    # (tm, H)
        hdim = hi.shape[1]
        # broadcast the per-node term to its K consecutive edges (sublane broadcast)
        h = _leaky(hj.reshape(tn, k, hdim) + hi[:, None, :]).reshape(tm, hdim)
        y = jnp.dot(h.astype(w2_ref.dtype), w2_ref[...],
                    preferred_element_type=jnp.float32) + b2_ref[...]       # (tm, D)
        if need_mask:   # ragged last tile: pad edge rows must not feed the max
            row = jax.lax.broadcasted_iota(jnp.int32, (tm, 1), 0)
            valid = (row + pl.program_id(0) * tm) < e_valid
            y = jnp.where(valid, y, -jnp.inf)
        dout = y.shape[1]
        agg = jnp.max(y.reshape(tn, k, dout), axis=1)                       # (tn, D)
        # LeakyReLU is monotonic -> leaky(max) == max(leaky); apply once per node.
        o_ref[...] = _leaky(agg).astype(o_ref.dtype)

    return kernel


def _post_mlp_kernel(x_ref, g1_ref, g2_ref, g3_ref,
                     w1x_ref, w1a_ref, w1b_ref, w1c_ref, b1_ref,
                     w2_ref, b2_ref, o_ref):
    # post_process with the (N, 774) concat folded away:
    #   cat([x, g1, g2, g3]) @ W1 == x@W1x + g1@W1a + g2@W1b + g3@W1c
    h = (jnp.dot(x_ref[...], w1x_ref[...], preferred_element_type=jnp.float32)
         + jnp.dot(g1_ref[...], w1a_ref[...], preferred_element_type=jnp.float32)
         + jnp.dot(g2_ref[...], w1b_ref[...], preferred_element_type=jnp.float32)
         + jnp.dot(g3_ref[...], w1c_ref[...], preferred_element_type=jnp.float32)
         + b1_ref[...])
    h = _leaky(h)
    y = jnp.dot(h.astype(w2_ref.dtype), w2_ref[...],
                preferred_element_type=jnp.float32) + b2_ref[...]
    o_ref[...] = _leaky(y).astype(o_ref.dtype)


def _readout_out_kernel(x_ref, wr_ref, br_ref, wo_ref, bo_ref, gamma_ref, beta_ref, o_ref):
    # readout: Linear(778,128)+LeakyReLU fused with the out head:
    # Linear(128,2) + BatchNorm1d(2) (train-mode batch stats, module default) + LeakyReLU.
    r = _leaky(jnp.dot(x_ref[...], wr_ref[...],
                       preferred_element_type=jnp.float32) + br_ref[...])
    z = jnp.dot(r, wo_ref[...], preferred_element_type=jnp.float32) + bo_ref[...]
    mean = jnp.mean(z, axis=0, keepdims=True)
    var = jnp.mean((z - mean) ** 2, axis=0, keepdims=True)   # biased var (BN semantics)
    zn = (z - mean) * jax.lax.rsqrt(var + BN_EPS)
    o_ref[...] = _leaky(zn * gamma_ref[...] + beta_ref[...])


# ----------------------------------------------------------------------------
# Pallas wrappers
# ----------------------------------------------------------------------------
def _edge_tile(e):
    """Edge-row tile: one full block when small, else 1024 (multiple of 8*K)."""
    return e if e <= DEFAULT_TM else DEFAULT_TM


def _row_tile(m):
    """Node-row tile: full block when small, else 1024."""
    return m if m <= DEFAULT_TM else DEFAULT_TM


def edge_conv_fused(x_nodes, src, p, num_nodes):
    """Fused EdgeConv: message MLP + max aggregation over the K consecutive kNN
    edges of every destination node (requires dst == repeat(arange(N), K))."""
    N, F = x_nodes.shape
    E = src.shape[0]
    assert E == K_NEIGHBORS * num_nodes, "fused EdgeConv requires kNN-structured edges"
    H = p["w1s"].shape[1]
    Dout = p["w2"].shape[1]

    # TODO(synk): fold this neighbor gather into the kernel (SMEM-prefetched src
    # indices + VMEM-resident node table) once in-kernel row gather is practical.
    x_j = x_nodes[src]                                   # (E, F) bf16 gather (XLA)

    tm = _edge_tile(E)
    tn = tm // K_NEIGHBORS
    flops = 2 * N * F * H + 2 * E * F * H + 2 * E * H * Dout
    bytes_acc = 2 * (N * F + E * F + N * Dout + 2 * F * H + H * Dout) + 4 * (H + Dout)

    return pl.pallas_call(
        _make_edge_conv_kernel(tm, E),
        out_shape=jax.ShapeDtypeStruct((N, Dout), jnp.bfloat16),
        grid=(pl.cdiv(E, tm),),
        in_specs=[
            pl.BlockSpec((tn, F), lambda i: (i, 0)),     # destination-node features
            pl.BlockSpec((tm, F), lambda i: (i, 0)),     # gathered neighbor features
            pl.BlockSpec((F, H), lambda i: (0, 0)),
            pl.BlockSpec((F, H), lambda i: (0, 0)),
            pl.BlockSpec((1, H), lambda i: (0, 0)),
            pl.BlockSpec((H, Dout), lambda i: (0, 0)),
            pl.BlockSpec((1, Dout), lambda i: (0, 0)),
        ],
        out_specs=pl.BlockSpec((tn, Dout), lambda i: (i, 0)),
        compiler_params=pltpu.CompilerParams(dimension_semantics=("parallel",)),
        cost_estimate=pl.CostEstimate(flops=flops, transcendentals=0,
                                      bytes_accessed=bytes_acc),
    )(x_nodes, x_j, p["w1s"], p["w1n"], p["b1"], p["w2"], p["b2"])


def post_mlp(x0, g1, g2, g3, p):
    """post_process MLP with the concat folded into four partial matmuls."""
    N, F0 = x0.shape
    C = g1.shape[1]
    H = p["w2"].shape[0]
    Dout = p["w2"].shape[1]
    tm = _row_tile(N)
    din = F0 + 3 * C
    flops = 2 * N * din * H + 2 * N * H * Dout
    bytes_acc = 2 * (N * (din + Dout) + din * H + H * Dout) + 4 * (H + Dout)

    return pl.pallas_call(
        _post_mlp_kernel,
        out_shape=jax.ShapeDtypeStruct((N, Dout), jnp.bfloat16),
        grid=(pl.cdiv(N, tm),),
        in_specs=[
            pl.BlockSpec((tm, F0), lambda i: (i, 0)),
            pl.BlockSpec((tm, C), lambda i: (i, 0)),
            pl.BlockSpec((tm, C), lambda i: (i, 0)),
            pl.BlockSpec((tm, C), lambda i: (i, 0)),
            pl.BlockSpec((F0, H), lambda i: (0, 0)),
            pl.BlockSpec((C, H), lambda i: (0, 0)),
            pl.BlockSpec((C, H), lambda i: (0, 0)),
            pl.BlockSpec((C, H), lambda i: (0, 0)),
            pl.BlockSpec((1, H), lambda i: (0, 0)),
            pl.BlockSpec((H, Dout), lambda i: (0, 0)),
            pl.BlockSpec((1, Dout), lambda i: (0, 0)),
        ],
        out_specs=pl.BlockSpec((tm, Dout), lambda i: (i, 0)),
        compiler_params=pltpu.CompilerParams(dimension_semantics=("parallel",)),
        cost_estimate=pl.CostEstimate(flops=flops, transcendentals=0,
                                      bytes_accessed=bytes_acc),
    )(x0, g1, g2, g3, p["w1x"], p["w1a"], p["w1b"], p["w1c"], p["b1"], p["w2"], p["b2"])


def readout_out(pooled, readout_params, out_params):
    """Fused readout + out head on the (G, 778) pooled matrix (G tiny -> one block).
    BN batch-statistics are computed over the whole block, so this call is never
    tiled over rows."""
    wr, br = readout_params
    wo, bo, gamma, beta = out_params
    G = pooled.shape[0]
    vmem = pl.BlockSpec(memory_space=pltpu.MemorySpace.VMEM)
    return pl.pallas_call(
        _readout_out_kernel,
        out_shape=jax.ShapeDtypeStruct((G, wo.shape[1]), jnp.float32),
        in_specs=[vmem] * 7,
        out_specs=vmem,
    )(pooled, wr, br, wo, bo, gamma, beta)


# ----------------------------------------------------------------------------
# Graph glue (plain JAX)
# ----------------------------------------------------------------------------
def knn_graph(pos, k, batch=None):
    """torch_cluster.knn_graph semantics: edge_index[0]=source (neighbor),
    edge_index[1]=target, no self loops; batch=None => kNN across all nodes.
    Distances via the Gram-matrix form so the N^2*F work lands on the MXU."""
    n = pos.shape[0]
    sq = jnp.sum(pos.astype(jnp.float32) ** 2, axis=-1)
    gram = jnp.dot(pos, pos.T, preferred_element_type=jnp.float32)   # MXU (bf16 for re-kNN)
    d2 = sq[:, None] + sq[None, :] - 2.0 * gram
    if batch is not None:
        d2 = jnp.where(batch[:, None] == batch[None, :], d2, 1e30)
    d2 = jnp.where(jnp.eye(n, dtype=bool), 1e30, d2)
    # TODO(synk): for very large N, tile this into a streaming per-block top-k kernel
    # instead of forming the full (N, N) matrix.
    _, nbr = jax.lax.top_k(-d2, k)                                   # (N, k) sources per target
    dst = jnp.repeat(jnp.arange(n, dtype=jnp.int32), k)
    src = nbr.reshape(-1).astype(jnp.int32)
    return jnp.stack([src, dst], axis=0)


def segment_mean(x, seg, num_segments):
    s = jax.ops.segment_sum(x, seg, num_segments=num_segments)
    c = jax.ops.segment_sum(jnp.ones((x.shape[0], 1), jnp.float32), seg,
                            num_segments=num_segments)
    return s / jnp.maximum(c, 1.0)


def calculate_global_variables(x, edge_index, batch, num_graphs):
    """graphnet DynEdge._calculate_global_variables: per-graph feature means (6)
    + xyzt edge-homophily (4) -> (G, 10)."""
    src, dst = edge_index[0], edge_index[1]
    same = (x[src, :4] == x[dst, :4]).astype(jnp.float32)            # (E, 4)
    homo = segment_mean(same, batch[dst], num_graphs)                # (G, 4)
    means = segment_mean(x, batch, num_graphs)                       # (G, 6)
    return jnp.concatenate([means, homo], axis=1)                    # (G, 10)


# ----------------------------------------------------------------------------
# Parameter init (deterministic, PyTorch-Linear-style uniform; zero padding to
# lane-friendly widths keeps the math identical to the 336/774 architecture)
# ----------------------------------------------------------------------------
def linear_init(key, fan_in, fan_out):
    k1, k2 = jax.random.split(key)
    bound = 1.0 / jnp.sqrt(jnp.float32(fan_in))
    w = jax.random.uniform(k1, (fan_in, fan_out), jnp.float32, -bound, bound)
    b = jax.random.uniform(k2, (1, fan_out), jnp.float32, -bound, bound)
    return w, b


def _pad_to(a, shape):
    return jnp.pad(a, [(0, s - d) for d, s in zip(a.shape, shape)])


def _make_edge_mlp(key, f, hidden, out, hidden_pad):
    """Linear(2f,hidden)+LeakyReLU+Linear(hidden,out)+LeakyReLU, with W1 split into
    the self/neighbor halves and the x_j-x_i subtraction folded into the weights."""
    k1, k2 = jax.random.split(key)
    w1, b1 = linear_init(k1, 2 * f, hidden)
    w2, b2 = linear_init(k2, hidden, out)
    w1a, w1b = w1[:f], w1[f:]
    return dict(
        w1s=_pad_to(w1a - w1b, (f, hidden_pad)).astype(jnp.bfloat16),
        w1n=_pad_to(w1b, (f, hidden_pad)).astype(jnp.bfloat16),
        b1=_pad_to(b1, (1, hidden_pad)),
        w2=_pad_to(w2, (hidden_pad, out)).astype(jnp.bfloat16),
        b2=b2,
    )


def _make_post_mlp(key):
    """Linear(774,336)+LeakyReLU+Linear(336,256)+LeakyReLU; W1 split into the four
    input row blocks (x, conv1, conv2, conv3); hidden padded 336->384 with zeros."""
    k1, k2 = jax.random.split(key)
    w1, b1 = linear_init(k1, NUM_FEATURES + 3 * 256, 336)
    w2, b2 = linear_init(k2, 336, 256)

    def _h(w):
        return _pad_to(w, (w.shape[0], 384)).astype(jnp.bfloat16)

    s0, s1, s2 = NUM_FEATURES, NUM_FEATURES + 256, NUM_FEATURES + 512
    return dict(
        w1x=_h(w1[:s0]), w1a=_h(w1[s0:s1]), w1b=_h(w1[s1:s2]), w1c=_h(w1[s2:]),
        b1=_pad_to(b1, (1, 384)),
        w2=_pad_to(w2, (384, 256)).astype(jnp.bfloat16),
        b2=b2,
    )


def init_params(key):
    keys = jax.random.split(key, 6)
    p = {}
    # conv1 MLP: Linear(2*6,128) -> LeakyReLU -> Linear(128,256) -> LeakyReLU
    p["conv1"] = _make_edge_mlp(keys[0], NUM_FEATURES, 128, 256, 128)
    # conv2 / conv3 MLPs: Linear(512,336) -> Linear(336,256)  (hidden padded to 384)
    p["conv2"] = _make_edge_mlp(keys[1], 256, 336, 256, 384)
    p["conv3"] = _make_edge_mlp(keys[2], 256, 336, 256, 384)
    # post_process: Linear(774,336) -> Linear(336,256)  (W1 row-split, hidden padded)
    p["post"] = _make_post_mlp(keys[3])
    # readout: Linear(778,128)   (G is tiny -> keep f32, no padding needed)
    p["readout"] = linear_init(keys[4], 778, 128)
    # out: Linear(128,2) + BatchNorm1d(2) (gamma=1, beta=0)
    w, b = linear_init(keys[5], 128, 2)
    p["out"] = (w, b, jnp.ones((1, 2), jnp.float32), jnp.zeros((1, 2), jnp.float32))
    return p


# ----------------------------------------------------------------------------
# EdgeModel forward
# ----------------------------------------------------------------------------
def edge_model_forward(params, x, edge_index, batch, num_graphs):
    n = x.shape[0]
    global_features = calculate_global_variables(x, edge_index, batch, num_graphs)

    # TODO(synk): the fused EdgeConv kernel assumes kNN-structured edges
    # (dst == repeat(arange(n), K_NEIGHBORS)); this holds for knn_graph-built input
    # graphs (graphnet/IceCube KNN builder) and for every re-kNN layer below.
    src = edge_index[0]
    graphs = [x.astype(jnp.bfloat16)]
    for i, name in enumerate(("conv1", "conv2", "conv3")):
        g = edge_conv_fused(graphs[-1], src, params[name], n)        # (N, 256) bf16, Pallas
        graphs.append(g)
        if i < 2:
            # graphnet DynEdgeConv: re-kNN on the layer output (batch=None here,
            # matching EdgeModel which calls layer(x, edge_index) without batch).
            src = knn_graph(g, K_NEIGHBORS, batch=None)[0]

    # post_process: concat folded into the kernel (no (N, 774) HBM round-trip)
    h = post_mlp(graphs[0], graphs[1], graphs[2], graphs[3], params["post"])  # (N,256) bf16

    # GLOBAL_POOLINGS order: max, add, mean (max exact in bf16, sums accumulate f32)
    # TODO(synk): contiguous batch segments would allow fusing these poolings into
    # the post kernel epilogue via scalar-prefetched per-graph offsets.
    pool_max = jax.ops.segment_max(h, batch, num_segments=num_graphs).astype(jnp.float32)
    h32 = h.astype(jnp.float32)
    pool_add = jax.ops.segment_sum(h32, batch, num_segments=num_graphs)
    counts = jax.ops.segment_sum(jnp.ones((n, 1), jnp.float32), batch,
                                 num_segments=num_graphs)
    pool_mean = pool_add / jnp.maximum(counts, 1.0)
    pooled = jnp.concatenate([pool_max, pool_add, pool_mean, global_features], axis=1)  # (G, 778)

    # readout Linear+LeakyReLU fused with out head (Linear + BN(batch stats) + LeakyReLU)
    return readout_out(pooled, params["readout"], params["out"])     # (G, 2)  Pallas


# ----------------------------------------------------------------------------
if __name__ == "__main__":
    key = jax.random.PRNGKey(0)
    k_param, k_x = jax.random.split(key)

    N = 32                                    # nodes (pulses)
    G = 2                                     # graphs (events)
    x = jax.random.normal(k_x, (N, NUM_FEATURES), jnp.float32)
    batch = jnp.repeat(jnp.arange(G, dtype=jnp.int32), N // G)       # (N,)
    # Input graph: kNN on xyz, per-event (typical IceCube/graphnet graph builder)
    edge_index = knn_graph(x[:, :3], K_NEIGHBORS, batch=batch)       # (2, N*k)

    params = init_params(k_param)

    fwd = jax.jit(edge_model_forward, static_argnames=("num_graphs",))
    out = fwd(params, x, edge_index, batch, num_graphs=G)
    out = jax.block_until_ready(out)
    assert out.shape == (G, 2) and out.dtype == jnp.float32
    print("KERNEL_OK")
</pallas_src>

<mosaic_0001>
module attributes {stable_mosaic.version = 11 : i64} {
  func.func private @main(%arg0: i32) attributes {dimension_semantics = [#tpu.dimension_semantics<core_parallel>], iteration_bounds = array<i64: 2>, tpu.core_type = #tpu.core_type<sc_scalar_subcore>, window_params = []} {
    return
  }
}

module attributes {stable_mosaic.version = 11 : i64} {
  func.func private @main(%arg0: i32) attributes {dimension_semantics = [#tpu.dimension_semantics<core_parallel>], iteration_bounds = array<i64: 2>, tpu.core_type = #tpu.core_type<sc_scalar_subcore>, window_params = []} {
    return
  }
}

module attributes {stable_mosaic.version = 11 : i64} {
  func.func @kernel(%arg0: i32, %arg1: memref<32x6xbf16, #tpu.memory_space<vmem>>, %arg2: memref<256x6xbf16, #tpu.memory_space<vmem>>, %arg3: memref<6x128xbf16, #tpu.memory_space<vmem>>, %arg4: memref<6x128xbf16, #tpu.memory_space<vmem>>, %arg5: memref<1x128xf32, #tpu.memory_space<vmem>>, %arg6: memref<128x256xbf16, #tpu.memory_space<vmem>>, %arg7: memref<1x256xf32, #tpu.memory_space<vmem>>, %arg8: memref<32x256xbf16, #tpu.memory_space<vmem>>) attributes {dimension_semantics = [#tpu.dimension_semantics<parallel>], iteration_bounds = array<i64: 1>, scalar_prefetch = 0 : i64, scratch_operands = 0 : i64, tpu.core_type = #tpu.core_type<tc>, window_params = [{transform_indices = @transform_0, window_bounds = array<i64: 32, 6>}, {transform_indices = @transform_1, window_bounds = array<i64: 256, 6>}, {pipeline_mode = #tpu.pipeline_mode<synchronous>, transform_indices = @transform_2, window_bounds = array<i64: 6, 128>}, {pipeline_mode = #tpu.pipeline_mode<synchronous>, transform_indices = @transform_3, window_bounds = array<i64: 6, 128>}, {pipeline_mode = #tpu.pipeline_mode<synchronous>, transform_indices = @transform_4, window_bounds = array<i64: 1, 128>}, {pipeline_mode = #tpu.pipeline_mode<synchronous>, transform_indices = @transform_5, window_bounds = array<i64: 128, 256>}, {pipeline_mode = #tpu.pipeline_mode<synchronous>, transform_indices = @transform_6, window_bounds = array<i64: 1, 256>}, {transform_indices = @transform_7, window_bounds = array<i64: 32, 256>}]} {
    %c0 = arith.constant 0 : index
    %c0_0 = arith.constant 0 : index
    %0 = vector.load %arg1[%c0, %c0_0] : memref<32x6xbf16, #tpu.memory_space<vmem>>, vector<32x6xbf16>
    %c0_1 = arith.constant 0 : index
    %c0_2 = arith.constant 0 : index
    %1 = vector.load %arg3[%c0_1, %c0_2] : memref<6x128xbf16, #tpu.memory_space<vmem>>, vector<6x128xbf16>
    %cst = arith.constant dense<0.000000e+00> : vector<32x128xf32>
    %2 = tpu.matmul %0, %1, %cst {dimension_numbers = #tpu.dot_dimension_numbers<[1], [0], [0], [1], [0, 0, 1, 1], [], []>} : vector<32x6xbf16>, vector<6x128xbf16>, vector<32x128xf32> -> vector<32x128xf32>
    %c0_3 = arith.constant 0 : index
    %c0_4 = arith.constant 0 : index
    %3 = vector.load %arg5[%c0_3, %c0_4] : memref<1x128xf32, #tpu.memory_space<vmem>>, vector<1x128xf32>
    %4 = vector.broadcast %3 : vector<1x128xf32> to vector<32x128xf32>
    %5 = arith.addf %2, %4 : vector<32x128xf32>
    %c0_5 = arith.constant 0 : index
    %c0_6 = arith.constant 0 : index
    %6 = vector.load %arg2[%c0_5, %c0_6] : memref<256x6xbf16, #tpu.memory_space<vmem>>, vector<256x6xbf16>
    %c0_7 = arith.constant 0 : index
    %c0_8 = arith.constant 0 : index
    %7 = vector.load %arg4[%c0_7, %c0_8] : memref<6x128xbf16, #tpu.memory_space<vmem>>, vector<6x128xbf16>
    %cst_9 = arith.constant dense<0.000000e+00> : vector<256x128xf32>
    %8 = tpu.matmul %6, %7, %cst_9 {dimension_numbers = #tpu.dot_dimension_numbers<[1], [0], [0], [1], [0, 0, 1, 1], [], []>} : vector<256x6xbf16>, vector<6x128xbf16>, vector<256x128xf32> -> vector<256x128xf32>
    %9 = vector.shape_cast %8 : vector<256x128xf32> to vector<32x8x128xf32>
    %10 = vector.shape_cast %5 : vector<32x128xf32> to vector<32x1x128xf32>
    %11 = vector.broadcast %10 : vector<32x1x128xf32> to vector<32x8x128xf32>
    %12 = arith.addf %9, %11 : vector<32x8x128xf32>
    %cst_10 = arith.constant 0.000000e+00 : f32
    %13 = vector.broadcast %cst_10 : f32 to vector<32x8x128xf32>
    %14 = arith.cmpf oge, %12, %13 : vector<32x8x128xf32>
    %cst_11 = arith.constant 0.00999999977 : f32
    %15 = vector.broadcast %cst_11 : f32 to vector<32x8x128xf32>
    %16 = arith.mulf %15, %12 : vector<32x8x128xf32>
    %17 = arith.select %14, %12, %16 : vector<32x8x128xi1>, vector<32x8x128xf32>
    %18 = vector.shape_cast %17 : vector<32x8x128xf32> to vector<256x128xf32>
    %19 = arith.truncf %18 : vector<256x128xf32> to vector<256x128xbf16>
    %c0_12 = arith.constant 0 : index
    %c0_13 = arith.constant 0 : index
    %20 = vector.load %arg6[%c0_12, %c0_13] : memref<128x256xbf16, #tpu.memory_space<vmem>>, vector<128x256xbf16>
    %cst_14 = arith.constant dense<0.000000e+00> : vector<256x256xf32>
    %21 = tpu.matmul %19, %20, %cst_14 {dimension_numbers = #tpu.dot_dimension_numbers<[1], [0], [0], [1], [0, 0, 1, 1], [], []>} : vector<256x128xbf16>, vector<128x256xbf16>, vector<256x256xf32> -> vector<256x256xf32>
    %c0_15 = arith.constant 0 : index
    %c0_16 = arith.constant 0 : index
    %22 = vector.load %arg7[%c0_15, %c0_16] : memref<1x256xf32, #tpu.memory_space<vmem>>, vector<1x256xf32>
    %23 = vector.broadcast %22 : vector<1x256xf32> to vector<256x256xf32>
    %24 = arith.addf %21, %23 : vector<256x256xf32>
    %25 = vector.shape_cast %24 : vector<256x256xf32> to vector<32x8x256xf32>
    %cst_17 = arith.constant dense<0xFF800000> : vector<32x256xf32>
    %26 = vector.multi_reduction <maximumf>, %25, %cst_17 [1] : vector<32x8x256xf32> to vector<32x256xf32>
    %cst_18 = arith.constant 0.000000e+00 : f32
    %27 = vector.broadcast %cst_18 : f32 to vector<32x256xf32>
    %28 = arith.cmpf oge, %26, %27 : vector<32x256xf32>
    %cst_19 = arith.constant 0.00999999977 : f32
    %29 = vector.broadcast %cst_19 : f32 to vector<32x256xf32>
    %30 = arith.mulf %29, %26 : vector<32x256xf32>
    %31 = arith.select %28, %26, %30 : vector<32x256xi1>, vector<32x256xf32>
    %32 = arith.truncf %31 : vector<32x256xf32> to vector<32x256xbf16>
    %c0_20 = arith.constant 0 : index
    %c0_21 = arith.constant 0 : index
    %33 = vector.load %arg8[%c0_20, %c0_21] : memref<32x256xbf16, #tpu.memory_space<vmem>>, vector<32x256xbf16>
    tpu.vector_store %arg8[%c0_20, %c0_21], %32 {strides = array<i32>} : memref<32x256xbf16, #tpu.memory_space<vmem>>, vector<32x256xbf16>,
    return
  }
  func.func @transform_0(%arg0: i32) -> (i32, i32) {
    %c0_i32 = arith.constant 0 : i32
    %c0_i32_0 = arith.constant 0 : i32
    return %arg0, %c0_i32 : i32, i32
  }
  func.func @transform_1(%arg0: i32) -> (i32, i32) {
    %c0_i32 = arith.constant 0 : i32
    %c0_i32_0 = arith.constant 0 : i32
    return %arg0, %c0_i32 : i32, i32
  }
  func.func @transform_2(%arg0: i32) -> (i32, i32) {
    %c0_i32 = arith.constant 0 : i32
    %c0_i32_0 = arith.constant 0 : i32
    %c0_i32_1 = arith.constant 0 : i32
    return %c0_i32, %c0_i32_0 : i32, i32
  }
  func.func @transform_3(%arg0: i32) -> (i32, i32) {
    %c0_i32 = arith.constant 0 : i32
    %c0_i32_0 = arith.constant 0 : i32
    %c0_i32_1 = arith.constant 0 : i32
    return %c0_i32, %c0_i32_0 : i32, i32
  }
  func.func @transform_4(%arg0: i32) -> (i32, i32) {
    %c0_i32 = arith.constant 0 : i32
    %c0_i32_0 = arith.constant 0 : i32
    %c0_i32_1 = arith.constant 0 : i32
    return %c0_i32, %c0_i32_0 : i32, i32
  }
  func.func @transform_5(%arg0: i32) -> (i32, i32) {
    %c0_i32 = arith.constant 0 : i32
    %c0_i32_0 = arith.constant 0 : i32
    %c0_i32_1 = arith.constant 0 : i32
    return %c0_i32, %c0_i32_0 : i32, i32
  }
  func.func @transform_6(%arg0: i32) -> (i32, i32) {
    %c0_i32 = arith.constant 0 : i32
    %c0_i32_0 = arith.constant 0 : i32
    %c0_i32_1 = arith.constant 0 : i32
    return %c0_i32, %c0_i32_0 : i32, i32
  }
  func.func @transform_7(%arg0: i32) -> (i32, i32) {
    %c0_i32 = arith.constant 0 : i32
    %c0_i32_0 = arith.constant 0 : i32
    return %arg0, %c0_i32 : i32, i32
  }
}

module attributes {stable_mosaic.version = 11 : i64} {
  func.func @_post_mlp_kernel(%arg0: i32, %arg1: memref<32x6xbf16, #tpu.memory_space<vmem>>, %arg2: memref<32x256xbf16, #tpu.memory_space<vmem>>, %arg3: memref<32x256xbf16, #tpu.memory_space<vmem>>, %arg4: memref<32x256xbf16, #tpu.memory_space<vmem>>, %arg5: memref<6x384xbf16, #tpu.memory_space<vmem>>, %arg6: memref<256x384xbf16, #tpu.memory_space<vmem>>, %arg7: memref<256x384xbf16, #tpu.memory_space<vmem>>, %arg8: memref<256x384xbf16, #tpu.memory_space<vmem>>, %arg9: memref<1x384xf32, #tpu.memory_space<vmem>>, %arg10: memref<384x256xbf16, #tpu.memory_space<vmem>>, %arg11: memref<1x256xf32, #tpu.memory_space<vmem>>, %arg12: memref<32x256xbf16, #tpu.memory_space<vmem>>) attributes {dimension_semantics = [#tpu.dimension_semantics<parallel>], iteration_bounds = array<i64: 1>, scalar_prefetch = 0 : i64, scratch_operands = 0 : i64, tpu.core_type = #tpu.core_type<tc>, window_params = [{transform_indices = @transform_0, window_bounds = array<i64: 32, 6>}, {transform_indices = @transform_1, window_bounds = array<i64: 32, 256>}, {transform_indices = @transform_2, window_bounds = array<i64: 32, 256>}, {transform_indices = @transform_3, window_bounds = array<i64: 32, 256>}, {pipeline_mode = #tpu.pipeline_mode<synchronous>, transform_indices = @transform_4, window_bounds = array<i64: 6, 384>}, {pipeline_mode = #tpu.pipeline_mode<synchronous>, transform_indices = @transform_5, window_bounds = array<i64: 256, 384>}, {pipeline_mode = #tpu.pipeline_mode<synchronous>, transform_indices = @transform_6, window_bounds = array<i64: 256, 384>}, {pipeline_mode = #tpu.pipeline_mode<synchronous>, transform_indices = @transform_7, window_bounds = array<i64: 256, 384>}, {pipeline_mode = #tpu.pipeline_mode<synchronous>, transform_indices = @transform_8, window_bounds = array<i64: 1, 384>}, {pipeline_mode = #tpu.pipeline_mode<synchronous>, transform_indices = @transform_9, window_bounds = array<i64: 384, 256>}, {pipeline_mode = #tpu.pipeline_mode<synchronous>, transform_indices = @transform_10, window_bounds = array<i64: 1, 256>}, {transform_indices = @transform_11, window_bounds = array<i64: 32, 256>}]} {
    %c0 = arith.constant 0 : index
    %c0_0 = arith.constant 0 : index
    %0 = vector.load %arg1[%c0, %c0_0] : memref<32x6xbf16, #tpu.memory_space<vmem>>, vector<32x6xbf16>
    %c0_1 = arith.constant 0 : index
    %c0_2 = arith.constant 0 : index
    %1 = vector.load %arg5[%c0_1, %c0_2] : memref<6x384xbf16, #tpu.memory_space<vmem>>, vector<6x384xbf16>
    %cst = arith.constant dense<0.000000e+00> : vector<32x384xf32>
    %2 = tpu.matmul %0, %1, %cst {dimension_numbers = #tpu.dot_dimension_numbers<[1], [0], [0], [1], [0, 0, 1, 1], [], []>} : vector<32x6xbf16>, vector<6x384xbf16>, vector<32x384xf32> -> vector<32x384xf32>
    %c0_3 = arith.constant 0 : index
    %c0_4 = arith.constant 0 : index
    %3 = vector.load %arg2[%c0_3, %c0_4] : memref<32x256xbf16, #tpu.memory_space<vmem>>, vector<32x256xbf16>
    %c0_5 = arith.constant 0 : index
    %c0_6 = arith.constant 0 : index
    %4 = vector.load %arg6[%c0_5, %c0_6] : memref<256x384xbf16, #tpu.memory_space<vmem>>, vector<256x384xbf16>
    %cst_7 = arith.constant dense<0.000000e+00> : vector<32x384xf32>
    %5 = tpu.matmul %3, %4, %cst_7 {dimension_numbers = #tpu.dot_dimension_numbers<[1], [0], [0], [1], [0, 0, 1, 1], [], []>} : vector<32x256xbf16>, vector<256x384xbf16>, vector<32x384xf32> -> vector<32x384xf32>
    %6 = arith.addf %2, %5 : vector<32x384xf32>
    %c0_8 = arith.constant 0 : index
    %c0_9 = arith.constant 0 : index
    %7 = vector.load %arg3[%c0_8, %c0_9] : memref<32x256xbf16, #tpu.memory_space<vmem>>, vector<32x256xbf16>
    %c0_10 = arith.constant 0 : index
    %c0_11 = arith.constant 0 : index
    %8 = vector.load %arg7[%c0_10, %c0_11] : memref<256x384xbf16, #tpu.memory_space<vmem>>, vector<256x384xbf16>
    %cst_12 = arith.constant dense<0.000000e+00> : vector<32x384xf32>
    %9 = tpu.matmul %7, %8, %cst_12 {dimension_numbers = #tpu.dot_dimension_numbers<[1], [0], [0], [1], [0, 0, 1, 1], [], []>} : vector<32x256xbf16>, vector<256x384xbf16>, vector<32x384xf32> -> vector<32x384xf32>
    %10 = arith.addf %6, %9 : vector<32x384xf32>
    %c0_13 = arith.constant 0 : index
    %c0_14 = arith.constant 0 : index
    %11 = vector.load %arg4[%c0_13, %c0_14] : memref<32x256xbf16, #tpu.memory_space<vmem>>, vector<32x256xbf16>
    %c0_15 = arith.constant 0 : index
    %c0_16 = arith.constant 0 : index
    %12 = vector.load %arg8[%c0_15, %c0_16] : memref<256x384xbf16, #tpu.memory_space<vmem>>, vector<256x384xbf16>
    %cst_17 = arith.constant dense<0.000000e+00> : vector<32x384xf32>
    %13 = tpu.matmul %11, %12, %cst_17 {dimension_numbers = #tpu.dot_dimension_numbers<[1], [0], [0], [1], [0, 0, 1, 1], [], []>} : vector<32x256xbf16>, vector<256x384xbf16>, vector<32x384xf32> -> vector<32x384xf32>
    %14 = arith.addf %10, %13 : vector<32x384xf32>
    %c0_18 = arith.constant 0 : index
    %c0_19 = arith.constant 0 : index
    %15 = vector.load %arg9[%c0_18, %c0_19] : memref<1x384xf32, #tpu.memory_space<vmem>>, vector<1x384xf32>
    %16 = vector.broadcast %15 : vector<1x384xf32> to vector<32x384xf32>
    %17 = arith.addf %14, %16 : vector<32x384xf32>
    %cst_20 = arith.constant 0.000000e+00 : f32
    %18 = vector.broadcast %cst_20 : f32 to vector<32x384xf32>
    %19 = arith.cmpf oge, %17, %18 : vector<32x384xf32>
    %cst_21 = arith.constant 0.00999999977 : f32
    %20 = vector.broadcast %cst_21 : f32 to vector<32x384xf32>
    %21 = arith.mulf %20, %17 : vector<32x384xf32>
    %22 = arith.select %19, %17, %21 : vector<32x384xi1>, vector<32x384xf32>
    %23 = arith.truncf %22 : vector<32x384xf32> to vector<32x384xbf16>
    %c0_22 = arith.constant 0 : index
    %c0_23 = arith.constant 0 : index
    %24 = vector.load %arg10[%c0_22, %c0_23] : memref<384x256xbf16, #tpu.memory_space<vmem>>, vector<384x256xbf16>
    %cst_24 = arith.constant dense<0.000000e+00> : vector<32x256xf32>
    %25 = tpu.matmul %23, %24, %cst_24 {dimension_numbers = #tpu.dot_dimension_numbers<[1], [0], [0], [1], [0, 0, 1, 1], [], []>} : vector<32x384xbf16>, vector<384x256xbf16>, vector<32x256xf32> -> vector<32x256xf32>
    %c0_25 = arith.constant 0 : index
    %c0_26 = arith.constant 0 : index
    %26 = vector.load %arg11[%c0_25, %c0_26] : memref<1x256xf32, #tpu.memory_space<vmem>>, vector<1x256xf32>
    %27 = vector.broadcast %26 : vector<1x256xf32> to vector<32x256xf32>
    %28 = arith.addf %25, %27 : vector<32x256xf32>
    %cst_27 = arith.constant 0.000000e+00 : f32
    %29 = vector.broadcast %cst_27 : f32 to vector<32x256xf32>
    %30 = arith.cmpf oge, %28, %29 : vector<32x256xf32>
    %cst_28 = arith.constant 0.00999999977 : f32
    %31 = vector.broadcast %cst_28 : f32 to vector<32x256xf32>
    %32 = arith.mulf %31, %28 : vector<32x256xf32>
    %33 = arith.select %30, %28, %32 : vector<32x256xi1>, vector<32x256xf32>
    %34 = arith.truncf %33 : vector<32x256xf32> to vector<32x256xbf16>
    %c0_29 = arith.constant 0 : index
    %c0_30 = arith.constant 0 : index
    %35 = vector.load %arg12[%c0_29, %c0_30] : memref<32x256xbf16, #tpu.memory_space<vmem>>, vector<32x256xbf16>
    tpu.vector_store %arg12[%c0_29, %c0_30], %34 {strides = array<i32>} : memref<32x256xbf16, #tpu.memory_space<vmem>>, vector<32x256xbf16>,
    return
  }
  func.func @transform_0(%arg0: i32) -> (i32, i32) {
    %c0_i32 = arith.constant 0 : i32
    %c0_i32_0 = arith.constant 0 : i32
    return %arg0, %c0_i32 : i32, i32
  }
  func.func @transform_1(%arg0: i32) -> (i32, i32) {
    %c0_i32 = arith.constant 0 : i32
    %c0_i32_0 = arith.constant 0 : i32
    return %arg0, %c0_i32 : i32, i32
  }
  func.func @transform_2(%arg0: i32) -> (i32, i32) {
    %c0_i32 = arith.constant 0 : i32
    %c0_i32_0 = arith.constant 0 : i32
    return %arg0, %c0_i32 : i32, i32
  }
  func.func @transform_3(%arg0: i32) -> (i32, i32) {
    %c0_i32 = arith.constant 0 : i32
    %c0_i32_0 = arith.constant 0 : i32
    return %arg0, %c0_i32 : i32, i32
  }
  func.func @transform_4(%arg0: i32) -> (i32, i32) {
    %c0_i32 = arith.constant 0 : i32
    %c0_i32_0 = arith.constant 0 : i32
    %c0_i32_1 = arith.constant 0 : i32
    return %c0_i32, %c0_i32_0 : i32, i32
  }
  func.func @transform_5(%arg0: i32) -> (i32, i32) {
    %c0_i32 = arith.constant 0 : i32
    %c0_i32_0 = arith.constant 0 : i32
    %c0_i32_1 = arith.constant 0 : i32
    return %c0_i32, %c0_i32_0 : i32, i32
  }
  func.func @transform_6(%arg0: i32) -> (i32, i32) {
    %c0_i32 = arith.constant 0 : i32
    %c0_i32_0 = arith.constant 0 : i32
    %c0_i32_1 = arith.constant 0 : i32
    return %c0_i32, %c0_i32_0 : i32, i32
  }
  func.func @transform_7(%arg0: i32) -> (i32, i32) {
    %c0_i32 = arith.constant 0 : i32
    %c0_i32_0 = arith.constant 0 : i32
    %c0_i32_1 = arith.constant 0 : i32
    return %c0_i32, %c0_i32_0 : i32, i32
  }
  func.func @transform_8(%arg0: i32) -> (i32, i32) {
    %c0_i32 = arith.constant 0 : i32
    %c0_i32_0 = arith.constant 0 : i32
    %c0_i32_1 = arith.constant 0 : i32
    return %c0_i32, %c0_i32_0 : i32, i32
  }
  func.func @transform_9(%arg0: i32) -> (i32, i32) {
    %c0_i32 = arith.constant 0 : i32
    %c0_i32_0 = arith.constant 0 : i32
    %c0_i32_1 = arith.constant 0 : i32
    return %c0_i32, %c0_i32_0 : i32, i32
  }
  func.func @transform_10(%arg0: i32) -> (i32, i32) {
    %c0_i32 = arith.constant 0 : i32
    %c0_i32_0 = arith.constant 0 : i32
    %c0_i32_1 = arith.constant 0 : i32
    return %c0_i32, %c0_i32_0 : i32, i32
  }
  func.func @transform_11(%arg0: i32) -> (i32, i32) {
    %c0_i32 = arith.constant 0 : i32
    %c0_i32_0 = arith.constant 0 : i32
    return %arg0, %c0_i32 : i32, i32
  }
}

module attributes {stable_mosaic.version = 11 : i64} {
  func.func @kernel(%arg0: i32, %arg1: memref<32x256xbf16, #tpu.memory_space<vmem>>, %arg2: memref<256x256xbf16, #tpu.memory_space<vmem>>, %arg3: memref<256x384xbf16, #tpu.memory_space<vmem>>, %arg4: memref<256x384xbf16, #tpu.memory_space<vmem>>, %arg5: memref<1x384xf32, #tpu.memory_space<vmem>>, %arg6: memref<384x256xbf16, #tpu.memory_space<vmem>>, %arg7: memref<1x256xf32, #tpu.memory_space<vmem>>, %arg8: memref<32x256xbf16, #tpu.memory_space<vmem>>) attributes {dimension_semantics = [#tpu.dimension_semantics<parallel>], iteration_bounds = array<i64: 1>, scalar_prefetch = 0 : i64, scratch_operands = 0 : i64, tpu.core_type = #tpu.core_type<tc>, window_params = [{transform_indices = @transform_0, window_bounds = array<i64: 32, 256>}, {transform_indices = @transform_1, window_bounds = array<i64: 256, 256>}, {pipeline_mode = #tpu.pipeline_mode<synchronous>, transform_indices = @transform_2, window_bounds = array<i64: 256, 384>}, {pipeline_mode = #tpu.pipeline_mode<synchronous>, transform_indices = @transform_3, window_bounds = array<i64: 256, 384>}, {pipeline_mode = #tpu.pipeline_mode<synchronous>, transform_indices = @transform_4, window_bounds = array<i64: 1, 384>}, {pipeline_mode = #tpu.pipeline_mode<synchronous>, transform_indices = @transform_5, window_bounds = array<i64: 384, 256>}, {pipeline_mode = #tpu.pipeline_mode<synchronous>, transform_indices = @transform_6, window_bounds = array<i64: 1, 256>}, {transform_indices = @transform_7, window_bounds = array<i64: 32, 256>}]} {
    %c0 = arith.constant 0 : index
    %c0_0 = arith.constant 0 : index
    %0 = vector.load %arg1[%c0, %c0_0] : memref<32x256xbf16, #tpu.memory_space<vmem>>, vector<32x256xbf16>
    %c0_1 = arith.constant 0 : index
    %c0_2 = arith.constant 0 : index
    %1 = vector.load %arg3[%c0_1, %c0_2] : memref<256x384xbf16, #tpu.memory_space<vmem>>, vector<256x384xbf16>
    %cst = arith.constant dense<0.000000e+00> : vector<32x384xf32>
    %2 = tpu.matmul %0, %1, %cst {dimension_numbers = #tpu.dot_dimension_numbers<[1], [0], [0], [1], [0, 0, 1, 1], [], []>} : vector<32x256xbf16>, vector<256x384xbf16>, vector<32x384xf32> -> vector<32x384xf32>
    %c0_3 = arith.constant 0 : index
    %c0_4 = arith.constant 0 : index
    %3 = vector.load %arg5[%c0_3, %c0_4] : memref<1x384xf32, #tpu.memory_space<vmem>>, vector<1x384xf32>
    %4 = vector.broadcast %3 : vector<1x384xf32> to vector<32x384xf32>
    %5 = arith.addf %2, %4 : vector<32x384xf32>
    %c0_5 = arith.constant 0 : index
    %c0_6 = arith.constant 0 : index
    %6 = vector.load %arg2[%c0_5, %c0_6] : memref<256x256xbf16, #tpu.memory_space<vmem>>, vector<256x256xbf16>
    %c0_7 = arith.constant 0 : index
    %c0_8 = arith.constant 0 : index
    %7 = vector.load %arg4[%c0_7, %c0_8] : memref<256x384xbf16, #tpu.memory_space<vmem>>, vector<256x384xbf16>
    %cst_9 = arith.constant dense<0.000000e+00> : vector<256x384xf32>
    %8 = tpu.matmul %6, %7, %cst_9 {dimension_numbers = #tpu.dot_dimension_numbers<[1], [0], [0], [1], [0, 0, 1, 1], [], []>} : vector<256x256xbf16>, vector<256x384xbf16>, vector<256x384xf32> -> vector<256x384xf32>
    %9 = vector.shape_cast %8 : vector<256x384xf32> to vector<32x8x384xf32>
    %10 = vector.shape_cast %5 : vector<32x384xf32> to vector<32x1x384xf32>
    %11 = vector.broadcast %10 : vector<32x1x384xf32> to vector<32x8x384xf32>
    %12 = arith.addf %9, %11 : vector<32x8x384xf32>
    %cst_10 = arith.constant 0.000000e+00 : f32
    %13 = vector.broadcast %cst_10 : f32 to vector<32x8x384xf32>
    %14 = arith.cmpf oge, %12, %13 : vector<32x8x384xf32>
    %cst_11 = arith.constant 0.00999999977 : f32
    %15 = vector.broadcast %cst_11 : f32 to vector<32x8x384xf32>
    %16 = arith.mulf %15, %12 : vector<32x8x384xf32>
    %17 = arith.select %14, %12, %16 : vector<32x8x384xi1>, vector<32x8x384xf32>
    %18 = vector.shape_cast %17 : vector<32x8x384xf32> to vector<256x384xf32>
    %19 = arith.truncf %18 : vector<256x384xf32> to vector<256x384xbf16>
    %c0_12 = arith.constant 0 : index
    %c0_13 = arith.constant 0 : index
    %20 = vector.load %arg6[%c0_12, %c0_13] : memref<384x256xbf16, #tpu.memory_space<vmem>>, vector<384x256xbf16>
    %cst_14 = arith.constant dense<0.000000e+00> : vector<256x256xf32>
    %21 = tpu.matmul %19, %20, %cst_14 {dimension_numbers = #tpu.dot_dimension_numbers<[1], [0], [0], [1], [0, 0, 1, 1], [], []>} : vector<256x384xbf16>, vector<384x256xbf16>, vector<256x256xf32> -> vector<256x256xf32>
    %c0_15 = arith.constant 0 : index
    %c0_16 = arith.constant 0 : index
    %22 = vector.load %arg7[%c0_15, %c0_16] : memref<1x256xf32, #tpu.memory_space<vmem>>, vector<1x256xf32>
    %23 = vector.broadcast %22 : vector<1x256xf32> to vector<256x256xf32>
    %24 = arith.addf %21, %23 : vector<256x256xf32>
    %25 = vector.shape_cast %24 : vector<256x256xf32> to vector<32x8x256xf32>
    %cst_17 = arith.constant dense<0xFF800000> : vector<32x256xf32>
    %26 = vector.multi_reduction <maximumf>, %25, %cst_17 [1] : vector<32x8x256xf32> to vector<32x256xf32>
    %cst_18 = arith.constant 0.000000e+00 : f32
    %27 = vector.broadcast %cst_18 : f32 to vector<32x256xf32>
    %28 = arith.cmpf oge, %26, %27 : vector<32x256xf32>
    %cst_19 = arith.constant 0.00999999977 : f32
    %29 = vector.broadcast %cst_19 : f32 to vector<32x256xf32>
    %30 = arith.mulf %29, %26 : vector<32x256xf32>
    %31 = arith.select %28, %26, %30 : vector<32x256xi1>, vector<32x256xf32>
    %32 = arith.truncf %31 : vector<32x256xf32> to vector<32x256xbf16>
    %c0_20 = arith.constant 0 : index
    %c0_21 = arith.constant 0 : index
    %33 = vector.load %arg8[%c0_20, %c0_21] : memref<32x256xbf16, #tpu.memory_space<vmem>>, vector<32x256xbf16>
    tpu.vector_store %arg8[%c0_20, %c0_21], %32 {strides = array<i32>} : memref<32x256xbf16, #tpu.memory_space<vmem>>, vector<32x256xbf16>,
    return
  }
  func.func @transform_0(%arg0: i32) -> (i32, i32) {
    %c0_i32 = arith.constant 0 : i32
    %c0_i32_0 = arith.constant 0 : i32
    return %arg0, %c0_i32 : i32, i32
  }
  func.func @transform_1(%arg0: i32) -> (i32, i32) {
    %c0_i32 = arith.constant 0 : i32
    %c0_i32_0 = arith.constant 0 : i32
    return %arg0, %c0_i32 : i32, i32
  }
  func.func @transform_2(%arg0: i32) -> (i32, i32) {
    %c0_i32 = arith.constant 0 : i32
    %c0_i32_0 = arith.constant 0 : i32
    %c0_i32_1 = arith.constant 0 : i32
    return %c0_i32, %c0_i32_0 : i32, i32
  }
  func.func @transform_3(%arg0: i32) -> (i32, i32) {
    %c0_i32 = arith.constant 0 : i32
    %c0_i32_0 = arith.constant 0 : i32
    %c0_i32_1 = arith.constant 0 : i32
    return %c0_i32, %c0_i32_0 : i32, i32
  }
  func.func @transform_4(%arg0: i32) -> (i32, i32) {
    %c0_i32 = arith.constant 0 : i32
    %c0_i32_0 = arith.constant 0 : i32
    %c0_i32_1 = arith.constant 0 : i32
    return %c0_i32, %c0_i32_0 : i32, i32
  }
  func.func @transform_5(%arg0: i32) -> (i32, i32) {
    %c0_i32 = arith.constant 0 : i32
    %c0_i32_0 = arith.constant 0 : i32
    %c0_i32_1 = arith.constant 0 : i32
    return %c0_i32, %c0_i32_0 : i32, i32
  }
  func.func @transform_6(%arg0: i32) -> (i32, i32) {
    %c0_i32 = arith.constant 0 : i32
    %c0_i32_0 = arith.constant 0 : i32
    %c0_i32_1 = arith.constant 0 : i32
    return %c0_i32, %c0_i32_0 : i32, i32
  }
  func.func @transform_7(%arg0: i32) -> (i32, i32) {
    %c0_i32 = arith.constant 0 : i32
    %c0_i32_0 = arith.constant 0 : i32
    return %arg0, %c0_i32 : i32, i32
  }
}

module attributes {stable_mosaic.version = 11 : i64} {
  func.func @_readout_out_kernel(%arg0: memref<2x778xf32, #tpu.memory_space<vmem>>, %arg1: memref<778x128xf32, #tpu.memory_space<vmem>>, %arg2: memref<1x128xf32, #tpu.memory_space<vmem>>, %arg3: memref<128x2xf32, #tpu.memory_space<vmem>>, %arg4: memref<1x2xf32, #tpu.memory_space<vmem>>, %arg5: memref<1x2xf32, #tpu.memory_space<vmem>>, %arg6: memref<1x2xf32, #tpu.memory_space<vmem>>, %arg7: memref<2x2xf32, #tpu.memory_space<vmem>>) attributes {dimension_semantics = [], scalar_prefetch = 0 : i64, scratch_operands = 0 : i64, tpu.core_type = #tpu.core_type<tc>} {
    %c0 = arith.constant 0 : index
    %c0_0 = arith.constant 0 : index
    %0 = vector.load %arg0[%c0, %c0_0] : memref<2x778xf32, #tpu.memory_space<vmem>>, vector<2x778xf32>
    %c0_1 = arith.constant 0 : index
    %c0_2 = arith.constant 0 : index
    %1 = vector.load %arg1[%c0_1, %c0_2] : memref<778x128xf32, #tpu.memory_space<vmem>>, vector<778x128xf32>
    %cst = arith.constant dense<0.000000e+00> : vector<2x128xf32>
    %2 = tpu.matmul %0, %1, %cst {dimension_numbers = #tpu.dot_dimension_numbers<[1], [0], [0], [1], [0, 0, 1, 1], [], []>} : vector<2x778xf32>, vector<778x128xf32>, vector<2x128xf32> -> vector<2x128xf32>
    %c0_3 = arith.constant 0 : index
    %c0_4 = arith.constant 0 : index
    %3 = vector.load %arg2[%c0_3, %c0_4] : memref<1x128xf32, #tpu.memory_space<vmem>>, vector<1x128xf32>
    %4 = vector.broadcast %3 : vector<1x128xf32> to vector<2x128xf32>
    %5 = arith.addf %2, %4 : vector<2x128xf32>
    %cst_5 = arith.constant 0.000000e+00 : f32
    %6 = vector.broadcast %cst_5 : f32 to vector<2x128xf32>
    %7 = arith.cmpf oge, %5, %6 : vector<2x128xf32>
    %cst_6 = arith.constant 0.00999999977 : f32
    %8 = vector.broadcast %cst_6 : f32 to vector<2x128xf32>
    %9 = arith.mulf %8, %5 : vector<2x128xf32>
    %10 = arith.select %7, %5, %9 : vector<2x128xi1>, vector<2x128xf32>
    %c0_7 = arith.constant 0 : index
    %c0_8 = arith.constant 0 : index
    %11 = vector.load %arg3[%c0_7, %c0_8] : memref<128x2xf32, #tpu.memory_space<vmem>>, vector<128x2xf32>
    %cst_9 = arith.constant dense<0.000000e+00> : vector<2x2xf32>
    %12 = tpu.matmul %10, %11, %cst_9 {dimension_numbers = #tpu.dot_dimension_numbers<[1], [0], [0], [1], [0, 0, 1, 1], [], []>} : vector<2x128xf32>, vector<128x2xf32>, vector<2x2xf32> -> vector<2x2xf32>
    %c0_10 = arith.constant 0 : index
    %c0_11 = arith.constant 0 : index
    %13 = vector.load %arg4[%c0_10, %c0_11] : memref<1x2xf32, #tpu.memory_space<vmem>>, vector<1x2xf32>
    %14 = vector.broadcast %13 : vector<1x2xf32> to vector<2x2xf32>
    %15 = arith.addf %12, %14 : vector<2x2xf32>
    %cst_12 = arith.constant dense<0.000000e+00> : vector<2xf32>
    %16 = vector.multi_reduction <add>, %15, %cst_12 [0] : vector<2x2xf32> to vector<2xf32>
    %17 = vector.shape_cast %16 : vector<2xf32> to vector<1x2xf32>
    %cst_13 = arith.constant 2.000000e+00 : f32
    %18 = vector.broadcast %cst_13 : f32 to vector<1x2xf32>
    %19 = arith.divf %17, %18 : vector<1x2xf32>
    %20 = vector.broadcast %19 : vector<1x2xf32> to vector<2x2xf32>
    %21 = arith.subf %15, %20 : vector<2x2xf32>
    %22 = arith.mulf %21, %21 : vector<2x2xf32>
    %cst_14 = arith.constant dense<0.000000e+00> : vector<2xf32>
    %23 = vector.multi_reduction <add>, %22, %cst_14 [0] : vector<2x2xf32> to vector<2xf32>
    %24 = vector.shape_cast %23 : vector<2xf32> to vector<1x2xf32>
    %cst_15 = arith.constant 2.000000e+00 : f32
    %25 = vector.broadcast %cst_15 : f32 to vector<1x2xf32>
    %26 = arith.divf %24, %25 : vector<1x2xf32>
    %27 = vector.broadcast %19 : vector<1x2xf32> to vector<2x2xf32>
    %28 = arith.subf %15, %27 : vector<2x2xf32>
    %cst_16 = arith.constant 9.99999974E-6 : f32
    %29 = vector.broadcast %cst_16 : f32 to vector<1x2xf32>
    %30 = arith.addf %26, %29 : vector<1x2xf32>
    %31 = math.rsqrt %30 : vector<1x2xf32>
    %32 = vector.broadcast %31 : vector<1x2xf32> to vector<2x2xf32>
    %33 = arith.mulf %28, %32 : vector<2x2xf32>
    %c0_17 = arith.constant 0 : index
    %c0_18 = arith.constant 0 : index
    %34 = vector.load %arg5[%c0_17, %c0_18] : memref<1x2xf32, #tpu.memory_space<vmem>>, vector<1x2xf32>
    %35 = vector.broadcast %34 : vector<1x2xf32> to vector<2x2xf32>
    %36 = arith.mulf %33, %35 : vector<2x2xf32>
    %c0_19 = arith.constant 0 : index
    %c0_20 = arith.constant 0 : index
    %37 = vector.load %arg6[%c0_19, %c0_20] : memref<1x2xf32, #tpu.memory_space<vmem>>, vector<1x2xf32>
    %38 = vector.broadcast %37 : vector<1x2xf32> to vector<2x2xf32>
    %39 = arith.addf %36, %38 : vector<2x2xf32>
    %cst_21 = arith.constant 0.000000e+00 : f32
    %40 = vector.broadcast %cst_21 : f32 to vector<2x2xf32>
    %41 = arith.cmpf oge, %39, %40 : vector<2x2xf32>
    %cst_22 = arith.constant 0.00999999977 : f32
    %42 = vector.broadcast %cst_22 : f32 to vector<2x2xf32>
    %43 = arith.mulf %42, %39 : vector<2x2xf32>
    %44 = arith.select %41, %39, %43 : vector<2x2xi1>, vector<2x2xf32>
    %c0_23 = arith.constant 0 : index
    %c0_24 = arith.constant 0 : index
    %45 = vector.load %arg7[%c0_23, %c0_24] : memref<2x2xf32, #tpu.memory_space<vmem>>, vector<2x2xf32>
    tpu.vector_store %arg7[%c0_23, %c0_24], %44 {strides = array<i32>} : memref<2x2xf32, #tpu.memory_space<vmem>>, vector<2x2xf32>,
    return
  }
}

</mosaic_0001>

<llo_original>
// kernel: edge_model_forward.5
$region0: #{edge_model_forward.5}
  #allocation0 [shape = 'u32[]', space=smem, size = 0x4, offset = 0x4, fixed_abs, tag = 'smem constant byte address 0x4 - core index']
  #allocation1 [shape = 'u32[144,128]{1,0:T(1,128)}', space=vmem, size = 0x12000, scoped, tag = 'internal scratch']
  %s0 = inlined_call_operand.vmem [shape: bf16[32,6], index: 0, kind: input, shape index: {}]
  %s1 = inlined_call_operand.vmem [shape: bf16[256,6], index: 1, kind: input, shape index: {}]
  %s2 = inlined_call_operand.vmem [shape: bf16[6,128], index: 2, kind: input, shape index: {}]
  %s3 = inlined_call_operand.vmem [shape: bf16[6,128], index: 3, kind: input, shape index: {}]
  %s4 = inlined_call_operand.vmem [shape: f32[1,128], index: 4, kind: input, shape index: {}]
  %s5 = inlined_call_operand.vmem [shape: bf16[128,256], index: 5, kind: input, shape index: {}]
  %s6 = inlined_call_operand.vmem [shape: f32[1,256], index: 6, kind: input, shape index: {}]
  %s7 = inlined_call_operand.vmem [shape: bf16[32,256], index: 7, kind: output, shape index: {}]
  %s8 = sld [smem:[#allocation0]]
  $region38: #{edge_model_forward.5} parent=0
    _
  %s10 = ssub.s32 1, %s8
  %s11 = scalar_select 0, %s10, %s8
  // Predicated region
  $region2: #{edge_model_forward.5} parent=0 // pred_check
    _
  $region3: #{edge_model_forward.5} parent=0 // pred_check_branch
    %13 = sbr.rel (0) target = $region5
  $region4: #{edge_model_forward.5} parent=0 // pred_region
    _
  $region5: #{edge_model_forward.5} parent=0 // pred_fallthru
    _
  // Predicated region
  $region6: #{edge_model_forward.5} parent=0 // pred_check
    _
  $region7: #{edge_model_forward.5} parent=0 // pred_check_branch
    %15 = sbr.rel (0) target = $region9
  $region8: #{edge_model_forward.5} parent=0 // pred_region
    _
  $region9: #{edge_model_forward.5} parent=0 // pred_fallthru
    _
  // Predicated region
  $region10: #{edge_model_forward.5} parent=0 // pred_check
    _
  $region11: #{edge_model_forward.5} parent=0 // pred_check_branch
    %17 = sbr.rel (0) target = $region13
  $region12: #{edge_model_forward.5} parent=0 // pred_region
    _
  $region13: #{edge_model_forward.5} parent=0 // pred_fallthru
    _
  // Predicated region
  $region14: #{edge_model_forward.5} parent=0 // pred_check
    _
  $region15: #{edge_model_forward.5} parent=0 // pred_check_branch
    %19 = sbr.rel (0) target = $region17
  $region16: #{edge_model_forward.5} parent=0 // pred_region
    _
  $region17: #{edge_model_forward.5} parent=0 // pred_fallthru
    _
  // Predicated region
  $region18: #{edge_model_forward.5} parent=0 // pred_check
    _
  $region19: #{edge_model_forward.5} parent=0 // pred_check_branch
    %21 = sbr.rel (0) target = $region21
  $region20: #{edge_model_forward.5} parent=0 // pred_region
    _
  $region21: #{edge_model_forward.5} parent=0 // pred_fallthru
    _
  // Predicated region
  $region22: #{edge_model_forward.5} parent=0 // pred_check
    _
  $region23: #{edge_model_forward.5} parent=0 // pred_check_branch
    %23 = sbr.rel (0) target = $region25
  $region24: #{edge_model_forward.5} parent=0 // pred_region
    _
  $region25: #{edge_model_forward.5} parent=0 // pred_fallthru
    _
  // Predicated region
  $region26: #{edge_model_forward.5} parent=0 // pred_check
    _
  $region27: #{edge_model_forward.5} parent=0 // pred_check_branch
    %25 = sbr.rel (0) target = $region29
  $region28: #{edge_model_forward.5} parent=0 // pred_region
    _
  $region29: #{edge_model_forward.5} parent=0 // pred_fallthru
    _
  %v27 = vld [vmem:[%s0] sm:$0xf]
  %v28 = vld [vmem:[%s0 + $0x4] sm:$0xf]
  %v29 = vld [vmem:[%s0 + $0x8] sm:$0xf]
  %v30 = vld [vmem:[%s0 + $0xc] sm:$0xf]
  %v31 = vld [vmem:[%s2] sm:$0x7]
  %v32 = vld [vmem:[%s4] sm:$0x1]
  %v34 = vlaneseq
  %v35 = vshrl.u32 %v34, 7
  %v36 = vsub.s32 0, %v35
  %v37 = vrot.slane %v32, %v36
  %v43 = vunpack.c.l.b16 %v27
  %v44 = vunpack.c.l.b16 %v28
  %v45 = vunpack.c.l.b16 %v29
  %v46 = vunpack.c.l.b16 %v30
  %v47 = vpack.c.b16 %v44, %v43
  %v48 = vpack.c.b16 %v46, %v45
  %vm49 = vcmask 48128
  %v51 = vsel %vm49, %v47, 0
  %v54 = vsel %vm49, %v48, 0
  %vm56 = vcmask 1042432
  %v58 = vsel %vm56, %v31, 0
  %60 = vmatprep.subr.bf16.mxu0 0
  %61 = vmatpush1.bf16.msra.mxu0 0
  %62 = vmatprep.subr.bf16.mxu0 0
  %63 = vmatpush1.bf16.msra.mxu0 0
  %64 = vmatprep.subr.bf16.mxu0 0
  %65 = vmatpush1.bf16.msra.mxu0 0
  %66 = vmatprep.subr.bf16.mxu0 0
  %67 = vmatpush1.bf16.msra.mxu0 0
  %68 = vmatprep.subr.bf16.mxu0 0
  %69 = vmatpush1.bf16.msra.mxu0 0
  %70 = vmatprep.subr.bf16.mxu0 0
  %71 = vmatpush1.bf16.msra.mxu0 0
  %72 = vmatprep.subr.bf16.mxu0 0
  %73 = vmatpush1.bf16.msra.mxu0 0
  %74 = vmatprep.subr.bf16.mxu0 0
  %75 = vmatpush1.bf16.msra.mxu0 %v58
  %76 = vmatprep.subr.bf16.mxu0 0
  %77 = vmatpush2.bf16.msra.mxu0 0
  %78 = vmatprep.subr.bf16.mxu0 0
  %79 = vmatpush2.bf16.msra.mxu0 0
  %80 = vmatprep.subr.bf16.mxu0 0
  %81 = vmatpush2.bf16.msra.mxu0 0
  %82 = vmatprep.subr.bf16.mxu0 0
  %83 = vmatpush2.bf16.msra.mxu0 0
  %84 = vmatprep.subr.bf16.mxu0 0
  %85 = vmatpush2.bf16.msra.mxu0 0
  %86 = vmatprep.subr.bf16.mxu0 0
  %87 = vmatpush2.bf16.msra.mxu0 0
  %88 = vmatprep.subr.bf16.mxu0 0
  %89 = vmatpush2.bf16.msra.mxu0 0
  %90 = vmatprep.subr.bf16.mxu0 0
  %91 = vmatpush2.bf16.msra.mxu0 0
  %92 = vmatprep.mubr.bf16.mxu0 0
  %93 = vmatmul.mubr.bf16.gmra.mxu0 %v51
  %v94 = vpop.f32.mrf.mxu0
  %v95 = vadd.f32 %v37, %v94
  %v96 = vpop.f32.mrf.mxu0
  %v97 = vpop.f32.mrf.mxu0
  %v98 = vadd.f32 %v37, %v97
  %v99 = vpop.f32.mrf.mxu0
  %100 = vmatprep.mubr.bf16.mxu0 0
  %101 = vmatmul.mubr.bf16.gmra.mxu0 %v54
  %v102 = vpop.f32.mrf.mxu0
  %v103 = vadd.f32 %v37, %v102
  %v104 = vpop.f32.mrf.mxu0
  %v105 = vpop.f32.mrf.mxu0
  %v106 = vadd.f32 %v37, %v105
  %v107 = vpop.f32.mrf.mxu0
  %108 = vdwg.mxu0
  %v109 = vld [vmem:[%s1] sm:$0xf]
  %v110 = vld [vmem:[%s1 + $0x4] sm:$0xf]
  %v111 = vld [vmem:[%s1 + $0x8] sm:$0xf]
  %v112 = vld [vmem:[%s1 + $0xc] sm:$0xf]
  %v113 = vld [vmem:[%s1 + $0x10] sm:$0xf]
  %v114 = vld [vmem:[%s1 + $0x14] sm:$0xf]
  %v115 = vld [vmem:[%s1 + $0x18] sm:$0xf]
  %v116 = vld [vmem:[%s1 + $0x1c] sm:$0xf]
  %v117 = vld [vmem:[%s1 + $0x20] sm:$0xf]
  %v118 = vld [vmem:[%s1 + $0x24] sm:$0xf]
  %v119 = vld [vmem:[%s1 + $0x28] sm:$0xf]
  %v120 = vld [vmem:[%s1 + $0x2c] sm:$0xf]
  %v121 = vld [vmem:[%s1 + $0x30] sm:$0xf]
  %v122 = vld [vmem:[%s1 + $0x34] sm:$0xf]
  %v123 = vld [vmem:[%s1 + $0x38] sm:$0xf]
  %v124 = vld [vmem:[%s1 + $0x3c] sm:$0xf]
  %v125 = vld [vmem:[%s1 + $0x40] sm:$0xf]
  %v126 = vld [vmem:[%s1 + $0x44] sm:$0xf]
  %v127 = vld [vmem:[%s1 + $0x48] sm:$0xf]
  %v128 = vld [vmem:[%s1 + $0x4c] sm:$0xf]
  %v129 = vld [vmem:[%s1 + $0x50] sm:$0xf]
  %v130 = vld [vmem:[%s1 + $0x54] sm:$0xf]
  %v131 = vld [vmem:[%s1 + $0x58] sm:$0xf]
  %v132 = vld [vmem:[%s1 + $0x5c] sm:$0xf]
  %v133 = vld [vmem:[%s1 + $0x60] sm:$0xf]
  %v134 = vld [vmem:[%s1 + $0x64] sm:$0xf]
  %v135 = vld [vmem:[%s1 + $0x68] sm:$0xf]
  %v136 = vld [vmem:[%s1 + $0x6c] sm:$0xf]
  %v137 = vld [vmem:[%s1 + $0x70] sm:$0xf]
  %v138 = vld [vmem:[%s1 + $0x74] sm:$0xf]
  %v139 = vld [vmem:[%s1 + $0x78] sm:$0xf]
  %v140 = vld [vmem:[%s1 + $0x7c] sm:$0xf]
  %v141 = vld [vmem:[%s3] sm:$0x7]
  %v174 = vunpack.c.l.b16 %v109
  %v175 = vunpack.c.l.b16 %v110
  %v176 = vunpack.c.l.b16 %v111
  %v177 = vunpack.c.l.b16 %v112
  %v178 = vunpack.c.l.b16 %v113
  %v179 = vunpack.c.l.b16 %v114
  %v180 = vunpack.c.l.b16 %v115
  %v181 = vunpack.c.l.b16 %v116
  %v182 = vunpack.c.l.b16 %v117
  %v183 = vunpack.c.l.b16 %v118
  %v184 = vunpack.c.l.b16 %v119
  %v185 = vunpack.c.l.b16 %v120
  %v186 = vunpack.c.l.b16 %v121
  %v187 = vunpack.c.l.b16 %v122
  %v188 = vunpack.c.l.b16 %v123
  %v189 = vunpack.c.l.b16 %v124
  %v190 = vunpack.c.l.b16 %v125
  %v191 = vunpack.c.l.b16 %v126
  %v192 = vunpack.c.l.b16 %v127
  %v193 = vunpack.c.l.b16 %v128
  %v194 = vunpack.c.l.b16 %v129
  %v195 = vunpack.c.l.b16 %v130
  %v196 = vunpack.c.l.b16 %v131
  %v197 = vunpack.c.l.b16 %v132
  %v198 = vunpack.c.l.b16 %v133
  %v199 = vunpack.c.l.b16 %v134
  %v200 = vunpack.c.l.b16 %v135
  %v201 = vunpack.c.l.b16 %v136
  %v202 = vunpack.c.l.b16 %v137
  %v203 = vunpack.c.l.b16 %v138
  %v204 = vunpack.c.l.b16 %v139
  %v205 = vunpack.c.l.b16 %v140
  %v206 = vpack.c.b16 %v175, %v174
  %v207 = vpack.c.b16 %v177, %v176
  %v208 = vpack.c.b16 %v179, %v178
  %v209 = vpack.c.b16 %v181, %v180
  %v210 = vpack.c.b16 %v183, %v182
  %v211 = vpack.c.b16 %v185, %v184
  %v212 = vpack.c.b16 %v187, %v186
  %v213 = vpack.c.b16 %v189, %v188
  %v214 = vpack.c.b16 %v191, %v190
  %v215 = vpack.c.b16 %v193, %v192
  %v216 = vpack.c.b16 %v195, %v194
  %v217 = vpack.c.b16 %v197, %v196
  %v218 = vpack.c.b16 %v199, %v198
  %v219 = vpack.c.b16 %v201, %v200
  %v220 = vpack.c.b16 %v203, %v202
  %v221 = vpack.c.b16 %v205, %v204
  %v223 = vsel %vm49, %v206, 0
  %v226 = vsel %vm49, %v207, 0
  %v229 = vsel %vm49, %v208, 0
  %v232 = vsel %vm49, %v209, 0
  %v235 = vsel %vm49, %v210, 0
  %v238 = vsel %vm49, %v211, 0
  %v241 = vsel %vm49, %v212, 0
  %v244 = vsel %vm49, %v213, 0
  %v247 = vsel %vm49, %v214, 0
  %v250 = vsel %vm49, %v215, 0
  %v253 = vsel %vm49, %v216, 0
  %v256 = vsel %vm49, %v217, 0
  %v259 = vsel %vm49, %v218, 0
  %v262 = vsel %vm49, %v219, 0
  %v265 = vsel %vm49, %v220, 0
  %v268 = vsel %vm49, %v221, 0
  %v271 = vsel %vm56, %v141, 0
  %273 = vmatprep.subr.bf16.mxu0 0
  %274 = vmatpush1.bf16.msra.mxu0 0
  %275 = vmatprep.subr.bf16.mxu0 0
  %276 = vmatpush1.bf16.msra.mxu0 0
  %277 = vmatprep.subr.bf16.mxu0 0
  %278 = vmatpush1.bf16.msra.mxu0 0
  %279 = vmatprep.subr.bf16.mxu0 0
  %280 = vmatpush1.bf16.msra.mxu0 0
  %281 = vmatprep.subr.bf16.mxu0 0
  %282 = vmatpush1.bf16.msra.mxu0 0
  %283 = vmatprep.subr.bf16.mxu0 0
  %284 = vmatpush1.bf16.msra.mxu0 0
  %285 = vmatprep.subr.bf16.mxu0 0
  %286 = vmatpush1.bf16.msra.mxu0 0
  %287 = vmatprep.subr.bf16.mxu0 0
  %288 = vmatpush1.bf16.msra.mxu0 %v271
  %289 = vmatprep.subr.bf16.mxu0 0
  %290 = vmatpush2.bf16.msra.mxu0 0
  %291 = vmatprep.subr.bf16.mxu0 0
  %292 = vmatpush2.bf16.msra.mxu0 0
  %293 = vmatprep.subr.bf16.mxu0 0
  %294 = vmatpush2.bf16.msra.mxu0 0
  %295 = vmatprep.subr.bf16.mxu0 0
  %296 = vmatpush2.bf16.msra.mxu0 0
  %297 = vmatprep.subr.bf16.mxu0 0
  %298 = vmatpush2.bf16.msra.mxu0 0
  %299 = vmatprep.subr.bf16.mxu0 0
  %300 = vmatpush2.bf16.msra.mxu0 0
  %301 = vmatprep.subr.bf16.mxu0 0
  %302 = vmatpush2.bf16.msra.mxu0 0
  %303 = vmatprep.subr.bf16.mxu0 0
  %304 = vmatpush2.bf16.msra.mxu0 0
  %305 = vmatprep.mubr.bf16.mxu0 0
  %306 = vmatmul.mubr.bf16.gmra.mxu0 %v223
  %v307 = vpop.f32.mrf.mxu0
  %v308 = vadd.f32 0.0, %v307
  %v309 = vpop.f32.mrf.mxu0
  %v310 = vpop.f32.mrf.mxu0
  %v311 = vadd.f32 0.0, %v310
  %v312 = vpop.f32.mrf.mxu0
  %313 = vmatprep.mubr.bf16.mxu0 0
  %314 = vmatmul.mubr.bf16.gmra.mxu0 %v226
  %v315 = vpop.f32.mrf.mxu0
  %v316 = vadd.f32 0.0, %v315
  %v317 = vpop.f32.mrf.mxu0
  %v318 = vpop.f32.mrf.mxu0
  %v319 = vadd.f32 0.0, %v318
  %v320 = vpop.f32.mrf.mxu0
  %321 = vmatprep.mubr.bf16.mxu0 0
  %322 = vmatmul.mubr.bf16.gmra.mxu0 %v229
  %v323 = vpop.f32.mrf.mxu0
  %v324 = vadd.f32 0.0, %v323
  %v325 = vpop.f32.mrf.mxu0
  %v326 = vpop.f32.mrf.mxu0
  %v327 = vadd.f32 0.0, %v326
  %v328 = vpop.f32.mrf.mxu0
  %329 = vmatprep.mubr.bf16.mxu0 0
  %330 = vmatmul.mubr.bf16.gmra.mxu0 %v232
  %v331 = vpop.f32.mrf.mxu0
  %v332 = vadd.f32 0.0, %v331
  %v333 = vpop.f32.mrf.mxu0
  %v334 = vpop.f32.mrf.mxu0
  %v335 = vadd.f32 0.0, %v334
  %v336 = vpop.f32.mrf.mxu0
  %337 = vmatprep.mubr.bf16.mxu0 0
  %338 = vmatmul.mubr.bf16.gmra.mxu0 %v235
  %v339 = vpop.f32.mrf.mxu0
  %v340 = vadd.f32 0.0, %v339
  %v341 = vpop.f32.mrf.mxu0
  %v342 = vpop.f32.mrf.mxu0
  %v343 = vadd.f32 0.0, %v342
  %v344 = vpop.f32.mrf.mxu0
  %345 = vmatprep.mubr.bf16.mxu0 0
  %346 = vmatmul.mubr.bf16.gmra.mxu0 %v238
  %v347 = vpop.f32.mrf.mxu0
  %v348 = vadd.f32 0.0, %v347
  %v349 = vpop.f32.mrf.mxu0
  %v350 = vpop.f32.mrf.mxu0
  %v351 = vadd.f32 0.0, %v350
  %v352 = vpop.f32.mrf.mxu0
  %353 = vmatprep.mubr.bf16.mxu0 0
  %354 = vmatmul.mubr.bf16.gmra.mxu0 %v241
  %v355 = vpop.f32.mrf.mxu0
  %v356 = vadd.f32 0.0, %v355
  %v357 = vpop.f32.mrf.mxu0
  %v358 = vpop.f32.mrf.mxu0
  %v359 = vadd.f32 0.0, %v358
  %v360 = vpop.f32.mrf.mxu0
  %361 = vmatprep.mubr.bf16.mxu0 0
  %362 = vmatmul.mubr.bf16.gmra.mxu0 %v244
  %v363 = vpop.f32.mrf.mxu0
  %v364 = vadd.f32 0.0, %v363
  %v365 = vpop.f32.mrf.mxu0
  %v366 = vpop.f32.mrf.mxu0
  %v367 = vadd.f32 0.0, %v366
  %v368 = vpop.f32.mrf.mxu0
  %369 = vmatprep.mubr.bf16.mxu0 0
  %370 = vmatmul.mubr.bf16.gmra.mxu0 %v247
  %v371 = vpop.f32.mrf.mxu0
  %v372 = vadd.f32 0.0, %v371
  %v373 = vpop.f32.mrf.mxu0
  %v374 = vpop.f32.mrf.mxu0
  %v375 = vadd.f32 0.0, %v374
  %v376 = vpop.f32.mrf.mxu0
  %377 = vmatprep.mubr.bf16.mxu0 0
  %378 = vmatmul.mubr.bf16.gmra.mxu0 %v250
  %v379 = vpop.f32.mrf.mxu0
  %v380 = vadd.f32 0.0, %v379
  %v381 = vpop.f32.mrf.mxu0
  %v382 = vpop.f32.mrf.mxu0
  %v383 = vadd.f32 0.0, %v382
  %v384 = vpop.f32.mrf.mxu0
  %385 = vmatprep.mubr.bf16.mxu0 0
  %386 = vmatmul.mubr.bf16.gmra.mxu0 %v253
  %v387 = vpop.f32.mrf.mxu0
  %v388 = vadd.f32 0.0, %v387
  %v389 = vpop.f32.mrf.mxu0
  %v390 = vpop.f32.mrf.mxu0
  %v391 = vadd.f32 0.0, %v390
  %v392 = vpop.f32.mrf.mxu0
  %393 = vmatprep.mubr.bf16.mxu0 0
  %394 = vmatmul.mubr.bf16.gmra.mxu0 %v256
  %v395 = vpop.f32.mrf.mxu0
  %v396 = vadd.f32 0.0, %v395
  %v397 = vpop.f32.mrf.mxu0
  %v398 = vpop.f32.mrf.mxu0
  %v399 = vadd.f32 0.0, %v398
  %v400 = vpop.f32.mrf.mxu0
  %401 = vmatprep.mubr.bf16.mxu0 0
  %402 = vmatmul.mubr.bf16.gmra.mxu0 %v259
  %v403 = vpop.f32.mrf.mxu0
  %v404 = vadd.f32 0.0, %v403
  %v405 = vpop.f32.mrf.mxu0
  %v406 = vpop.f32.mrf.mxu0
  %v407 = vadd.f32 0.0, %v406
  %v408 = vpop.f32.mrf.mxu0
  %409 = vmatprep.mubr.bf16.mxu0 0
  %410 = vmatmul.mubr.bf16.gmra.mxu0 %v262
  %v411 = vpop.f32.mrf.mxu0
  %v412 = vadd.f32 0.0, %v411
  %v413 = vpop.f32.mrf.mxu0
  %v414 = vpop.f32.mrf.mxu0
  %v415 = vadd.f32 0.0, %v414
  %v416 = vpop.f32.mrf.mxu0
  %417 = vmatprep.mubr.bf16.mxu0 0
  %418 = vmatmul.mubr.bf16.gmra.mxu0 %v265
  %v419 = vpop.f32.mrf.mxu0
  %v420 = vadd.f32 0.0, %v419
  %v421 = vpop.f32.mrf.mxu0
  %v422 = vpop.f32.mrf.mxu0
  %v423 = vadd.f32 0.0, %v422
  %v424 = vpop.f32.mrf.mxu0
  %425 = vmatprep.mubr.bf16.mxu0 0
  %426 = vmatmul.mubr.bf16.gmra.mxu0 %v268
  %v427 = vpop.f32.mrf.mxu0
  %v428 = vadd.f32 0.0, %v427
  %v429 = vpop.f32.mrf.mxu0
  %v430 = vpop.f32.mrf.mxu0
  %v431 = vadd.f32 0.0, %v430
  %v432 = vpop.f32.mrf.mxu0
  %433 = vdwg.mxu0
  %v438 = vcombine.high %v95, %v95
  %v440 = vunpack.c.l.s4 1966171168
  %v441 = vunpack.c.0.s8 %v440
  %v442 = vlaneseq
  %v443 = vshrl.u32 %v442, 7
  %v444 = vsub.s32 %v441, %v443
  %v445 = vrot.slane %v95, %v444
  %v447 = vunpack.c.l.s4 1966171168
  %v448 = vunpack.c.0.s8 %v447
  %v449 = vlaneseq
  %v450 = vshrl.u32 %v449, 7
  %v451 = vsub.s32 %v448, %v450
  %v452 = vrot.slane %v438, %v451
  %v453 = vcombine.high %v445, %v445
  %v454 = vcombine.high %v452, %v452
  %v456 = vunpack.c.l.s4 1966171168
  %v457 = vunpack.c.0.s8 %v456
  %v458 = vlaneseq
  %v459 = vshrl.u32 %v458, 7
  %v460 = vsub.s32 %v457, %v459
  %v461 = vrot.slane %v445, %v460
  %v463 = vunpack.c.l.s4 1966171168
  %v464 = vunpack.c.0.s8 %v463
  %v465 = vlaneseq
  %v466 = vshrl.u32 %v465, 7
  %v467 = vsub.s32 %v464, %v466
  %v468 = vrot.slane %v452, %v467
  %v470 = vunpack.c.l.s4 1966171168
  %v471 = vunpack.c.0.s8 %v470
  %v472 = vlaneseq
  %v473 = vshrl.u32 %v472, 7
  %v474 = vsub.s32 %v471, %v473
  %v475 = vrot.slane %v453, %v474
  %v477 = vunpack.c.l.s4 1966171168
  %v478 = vunpack.c.0.s8 %v477
  %v479 = vlaneseq
  %v480 = vshrl.u32 %v479, 7
  %v481 = vsub.s32 %v478, %v480
  %v482 = vrot.slane %v454, %v481
  %v483 = vcombine.high %v461, %v461
  %v484 = vcombine.high %v468, %v468
  %v485 = vcombine.high %v475, %v475
  %v486 = vcombine.high %v482, %v482
  %v487 = vcombine.high %v98, %v98
  %v489 = vunpack.c.l.s4 1966171168
  %v490 = vunpack.c.0.s8 %v489
  %v491 = vlaneseq
  %v492 = vshrl.u32 %v491, 7
  %v493 = vsub.s32 %v490, %v492
  %v494 = vrot.slane %v98, %v493
  %v496 = vunpack.c.l.s4 1966171168
  %v497 = vunpack.c.0.s8 %v496
  %v498 = vlaneseq
  %v499 = vshrl.u32 %v498, 7
  %v500 = vsub.s32 %v497, %v499
  %v501 = vrot.slane %v487, %v500
  %v502 = vcombine.high %v494, %v494
  %v503 = vcombine.high %v501, %v501
  %v505 = vunpack.c.l.s4 1966171168
  %v506 = vunpack.c.0.s8 %v505
  %v507 = vlaneseq
  %v508 = vshrl.u32 %v507, 7
  %v509 = vsub.s32 %v506, %v508
  %v510 = vrot.slane %v494, %v509
  %v512 = vunpack.c.l.s4 1966171168
  %v513 = vunpack.c.0.s8 %v512
  %v514 = vlaneseq
  %v515 = vshrl.u32 %v514, 7
  %v516 = vsub.s32 %v513, %v515
  %v517 = vrot.slane %v501, %v516
  %v519 = vunpack.c.l.s4 1966171168
  %v520 = vunpack.c.0.s8 %v519
  %v521 = vlaneseq
  %v522 = vshrl.u32 %v521, 7
  %v523 = vsub.s32 %v520, %v522
  %v524 = vrot.slane %v502, %v523
  %v526 = vunpack.c.l.s4 1966171168
  %v527 = vunpack.c.0.s8 %v526
  %v528 = vlaneseq
  %v529 = vshrl.u32 %v528, 7
  %v530 = vsub.s32 %v527, %v529
  %v531 = vrot.slane %v503, %v530
  %v532 = vcombine.high %v510, %v510
  %v533 = vcombine.high %v517, %v517
  %v534 = vcombine.high %v524, %v524
  %v535 = vcombine.high %v531, %v531
  %v536 = vcombine.high %v103, %v103
  %v538 = vunpack.c.l.s4 1966171168
  %v539 = vunpack.c.0.s8 %v538
  %v540 = vlaneseq
  %v541 = vshrl.u32 %v540, 7
  %v542 = vsub.s32 %v539, %v541
  %v543 = vrot.slane %v103, %v542
  %v545 = vunpack.c.l.s4 1966171168
  %v546 = vunpack.c.0.s8 %v545
  %v547 = vlaneseq
  %v548 = vshrl.u32 %v547, 7
  %v549 = vsub.s32 %v546, %v548
  %v550 = vrot.slane %v536, %v549
  %v551 = vcombine.high %v543, %v543
  %v552 = vcombine.high %v550, %v550
  %v554 = vunpack.c.l.s4 1966171168
  %v555 = vunpack.c.0.s8 %v554
  %v556 = vlaneseq
  %v557 = vshrl.u32 %v556, 7
  %v558 = vsub.s32 %v555, %v557
  %v559 = vrot.slane %v543, %v558
  %v561 = vunpack.c.l.s4 1966171168
  %v562 = vunpack.c.0.s8 %v561
  %v563 = vlaneseq
  %v564 = vshrl.u32 %v563, 7
  %v565 = vsub.s32 %v562, %v564
  %v566 = vrot.slane %v550, %v565
  %v568 = vunpack.c.l.s4 1966171168
  %v569 = vunpack.c.0.s8 %v568
  %v570 = vlaneseq
  %v571 = vshrl.u32 %v570, 7
  %v572 = vsub.s32 %v569, %v571
  %v573 = vrot.slane %v551, %v572
  %v575 = vunpack.c.l.s4 1966171168
  %v576 = vunpack.c.0.s8 %v575
  %v577 = vlaneseq
  %v578 = vshrl.u32 %v577, 7
  %v579 = vsub.s32 %v576, %v578
  %v580 = vrot.slane %v552, %v579
  %v581 = vcombine.high %v559, %v559
  %v582 = vcombine.high %v566, %v566
  %v583 = vcombine.high %v573, %v573
  %v584 = vcombine.high %v580, %v580
  %v585 = vcombine.high %v106, %v106
  %v587 = vunpack.c.l.s4 1966171168
  %v588 = vunpack.c.0.s8 %v587
  %v589 = vlaneseq
  %v590 = vshrl.u32 %v589, 7
  %v591 = vsub.s32 %v588, %v590
  %v592 = vrot.slane %v106, %v591
  %v594 = vunpack.c.l.s4 1966171168
  %v595 = vunpack.c.0.s8 %v594
  %v596 = vlaneseq
  %v597 = vshrl.u32 %v596, 7
  %v598 = vsub.s32 %v595, %v597
  %v599 = vrot.slane %v585, %v598
  %v600 = vcombine.high %v592, %v592
  %v601 = vcombine.high %v599, %v599
  %v603 = vunpack.c.l.s4 1966171168
  %v604 = vunpack.c.0.s8 %v603
  %v605 = vlaneseq
  %v606 = vshrl.u32 %v605, 7
  %v607 = vsub.s32 %v604, %v606
  %v608 = vrot.slane %v592, %v607
  %v610 = vunpack.c.l.s4 1966171168
  %v611 = vunpack.c.0.s8 %v610
  %v612 = vlaneseq
  %v613 = vshrl.u32 %v612, 7
  %v614 = vsub.s32 %v611, %v613
  %v615 = vrot.slane %v599, %v614
  %v617 = vunpack.c.l.s4 1966171168
  %v618 = vunpack.c.0.s8 %v617
  %v619 = vlaneseq
  %v620 = vshrl.u32 %v619, 7
  %v621 = vsub.s32 %v618, %v620
  %v622 = vrot.slane %v600, %v621
  %v624 = vunpack.c.l.s4 1966171168
  %v625 = vunpack.c.0.s8 %v624
  %v626 = vlaneseq
  %v627 = vshrl.u32 %v626, 7
  %v628 = vsub.s32 %v625, %v627
  %v629 = vrot.slane %v601, %v628
  %v630 = vcombine.high %v608, %v608
  %v631 = vcombine.high %v615, %v615
  %v632 = vcombine.high %v622, %v622
  %v633 = vcombine.high %v629, %v629
  %v634 = vlaneseq
  %v635 = vshrl.u32 %v634, 7
  %v636 = vsub.s32 0, %v635
  %v637 = vrot.slane %v461, %v636
  %v638 = vlaneseq
  %v639 = vshrl.u32 %v638, 7
  %v640 = vsub.s32 0, %v639
  %v641 = vrot.slane %v475, %v640
  %v642 = vlaneseq
  %v643 = vshrl.u32 %v642, 7
  %v644 = vsub.s32 0, %v643
  %v645 = vrot.slane %v483, %v644
  %v646 = vlaneseq
  %v647 = vshrl.u32 %v646, 7
  %v648 = vsub.s32 0, %v647
  %v649 = vrot.slane %v485, %v648
  %v650 = vlaneseq
  %v651 = vshrl.u32 %v650, 7
  %v652 = vsub.s32 0, %v651
  %v653 = vrot.slane %v468, %v652
  %v654 = vlaneseq
  %v655 = vshrl.u32 %v654, 7
  %v656 = vsub.s32 0, %v655
  %v657 = vrot.slane %v482, %v656
  %v658 = vlaneseq
  %v659 = vshrl.u32 %v658, 7
  %v660 = vsub.s32 0, %v659
  %v661 = vrot.slane %v484, %v660
  %v662 = vlaneseq
  %v663 = vshrl.u32 %v662, 7
  %v664 = vsub.s32 0, %v663
  %v665 = vrot.slane %v486, %v664
  %v666 = vlaneseq
  %v667 = vshrl.u32 %v666, 7
  %v668 = vsub.s32 0, %v667
  %v669 = vrot.slane %v510, %v668
  %v670 = vlaneseq
  %v671 = vshrl.u32 %v670, 7
  %v672 = vsub.s32 0, %v671
  %v673 = vrot.slane %v524, %v672
  %v674 = vlaneseq
  %v675 = vshrl.u32 %v674, 7
  %v676 = vsub.s32 0, %v675
  %v677 = vrot.slane %v532, %v676
  %v678 = vlaneseq
  %v679 = vshrl.u32 %v678, 7
  %v680 = vsub.s32 0, %v679
  %v681 = vrot.slane %v534, %v680
  %v682 = vlaneseq
  %v683 = vshrl.u32 %v682, 7
  %v684 = vsub.s32 0, %v683
  %v685 = vrot.slane %v517, %v684
  %v686 = vlaneseq
  %v687 = vshrl.u32 %v686, 7
  %v688 = vsub.s32 0, %v687
  %v689 = vrot.slane %v531, %v688
  %v690 = vlaneseq
  %v691 = vshrl.u32 %v690, 7
  %v692 = vsub.s32 0, %v691
  %v693 = vrot.slane %v533, %v692
  %v694 = vlaneseq
  %v695 = vshrl.u32 %v694, 7
  %v696 = vsub.s32 0, %v695
  %v697 = vrot.slane %v535, %v696
  %v698 = vlaneseq
  %v699 = vshrl.u32 %v698, 7
  %v700 = vsub.s32 0, %v699
  %v701 = vrot.slane %v559, %v700
  %v702 = vlaneseq
  %v703 = vshrl.u32 %v702, 7
  %v704 = vsub.s32 0, %v703
  %v705 = vrot.slane %v573, %v704
  %v706 = vlaneseq
  %v707 = vshrl.u32 %v706, 7
  %v708 = vsub.s32 0, %v707
  %v709 = vrot.slane %v581, %v708
  %v710 = vlaneseq
  %v711 = vshrl.u32 %v710, 7
  %v712 = vsub.s32 0, %v711
  %v713 = vrot.slane %v583, %v712
  %v714 = vlaneseq
  %v715 = vshrl.u32 %v714, 7
  %v716 = vsub.s32 0, %v715
  %v717 = vrot.slane %v566, %v716
  %v718 = vlaneseq
  %v719 = vshrl.u32 %v718, 7
  %v720 = vsub.s32 0, %v719
  %v721 = vrot.slane %v580, %v720
  %v722 = vlaneseq
  %v723 = vshrl.u32 %v722, 7
  %v724 = vsub.s32 0, %v723
  %v725 = vrot.slane %v582, %v724
  %v726 = vlaneseq
  %v727 = vshrl.u32 %v726, 7
  %v728 = vsub.s32 0, %v727
  %v729 = vrot.slane %v584, %v728
  %v730 = vlaneseq
  %v731 = vshrl.u32 %v730, 7
  %v732 = vsub.s32 0, %v731
  %v733 = vrot.slane %v608, %v732
  %v734 = vlaneseq
  %v735 = vshrl.u32 %v734, 7
  %v736 = vsub.s32 0, %v735
  %v737 = vrot.slane %v622, %v736
  %v738 = vlaneseq
  %v739 = vshrl.u32 %v738, 7
  %v740 = vsub.s32 0, %v739
  %v741 = vrot.slane %v630, %v740
  %v742 = vlaneseq
  %v743 = vshrl.u32 %v742, 7
  %v744 = vsub.s32 0, %v743
  %v745 = vrot.slane %v632, %v744
  %v746 = vlaneseq
  %v747 = vshrl.u32 %v746, 7
  %v748 = vsub.s32 0, %v747
  %v749 = vrot.slane %v615, %v748
  %v750 = vlaneseq
  %v751 = vshrl.u32 %v750, 7
  %v752 = vsub.s32 0, %v751
  %v753 = vrot.slane %v629, %v752
  %v754 = vlaneseq
  %v755 = vshrl.u32 %v754, 7
  %v756 = vsub.s32 0, %v755
  %v757 = vrot.slane %v631, %v756
  %v758 = vlaneseq
  %v759 = vshrl.u32 %v758, 7
  %v760 = vsub.s32 0, %v759
  %v761 = vrot.slane %v633, %v760
  %v794 = vadd.f32 %v308, %v637
  %v795 = vadd.f32 %v311, %v641
  %v796 = vadd.f32 %v316, %v645
  %v797 = vadd.f32 %v319, %v649
  %v798 = vadd.f32 %v324, %v653
  %v799 = vadd.f32 %v327, %v657
  %v800 = vadd.f32 %v332, %v661
  %v801 = vadd.f32 %v335, %v665
  %v802 = vadd.f32 %v340, %v669
  %v803 = vadd.f32 %v343, %v673
  %v804 = vadd.f32 %v348, %v677
  %v805 = vadd.f32 %v351, %v681
  %v806 = vadd.f32 %v356, %v685
  %v807 = vadd.f32 %v359, %v689
  %v808 = vadd.f32 %v364, %v693
  %v809 = vadd.f32 %v367, %v697
  %v810 = vadd.f32 %v372, %v701
  %v811 = vadd.f32 %v375, %v705
  %v812 = vadd.f32 %v380, %v709
  %v813 = vadd.f32 %v383, %v713
  %v814 = vadd.f32 %v388, %v717
  %v815 = vadd.f32 %v391, %v721
  %v816 = vadd.f32 %v396, %v725
  %v817 = vadd.f32 %v399, %v729
  %v818 = vadd.f32 %v404, %v733
  %v819 = vadd.f32 %v407, %v737
  %v820 = vadd.f32 %v412, %v741
  %v821 = vadd.f32 %v415, %v745
  %v822 = vadd.f32 %v420, %v749
  %v823 = vadd.f32 %v423, %v753
  %v824 = vadd.f32 %v428, %v757
  %v825 = vadd.f32 %v431, %v761
  %vm826 = vcmp.ge.f32.partialorder %v794, 0.0
  %vm827 = vcmp.ge.f32.partialorder %v795, 0.0
  %vm828 = vcmp.ge.f32.partialorder %v796, 0.0
  %vm829 = vcmp.ge.f32.partialorder %v797, 0.0
  %vm830 = vcmp.ge.f32.partialorder %v798, 0.0
  %vm831 = vcmp.ge.f32.partialorder %v799, 0.0
  %vm832 = vcmp.ge.f32.partialorder %v800, 0.0
  %vm833 = vcmp.ge.f32.partialorder %v801, 0.0
  %vm834 = vcmp.ge.f32.partialorder %v802, 0.0
  %vm835 = vcmp.ge.f32.partialorder %v803, 0.0
  %vm836 = vcmp.ge.f32.partialorder %v804, 0.0
  %vm837 = vcmp.ge.f32.partialorder %v805, 0.0
  %vm838 = vcmp.ge.f32.partialorder %v806, 0.0
  %vm839 = vcmp.ge.f32.partialorder %v807, 0.0
  %vm840 = vcmp.ge.f32.partialorder %v808, 0.0
  %vm841 = vcmp.ge.f32.partialorder %v809, 0.0
  %vm842 = vcmp.ge.f32.partialorder %v810, 0.0
  %vm843 = vcmp.ge.f32.partialorder %v811, 0.0
  %vm844 = vcmp.ge.f32.partialorder %v812, 0.0
  %vm845 = vcmp.ge.f32.partialorder %v813, 0.0
  %vm846 = vcmp.ge.f32.partialorder %v814, 0.0
  %vm847 = vcmp.ge.f32.partialorder %v815, 0.0
  %vm848 = vcmp.ge.f32.partialorder %v816, 0.0
  %vm849 = vcmp.ge.f32.partialorder %v817, 0.0
  %vm850 = vcmp.ge.f32.partialorder %v818, 0.0
  %vm851 = vcmp.ge.f32.partialorder %v819, 0.0
  %vm852 = vcmp.ge.f32.partialorder %v820, 0.0
  %vm853 = vcmp.ge.f32.partialorder %v821, 0.0
  %vm854 = vcmp.ge.f32.partialorder %v822, 0.0
  %vm855 = vcmp.ge.f32.partialorder %v823, 0.0
  %vm856 = vcmp.ge.f32.partialorder %v824, 0.0
  %vm857 = vcmp.ge.f32.partialorder %v825, 0.0
  %v858 = vmul.f32 %v794, 0.01
  %v859 = vmul.f32 %v795, 0.01
  %v860 = vmul.f32 %v796, 0.01
  %v861 = vmul.f32 %v797, 0.01
  %v862 = vmul.f32 %v798, 0.01
  %v863 = vmul.f32 %v799, 0.01
  %v864 = vmul.f32 %v800, 0.01
  %v865 = vmul.f32 %v801, 0.01
  %v866 = vmul.f32 %v802, 0.01
  %v867 = vmul.f32 %v803, 0.01
  %v868 = vmul.f32 %v804, 0.01
  %v869 = vmul.f32 %v805, 0.01
  %v870 = vmul.f32 %v806, 0.01
  %v871 = vmul.f32 %v807, 0.01
  %v872 = vmul.f32 %v808, 0.01
  %v873 = vmul.f32 %v809, 0.01
  %v874 = vmul.f32 %v810, 0.01
  %v875 = vmul.f32 %v811, 0.01
  %v876 = vmul.f32 %v812, 0.01
  %v877 = vmul.f32 %v813, 0.01
  %v878 = vmul.f32 %v814, 0.01
  %v879 = vmul.f32 %v815, 0.01
  %v880 = vmul.f32 %v816, 0.01
  %v881 = vmul.f32 %v817, 0.01
  %v882 = vmul.f32 %v818, 0.01
  %v883 = vmul.f32 %v819, 0.01
  %v884 = vmul.f32 %v820, 0.01
  %v885 = vmul.f32 %v821, 0.01
  %v886 = vmul.f32 %v822, 0.01
  %v887 = vmul.f32 %v823, 0.01
  %v888 = vmul.f32 %v824, 0.01
  %v889 = vmul.f32 %v825, 0.01
  %v890 = vsel %vm826, %v794, %v858
  %v891 = vsel %vm827, %v795, %v859
  %v892 = vsel %vm828, %v796, %v860
  %v893 = vsel %vm829, %v797, %v861
  %v894 = vsel %vm830, %v798, %v862
  %v895 = vsel %vm831, %v799, %v863
  %v896 = vsel %vm832, %v800, %v864
  %v897 = vsel %vm833, %v801, %v865
  %v898 = vsel %vm834, %v802, %v866
  %v899 = vsel %vm835, %v803, %v867
  %v900 = vsel %vm836, %v804, %v868
  %v901 = vsel %vm837, %v805, %v869
  %v902 = vsel %vm838, %v806, %v870
  %v903 = vsel %vm839, %v807, %v871
  %v904 = vsel %vm840, %v808, %v872
  %v905 = vsel %vm841, %v809, %v873
  %v906 = vsel %vm842, %v810, %v874
  %v907 = vsel %vm843, %v811, %v875
  %v908 = vsel %vm844, %v812, %v876
  %v909 = vsel %vm845, %v813, %v877
  %v910 = vsel %vm846, %v814, %v878
  %v911 = vsel %vm847, %v815, %v879
  %v912 = vsel %vm848, %v816, %v880
  %v913 = vsel %vm849, %v817, %v881
  %v914 = vsel %vm850, %v818, %v882
  %v915 = vsel %vm851, %v819, %v883
  %v916 = vsel %vm852, %v820, %v884
  %v917 = vsel %vm853, %v821, %v885
  %v918 = vsel %vm854, %v822, %v886
  %v919 = vsel %vm855, %v823, %v887
  %v920 = vsel %vm856, %v824, %v888
  %v921 = vsel %vm857, %v825, %v889
  %v922 = vpack.c.bf16 %v891, %v890
  %v923 = vpack.c.bf16 %v893, %v892
  %v924 = vpack.c.bf16 %v895, %v894
  %v925 = vpack.c.bf16 %v897, %v896
  %v926 = vpack.c.bf16 %v899, %v898
  %v927 = vpack.c.bf16 %v901, %v900
  %v928 = vpack.c.bf16 %v903, %v902
  %v929 = vpack.c.bf16 %v905, %v904
  %v930 = vpack.c.bf16 %v907, %v906
  %v931 = vpack.c.bf16 %v909, %v908
  %v932 = vpack.c.bf16 %v911, %v910
  %v933 = vpack.c.bf16 %v913, %v912
  %v934 = vpack.c.bf16 %v915, %v914
  %v935 = vpack.c.bf16 %v917, %v916
  %v936 = vpack.c.bf16 %v919, %v918
  %v937 = vpack.c.bf16 %v921, %v920
  %v938 = vld [vmem:[%s5] sm:$0xff]
  %v939 = vld [vmem:[%s5 + $0x8] sm:$0xff]
  %v940 = vld [vmem:[%s5 + $0x10] sm:$0xff]
  %v941 = vld [vmem:[%s5 + $0x18] sm:$0xff]
  %v942 = vld [vmem:[%s5 + $0x20] sm:$0xff]
  %v943 = vld [vmem:[%s5 + $0x28] sm:$0xff]
  %v944 = vld [vmem:[%s5 + $0x30] sm:$0xff]
  %v945 = vld [vmem:[%s5 + $0x38] sm:$0xff]
  %v946 = vld [vmem:[%s5 + $0x40] sm:$0xff]
  %v947 = vld [vmem:[%s5 + $0x48] sm:$0xff]
  %v948 = vld [vmem:[%s5 + $0x50] sm:$0xff]
  %v949 = vld [vmem:[%s5 + $0x58] sm:$0xff]
  %v950 = vld [vmem:[%s5 + $0x60] sm:$0xff]
  %v951 = vld [vmem:[%s5 + $0x68] sm:$0xff]
  %v952 = vld [vmem:[%s5 + $0x70] sm:$0xff]
  %v953 = vld [vmem:[%s5 + $0x78] sm:$0xff]
  %v954 = vld [vmem:[%s6] sm:$0x3]
  %v956 = vlaneseq
  %v957 = vshrl.u32 %v956, 7
  %v958 = vsub.s32 0, %v957
  %v959 = vrot.slane %v954, %v958
  %v960 = vlaneseq
  %v961 = vshrl.u32 %v960, 7
  %v962 = vsub.s32 1, %v961
  %v963 = vrot.slane %v954, %v962
  %v982 = vunpack.c.l.b16 %v938
  %v983 = vunpack.c.h.b16 %v938
  %v984 = vunpack.c.l.b16 %v939
  %v985 = vunpack.c.h.b16 %v939
  %v986 = vunpack.c.l.b16 %v940
  %v987 = vunpack.c.h.b16 %v940
  %v988 = vunpack.c.l.b16 %v941
  %v989 = vunpack.c.h.b16 %v941
  %v990 = vunpack.c.l.b16 %v942
  %v991 = vunpack.c.h.b16 %v942
  %v992 = vunpack.c.l.b16 %v943
  %v993 = vunpack.c.h.b16 %v943
  %v994 = vunpack.c.l.b16 %v944
  %v995 = vunpack.c.h.b16 %v944
  %v996 = vunpack.c.l.b16 %v945
  %v997 = vunpack.c.h.b16 %v945
  %v998 = vunpack.c.l.b16 %v946
  %v999 = vunpack.c.h.b16 %v946
  %v1000 = vunpack.c.l.b16 %v947
  %v1001 = vunpack.c.h.b16 %v947
  %v1002 = vunpack.c.l.b16 %v948
  %v1003 = vunpack.c.h.b16 %v948
  %v1004 = vunpack.c.l.b16 %v949
  %v1005 = vunpack.c.h.b16 %v949
  %v1006 = vunpack.c.l.b16 %v950
  %v1007 = vunpack.c.h.b16 %v950
  %v1008 = vunpack.c.l.b16 %v951
  %v1009 = vunpack.c.h.b16 %v951
  %v1010 = vunpack.c.l.b16 %v952
  %v1011 = vunpack.c.h.b16 %v952
  %v1012 = vunpack.c.l.b16 %v953
  %v1013 = vunpack.c.h.b16 %v953
  %v1014 = vpack.c.b16 %v984, %v982
  %v1015 = vpack.c.b16 %v985, %v983
  %v1016 = vpack.c.b16 %v988, %v986
  %v1017 = vpack.c.b16 %v989, %v987
  %v1018 = vpack.c.b16 %v992, %v990
  %v1019 = vpack.c.b16 %v993, %v991
  %v1020 = vpack.c.b16 %v996, %v994
  %v1021 = vpack.c.b16 %v997, %v995
  %v1022 = vpack.c.b16 %v1000, %v998
  %v1023 = vpack.c.b16 %v1001, %v999
  %v1024 = vpack.c.b16 %v1004, %v1002
  %v1025 = vpack.c.b16 %v1005, %v1003
  %v1026 = vpack.c.b16 %v1008, %v1006
  %v1027 = vpack.c.b16 %v1009, %v1007
  %v1028 = vpack.c.b16 %v1012, %v1010
  %v1029 = vpack.c.b16 %v1013, %v1011
  %1046 = vmatprep.subr.bf16.mxu0 %v1029
  %1047 = vmatpush1.bf16.msra.mxu0 %v1028
  %1048 = vmatprep.subr.bf16.mxu0 %v1027
  %1049 = vmatpush1.bf16.msra.mxu0 %v1026
  %1050 = vmatprep.subr.bf16.mxu0 %v1025
  %1051 = vmatpush1.bf16.msra.mxu0 %v1024
  %1052 = vmatprep.subr.bf16.mxu0 %v1023
  %1053 = vmatpush1.bf16.msra.mxu0 %v1022
  %1054 = vmatprep.subr.bf16.mxu0 %v1021
  %1055 = vmatpush1.bf16.msra.mxu0 %v1020
  %1056 = vmatprep.subr.bf16.mxu0 %v1019
  %1057 = vmatpush1.bf16.msra.mxu0 %v1018
  %1058 = vmatprep.subr.bf16.mxu0 %v1017
  %1059 = vmatpush1.bf16.msra.mxu0 %v1016
  %1060 = vmatprep.subr.bf16.mxu0 %v1015
  %1061 = vmatpush1.bf16.msra.mxu0 %v1014
  %1062 = vmatprep.subr.bf16.mxu0 0
  %1063 = vmatpush2.bf16.msra.mxu0 0
  %1064 = vmatprep.subr.bf16.mxu0 0
  %1065 = vmatpush2.bf16.msra.mxu0 0
  %1066 = vmatprep.subr.bf16.mxu0 0
  %1067 = vmatpush2.bf16.msra.mxu0 0
  %1068 = vmatprep.subr.bf16.mxu0 0
  %1069 = vmatpush2.bf16.msra.mxu0 0
  %1070 = vmatprep.subr.bf16.mxu0 0
  %1071 = vmatpush2.bf16.msra.mxu0 0
  %1072 = vmatprep.subr.bf16.mxu0 0
  %1073 = vmatpush2.bf16.msra.mxu0 0
  %1074 = vmatprep.subr.bf16.mxu0 0
  %1075 = vmatpush2.bf16.msra.mxu0 0
  %1076 = vmatprep.subr.bf16.mxu0 0
  %1077 = vmatpush2.bf16.msra.mxu0 0
  %1078 = vmatprep.mubr.bf16.mxu0 0
  %1079 = vmatmul.mubr.bf16.gmra.mxu0 %v922
  %v1080 = vpop.f32.mrf.mxu0
  %v1081 = vadd.f32 %v959, %v1080
  %v1082 = vpop.f32.mrf.mxu0
  %v1083 = vadd.f32 %v963, %v1082
  %v1084 = vpop.f32.mrf.mxu0
  %v1085 = vadd.f32 %v959, %v1084
  %v1086 = vpop.f32.mrf.mxu0
  %v1087 = vadd.f32 %v963, %v1086
  %1088 = vmatprep.mubr.bf16.mxu0 0
  %1089 = vmatmul.mubr.bf16.gmra.mxu0 %v923
  %v1090 = vpop.f32.mrf.mxu0
  %v1091 = vadd.f32 %v959, %v1090
  %v1092 = vpop.f32.mrf.mxu0
  %v1093 = vadd.f32 %v963, %v1092
  %v1094 = vpop.f32.mrf.mxu0
  %v1095 = vadd.f32 %v959, %v1094
  %v1096 = vpop.f32.mrf.mxu0
  %v1097 = vadd.f32 %v963, %v1096
  %1098 = vmatprep.mubr.bf16.mxu0 0
  %1099 = vmatmul.mubr.bf16.gmra.mxu0 %v924
  %v1100 = vpop.f32.mrf.mxu0
  %v1101 = vadd.f32 %v959, %v1100
  %v1102 = vpop.f32.mrf.mxu0
  %v1103 = vadd.f32 %v963, %v1102
  %v1104 = vpop.f32.mrf.mxu0
  %v1105 = vadd.f32 %v959, %v1104
  %v1106 = vpop.f32.mrf.mxu0
  %v1107 = vadd.f32 %v963, %v1106
  %1108 = vmatprep.mubr.bf16.mxu0 0
  %1109 = vmatmul.mubr.bf16.gmra.mxu0 %v925
  %v1110 = vpop.f32.mrf.mxu0
  %v1111 = vadd.f32 %v959, %v1110
  %v1112 = vpop.f32.mrf.mxu0
  %v1113 = vadd.f32 %v963, %v1112
  %v1114 = vpop.f32.mrf.mxu0
  %v1115 = vadd.f32 %v959, %v1114
  %v1116 = vpop.f32.mrf.mxu0
  %v1117 = vadd.f32 %v963, %v1116
  %1118 = vmatprep.mubr.bf16.mxu0 0
  %1119 = vmatmul.mubr.bf16.gmra.mxu0 %v926
  %v1120 = vpop.f32.mrf.mxu0
  %v1121 = vadd.f32 %v959, %v1120
  %v1122 = vpop.f32.mrf.mxu0
  %v1123 = vadd.f32 %v963, %v1122
  %v1124 = vpop.f32.mrf.mxu0
  %v1125 = vadd.f32 %v959, %v1124
  %v1126 = vpop.f32.mrf.mxu0
  %v1127 = vadd.f32 %v963, %v1126
  %1128 = vmatprep.mubr.bf16.mxu0 0
  %1129 = vmatmul.mubr.bf16.gmra.mxu0 %v927
  %v1130 = vpop.f32.mrf.mxu0
  %v1131 = vadd.f32 %v959, %v1130
  %v1132 = vpop.f32.mrf.mxu0
  %v1133 = vadd.f32 %v963, %v1132
  %v1134 = vpop.f32.mrf.mxu0
  %v1135 = vadd.f32 %v959, %v1134
  %v1136 = vpop.f32.mrf.mxu0
  %v1137 = vadd.f32 %v963, %v1136
  %1138 = vmatprep.mubr.bf16.mxu0 0
  %1139 = vmatmul.mubr.bf16.gmra.mxu0 %v928
  %v1140 = vpop.f32.mrf.mxu0
  %v1141 = vadd.f32 %v959, %v1140
  %v1142 = vpop.f32.mrf.mxu0
  %v1143 = vadd.f32 %v963, %v1142
  %v1144 = vpop.f32.mrf.mxu0
  %v1145 = vadd.f32 %v959, %v1144
  %v1146 = vpop.f32.mrf.mxu0
  %v1147 = vadd.f32 %v963, %v1146
  %1148 = vmatprep.mubr.bf16.mxu0 0
  %1149 = vmatmul.mubr.bf16.gmra.mxu0 %v929
  %v1150 = vpop.f32.mrf.mxu0
  %v1151 = vadd.f32 %v959, %v1150
  %v1152 = vpop.f32.mrf.mxu0
  %v1153 = vadd.f32 %v963, %v1152
  %v1154 = vpop.f32.mrf.mxu0
  %v1155 = vadd.f32 %v959, %v1154
  %v1156 = vpop.f32.mrf.mxu0
  %v1157 = vadd.f32 %v963, %v1156
  %1158 = vmatprep.mubr.bf16.mxu0 0
  %1159 = vmatmul.mubr.bf16.gmra.mxu0 %v930
  %v1160 = vpop.f32.mrf.mxu0
  %v1161 = vadd.f32 %v959, %v1160
  %v1162 = vpop.f32.mrf.mxu0
  %v1163 = vadd.f32 %v963, %v1162
  %v1164 = vpop.f32.mrf.mxu0
  %v1165 = vadd.f32 %v959, %v1164
  %v1166 = vpop.f32.mrf.mxu0
  %v1167 = vadd.f32 %v963, %v1166
  %1168 = vmatprep.mubr.bf16.mxu0 0
  %1169 = vmatmul.mubr.bf16.gmra.mxu0 %v931
  %v1170 = vpop.f32.mrf.mxu0
  %v1171 = vadd.f32 %v959, %v1170
  %v1172 = vpop.f32.mrf.mxu0
  %v1173 = vadd.f32 %v963, %v1172
  %v1174 = vpop.f32.mrf.mxu0
  %v1175 = vadd.f32 %v959, %v1174
  %v1176 = vpop.f32.mrf.mxu0
  %v1177 = vadd.f32 %v963, %v1176
  %1178 = vmatprep.mubr.bf16.mxu0 0
  %1179 = vmatmul.mubr.bf16.gmra.mxu0 %v932
  %v1180 = vpop.f32.mrf.mxu0
  %v1181 = vadd.f32 %v959, %v1180
  %v1182 = vpop.f32.mrf.mxu0
  %v1183 = vadd.f32 %v963, %v1182
  %v1184 = vpop.f32.mrf.mxu0
  %v1185 = vadd.f32 %v959, %v1184
  %v1186 = vpop.f32.mrf.mxu0
  %v1187 = vadd.f32 %v963, %v1186
  %1188 = vmatprep.mubr.bf16.mxu0 0
  %1189 = vmatmul.mubr.bf16.gmra.mxu0 %v933
  %v1190 = vpop.f32.mrf.mxu0
  %v1191 = vadd.f32 %v959, %v1190
  %v1192 = vpop.f32.mrf.mxu0
  %v1193 = vadd.f32 %v963, %v1192
  %v1194 = vpop.f32.mrf.mxu0
  %v1195 = vadd.f32 %v959, %v1194
  %v1196 = vpop.f32.mrf.mxu0
  %v1197 = vadd.f32 %v963, %v1196
  %1198 = vmatprep.mubr.bf16.mxu0 0
  %1199 = vmatmul.mubr.bf16.gmra.mxu0 %v934
  %v1200 = vpop.f32.mrf.mxu0
  %v1201 = vadd.f32 %v959, %v1200
  %v1202 = vpop.f32.mrf.mxu0
  %v1203 = vadd.f32 %v963, %v1202
  %v1204 = vpop.f32.mrf.mxu0
  %v1205 = vadd.f32 %v959, %v1204
  %v1206 = vpop.f32.mrf.mxu0
  %v1207 = vadd.f32 %v963, %v1206
  %1208 = vmatprep.mubr.bf16.mxu0 0
  %1209 = vmatmul.mubr.bf16.gmra.mxu0 %v935
  %v1210 = vpop.f32.mrf.mxu0
  %v1211 = vadd.f32 %v959, %v1210
  %v1212 = vpop.f32.mrf.mxu0
  %v1213 = vadd.f32 %v963, %v1212
  %v1214 = vpop.f32.mrf.mxu0
  %v1215 = vadd.f32 %v959, %v1214
  %v1216 = vpop.f32.mrf.mxu0
  %v1217 = vadd.f32 %v963, %v1216
  %1218 = vmatprep.mubr.bf16.mxu0 0
  %1219 = vmatmul.mubr.bf16.gmra.mxu0 %v936
  %v1220 = vpop.f32.mrf.mxu0
  %v1221 = vadd.f32 %v959, %v1220
  %v1222 = vpop.f32.mrf.mxu0
  %v1223 = vadd.f32 %v963, %v1222
  %v1224 = vpop.f32.mrf.mxu0
  %v1225 = vadd.f32 %v959, %v1224
  %v1226 = vpop.f32.mrf.mxu0
  %v1227 = vadd.f32 %v963, %v1226
  %1228 = vmatprep.mubr.bf16.mxu0 0
  %1229 = vmatmul.mubr.bf16.gmra.mxu0 %v937
  %v1230 = vpop.f32.mrf.mxu0
  %v1231 = vadd.f32 %v959, %v1230
  %v1232 = vpop.f32.mrf.mxu0
  %v1233 = vadd.f32 %v963, %v1232
  %v1234 = vpop.f32.mrf.mxu0
  %v1235 = vadd.f32 %v959, %v1234
  %v1236 = vpop.f32.mrf.mxu0
  %v1237 = vadd.f32 %v963, %v1236
  %1238 = vdwg.mxu0
  %v1239 = vrot.slane %v1081, 4
  %v1240 = vmax.f32 %v1081, %v1239
  %v1241 = vrot.slane %v1240, 2
  %v1242 = vmax.f32 %v1240, %v1241
  %v1243 = vrot.slane %v1242, 1
  %v1244 = vmax.f32 %v1242, %v1243
  %v1245 = vrot.slane %v1083, 4
  %v1246 = vmax.f32 %v1083, %v1245
  %v1247 = vrot.slane %v1246, 2
  %v1248 = vmax.f32 %v1246, %v1247
  %v1249 = vrot.slane %v1248, 1
  %v1250 = vmax.f32 %v1248, %v1249
  %v1251 = vrot.slane %v1085, 4
  %v1252 = vmax.f32 %v1085, %v1251
  %v1253 = vrot.slane %v1252, 2
  %v1254 = vmax.f32 %v1252, %v1253
  %v1255 = vrot.slane %v1254, 1
  %v1256 = vmax.f32 %v1254, %v1255
  %v1257 = vrot.slane %v1087, 4
  %v1258 = vmax.f32 %v1087, %v1257
  %v1259 = vrot.slane %v1258, 2
  %v1260 = vmax.f32 %v1258, %v1259
  %v1261 = vrot.slane %v1260, 1
  %v1262 = vmax.f32 %v1260, %v1261
  %v1263 = vrot.slane %v1091, 4
  %v1264 = vmax.f32 %v1091, %v1263
  %v1265 = vrot.slane %v1264, 2
  %v1266 = vmax.f32 %v1264, %v1265
  %v1267 = vrot.slane %v1266, 1
  %v1268 = vmax.f32 %v1266, %v1267
  %v1269 = vrot.slane %v1093, 4
  %v1270 = vmax.f32 %v1093, %v1269
  %v1271 = vrot.slane %v1270, 2
  %v1272 = vmax.f32 %v1270, %v1271
  %v1273 = vrot.slane %v1272, 1
  %v1274 = vmax.f32 %v1272, %v1273
  %v1275 = vrot.slane %v1095, 4
  %v1276 = vmax.f32 %v1095, %v1275
  %v1277 = vrot.slane %v1276, 2
  %v1278 = vmax.f32 %v1276, %v1277
  %v1279 = vrot.slane %v1278, 1
  %v1280 = vmax.f32 %v1278, %v1279
  %v1281 = vrot.slane %v1097, 4
  %v1282 = vmax.f32 %v1097, %v1281
  %v1283 = vrot.slane %v1282, 2
  %v1284 = vmax.f32 %v1282, %v1283
  %v1285 = vrot.slane %v1284, 1
  %v1286 = vmax.f32 %v1284, %v1285
  %v1287 = vrot.slane %v1101, 4
  %v1288 = vmax.f32 %v1101, %v1287
  %v1289 = vrot.slane %v1288, 2
  %v1290 = vmax.f32 %v1288, %v1289
  %v1291 = vrot.slane %v1290, 1
  %v1292 = vmax.f32 %v1290, %v1291
  %v1293 = vrot.slane %v1103, 4
  %v1294 = vmax.f32 %v1103, %v1293
  %v1295 = vrot.slane %v1294, 2
  %v1296 = vmax.f32 %v1294, %v1295
  %v1297 = vrot.slane %v1296, 1
  %v1298 = vmax.f32 %v1296, %v1297
  %v1299 = vrot.slane %v1105, 4
  %v1300 = vmax.f32 %v1105, %v1299
  %v1301 = vrot.slane %v1300, 2
  %v1302 = vmax.f32 %v1300, %v1301
  %v1303 = vrot.slane %v1302, 1
  %v1304 = vmax.f32 %v1302, %v1303
  %v1305 = vrot.slane %v1107, 4
  %v1306 = vmax.f32 %v1107, %v1305
  %v1307 = vrot.slane %v1306, 2
  %v1308 = vmax.f32 %v1306, %v1307
  %v1309 = vrot.slane %v1308, 1
  %v1310 = vmax.f32 %v1308, %v1309
  %v1311 = vrot.slane %v1111, 4
  %v1312 = vmax.f32 %v1111, %v1311
  %v1313 = vrot.slane %v1312, 2
  %v1314 = vmax.f32 %v1312, %v1313
  %v1315 = vrot.slane %v1314, 1
  %v1316 = vmax.f32 %v1314, %v1315
  %v1317 = vrot.slane %v1113, 4
  %v1318 = vmax.f32 %v1113, %v1317
  %v1319 = vrot.slane %v1318, 2
  %v1320 = vmax.f32 %v1318, %v1319
  %v1321 = vrot.slane %v1320, 1
  %v1322 = vmax.f32 %v1320, %v1321
  %v1323 = vrot.slane %v1115, 4
  %v1324 = vmax.f32 %v1115, %v1323
  %v1325 = vrot.slane %v1324, 2
  %v1326 = vmax.f32 %v1324, %v1325
  %v1327 = vrot.slane %v1326, 1
  %v1328 = vmax.f32 %v1326, %v1327
  %v1329 = vrot.slane %v1117, 4
  %v1330 = vmax.f32 %v1117, %v1329
  %v1331 = vrot.slane %v1330, 2
  %v1332 = vmax.f32 %v1330, %v1331
  %v1333 = vrot.slane %v1332, 1
  %v1334 = vmax.f32 %v1332, %v1333
  %v1335 = vrot.slane %v1121, 4
  %v1336 = vmax.f32 %v1121, %v1335
  %v1337 = vrot.slane %v1336, 2
  %v1338 = vmax.f32 %v1336, %v1337
  %v1339 = vrot.slane %v1338, 1
  %v1340 = vmax.f32 %v1338, %v1339
  %v1341 = vrot.slane %v1123, 4
  %v1342 = vmax.f32 %v1123, %v1341
  %v1343 = vrot.slane %v1342, 2
  %v1344 = vmax.f32 %v1342, %v1343
  %v1345 = vrot.slane %v1344, 1
  %v1346 = vmax.f32 %v1344, %v1345
  %v1347 = vrot.slane %v1125, 4
  %v1348 = vmax.f32 %v1125, %v1347
  %v1349 = vrot.slane %v1348, 2
  %v1350 = vmax.f32 %v1348, %v1349
  %v1351 = vrot.slane %v1350, 1
  %v1352 = vmax.f32 %v1350, %v1351
  %v1353 = vrot.slane %v1127, 4
  %v1354 = vmax.f32 %v1127, %v1353
  %v1355 = vrot.slane %v1354, 2
  %v1356 = vmax.f32 %v1354, %v1355
  %v1357 = vrot.slane %v1356, 1
  %v1358 = vmax.f32 %v1356, %v1357
  %v1359 = vrot.slane %v1131, 4
  %v1360 = vmax.f32 %v1131, %v1359
  %v1361 = vrot.slane %v1360, 2
  %v1362 = vmax.f32 %v1360, %v1361
  %v1363 = vrot.slane %v1362, 1
  %v1364 = vmax.f32 %v1362, %v1363
  %v1365 = vrot.slane %v1133, 4
  %v1366 = vmax.f32 %v1133, %v1365
  %v1367 = vrot.slane %v1366, 2
  %v1368 = vmax.f32 %v1366, %v1367
  %v1369 = vrot.slane %v1368, 1
  %v1370 = vmax.f32 %v1368, %v1369
  %v1371 = vrot.slane %v1135, 4
  %v1372 = vmax.f32 %v1135, %v1371
  %v1373 = vrot.slane %v1372, 2
  %v1374 = vmax.f32 %v1372, %v1373
  %v1375 = vrot.slane %v1374, 1
  %v1376 = vmax.f32 %v1374, %v1375
  %v1377 = vrot.slane %v1137, 4
  %v1378 = vmax.f32 %v1137, %v1377
  %v1379 = vrot.slane %v1378, 2
  %v1380 = vmax.f32 %v1378, %v1379
  %v1381 = vrot.slane %v1380, 1
  %v1382 = vmax.f32 %v1380, %v1381
  %v1383 = vrot.slane %v1141, 4
  %v1384 = vmax.f32 %v1141, %v1383
  %v1385 = vrot.slane %v1384, 2
  %v1386 = vmax.f32 %v1384, %v1385
  %v1387 = vrot.slane %v1386, 1
  %v1388 = vmax.f32 %v1386, %v1387
  %v1389 = vrot.slane %v1143, 4
  %v1390 = vmax.f32 %v1143, %v1389
  %v1391 = vrot.slane %v1390, 2
  %v1392 = vmax.f32 %v1390, %v1391
  %v1393 = vrot.slane %v1392, 1
  %v1394 = vmax.f32 %v1392, %v1393
  %v1395 = vrot.slane %v1145, 4
  %v1396 = vmax.f32 %v1145, %v1395
  %v1397 = vrot.slane %v1396, 2
  %v1398 = vmax.f32 %v1396, %v1397
  %v1399 = vrot.slane %v1398, 1
  %v1400 = vmax.f32 %v1398, %v1399
  %v1401 = vrot.slane %v1147, 4
  %v1402 = vmax.f32 %v1147, %v1401
  %v1403 = vrot.slane %v1402, 2
  %v1404 = vmax.f32 %v1402, %v1403
  %v1405 = vrot.slane %v1404, 1
  %v1406 = vmax.f32 %v1404, %v1405
  %v1407 = vrot.slane %v1151, 4
  %v1408 = vmax.f32 %v1151, %v1407
  %v1409 = vrot.slane %v1408, 2
  %v1410 = vmax.f32 %v1408, %v1409
  %v1411 = vrot.slane %v1410, 1
  %v1412 = vmax.f32 %v1410, %v1411
  %v1413 = vrot.slane %v1153, 4
  %v1414 = vmax.f32 %v1153, %v1413
  %v1415 = vrot.slane %v1414, 2
  %v1416 = vmax.f32 %v1414, %v1415
  %v1417 = vrot.slane %v1416, 1
  %v1418 = vmax.f32 %v1416, %v1417
  %v1419 = vrot.slane %v1155, 4
  %v1420 = vmax.f32 %v1155, %v1419
  %v1421 = vrot.slane %v1420, 2
  %v1422 = vmax.f32 %v1420, %v1421
  %v1423 = vrot.slane %v1422, 1
  %v1424 = vmax.f32 %v1422, %v1423
  %v1425 = vrot.slane %v1157, 4
  %v1426 = vmax.f32 %v1157, %v1425
  %v1427 = vrot.slane %v1426, 2
  %v1428 = vmax.f32 %v1426, %v1427
  %v1429 = vrot.slane %v1428, 1
  %v1430 = vmax.f32 %v1428, %v1429
  %v1431 = vrot.slane %v1161, 4
  %v1432 = vmax.f32 %v1161, %v1431
  %v1433 = vrot.slane %v1432, 2
  %v1434 = vmax.f32 %v1432, %v1433
  %v1435 = vrot.slane %v1434, 1
  %v1436 = vmax.f32 %v1434, %v1435
  %v1437 = vrot.slane %v1163, 4
  %v1438 = vmax.f32 %v1163, %v1437
  %v1439 = vrot.slane %v1438, 2
  %v1440 = vmax.f32 %v1438, %v1439
  %v1441 = vrot.slane %v1440, 1
  %v1442 = vmax.f32 %v1440, %v1441
  %v1443 = vrot.slane %v1165, 4
  %v1444 = vmax.f32 %v1165, %v1443
  %v1445 = vrot.slane %v1444, 2
  %v1446 = vmax.f32 %v1444, %v1445
  %v1447 = vrot.slane %v1446, 1
  %v1448 = vmax.f32 %v1446, %v1447
  %v1449 = vrot.slane %v1167, 4
  %v1450 = vmax.f32 %v1167, %v1449
  %v1451 = vrot.slane %v1450, 2
  %v1452 = vmax.f32 %v1450, %v1451
  %v1453 = vrot.slane %v1452, 1
  %v1454 = vmax.f32 %v1452, %v1453
  %v1455 = vrot.slane %v1171, 4
  %v1456 = vmax.f32 %v1171, %v1455
  %v1457 = vrot.slane %v1456, 2
  %v1458 = vmax.f32 %v1456, %v1457
  %v1459 = vrot.slane %v1458, 1
  %v1460 = vmax.f32 %v1458, %v1459
  %v1461 = vrot.slane %v1173, 4
  %v1462 = vmax.f32 %v1173, %v1461
  %v1463 = vrot.slane %v1462, 2
  %v1464 = vmax.f32 %v1462, %v1463
  %v1465 = vrot.slane %v1464, 1
  %v1466 = vmax.f32 %v1464, %v1465
  %v1467 = vrot.slane %v1175, 4
  %v1468 = vmax.f32 %v1175, %v1467
  %v1469 = vrot.slane %v1468, 2
  %v1470 = vmax.f32 %v1468, %v1469
  %v1471 = vrot.slane %v1470, 1
  %v1472 = vmax.f32 %v1470, %v1471
  %v1473 = vrot.slane %v1177, 4
  %v1474 = vmax.f32 %v1177, %v1473
  %v1475 = vrot.slane %v1474, 2
  %v1476 = vmax.f32 %v1474, %v1475
  %v1477 = vrot.slane %v1476, 1
  %v1478 = vmax.f32 %v1476, %v1477
  %v1479 = vrot.slane %v1181, 4
  %v1480 = vmax.f32 %v1181, %v1479
  %v1481 = vrot.slane %v1480, 2
  %v1482 = vmax.f32 %v1480, %v1481
  %v1483 = vrot.slane %v1482, 1
  %v1484 = vmax.f32 %v1482, %v1483
  %v1485 = vrot.slane %v1183, 4
  %v1486 = vmax.f32 %v1183, %v1485
  %v1487 = vrot.slane %v1486, 2
  %v1488 = vmax.f32 %v1486, %v1487
  %v1489 = vrot.slane %v1488, 1
  %v1490 = vmax.f32 %v1488, %v1489
  %v1491 = vrot.slane %v1185, 4
  %v1492 = vmax.f32 %v1185, %v1491
  %v1493 = vrot.slane %v1492, 2
  %v1494 = vmax.f32 %v1492, %v1493
  %v1495 = vrot.slane %v1494, 1
  %v1496 = vmax.f32 %v1494, %v1495
  %v1497 = vrot.slane %v1187, 4
  %v1498 = vmax.f32 %v1187, %v1497
  %v1499 = vrot.slane %v1498, 2
  %v1500 = vmax.f32 %v1498, %v1499
  %v1501 = vrot.slane %v1500, 1
  %v1502 = vmax.f32 %v1500, %v1501
  %v1503 = vrot.slane %v1191, 4
  %v1504 = vmax.f32 %v1191, %v1503
  %v1505 = vrot.slane %v1504, 2
  %v1506 = vmax.f32 %v1504, %v1505
  %v1507 = vrot.slane %v1506, 1
  %v1508 = vmax.f32 %v1506, %v1507
  %v1509 = vrot.slane %v1193, 4
  %v1510 = vmax.f32 %v1193, %v1509
  %v1511 = vrot.slane %v1510, 2
  %v1512 = vmax.f32 %v1510, %v1511
  %v1513 = vrot.slane %v1512, 1
  %v1514 = vmax.f32 %v1512, %v1513
  %v1515 = vrot.slane %v1195, 4
  %v1516 = vmax.f32 %v1195, %v1515
  %v1517 = vrot.slane %v1516, 2
  %v1518 = vmax.f32 %v1516, %v1517
  %v1519 = vrot.slane %v1518, 1
  %v1520 = vmax.f32 %v1518, %v1519
  %v1521 = vrot.slane %v1197, 4
  %v1522 = vmax.f32 %v1197, %v1521
  %v1523 = vrot.slane %v1522, 2
  %v1524 = vmax.f32 %v1522, %v1523
  %v1525 = vrot.slane %v1524, 1
  %v1526 = vmax.f32 %v1524, %v1525
  %v1527 = vrot.slane %v1201, 4
  %v1528 = vmax.f32 %v1201, %v1527
  %v1529 = vrot.slane %v1528, 2
  %v1530 = vmax.f32 %v1528, %v1529
  %v1531 = vrot.slane %v1530, 1
  %v1532 = vmax.f32 %v1530, %v1531
  %v1533 = vrot.slane %v1203, 4
  %v1534 = vmax.f32 %v1203, %v1533
  %v1535 = vrot.slane %v1534, 2
  %v1536 = vmax.f32 %v1534, %v1535
  %v1537 = vrot.slane %v1536, 1
  %v1538 = vmax.f32 %v1536, %v1537
  %v1539 = vrot.slane %v1205, 4
  %v1540 = vmax.f32 %v1205, %v1539
  %v1541 = vrot.slane %v1540, 2
  %v1542 = vmax.f32 %v1540, %v1541
  %v1543 = vrot.slane %v1542, 1
  %v1544 = vmax.f32 %v1542, %v1543
  %v1545 = vrot.slane %v1207, 4
  %v1546 = vmax.f32 %v1207, %v1545
  %v1547 = vrot.slane %v1546, 2
  %v1548 = vmax.f32 %v1546, %v1547
  %v1549 = vrot.slane %v1548, 1
  %v1550 = vmax.f32 %v1548, %v1549
  %v1551 = vrot.slane %v1211, 4
  %v1552 = vmax.f32 %v1211, %v1551
  %v1553 = vrot.slane %v1552, 2
  %v1554 = vmax.f32 %v1552, %v1553
  %v1555 = vrot.slane %v1554, 1
  %v1556 = vmax.f32 %v1554, %v1555
  %v1557 = vrot.slane %v1213, 4
  %v1558 = vmax.f32 %v1213, %v1557
  %v1559 = vrot.slane %v1558, 2
  %v1560 = vmax.f32 %v1558, %v1559
  %v1561 = vrot.slane %v1560, 1
  %v1562 = vmax.f32 %v1560, %v1561
  %v1563 = vrot.slane %v1215, 4
  %v1564 = vmax.f32 %v1215, %v1563
  %v1565 = vrot.slane %v1564, 2
  %v1566 = vmax.f32 %v1564, %v1565
  %v1567 = vrot.slane %v1566, 1
  %v1568 = vmax.f32 %v1566, %v1567
  %v1569 = vrot.slane %v1217, 4
  %v1570 = vmax.f32 %v1217, %v1569
  %v1571 = vrot.slane %v1570, 2
  %v1572 = vmax.f32 %v1570, %v1571
  %v1573 = vrot.slane %v1572, 1
  %v1574 = vmax.f32 %v1572, %v1573
  %v1575 = vrot.slane %v1221, 4
  %v1576 = vmax.f32 %v1221, %v1575
  %v1577 = vrot.slane %v1576, 2
  %v1578 = vmax.f32 %v1576, %v1577
  %v1579 = vrot.slane %v1578, 1
  %v1580 = vmax.f32 %v1578, %v1579
  %v1581 = vrot.slane %v1223, 4
  %v1582 = vmax.f32 %v1223, %v1581
  %v1583 = vrot.slane %v1582, 2
  %v1584 = vmax.f32 %v1582, %v1583
  %v1585 = vrot.slane %v1584, 1
  %v1586 = vmax.f32 %v1584, %v1585
  %v1587 = vrot.slane %v1225, 4
  %v1588 = vmax.f32 %v1225, %v1587
  %v1589 = vrot.slane %v1588, 2
  %v1590 = vmax.f32 %v1588, %v1589
  %v1591 = vrot.slane %v1590, 1
  %v1592 = vmax.f32 %v1590, %v1591
  %v1593 = vrot.slane %v1227, 4
  %v1594 = vmax.f32 %v1227, %v1593
  %v1595 = vrot.slane %v1594, 2
  %v1596 = vmax.f32 %v1594, %v1595
  %v1597 = vrot.slane %v1596, 1
  %v1598 = vmax.f32 %v1596, %v1597
  %v1599 = vrot.slane %v1231, 4
  %v1600 = vmax.f32 %v1231, %v1599
  %v1601 = vrot.slane %v1600, 2
  %v1602 = vmax.f32 %v1600, %v1601
  %v1603 = vrot.slane %v1602, 1
  %v1604 = vmax.f32 %v1602, %v1603
  %v1605 = vrot.slane %v1233, 4
  %v1606 = vmax.f32 %v1233, %v1605
  %v1607 = vrot.slane %v1606, 2
  %v1608 = vmax.f32 %v1606, %v1607
  %v1609 = vrot.slane %v1608, 1
  %v1610 = vmax.f32 %v1608, %v1609
  %v1611 = vrot.slane %v1235, 4
  %v1612 = vmax.f32 %v1235, %v1611
  %v1613 = vrot.slane %v1612, 2
  %v1614 = vmax.f32 %v1612, %v1613
  %v1615 = vrot.slane %v1614, 1
  %v1616 = vmax.f32 %v1614, %v1615
  %v1617 = vrot.slane %v1237, 4
  %v1618 = vmax.f32 %v1237, %v1617
  %v1619 = vrot.slane %v1618, 2
  %v1620 = vmax.f32 %v1618, %v1619
  %v1621 = vrot.slane %v1620, 1
  %v1622 = vmax.f32 %v1620, %v1621
  %vm1623 = vcmp.ge.f32.partialorder %v1244, 0.0
  %vm1624 = vcmp.ge.f32.partialorder %v1250, 0.0
  %vm1625 = vcmp.ge.f32.partialorder %v1256, 0.0
  %vm1626 = vcmp.ge.f32.partialorder %v1262, 0.0
  %vm1627 = vcmp.ge.f32.partialorder %v1268, 0.0
  %vm1628 = vcmp.ge.f32.partialorder %v1274, 0.0
  %vm1629 = vcmp.ge.f32.partialorder %v1280, 0.0
  %vm1630 = vcmp.ge.f32.partialorder %v1286, 0.0
  %vm1631 = vcmp.ge.f32.partialorder %v1292, 0.0
  %vm1632 = vcmp.ge.f32.partialorder %v1298, 0.0
  %vm1633 = vcmp.ge.f32.partialorder %v1304, 0.0
  %vm1634 = vcmp.ge.f32.partialorder %v1310, 0.0
  %vm1635 = vcmp.ge.f32.partialorder %v1316, 0.0
  %vm1636 = vcmp.ge.f32.partialorder %v1322, 0.0
  %vm1637 = vcmp.ge.f32.partialorder %v1328, 0.0
  %vm1638 = vcmp.ge.f32.partialorder %v1334, 0.0
  %vm1639 = vcmp.ge.f32.partialorder %v1340, 0.0
  %vm1640 = vcmp.ge.f32.partialorder %v1346, 0.0
  %vm1641 = vcmp.ge.f32.partialorder %v1352, 0.0
  %vm1642 = vcmp.ge.f32.partialorder %v1358, 0.0
  %vm1643 = vcmp.ge.f32.partialorder %v1364, 0.0
  %vm1644 = vcmp.ge.f32.partialorder %v1370, 0.0
  %vm1645 = vcmp.ge.f32.partialorder %v1376, 0.0
  %vm1646 = vcmp.ge.f32.partialorder %v1382, 0.0
  %vm1647 = vcmp.ge.f32.partialorder %v1388, 0.0
  %vm1648 = vcmp.ge.f32.partialorder %v1394, 0.0
  %vm1649 = vcmp.ge.f32.partialorder %v1400, 0.0
  %vm1650 = vcmp.ge.f32.partialorder %v1406, 0.0
  %vm1651 = vcmp.ge.f32.partialorder %v1412, 0.0
  %vm1652 = vcmp.ge.f32.partialorder %v1418, 0.0
  %vm1653 = vcmp.ge.f32.partialorder %v1424, 0.0
  %vm1654 = vcmp.ge.f32.partialorder %v1430, 0.0
  %vm1655 = vcmp.ge.f32.partialorder %v1436, 0.0
  %vm1656 = vcmp.ge.f32.partialorder %v1442, 0.0
  %vm1657 = vcmp.ge.f32.partialorder %v1448, 0.0
  %vm1658 = vcmp.ge.f32.partialorder %v1454, 0.0
  %vm1659 = vcmp.ge.f32.partialorder %v1460, 0.0
  %vm1660 = vcmp.ge.f32.partialorder %v1466, 0.0
  %vm1661 = vcmp.ge.f32.partialorder %v1472, 0.0
  %vm1662 = vcmp.ge.f32.partialorder %v1478, 0.0
  %vm1663 = vcmp.ge.f32.partialorder %v1484, 0.0
  %vm1664 = vcmp.ge.f32.partialorder %v1490, 0.0
  %vm1665 = vcmp.ge.f32.partialorder %v1496, 0.0
  %vm1666 = vcmp.ge.f32.partialorder %v1502, 0.0
  %vm1667 = vcmp.ge.f32.partialorder %v1508, 0.0
  %vm1668 = vcmp.ge.f32.partialorder %v1514, 0.0
  %vm1669 = vcmp.ge.f32.partialorder %v1520, 0.0
  %vm1670 = vcmp.ge.f32.partialorder %v1526, 0.0
  %vm1671 = vcmp.ge.f32.partialorder %v1532, 0.0
  %vm1672 = vcmp.ge.f32.partialorder %v1538, 0.0
  %vm1673 = vcmp.ge.f32.partialorder %v1544, 0.0
  %vm1674 = vcmp.ge.f32.partialorder %v1550, 0.0
  %vm1675 = vcmp.ge.f32.partialorder %v1556, 0.0
  %vm1676 = vcmp.ge.f32.partialorder %v1562, 0.0
  %vm1677 = vcmp.ge.f32.partialorder %v1568, 0.0
  %vm1678 = vcmp.ge.f32.partialorder %v1574, 0.0
  %vm1679 = vcmp.ge.f32.partialorder %v1580, 0.0
  %vm1680 = vcmp.ge.f32.partialorder %v1586, 0.0
  %vm1681 = vcmp.ge.f32.partialorder %v1592, 0.0
  %vm1682 = vcmp.ge.f32.partialorder %v1598, 0.0
  %vm1683 = vcmp.ge.f32.partialorder %v1604, 0.0
  %vm1684 = vcmp.ge.f32.partialorder %v1610, 0.0
  %vm1685 = vcmp.ge.f32.partialorder %v1616, 0.0
  %vm1686 = vcmp.ge.f32.partialorder %v1622, 0.0
  %v1687 = vmul.f32 %v1244, 0.01
  %v1688 = vmul.f32 %v1250, 0.01
  %v1689 = vmul.f32 %v1256, 0.01
  %v1690 = vmul.f32 %v1262, 0.01
  %v1691 = vmul.f32 %v1268, 0.01
  %v1692 = vmul.f32 %v1274, 0.01
  %v1693 = vmul.f32 %v1280, 0.01
  %v1694 = vmul.f32 %v1286, 0.01
  %v1695 = vmul.f32 %v1292, 0.01
  %v1696 = vmul.f32 %v1298, 0.01
  %v1697 = vmul.f32 %v1304, 0.01
  %v1698 = vmul.f32 %v1310, 0.01
  %v1699 = vmul.f32 %v1316, 0.01
  %v1700 = vmul.f32 %v1322, 0.01
  %v1701 = vmul.f32 %v1328, 0.01
  %v1702 = vmul.f32 %v1334, 0.01
  %v1703 = vmul.f32 %v1340, 0.01
  %v1704 = vmul.f32 %v1346, 0.01
  %v1705 = vmul.f32 %v1352, 0.01
  %v1706 = vmul.f32 %v1358, 0.01
  %v1707 = vmul.f32 %v1364, 0.01
  %v1708 = vmul.f32 %v1370, 0.01
  %v1709 = vmul.f32 %v1376, 0.01
  %v1710 = vmul.f32 %v1382, 0.01
  %v1711 = vmul.f32 %v1388, 0.01
  %v1712 = vmul.f32 %v1394, 0.01
  %v1713 = vmul.f32 %v1400, 0.01
  %v1714 = vmul.f32 %v1406, 0.01
  %v1715 = vmul.f32 %v1412, 0.01
  %v1716 = vmul.f32 %v1418, 0.01
  %v1717 = vmul.f32 %v1424, 0.01
  %v1718 = vmul.f32 %v1430, 0.01
  %v1719 = vmul.f32 %v1436, 0.01
  %v1720 = vmul.f32 %v1442, 0.01
  %v1721 = vmul.f32 %v1448, 0.01
  %v1722 = vmul.f32 %v1454, 0.01
  %v1723 = vmul.f32 %v1460, 0.01
  %v1724 = vmul.f32 %v1466, 0.01
  %v1725 = vmul.f32 %v1472, 0.01
  %v1726 = vmul.f32 %v1478, 0.01
  %v1727 = vmul.f32 %v1484, 0.01
  %v1728 = vmul.f32 %v1490, 0.01
  %v1729 = vmul.f32 %v1496, 0.01
  %v1730 = vmul.f32 %v1502, 0.01
  %v1731 = vmul.f32 %v1508, 0.01
  %v1732 = vmul.f32 %v1514, 0.01
  %v1733 = vmul.f32 %v1520, 0.01
  %v1734 = vmul.f32 %v1526, 0.01
  %v1735 = vmul.f32 %v1532, 0.01
  %v1736 = vmul.f32 %v1538, 0.01
  %v1737 = vmul.f32 %v1544, 0.01
  %v1738 = vmul.f32 %v1550, 0.01
  %v1739 = vmul.f32 %v1556, 0.01
  %v1740 = vmul.f32 %v1562, 0.01
  %v1741 = vmul.f32 %v1568, 0.01
  %v1742 = vmul.f32 %v1574, 0.01
  %v1743 = vmul.f32 %v1580, 0.01
  %v1744 = vmul.f32 %v1586, 0.01
  %v1745 = vmul.f32 %v1592, 0.01
  %v1746 = vmul.f32 %v1598, 0.01
  %v1747 = vmul.f32 %v1604, 0.01
  %v1748 = vmul.f32 %v1610, 0.01
  %v1749 = vmul.f32 %v1616, 0.01
  %v1750 = vmul.f32 %v1622, 0.01
  %v1751 = vsel %vm1623, %v1244, %v1687
  %v1752 = vsel %vm1624, %v1250, %v1688
  %v1753 = vsel %vm1625, %v1256, %v1689
  %v1754 = vsel %vm1626, %v1262, %v1690
  %v1755 = vsel %vm1627, %v1268, %v1691
  %v1756 = vsel %vm1628, %v1274, %v1692
  %v1757 = vsel %vm1629, %v1280, %v1693
  %v1758 = vsel %vm1630, %v1286, %v1694
  %v1759 = vsel %vm1631, %v1292, %v1695
  %v1760 = vsel %vm1632, %v1298, %v1696
  %v1761 = vsel %vm1633, %v1304, %v1697
  %v1762 = vsel %vm1634, %v1310, %v1698
  %v1763 = vsel %vm1635, %v1316, %v1699
  %v1764 = vsel %vm1636, %v1322, %v1700
  %v1765 = vsel %vm1637, %v1328, %v1701
  %v1766 = vsel %vm1638, %v1334, %v1702
  %v1767 = vsel %vm1639, %v1340, %v1703
  %v1768 = vsel %vm1640, %v1346, %v1704
  %v1769 = vsel %vm1641, %v1352, %v1705
  %v1770 = vsel %vm1642, %v1358, %v1706
  %v1771 = vsel %vm1643, %v1364, %v1707
  %v1772 = vsel %vm1644, %v1370, %v1708
  %v1773 = vsel %vm1645, %v1376, %v1709
  %v1774 = vsel %vm1646, %v1382, %v1710
  %v1775 = vsel %vm1647, %v1388, %v1711
  %v1776 = vsel %vm1648, %v1394, %v1712
  %v1777 = vsel %vm1649, %v1400, %v1713
  %v1778 = vsel %vm1650, %v1406, %v1714
  %v1779 = vsel %vm1651, %v1412, %v1715
  %v1780 = vsel %vm1652, %v1418, %v1716
  %v1781 = vsel %vm1653, %v1424, %v1717
  %v1782 = vsel %vm1654, %v1430, %v1718
  %v1783 = vsel %vm1655, %v1436, %v1719
  %v1784 = vsel %vm1656, %v1442, %v1720
  %v1785 = vsel %vm1657, %v1448, %v1721
  %v1786 = vsel %vm1658, %v1454, %v1722
  %v1787 = vsel %vm1659, %v1460, %v1723
  %v1788 = vsel %vm1660, %v1466, %v1724
  %v1789 = vsel %vm1661, %v1472, %v1725
  %v1790 = vsel %vm1662, %v1478, %v1726
  %v1791 = vsel %vm1663, %v1484, %v1727
  %v1792 = vsel %vm1664, %v1490, %v1728
  %v1793 = vsel %vm1665, %v1496, %v1729
  %v1794 = vsel %vm1666, %v1502, %v1730
  %v1795 = vsel %vm1667, %v1508, %v1731
  %v1796 = vsel %vm1668, %v1514, %v1732
  %v1797 = vsel %vm1669, %v1520, %v1733
  %v1798 = vsel %vm1670, %v1526, %v1734
  %v1799 = vsel %vm1671, %v1532, %v1735
  %v1800 = vsel %vm1672, %v1538, %v1736
  %v1801 = vsel %vm1673, %v1544, %v1737
  %v1802 = vsel %vm1674, %v1550, %v1738
  %v1803 = vsel %vm1675, %v1556, %v1739
  %v1804 = vsel %vm1676, %v1562, %v1740
  %v1805 = vsel %vm1677, %v1568, %v1741
  %v1806 = vsel %vm1678, %v1574, %v1742
  %v1807 = vsel %vm1679, %v1580, %v1743
  %v1808 = vsel %vm1680, %v1586, %v1744
  %v1809 = vsel %vm1681, %v1592, %v1745
  %v1810 = vsel %vm1682, %v1598, %v1746
  %v1811 = vsel %vm1683, %v1604, %v1747
  %v1812 = vsel %vm1684, %v1610, %v1748
  %v1813 = vsel %vm1685, %v1616, %v1749
  %v1814 = vsel %vm1686, %v1622, %v1750
  %v1815 = vpack.c.bf16 %v1751, %v1751
  %v1816 = vpack.c.bf16 %v1752, %v1752
  %v1817 = vpack.c.bf16 %v1753, %v1753
  %v1818 = vpack.c.bf16 %v1754, %v1754
  %v1819 = vpack.c.bf16 %v1755, %v1755
  %v1820 = vpack.c.bf16 %v1756, %v1756
  %v1821 = vpack.c.bf16 %v1757, %v1757
  %v1822 = vpack.c.bf16 %v1758, %v1758
  %v1823 = vpack.c.bf16 %v1759, %v1759
  %v1824 = vpack.c.bf16 %v1760, %v1760
  %v1825 = vpack.c.bf16 %v1761, %v1761
  %v1826 = vpack.c.bf16 %v1762, %v1762
  %v1827 = vpack.c.bf16 %v1763, %v1763
  %v1828 = vpack.c.bf16 %v1764, %v1764
  %v1829 = vpack.c.bf16 %v1765, %v1765
  %v1830 = vpack.c.bf16 %v1766, %v1766
  %v1831 = vpack.c.bf16 %v1767, %v1767
  %v1832 = vpack.c.bf16 %v1768, %v1768
  %v1833 = vpack.c.bf16 %v1769, %v1769
  %v1834 = vpack.c.bf16 %v1770, %v1770
  %v1835 = vpack.c.bf16 %v1771, %v1771
  %v1836 = vpack.c.bf16 %v1772, %v1772
  %v1837 = vpack.c.bf16 %v1773, %v1773
  %v1838 = vpack.c.bf16 %v1774, %v1774
  %v1839 = vpack.c.bf16 %v1775, %v1775
  %v1840 = vpack.c.bf16 %v1776, %v1776
  %v1841 = vpack.c.bf16 %v1777, %v1777
  %v1842 = vpack.c.bf16 %v1778, %v1778
  %v1843 = vpack.c.bf16 %v1779, %v1779
  %v1844 = vpack.c.bf16 %v1780, %v1780
  %v1845 = vpack.c.bf16 %v1781, %v1781
  %v1846 = vpack.c.bf16 %v1782, %v1782
  %v1847 = vpack.c.bf16 %v1783, %v1783
  %v1848 = vpack.c.bf16 %v1784, %v1784
  %v1849 = vpack.c.bf16 %v1785, %v1785
  %v1850 = vpack.c.bf16 %v1786, %v1786
  %v1851 = vpack.c.bf16 %v1787, %v1787
  %v1852 = vpack.c.bf16 %v1788, %v1788
  %v1853 = vpack.c.bf16 %v1789, %v1789
  %v1854 = vpack.c.bf16 %v1790, %v1790
  %v1855 = vpack.c.bf16 %v1791, %v1791
  %v1856 = vpack.c.bf16 %v1792, %v1792
  %v1857 = vpack.c.bf16 %v1793, %v1793
  %v1858 = vpack.c.bf16 %v1794, %v1794
  %v1859 = vpack.c.bf16 %v1795, %v1795
  %v1860 = vpack.c.bf16 %v1796, %v1796
  %v1861 = vpack.c.bf16 %v1797, %v1797
  %v1862 = vpack.c.bf16 %v1798, %v1798
  %v1863 = vpack.c.bf16 %v1799, %v1799
  %v1864 = vpack.c.bf16 %v1800, %v1800
  %v1865 = vpack.c.bf16 %v1801, %v1801
  %v1866 = vpack.c.bf16 %v1802, %v1802
  %v1867 = vpack.c.bf16 %v1803, %v1803
  %v1868 = vpack.c.bf16 %v1804, %v1804
  %v1869 = vpack.c.bf16 %v1805, %v1805
  %v1870 = vpack.c.bf16 %v1806, %v1806
  %v1871 = vpack.c.bf16 %v1807, %v1807
  %v1872 = vpack.c.bf16 %v1808, %v1808
  %v1873 = vpack.c.bf16 %v1809, %v1809
  %v1874 = vpack.c.bf16 %v1810, %v1810
  %v1875 = vpack.c.bf16 %v1811, %v1811
  %v1876 = vpack.c.bf16 %v1812, %v1812
  %v1877 = vpack.c.bf16 %v1813, %v1813
  %v1878 = vpack.c.bf16 %v1814, %v1814
  %v1943 = vunpack.c.l.b16 %v1815
  %v1944 = vunpack.c.l.b16 %v1816
  %v1945 = vunpack.c.l.b16 %v1817
  %v1946 = vunpack.c.l.b16 %v1818
  %v1947 = vunpack.c.l.b16 %v1819
  %v1948 = vunpack.c.l.b16 %v1820
  %v1949 = vunpack.c.l.b16 %v1821
  %v1950 = vunpack.c.l.b16 %v1822
  %v1951 = vunpack.c.l.b16 %v1823
  %v1952 = vunpack.c.l.b16 %v1824
  %v1953 = vunpack.c.l.b16 %v1825
  %v1954 = vunpack.c.l.b16 %v1826
  %v1955 = vunpack.c.l.b16 %v1827
  %v1956 = vunpack.c.l.b16 %v1828
  %v1957 = vunpack.c.l.b16 %v1829
  %v1958 = vunpack.c.l.b16 %v1830
  %v1959 = vunpack.c.l.b16 %v1831
  %v1960 = vunpack.c.l.b16 %v1832
  %v1961 = vunpack.c.l.b16 %v1833
  %v1962 = vunpack.c.l.b16 %v1834
  %v1963 = vunpack.c.l.b16 %v1835
  %v1964 = vunpack.c.l.b16 %v1836
  %v1965 = vunpack.c.l.b16 %v1837
  %v1966 = vunpack.c.l.b16 %v1838
  %v1967 = vunpack.c.l.b16 %v1839
  %v1968 = vunpack.c.l.b16 %v1840
  %v1969 = vunpack.c.l.b16 %v1841
  %v1970 = vunpack.c.l.b16 %v1842
  %v1971 = vunpack.c.l.b16 %v1843
  %v1972 = vunpack.c.l.b16 %v1844
  %v1973 = vunpack.c.l.b16 %v1845
  %v1974 = vunpack.c.l.b16 %v1846
  %v1975 = vunpack.c.l.b16 %v1847
  %v1976 = vunpack.c.l.b16 %v1848
  %v1977 = vunpack.c.l.b16 %v1849
  %v1978 = vunpack.c.l.b16 %v1850
  %v1979 = vunpack.c.l.b16 %v1851
  %v1980 = vunpack.c.l.b16 %v1852
  %v1981 = vunpack.c.l.b16 %v1853
  %v1982 = vunpack.c.l.b16 %v1854
  %v1983 = vunpack.c.l.b16 %v1855
  %v1984 = vunpack.c.l.b16 %v1856
  %v1985 = vunpack.c.l.b16 %v1857
  %v1986 = vunpack.c.l.b16 %v1858
  %v1987 = vunpack.c.l.b16 %v1859
  %v1988 = vunpack.c.l.b16 %v1860
  %v1989 = vunpack.c.l.b16 %v1861
  %v1990 = vunpack.c.l.b16 %v1862
  %v1991 = vunpack.c.l.b16 %v1863
  %v1992 = vunpack.c.l.b16 %v1864
  %v1993 = vunpack.c.l.b16 %v1865
  %v1994 = vunpack.c.l.b16 %v1866
  %v1995 = vunpack.c.l.b16 %v1867
  %v1996 = vunpack.c.l.b16 %v1868
  %v1997 = vunpack.c.l.b16 %v1869
  %v1998 = vunpack.c.l.b16 %v1870
  %v1999 = vunpack.c.l.b16 %v1871
  %v2000 = vunpack.c.l.b16 %v1872
  %v2001 = vunpack.c.l.b16 %v1873
  %v2002 = vunpack.c.l.b16 %v1874
  %v2003 = vunpack.c.l.b16 %v1875
  %v2004 = vunpack.c.l.b16 %v1876
  %v2005 = vunpack.c.l.b16 %v1877
  %v2006 = vunpack.c.l.b16 %v1878
  %v2007 = vpack.c.b16 %v1944, %v1943
  %v2008 = vpack.c.b16 %v1946, %v1945
  %v2009 = vpack.c.b16 %v1948, %v1947
  %v2010 = vpack.c.b16 %v1950, %v1949
  %v2011 = vpack.c.b16 %v1952, %v1951
  %v2012 = vpack.c.b16 %v1954, %v1953
  %v2013 = vpack.c.b16 %v1956, %v1955
  %v2014 = vpack.c.b16 %v1958, %v1957
  %v2015 = vpack.c.b16 %v1960, %v1959
  %v2016 = vpack.c.b16 %v1962, %v1961
  %v2017 = vpack.c.b16 %v1964, %v1963
  %v2018 = vpack.c.b16 %v1966, %v1965
  %v2019 = vpack.c.b16 %v1968, %v1967
  %v2020 = vpack.c.b16 %v1970, %v1969
  %v2021 = vpack.c.b16 %v1972, %v1971
  %v2022 = vpack.c.b16 %v1974, %v1973
  %v2023 = vpack.c.b16 %v1976, %v1975
  %v2024 = vpack.c.b16 %v1978, %v1977
  %v2025 = vpack.c.b16 %v1980, %v1979
  %v2026 = vpack.c.b16 %v1982, %v1981
  %v2027 = vpack.c.b16 %v1984, %v1983
  %v2028 = vpack.c.b16 %v1986, %v1985
  %v2029 = vpack.c.b16 %v1988, %v1987
  %v2030 = vpack.c.b16 %v1990, %v1989
  %v2031 = vpack.c.b16 %v1992, %v1991
  %v2032 = vpack.c.b16 %v1994, %v1993
  %v2033 = vpack.c.b16 %v1996, %v1995
  %v2034 = vpack.c.b16 %v1998, %v1997
  %v2035 = vpack.c.b16 %v2000, %v1999
  %v2036 = vpack.c.b16 %v2002, %v2001
  %v2037 = vpack.c.b16 %v2004, %v2003
  %v2038 = vpack.c.b16 %v2006, %v2005
  %v2039 = vunpack.c.l.b16 %v2007
  %v2040 = vunpack.c.h.b16 %v2007
  %v2041 = vunpack.c.l.b16 %v2008
  %v2042 = vunpack.c.h.b16 %v2008
  %v2043 = vunpack.c.l.b16 %v2009
  %v2044 = vunpack.c.h.b16 %v2009
  %v2045 = vunpack.c.l.b16 %v2010
  %v2046 = vunpack.c.h.b16 %v2010
  %v2047 = vunpack.c.l.b16 %v2011
  %v2048 = vunpack.c.h.b16 %v2011
  %v2049 = vunpack.c.l.b16 %v2012
  %v2050 = vunpack.c.h.b16 %v2012
  %v2051 = vunpack.c.l.b16 %v2013
  %v2052 = vunpack.c.h.b16 %v2013
  %v2053 = vunpack.c.l.b16 %v2014
  %v2054 = vunpack.c.h.b16 %v2014
  %v2055 = vunpack.c.l.b16 %v2015
  %v2056 = vunpack.c.h.b16 %v2015
  %v2057 = vunpack.c.l.b16 %v2016
  %v2058 = vunpack.c.h.b16 %v2016
  %v2059 = vunpack.c.l.b16 %v2017
  %v2060 = vunpack.c.h.b16 %v2017
  %v2061 = vunpack.c.l.b16 %v2018
  %v2062 = vunpack.c.h.b16 %v2018
  %v2063 = vunpack.c.l.b16 %v2019
  %v2064 = vunpack.c.h.b16 %v2019
  %v2065 = vunpack.c.l.b16 %v2020
  %v2066 = vunpack.c.h.b16 %v2020
  %v2067 = vunpack.c.l.b16 %v2021
  %v2068 = vunpack.c.h.b16 %v2021
  %v2069 = vunpack.c.l.b16 %v2022
  %v2070 = vunpack.c.h.b16 %v2022
  %v2071 = vunpack.c.l.b16 %v2023
  %v2072 = vunpack.c.h.b16 %v2023
  %v2073 = vunpack.c.l.b16 %v2024
  %v2074 = vunpack.c.h.b16 %v2024
  %v2075 = vunpack.c.l.b16 %v2025
  %v2076 = vunpack.c.h.b16 %v2025
  %v2077 = vunpack.c.l.b16 %v2026
  %v2078 = vunpack.c.h.b16 %v2026
  %v2079 = vunpack.c.l.b16 %v2027
  %v2080 = vunpack.c.h.b16 %v2027
  %v2081 = vunpack.c.l.b16 %v2028
  %v2082 = vunpack.c.h.b16 %v2028
  %v2083 = vunpack.c.l.b16 %v2029
  %v2084 = vunpack.c.h.b16 %v2029
  %v2085 = vunpack.c.l.b16 %v2030
  %v2086 = vunpack.c.h.b16 %v2030
  %v2087 = vunpack.c.l.b16 %v2031
  %v2088 = vunpack.c.h.b16 %v2031
  %v2089 = vunpack.c.l.b16 %v2032
  %v2090 = vunpack.c.h.b16 %v2032
  %v2091 = vunpack.c.l.b16 %v2033
  %v2092 = vunpack.c.h.b16 %v2033
  %v2093 = vunpack.c.l.b16 %v2034
  %v2094 = vunpack.c.h.b16 %v2034
  %v2095 = vunpack.c.l.b16 %v2035
  %v2096 = vunpack.c.h.b16 %v2035
  %v2097 = vunpack.c.l.b16 %v2036
  %v2098 = vunpack.c.h.b16 %v2036
  %v2099 = vunpack.c.l.b16 %v2037
  %v2100 = vunpack.c.h.b16 %v2037
  %v2101 = vunpack.c.l.b16 %v2038
  %v2102 = vunpack.c.h.b16 %v2038
  %vm2103 = vcmask 1041409
  %v2104 = vsel %vm2103, %v2041, %v2039
  %vm2105 = vcmask 1042434
  %v2106 = vsel %vm2105, %v2043, %v2104
  %vm2107 = vcmask 1043459
  %v2108 = vsel %vm2107, %v2045, %v2106
  %vm2109 = vcmask 1044484
  %v2110 = vsel %vm2109, %v2047, %v2108
  %vm2111 = vcmask 1045509
  %v2112 = vsel %vm2111, %v2049, %v2110
  %vm2113 = vcmask 1046534
  %v2114 = vsel %vm2113, %v2051, %v2112
  %vm2115 = vcmask 1047559
  %v2116 = vsel %vm2115, %v2053, %v2114
  %v2117 = vsel %vm2103, %v2042, %v2040
  %v2118 = vsel %vm2105, %v2044, %v2117
  %v2119 = vsel %vm2107, %v2046, %v2118
  %v2120 = vsel %vm2109, %v2048, %v2119
  %v2121 = vsel %vm2111, %v2050, %v2120
  %v2122 = vsel %vm2113, %v2052, %v2121
  %v2123 = vsel %vm2115, %v2054, %v2122
  %v2124 = vsel %vm2103, %v2057, %v2055
  %v2125 = vsel %vm2105, %v2059, %v2124
  %v2126 = vsel %vm2107, %v2061, %v2125
  %v2127 = vsel %vm2109, %v2063, %v2126
  %v2128 = vsel %vm2111, %v2065, %v2127
  %v2129 = vsel %vm2113, %v2067, %v2128
  %v2130 = vsel %vm2115, %v2069, %v2129
  %v2131 = vsel %vm2103, %v2058, %v2056
  %v2132 = vsel %vm2105, %v2060, %v2131
  %v2133 = vsel %vm2107, %v2062, %v2132
  %v2134 = vsel %vm2109, %v2064, %v2133
  %v2135 = vsel %vm2111, %v2066, %v2134
  %v2136 = vsel %vm2113, %v2068, %v2135
  %v2137 = vsel %vm2115, %v2070, %v2136
  %v2138 = vsel %vm2103, %v2073, %v2071
  %v2139 = vsel %vm2105, %v2075, %v2138
  %v2140 = vsel %vm2107, %v2077, %v2139
  %v2141 = vsel %vm2109, %v2079, %v2140
  %v2142 = vsel %vm2111, %v2081, %v2141
  %v2143 = vsel %vm2113, %v2083, %v2142
  %v2144 = vsel %vm2115, %v2085, %v2143
  %v2145 = vsel %vm2103, %v2074, %v2072
  %v2146 = vsel %vm2105, %v2076, %v2145
  %v2147 = vsel %vm2107, %v2078, %v2146
  %v2148 = vsel %vm2109, %v2080, %v2147
  %v2149 = vsel %vm2111, %v2082, %v2148
  %v2150 = vsel %vm2113, %v2084, %v2149
  %v2151 = vsel %vm2115, %v2086, %v2150
  %v2152 = vsel %vm2103, %v2089, %v2087
  %v2153 = vsel %vm2105, %v2091, %v2152
  %v2154 = vsel %vm2107, %v2093, %v2153
  %v2155 = vsel %vm2109, %v2095, %v2154
  %v2156 = vsel %vm2111, %v2097, %v2155
  %v2157 = vsel %vm2113, %v2099, %v2156
  %v2158 = vsel %vm2115, %v2101, %v2157
  %v2159 = vsel %vm2103, %v2090, %v2088
  %v2160 = vsel %vm2105, %v2092, %v2159
  %v2161 = vsel %vm2107, %v2094, %v2160
  %v2162 = vsel %vm2109, %v2096, %v2161
  %v2163 = vsel %vm2111, %v2098, %v2162
  %v2164 = vsel %vm2113, %v2100, %v2163
  %v2165 = vsel %vm2115, %v2102, %v2164
  %v2166 = vpack.c.b16 %v2123, %v2116
  %v2167 = vpack.c.b16 %v2137, %v2130
  %v2168 = vpack.c.b16 %v2151, %v2144
  %v2169 = vpack.c.b16 %v2165, %v2158
  %2174 = vst [vmem:[%s7] sm:$0xff] %v2166
  %2175 = vst [vmem:[%s7 + $0x8] sm:$0xff] %v2167
  %2176 = vst [vmem:[%s7 + $0x10] sm:$0xff] %v2168
  %2177 = vst [vmem:[%s7 + $0x18] sm:$0xff] %v2169
  // Predicated region
  $region30: #{edge_model_forward.5} parent=0 // pred_check
    _
  $region31: #{edge_model_forward.5} parent=0 // pred_check_branch
    %2179 = sbr.rel (0) target = $region33
  $region32: #{edge_model_forward.5} parent=0 // pred_region
    _
  $region33: #{edge_model_forward.5} parent=0 // pred_fallthru
    _
  // Predicated region
  $region34: #{edge_model_forward.5} parent=0 // pred_check
    _
  $region35: #{edge_model_forward.5} parent=0 // pred_check_branch
    %2181 = sbr.rel (0) target = $region37
  $region36: #{edge_model_forward.5} parent=0 // pred_region
    _
  $region37: #{edge_model_forward.5} parent=0 // pred_fallthru
    _

// kernel: edge_model_forward.8
$region0: #{edge_model_forward.8}
  #allocation0 [shape = 'u32[]', space=smem, size = 0x4, offset = 0x4, fixed_abs, tag = 'smem constant byte address 0x4 - core index']
  #allocation1 [shape = 'u32[144,128]{1,0:T(1,128)}', space=vmem, size = 0x12000, scoped, tag = 'internal scratch']
  %s0 = inlined_call_operand.vmem [shape: bf16[32,6], index: 0, kind: input, shape index: {}]
  %s1 = inlined_call_operand.vmem [shape: bf16[32,256], index: 1, kind: input, shape index: {}]
  %s2 = inlined_call_operand.vmem [shape: bf16[32,256], index: 2, kind: input, shape index: {}]
  %s3 = inlined_call_operand.vmem [shape: bf16[32,256], index: 3, kind: input, shape index: {}]
  %s4 = inlined_call_operand.vmem [shape: bf16[6,384], index: 4, kind: input, shape index: {}]
  %s5 = inlined_call_operand.vmem [shape: bf16[256,384], index: 5, kind: input, shape index: {}]
  %s6 = inlined_call_operand.vmem [shape: bf16[256,384], index: 6, kind: input, shape index: {}]
  %s7 = inlined_call_operand.vmem [shape: bf16[256,384], index: 7, kind: input, shape index: {}]
  %s8 = inlined_call_operand.vmem [shape: f32[1,384], index: 8, kind: input, shape index: {}]
  %s9 = inlined_call_operand.vmem [shape: bf16[384,256], index: 9, kind: input, shape index: {}]
  %s10 = inlined_call_operand.vmem [shape: f32[1,256], index: 10, kind: input, shape index: {}]
  %s11 = inlined_call_operand.vmem [shape: bf16[32,256], index: 11, kind: output, shape index: {}]
  %s12 = sld [smem:[#allocation0]]
  $region54: #{edge_model_forward.8} parent=0
    _
  %s14 = ssub.s32 1, %s12
  %s15 = scalar_select 0, %s14, %s12
  // Predicated region
  $region2: #{edge_model_forward.8} parent=0 // pred_check
    _
  $region3: #{edge_model_forward.8} parent=0 // pred_check_branch
    %17 = sbr.rel (0) target = $region5
  $region4: #{edge_model_forward.8} parent=0 // pred_region
    _
  $region5: #{edge_model_forward.8} parent=0 // pred_fallthru
    _
  // Predicated region
  $region6: #{edge_model_forward.8} parent=0 // pred_check
    _
  $region7: #{edge_model_forward.8} parent=0 // pred_check_branch
    %19 = sbr.rel (0) target = $region9
  $region8: #{edge_model_forward.8} parent=0 // pred_region
    _
  $region9: #{edge_model_forward.8} parent=0 // pred_fallthru
    _
  // Predicated region
  $region10: #{edge_model_forward.8} parent=0 // pred_check
    _
  $region11: #{edge_model_forward.8} parent=0 // pred_check_branch
    %21 = sbr.rel (0) target = $region13
  $region12: #{edge_model_forward.8} parent=0 // pred_region
    _
  $region13: #{edge_model_forward.8} parent=0 // pred_fallthru
    _
  // Predicated region
  $region14: #{edge_model_forward.8} parent=0 // pred_check
    _
  $region15: #{edge_model_forward.8} parent=0 // pred_check_branch
    %23 = sbr.rel (0) target = $region17
  $region16: #{edge_model_forward.8} parent=0 // pred_region
    _
  $region17: #{edge_model_forward.8} parent=0 // pred_fallthru
    _
  // Predicated region
  $region18: #{edge_model_forward.8} parent=0 // pred_check
    _
  $region19: #{edge_model_forward.8} parent=0 // pred_check_branch
    %25 = sbr.rel (0) target = $region21
  $region20: #{edge_model_forward.8} parent=0 // pred_region
    _
  $region21: #{edge_model_forward.8} parent=0 // pred_fallthru
    _
  // Predicated region
  $region22: #{edge_model_forward.8} parent=0 // pred_check
    _
  $region23: #{edge_model_forward.8} parent=0 // pred_check_branch
    %27 = sbr.rel (0) target = $region25
  $region24: #{edge_model_forward.8} parent=0 // pred_region
    _
  $region25: #{edge_model_forward.8} parent=0 // pred_fallthru
    _
  // Predicated region
  $region26: #{edge_model_forward.8} parent=0 // pred_check
    _
  $region27: #{edge_model_forward.8} parent=0 // pred_check_branch
    %29 = sbr.rel (0) target = $region29
  $region28: #{edge_model_forward.8} parent=0 // pred_region
    _
  $region29: #{edge_model_forward.8} parent=0 // pred_fallthru
    _
  // Predicated region
  $region30: #{edge_model_forward.8} parent=0 // pred_check
    _
  $region31: #{edge_model_forward.8} parent=0 // pred_check_branch
    %31 = sbr.rel (0) target = $region33
  $region32: #{edge_model_forward.8} parent=0 // pred_region
    _
  $region33: #{edge_model_forward.8} parent=0 // pred_fallthru
    _
  // Predicated region
  $region34: #{edge_model_forward.8} parent=0 // pred_check
    _
  $region35: #{edge_model_forward.8} parent=0 // pred_check_branch
    %33 = sbr.rel (0) target = $region37
  $region36: #{edge_model_forward.8} parent=0 // pred_region
    _
  $region37: #{edge_model_forward.8} parent=0 // pred_fallthru
    _
  // Predicated region
  $region38: #{edge_model_forward.8} parent=0 // pred_check
    _
  $region39: #{edge_model_forward.8} parent=0 // pred_check_branch
    %35 = sbr.rel (0) target = $region41
  $region40: #{edge_model_forward.8} parent=0 // pred_region
    _
  $region41: #{edge_model_forward.8} parent=0 // pred_fallthru
    _
  // Predicated region
  $region42: #{edge_model_forward.8} parent=0 // pred_check
    _
  $region43: #{edge_model_forward.8} parent=0 // pred_check_branch
    %37 = sbr.rel (0) target = $region45
  $region44: #{edge_model_forward.8} parent=0 // pred_region
    _
  $region45: #{edge_model_forward.8} parent=0 // pred_fallthru
    _
  %v39 = vld [vmem:[%s0] sm:$0xf]
  %v40 = vld [vmem:[%s0 + $0x4] sm:$0xf]
  %v41 = vld [vmem:[%s0 + $0x8] sm:$0xf]
  %v42 = vld [vmem:[%s0 + $0xc] sm:$0xf]
  %v43 = vld [vmem:[%s4] sm:$0x77]
  %v44 = vld [vmem:[%s4 + $0x8] sm:$0x7]
  %v45 = vld [vmem:[%s1] sm:$0xff]
  %v46 = vld [vmem:[%s1 + $0x8] sm:$0xff]
  %v47 = vld [vmem:[%s1 + $0x10] sm:$0xff]
  %v48 = vld [vmem:[%s1 + $0x18] sm:$0xff]
  %v49 = vld [vmem:[%s5] sm:$0xff]
  %v50 = vld [vmem:[%s5 + $0x8] sm:$0xf]
  %v51 = vld [vmem:[%s5 + $0xc] sm:$0xff]
  %v52 = vld [vmem:[%s5 + $0x14] sm:$0xf]
  %v53 = vld [vmem:[%s5 + $0x18] sm:$0xff]
  %v54 = vld [vmem:[%s5 + $0x20] sm:$0xf]
  %v55 = vld [vmem:[%s5 + $0x24] sm:$0xff]
  %v56 = vld [vmem:[%s5 + $0x2c] sm:$0xf]
  %v57 = vld [vmem:[%s5 + $0x30] sm:$0xff]
  %v58 = vld [vmem:[%s5 + $0x38] sm:$0xf]
  %v59 = vld [vmem:[%s5 + $0x3c] sm:$0xff]
  %v60 = vld [vmem:[%s5 + $0x44] sm:$0xf]
  %v61 = vld [vmem:[%s5 + $0x48] sm:$0xff]
  %v62 = vld [vmem:[%s5 + $0x50] sm:$0xf]
  %v63 = vld [vmem:[%s5 + $0x54] sm:$0xff]
  %v64 = vld [vmem:[%s5 + $0x5c] sm:$0xf]
  %v65 = vld [vmem:[%s5 + $0x60] sm:$0xff]
  %v66 = vld [vmem:[%s5 + $0x68] sm:$0xf]
  %v67 = vld [vmem:[%s5 + $0x6c] sm:$0xff]
  %v68 = vld [vmem:[%s5 + $0x74] sm:$0xf]
  %v69 = vld [vmem:[%s5 + $0x78] sm:$0xff]
  %v70 = vld [vmem:[%s5 + $0x80] sm:$0xf]
  %v71 = vld [vmem:[%s5 + $0x84] sm:$0xff]
  %v72 = vld [vmem:[%s5 + $0x8c] sm:$0xf]
  %v73 = vld [vmem:[%s5 + $0x90] sm:$0xff]
  %v74 = vld [vmem:[%s5 + $0x98] sm:$0xf]
  %v75 = vld [vmem:[%s5 + $0x9c] sm:$0xff]
  %v76 = vld [vmem:[%s5 + $0xa4] sm:$0xf]
  %v77 = vld [vmem:[%s5 + $0xa8] sm:$0xff]
  %v78 = vld [vmem:[%s5 + $0xb0] sm:$0xf]
  %v79 = vld [vmem:[%s5 + $0xb4] sm:$0xff]
  %v80 = vld [vmem:[%s5 + $0xbc] sm:$0xf]
  %v81 = vld [vmem:[%s5 + $0xc0] sm:$0xff]
  %v82 = vld [vmem:[%s5 + $0xc8] sm:$0xf]
  %v83 = vld [vmem:[%s5 + $0xcc] sm:$0xff]
  %v84 = vld [vmem:[%s5 + $0xd4] sm:$0xf]
  %v85 = vld [vmem:[%s5 + $0xd8] sm:$0xff]
  %v86 = vld [vmem:[%s5 + $0xe0] sm:$0xf]
  %v87 = vld [vmem:[%s5 + $0xe4] sm:$0xff]
  %v88 = vld [vmem:[%s5 + $0xec] sm:$0xf]
  %v89 = vld [vmem:[%s5 + $0xf0] sm:$0xff]
  %v90 = vld [vmem:[%s5 + $0xf8] sm:$0xf]
  %v91 = vld [vmem:[%s5 + $0xfc] sm:$0xff]
  %v92 = vld [vmem:[%s5 + $0x104] sm:$0xf]
  %v93 = vld [vmem:[%s5 + $0x108] sm:$0xff]
  %v94 = vld [vmem:[%s5 + $0x110] sm:$0xf]
  %v95 = vld [vmem:[%s5 + $0x114] sm:$0xff]
  %v96 = vld [vmem:[%s5 + $0x11c] sm:$0xf]
  %v97 = vld [vmem:[%s5 + $0x120] sm:$0xff]
  %v98 = vld [vmem:[%s5 + $0x128] sm:$0xf]
  %v99 = vld [vmem:[%s5 + $0x12c] sm:$0xff]
  %v100 = vld [vmem:[%s5 + $0x134] sm:$0xf]
  %v101 = vld [vmem:[%s5 + $0x138] sm:$0xff]
  %v102 = vld [vmem:[%s5 + $0x140] sm:$0xf]
  %v103 = vld [vmem:[%s5 + $0x144] sm:$0xff]
  %v104 = vld [vmem:[%s5 + $0x14c] sm:$0xf]
  %v105 = vld [vmem:[%s5 + $0x150] sm:$0xff]
  %v106 = vld [vmem:[%s5 + $0x158] sm:$0xf]
  %v107 = vld [vmem:[%s5 + $0x15c] sm:$0xff]
  %v108 = vld [vmem:[%s5 + $0x164] sm:$0xf]
  %v109 = vld [vmem:[%s5 + $0x168] sm:$0xff]
  %v110 = vld [vmem:[%s5 + $0x170] sm:$0xf]
  %v111 = vld [vmem:[%s5 + $0x174] sm:$0xff]
  %v112 = vld [vmem:[%s5 + $0x17c] sm:$0xf]
  %v117 = vunpack.c.l.b16 %v45
  %v118 = vunpack.c.h.b16 %v45
  %v119 = vunpack.c.l.b16 %v46
  %v120 = vunpack.c.h.b16 %v46
  %v121 = vunpack.c.l.b16 %v47
  %v122 = vunpack.c.h.b16 %v47
  %v123 = vunpack.c.l.b16 %v48
  %v124 = vunpack.c.h.b16 %v48
  %v125 = vpack.c.b16 %v119, %v117
  %v126 = vpack.c.b16 %v120, %v118
  %v127 = vpack.c.b16 %v123, %v121
  %v128 = vpack.c.b16 %v124, %v122
  %v197 = vunpack.c.l.b16 %v49
  %v198 = vunpack.c.h.b16 %v49
  %v199 = vunpack.c.l.b16 %v50
  %v200 = vunpack.c.l.b16 %v51
  %v201 = vunpack.c.h.b16 %v51
  %v202 = vunpack.c.l.b16 %v52
  %v203 = vunpack.c.l.b16 %v53
  %v204 = vunpack.c.h.b16 %v53
  %v205 = vunpack.c.l.b16 %v54
  %v206 = vunpack.c.l.b16 %v55
  %v207 = vunpack.c.h.b16 %v55
  %v208 = vunpack.c.l.b16 %v56
  %v209 = vunpack.c.l.b16 %v57
  %v210 = vunpack.c.h.b16 %v57
  %v211 = vunpack.c.l.b16 %v58
  %v212 = vunpack.c.l.b16 %v59
  %v213 = vunpack.c.h.b16 %v59
  %v214 = vunpack.c.l.b16 %v60
  %v215 = vunpack.c.l.b16 %v61
  %v216 = vunpack.c.h.b16 %v61
  %v217 = vunpack.c.l.b16 %v62
  %v218 = vunpack.c.l.b16 %v63
  %v219 = vunpack.c.h.b16 %v63
  %v220 = vunpack.c.l.b16 %v64
  %v221 = vunpack.c.l.b16 %v65
  %v222 = vunpack.c.h.b16 %v65
  %v223 = vunpack.c.l.b16 %v66
  %v224 = vunpack.c.l.b16 %v67
  %v225 = vunpack.c.h.b16 %v67
  %v226 = vunpack.c.l.b16 %v68
  %v227 = vunpack.c.l.b16 %v69
  %v228 = vunpack.c.h.b16 %v69
  %v229 = vunpack.c.l.b16 %v70
  %v230 = vunpack.c.l.b16 %v71
  %v231 = vunpack.c.h.b16 %v71
  %v232 = vunpack.c.l.b16 %v72
  %v233 = vunpack.c.l.b16 %v73
  %v234 = vunpack.c.h.b16 %v73
  %v235 = vunpack.c.l.b16 %v74
  %v236 = vunpack.c.l.b16 %v75
  %v237 = vunpack.c.h.b16 %v75
  %v238 = vunpack.c.l.b16 %v76
  %v239 = vunpack.c.l.b16 %v77
  %v240 = vunpack.c.h.b16 %v77
  %v241 = vunpack.c.l.b16 %v78
  %v242 = vunpack.c.l.b16 %v79
  %v243 = vunpack.c.h.b16 %v79
  %v244 = vunpack.c.l.b16 %v80
  %v245 = vunpack.c.l.b16 %v81
  %v246 = vunpack.c.h.b16 %v81
  %v247 = vunpack.c.l.b16 %v82
  %v248 = vunpack.c.l.b16 %v83
  %v249 = vunpack.c.h.b16 %v83
  %v250 = vunpack.c.l.b16 %v84
  %v251 = vunpack.c.l.b16 %v85
  %v252 = vunpack.c.h.b16 %v85
  %v253 = vunpack.c.l.b16 %v86
  %v254 = vunpack.c.l.b16 %v87
  %v255 = vunpack.c.h.b16 %v87
  %v256 = vunpack.c.l.b16 %v88
  %v257 = vunpack.c.l.b16 %v89
  %v258 = vunpack.c.h.b16 %v89
  %v259 = vunpack.c.l.b16 %v90
  %v260 = vunpack.c.l.b16 %v91
  %v261 = vunpack.c.h.b16 %v91
  %v262 = vunpack.c.l.b16 %v92
  %v263 = vunpack.c.l.b16 %v93
  %v264 = vunpack.c.h.b16 %v93
  %v265 = vunpack.c.l.b16 %v94
  %v266 = vunpack.c.l.b16 %v95
  %v267 = vunpack.c.h.b16 %v95
  %v268 = vunpack.c.l.b16 %v96
  %v269 = vunpack.c.l.b16 %v97
  %v270 = vunpack.c.h.b16 %v97
  %v271 = vunpack.c.l.b16 %v98
  %v272 = vunpack.c.l.b16 %v99
  %v273 = vunpack.c.h.b16 %v99
  %v274 = vunpack.c.l.b16 %v100
  %v275 = vunpack.c.l.b16 %v101
  %v276 = vunpack.c.h.b16 %v101
  %v277 = vunpack.c.l.b16 %v102
  %v278 = vunpack.c.l.b16 %v103
  %v279 = vunpack.c.h.b16 %v103
  %v280 = vunpack.c.l.b16 %v104
  %v281 = vunpack.c.l.b16 %v105
  %v282 = vunpack.c.h.b16 %v105
  %v283 = vunpack.c.l.b16 %v106
  %v284 = vunpack.c.l.b16 %v107
  %v285 = vunpack.c.h.b16 %v107
  %v286 = vunpack.c.l.b16 %v108
  %v287 = vunpack.c.l.b16 %v109
  %v288 = vunpack.c.h.b16 %v109
  %v289 = vunpack.c.l.b16 %v110
  %v290 = vunpack.c.l.b16 %v111
  %v291 = vunpack.c.h.b16 %v111
  %v292 = vunpack.c.l.b16 %v112
  %v293 = vpack.c.b16 %v200, %v197
  %v294 = vpack.c.b16 %v201, %v198
  %v295 = vpack.c.b16 %v202, %v199
  %v296 = vpack.c.b16 %v206, %v203
  %v297 = vpack.c.b16 %v207, %v204
  %v298 = vpack.c.b16 %v208, %v205
  %v299 = vpack.c.b16 %v212, %v209
  %v300 = vpack.c.b16 %v213, %v210
  %v301 = vpack.c.b16 %v214, %v211
  %v302 = vpack.c.b16 %v218, %v215
  %v303 = vpack.c.b16 %v219, %v216
  %v304 = vpack.c.b16 %v220, %v217
  %v305 = vpack.c.b16 %v224, %v221
  %v306 = vpack.c.b16 %v225, %v222
  %v307 = vpack.c.b16 %v226, %v223
  %v308 = vpack.c.b16 %v230, %v227
  %v309 = vpack.c.b16 %v231, %v228
  %v310 = vpack.c.b16 %v232, %v229
  %v311 = vpack.c.b16 %v236, %v233
  %v312 = vpack.c.b16 %v237, %v234
  %v313 = vpack.c.b16 %v238, %v235
  %v314 = vpack.c.b16 %v242, %v239
  %v315 = vpack.c.b16 %v243, %v240
  %v316 = vpack.c.b16 %v244, %v241
  %v317 = vpack.c.b16 %v248, %v245
  %v318 = vpack.c.b16 %v249, %v246
  %v319 = vpack.c.b16 %v250, %v247
  %v320 = vpack.c.b16 %v254, %v251
  %v321 = vpack.c.b16 %v255, %v252
  %v322 = vpack.c.b16 %v256, %v253
  %v323 = vpack.c.b16 %v260, %v257
  %v324 = vpack.c.b16 %v261, %v258
  %v325 = vpack.c.b16 %v262, %v259
  %v326 = vpack.c.b16 %v266, %v263
  %v327 = vpack.c.b16 %v267, %v264
  %v328 = vpack.c.b16 %v268, %v265
  %v329 = vpack.c.b16 %v272, %v269
  %v330 = vpack.c.b16 %v273, %v270
  %v331 = vpack.c.b16 %v274, %v271
  %v332 = vpack.c.b16 %v278, %v275
  %v333 = vpack.c.b16 %v279, %v276
  %v334 = vpack.c.b16 %v280, %v277
  %v335 = vpack.c.b16 %v284, %v281
  %v336 = vpack.c.b16 %v285, %v282
  %v337 = vpack.c.b16 %v286, %v283
  %v338 = vpack.c.b16 %v290, %v287
  %v339 = vpack.c.b16 %v291, %v288
  %v340 = vpack.c.b16 %v292, %v289
  %389 = vmatprep.subr.bf16.mxu0 %v315
  %390 = vmatpush1.bf16.msra.mxu0 %v314
  %391 = vmatprep.subr.bf16.mxu0 %v312
  %392 = vmatpush1.bf16.msra.mxu0 %v311
  %393 = vmatprep.subr.bf16.mxu0 %v309
  %394 = vmatpush1.bf16.msra.mxu0 %v308
  %395 = vmatprep.subr.bf16.mxu0 %v306
  %396 = vmatpush1.bf16.msra.mxu0 %v305
  %397 = vmatprep.subr.bf16.mxu0 %v303
  %398 = vmatpush1.bf16.msra.mxu0 %v302
  %399 = vmatprep.subr.bf16.mxu0 %v300
  %400 = vmatpush1.bf16.msra.mxu0 %v299
  %401 = vmatprep.subr.bf16.mxu0 %v297
  %402 = vmatpush1.bf16.msra.mxu0 %v296
  %403 = vmatprep.subr.bf16.mxu0 %v294
  %404 = vmatpush1.bf16.msra.mxu0 %v293
  %405 = vmatprep.subr.bf16.mxu0 %v339
  %406 = vmatpush2.bf16.msra.mxu0 %v338
  %407 = vmatprep.subr.bf16.mxu0 %v336
  %408 = vmatpush2.bf16.msra.mxu0 %v335
  %409 = vmatprep.subr.bf16.mxu0 %v333
  %410 = vmatpush2.bf16.msra.mxu0 %v332
  %411 = vmatprep.subr.bf16.mxu0 %v330
  %412 = vmatpush2.bf16.msra.mxu0 %v329
  %413 = vmatprep.subr.bf16.mxu0 %v327
  %414 = vmatpush2.bf16.msra.mxu0 %v326
  %415 = vmatprep.subr.bf16.mxu0 %v324
  %416 = vmatpush2.bf16.msra.mxu0 %v323
  %417 = vmatprep.subr.bf16.mxu0 %v321
  %418 = vmatpush2.bf16.msra.mxu0 %v320
  %419 = vmatprep.subr.bf16.mxu0 %v318
  %420 = vmatpush2.bf16.msra.mxu0 %v317
  %421 = vmatprep.mubr.bf16.mxu0 %v126
  %422 = vmatmul.mubr.bf16.gmra.mxu0 %v125
  %v423 = vpop.f32.mrf.mxu0
  %v424 = vadd.f32 0.0, %v423
  %v425 = vpop.f32.mrf.mxu0
  %v426 = vadd.f32 0.0, %v425
  %v427 = vpop.f32.mrf.mxu0
  %v428 = vadd.f32 0.0, %v427
  %v429 = vpop.f32.mrf.mxu0
  %v430 = vadd.f32 0.0, %v429
  %431 = vmatprep.mubr.bf16.mxu0 %v128
  %432 = vmatmul.mubr.bf16.gmra.mxu0 %v127
  %v433 = vpop.f32.mrf.mxu0
  %v434 = vadd.f32 0.0, %v433
  %v435 = vpop.f32.mrf.mxu0
  %v436 = vadd.f32 0.0, %v435
  %v437 = vpop.f32.mrf.mxu0
  %v438 = vadd.f32 0.0, %v437
  %v439 = vpop.f32.mrf.mxu0
  %v440 = vadd.f32 0.0, %v439
  %441 = vdwg.mxu0
  %442 = vmatprep.subr.bf16.mxu0 0
  %443 = vmatpush1.bf16.msra.mxu0 %v316
  %444 = vmatprep.subr.bf16.mxu0 0
  %445 = vmatpush1.bf16.msra.mxu0 %v313
  %446 = vmatprep.subr.bf16.mxu0 0
  %447 = vmatpush1.bf16.msra.mxu0 %v310
  %448 = vmatprep.subr.bf16.mxu0 0
  %449 = vmatpush1.bf16.msra.mxu0 %v307
  %450 = vmatprep.subr.bf16.mxu0 0
  %451 = vmatpush1.bf16.msra.mxu0 %v304
  %452 = vmatprep.subr.bf16.mxu0 0
  %453 = vmatpush1.bf16.msra.mxu0 %v301
  %454 = vmatprep.subr.bf16.mxu0 0
  %455 = vmatpush1.bf16.msra.mxu0 %v298
  %456 = vmatprep.subr.bf16.mxu0 0
  %457 = vmatpush1.bf16.msra.mxu0 %v295
  %458 = vmatprep.subr.bf16.mxu0 0
  %459 = vmatpush2.bf16.msra.mxu0 %v340
  %460 = vmatprep.subr.bf16.mxu0 0
  %461 = vmatpush2.bf16.msra.mxu0 %v337
  %462 = vmatprep.subr.bf16.mxu0 0
  %463 = vmatpush2.bf16.msra.mxu0 %v334
  %464 = vmatprep.subr.bf16.mxu0 0
  %465 = vmatpush2.bf16.msra.mxu0 %v331
  %466 = vmatprep.subr.bf16.mxu0 0
  %467 = vmatpush2.bf16.msra.mxu0 %v328
  %468 = vmatprep.subr.bf16.mxu0 0
  %469 = vmatpush2.bf16.msra.mxu0 %v325
  %470 = vmatprep.subr.bf16.mxu0 0
  %471 = vmatpush2.bf16.msra.mxu0 %v322
  %472 = vmatprep.subr.bf16.mxu0 0
  %473 = vmatpush2.bf16.msra.mxu0 %v319
  %474 = vmatprep.mubr.bf16.mxu0 %v126
  %475 = vmatmul.mubr.bf16.gmra.mxu0 %v125
  %v476 = vpop.f32.mrf.mxu0
  %v477 = vadd.f32 0.0, %v476
  %v478 = vpop.f32.mrf.mxu0
  %v479 = vpop.f32.mrf.mxu0
  %v480 = vadd.f32 0.0, %v479
  %v481 = vpop.f32.mrf.mxu0
  %482 = vmatprep.mubr.bf16.mxu0 %v128
  %483 = vmatmul.mubr.bf16.gmra.mxu0 %v127
  %v484 = vpop.f32.mrf.mxu0
  %v485 = vadd.f32 0.0, %v484
  %v486 = vpop.f32.mrf.mxu0
  %v487 = vpop.f32.mrf.mxu0
  %v488 = vadd.f32 0.0, %v487
  %v489 = vpop.f32.mrf.mxu0
  %490 = vdwg.mxu0
  %v495 = vunpack.c.l.b16 %v39
  %v496 = vunpack.c.l.b16 %v40
  %v497 = vunpack.c.l.b16 %v41
  %v498 = vunpack.c.l.b16 %v42
  %v499 = vpack.c.b16 %v496, %v495
  %v500 = vpack.c.b16 %v498, %v497
  %v503 = vunpack.c.l.b16 %v43
  %v504 = vunpack.c.h.b16 %v43
  %v505 = vunpack.c.l.b16 %v44
  %v506 = vpack.c.b16 %v503, %v503
  %v507 = vpack.c.b16 %v504, %v504
  %v508 = vpack.c.b16 %v505, %v505
  %vm509 = vcmask 48128
  %v511 = vsel %vm509, %v499, 0
  %v514 = vsel %vm509, %v500, 0
  %vm516 = vcmask 1042432
  %v518 = vsel %vm516, %v506, 0
  %v521 = vsel %vm516, %v507, 0
  %v524 = vsel %vm516, %v508, 0
  %526 = vmatprep.subr.bf16.mxu0 0
  %527 = vmatpush1.bf16.msra.mxu0 0
  %528 = vmatprep.subr.bf16.mxu0 0
  %529 = vmatpush1.bf16.msra.mxu0 0
  %530 = vmatprep.subr.bf16.mxu0 0
  %531 = vmatpush1.bf16.msra.mxu0 0
  %532 = vmatprep.subr.bf16.mxu0 0
  %533 = vmatpush1.bf16.msra.mxu0 0
  %534 = vmatprep.subr.bf16.mxu0 0
  %535 = vmatpush1.bf16.msra.mxu0 0
  %536 = vmatprep.subr.bf16.mxu0 0
  %537 = vmatpush1.bf16.msra.mxu0 0
  %538 = vmatprep.subr.bf16.mxu0 0
  %539 = vmatpush1.bf16.msra.mxu0 0
  %540 = vmatprep.subr.bf16.mxu0 %v521
  %541 = vmatpush1.bf16.msra.mxu0 %v518
  %542 = vmatprep.subr.bf16.mxu0 0
  %543 = vmatpush2.bf16.msra.mxu0 0
  %544 = vmatprep.subr.bf16.mxu0 0
  %545 = vmatpush2.bf16.msra.mxu0 0
  %546 = vmatprep.subr.bf16.mxu0 0
  %547 = vmatpush2.bf16.msra.mxu0 0
  %548 = vmatprep.subr.bf16.mxu0 0
  %549 = vmatpush2.bf16.msra.mxu0 0
  %550 = vmatprep.subr.bf16.mxu0 0
  %551 = vmatpush2.bf16.msra.mxu0 0
  %552 = vmatprep.subr.bf16.mxu0 0
  %553 = vmatpush2.bf16.msra.mxu0 0
  %554 = vmatprep.subr.bf16.mxu0 0
  %555 = vmatpush2.bf16.msra.mxu0 0
  %556 = vmatprep.subr.bf16.mxu0 0
  %557 = vmatpush2.bf16.msra.mxu0 0
  %558 = vmatprep.mubr.bf16.mxu0 0
  %559 = vmatmul.mubr.bf16.gmra.mxu0 %v511
  %v560 = vpop.f32.mrf.mxu0
  %v561 = vadd.f32 %v424, %v560
  %v562 = vpop.f32.mrf.mxu0
  %v563 = vadd.f32 %v426, %v562
  %v564 = vpop.f32.mrf.mxu0
  %v565 = vadd.f32 %v428, %v564
  %v566 = vpop.f32.mrf.mxu0
  %v567 = vadd.f32 %v430, %v566
  %568 = vmatprep.mubr.bf16.mxu0 0
  %569 = vmatmul.mubr.bf16.gmra.mxu0 %v514
  %v570 = vpop.f32.mrf.mxu0
  %v571 = vadd.f32 %v434, %v570
  %v572 = vpop.f32.mrf.mxu0
  %v573 = vadd.f32 %v436, %v572
  %v574 = vpop.f32.mrf.mxu0
  %v575 = vadd.f32 %v438, %v574
  %v576 = vpop.f32.mrf.mxu0
  %v577 = vadd.f32 %v440, %v576
  %578 = vdwg.mxu0
  %579 = vmatprep.subr.bf16.mxu0 0
  %580 = vmatpush1.bf16.msra.mxu0 0
  %581 = vmatprep.subr.bf16.mxu0 0
  %582 = vmatpush1.bf16.msra.mxu0 0
  %583 = vmatprep.subr.bf16.mxu0 0
  %584 = vmatpush1.bf16.msra.mxu0 0
  %585 = vmatprep.subr.bf16.mxu0 0
  %586 = vmatpush1.bf16.msra.mxu0 0
  %587 = vmatprep.subr.bf16.mxu0 0
  %588 = vmatpush1.bf16.msra.mxu0 0
  %589 = vmatprep.subr.bf16.mxu0 0
  %590 = vmatpush1.bf16.msra.mxu0 0
  %591 = vmatprep.subr.bf16.mxu0 0
  %592 = vmatpush1.bf16.msra.mxu0 0
  %593 = vmatprep.subr.bf16.mxu0 0
  %594 = vmatpush1.bf16.msra.mxu0 %v524
  %595 = vmatprep.subr.bf16.mxu0 0
  %596 = vmatpush2.bf16.msra.mxu0 0
  %597 = vmatprep.subr.bf16.mxu0 0
  %598 = vmatpush2.bf16.msra.mxu0 0
  %599 = vmatprep.subr.bf16.mxu0 0
  %600 = vmatpush2.bf16.msra.mxu0 0
  %601 = vmatprep.subr.bf16.mxu0 0
  %602 = vmatpush2.bf16.msra.mxu0 0
  %603 = vmatprep.subr.bf16.mxu0 0
  %604 = vmatpush2.bf16.msra.mxu0 0
  %605 = vmatprep.subr.bf16.mxu0 0
  %606 = vmatpush2.bf16.msra.mxu0 0
  %607 = vmatprep.subr.bf16.mxu0 0
  %608 = vmatpush2.bf16.msra.mxu0 0
  %609 = vmatprep.subr.bf16.mxu0 0
  %610 = vmatpush2.bf16.msra.mxu0 0
  %611 = vmatprep.mubr.bf16.mxu0 0
  %612 = vmatmul.mubr.bf16.gmra.mxu0 %v511
  %v613 = vpop.f32.mrf.mxu0
  %v614 = vadd.f32 %v477, %v613
  %v615 = vpop.f32.mrf.mxu0
  %v616 = vpop.f32.mrf.mxu0
  %v617 = vadd.f32 %v480, %v616
  %v618 = vpop.f32.mrf.mxu0
  %619 = vmatprep.mubr.bf16.mxu0 0
  %620 = vmatmul.mubr.bf16.gmra.mxu0 %v514
  %v621 = vpop.f32.mrf.mxu0
  %v622 = vadd.f32 %v485, %v621
  %v623 = vpop.f32.mrf.mxu0
  %v624 = vpop.f32.mrf.mxu0
  %v625 = vadd.f32 %v488, %v624
  %v626 = vpop.f32.mrf.mxu0
  %627 = vdwg.mxu0
  %v628 = vld [vmem:[%s2] sm:$0xff]
  %v629 = vld [vmem:[%s2 + $0x8] sm:$0xff]
  %v630 = vld [vmem:[%s2 + $0x10] sm:$0xff]
  %v631 = vld [vmem:[%s2 + $0x18] sm:$0xff]
  %v632 = vld [vmem:[%s6] sm:$0xff]
  %v633 = vld [vmem:[%s6 + $0x8] sm:$0xf]
  %v634 = vld [vmem:[%s6 + $0xc] sm:$0xff]
  %v635 = vld [vmem:[%s6 + $0x14] sm:$0xf]
  %v636 = vld [vmem:[%s6 + $0x18] sm:$0xff]
  %v637 = vld [vmem:[%s6 + $0x20] sm:$0xf]
  %v638 = vld [vmem:[%s6 + $0x24] sm:$0xff]
  %v639 = vld [vmem:[%s6 + $0x2c] sm:$0xf]
  %v640 = vld [vmem:[%s6 + $0x30] sm:$0xff]
  %v641 = vld [vmem:[%s6 + $0x38] sm:$0xf]
  %v642 = vld [vmem:[%s6 + $0x3c] sm:$0xff]
  %v643 = vld [vmem:[%s6 + $0x44] sm:$0xf]
  %v644 = vld [vmem:[%s6 + $0x48] sm:$0xff]
  %v645 = vld [vmem:[%s6 + $0x50] sm:$0xf]
  %v646 = vld [vmem:[%s6 + $0x54] sm:$0xff]
  %v647 = vld [vmem:[%s6 + $0x5c] sm:$0xf]
  %v648 = vld [vmem:[%s6 + $0x60] sm:$0xff]
  %v649 = vld [vmem:[%s6 + $0x68] sm:$0xf]
  %v650 = vld [vmem:[%s6 + $0x6c] sm:$0xff]
  %v651 = vld [vmem:[%s6 + $0x74] sm:$0xf]
  %v652 = vld [vmem:[%s6 + $0x78] sm:$0xff]
  %v653 = vld [vmem:[%s6 + $0x80] sm:$0xf]
  %v654 = vld [vmem:[%s6 + $0x84] sm:$0xff]
  %v655 = vld [vmem:[%s6 + $0x8c] sm:$0xf]
  %v656 = vld [vmem:[%s6 + $0x90] sm:$0xff]
  %v657 = vld [vmem:[%s6 + $0x98] sm:$0xf]
  %v658 = vld [vmem:[%s6 + $0x9c] sm:$0xff]
  %v659 = vld [vmem:[%s6 + $0xa4] sm:$0xf]
  %v660 = vld [vmem:[%s6 + $0xa8] sm:$0xff]
  %v661 = vld [vmem:[%s6 + $0xb0] sm:$0xf]
  %v662 = vld [vmem:[%s6 + $0xb4] sm:$0xff]
  %v663 = vld [vmem:[%s6 + $0xbc] sm:$0xf]
  %v664 = vld [vmem:[%s6 + $0xc0] sm:$0xff]
  %v665 = vld [vmem:[%s6 + $0xc8] sm:$0xf]
  %v666 = vld [vmem:[%s6 + $0xcc] sm:$0xff]
  %v667 = vld [vmem:[%s6 + $0xd4] sm:$0xf]
  %v668 = vld [vmem:[%s6 + $0xd8] sm:$0xff]
  %v669 = vld [vmem:[%s6 + $0xe0] sm:$0xf]
  %v670 = vld [vmem:[%s6 + $0xe4] sm:$0xff]
  %v671 = vld [vmem:[%s6 + $0xec] sm:$0xf]
  %v672 = vld [vmem:[%s6 + $0xf0] sm:$0xff]
  %v673 = vld [vmem:[%s6 + $0xf8] sm:$0xf]
  %v674 = vld [vmem:[%s6 + $0xfc] sm:$0xff]
  %v675 = vld [vmem:[%s6 + $0x104] sm:$0xf]
  %v676 = vld [vmem:[%s6 + $0x108] sm:$0xff]
  %v677 = vld [vmem:[%s6 + $0x110] sm:$0xf]
  %v678 = vld [vmem:[%s6 + $0x114] sm:$0xff]
  %v679 = vld [vmem:[%s6 + $0x11c] sm:$0xf]
  %v680 = vld [vmem:[%s6 + $0x120] sm:$0xff]
  %v681 = vld [vmem:[%s6 + $0x128] sm:$0xf]
  %v682 = vld [vmem:[%s6 + $0x12c] sm:$0xff]
  %v683 = vld [vmem:[%s6 + $0x134] sm:$0xf]
  %v684 = vld [vmem:[%s6 + $0x138] sm:$0xff]
  %v685 = vld [vmem:[%s6 + $0x140] sm:$0xf]
  %v686 = vld [vmem:[%s6 + $0x144] sm:$0xff]
  %v687 = vld [vmem:[%s6 + $0x14c] sm:$0xf]
  %v688 = vld [vmem:[%s6 + $0x150] sm:$0xff]
  %v689 = vld [vmem:[%s6 + $0x158] sm:$0xf]
  %v690 = vld [vmem:[%s6 + $0x15c] sm:$0xff]
  %v691 = vld [vmem:[%s6 + $0x164] sm:$0xf]
  %v692 = vld [vmem:[%s6 + $0x168] sm:$0xff]
  %v693 = vld [vmem:[%s6 + $0x170] sm:$0xf]
  %v694 = vld [vmem:[%s6 + $0x174] sm:$0xff]
  %v695 = vld [vmem:[%s6 + $0x17c] sm:$0xf]
  %v700 = vunpack.c.l.b16 %v628
  %v701 = vunpack.c.h.b16 %v628
  %v702 = vunpack.c.l.b16 %v629
  %v703 = vunpack.c.h.b16 %v629
  %v704 = vunpack.c.l.b16 %v630
  %v705 = vunpack.c.h.b16 %v630
  %v706 = vunpack.c.l.b16 %v631
  %v707 = vunpack.c.h.b16 %v631
  %v708 = vpack.c.b16 %v702, %v700
  %v709 = vpack.c.b16 %v703, %v701
  %v710 = vpack.c.b16 %v706, %v704
  %v711 = vpack.c.b16 %v707, %v705
  %v780 = vunpack.c.l.b16 %v632
  %v781 = vunpack.c.h.b16 %v632
  %v782 = vunpack.c.l.b16 %v633
  %v783 = vunpack.c.l.b16 %v634
  %v784 = vunpack.c.h.b16 %v634
  %v785 = vunpack.c.l.b16 %v635
  %v786 = vunpack.c.l.b16 %v636
  %v787 = vunpack.c.h.b16 %v636
  %v788 = vunpack.c.l.b16 %v637
  %v789 = vunpack.c.l.b16 %v638
  %v790 = vunpack.c.h.b16 %v638
  %v791 = vunpack.c.l.b16 %v639
  %v792 = vunpack.c.l.b16 %v640
  %v793 = vunpack.c.h.b16 %v640
  %v794 = vunpack.c.l.b16 %v641
  %v795 = vunpack.c.l.b16 %v642
  %v796 = vunpack.c.h.b16 %v642
  %v797 = vunpack.c.l.b16 %v643
  %v798 = vunpack.c.l.b16 %v644
  %v799 = vunpack.c.h.b16 %v644
  %v800 = vunpack.c.l.b16 %v645
  %v801 = vunpack.c.l.b16 %v646
  %v802 = vunpack.c.h.b16 %v646
  %v803 = vunpack.c.l.b16 %v647
  %v804 = vunpack.c.l.b16 %v648
  %v805 = vunpack.c.h.b16 %v648
  %v806 = vunpack.c.l.b16 %v649
  %v807 = vunpack.c.l.b16 %v650
  %v808 = vunpack.c.h.b16 %v650
  %v809 = vunpack.c.l.b16 %v651
  %v810 = vunpack.c.l.b16 %v652
  %v811 = vunpack.c.h.b16 %v652
  %v812 = vunpack.c.l.b16 %v653
  %v813 = vunpack.c.l.b16 %v654
  %v814 = vunpack.c.h.b16 %v654
  %v815 = vunpack.c.l.b16 %v655
  %v816 = vunpack.c.l.b16 %v656
  %v817 = vunpack.c.h.b16 %v656
  %v818 = vunpack.c.l.b16 %v657
  %v819 = vunpack.c.l.b16 %v658
  %v820 = vunpack.c.h.b16 %v658
  %v821 = vunpack.c.l.b16 %v659
  %v822 = vunpack.c.l.b16 %v660
  %v823 = vunpack.c.h.b16 %v660
  %v824 = vunpack.c.l.b16 %v661
  %v825 = vunpack.c.l.b16 %v662
  %v826 = vunpack.c.h.b16 %v662
  %v827 = vunpack.c.l.b16 %v663
  %v828 = vunpack.c.l.b16 %v664
  %v829 = vunpack.c.h.b16 %v664
  %v830 = vunpack.c.l.b16 %v665
  %v831 = vunpack.c.l.b16 %v666
  %v832 = vunpack.c.h.b16 %v666
  %v833 = vunpack.c.l.b16 %v667
  %v834 = vunpack.c.l.b16 %v668
  %v835 = vunpack.c.h.b16 %v668
  %v836 = vunpack.c.l.b16 %v669
  %v837 = vunpack.c.l.b16 %v670
  %v838 = vunpack.c.h.b16 %v670
  %v839 = vunpack.c.l.b16 %v671
  %v840 = vunpack.c.l.b16 %v672
  %v841 = vunpack.c.h.b16 %v672
  %v842 = vunpack.c.l.b16 %v673
  %v843 = vunpack.c.l.b16 %v674
  %v844 = vunpack.c.h.b16 %v674
  %v845 = vunpack.c.l.b16 %v675
  %v846 = vunpack.c.l.b16 %v676
  %v847 = vunpack.c.h.b16 %v676
  %v848 = vunpack.c.l.b16 %v677
  %v849 = vunpack.c.l.b16 %v678
  %v850 = vunpack.c.h.b16 %v678
  %v851 = vunpack.c.l.b16 %v679
  %v852 = vunpack.c.l.b16 %v680
  %v853 = vunpack.c.h.b16 %v680
  %v854 = vunpack.c.l.b16 %v681
  %v855 = vunpack.c.l.b16 %v682
  %v856 = vunpack.c.h.b16 %v682
  %v857 = vunpack.c.l.b16 %v683
  %v858 = vunpack.c.l.b16 %v684
  %v859 = vunpack.c.h.b16 %v684
  %v860 = vunpack.c.l.b16 %v685
  %v861 = vunpack.c.l.b16 %v686
  %v862 = vunpack.c.h.b16 %v686
  %v863 = vunpack.c.l.b16 %v687
  %v864 = vunpack.c.l.b16 %v688
  %v865 = vunpack.c.h.b16 %v688
  %v866 = vunpack.c.l.b16 %v689
  %v867 = vunpack.c.l.b16 %v690
  %v868 = vunpack.c.h.b16 %v690
  %v869 = vunpack.c.l.b16 %v691
  %v870 = vunpack.c.l.b16 %v692
  %v871 = vunpack.c.h.b16 %v692
  %v872 = vunpack.c.l.b16 %v693
  %v873 = vunpack.c.l.b16 %v694
  %v874 = vunpack.c.h.b16 %v694
  %v875 = vunpack.c.l.b16 %v695
  %v876 = vpack.c.b16 %v783, %v780
  %v877 = vpack.c.b16 %v784, %v781
  %v878 = vpack.c.b16 %v785, %v782
  %v879 = vpack.c.b16 %v789, %v786
  %v880 = vpack.c.b16 %v790, %v787
  %v881 = vpack.c.b16 %v791, %v788
  %v882 = vpack.c.b16 %v795, %v792
  %v883 = vpack.c.b16 %v796, %v793
  %v884 = vpack.c.b16 %v797, %v794
  %v885 = vpack.c.b16 %v801, %v798
  %v886 = vpack.c.b16 %v802, %v799
  %v887 = vpack.c.b16 %v803, %v800
  %v888 = vpack.c.b16 %v807, %v804
  %v889 = vpack.c.b16 %v808, %v805
  %v890 = vpack.c.b16 %v809, %v806
  %v891 = vpack.c.b16 %v813, %v810
  %v892 = vpack.c.b16 %v814, %v811
  %v893 = vpack.c.b16 %v815, %v812
  %v894 = vpack.c.b16 %v819, %v816
  %v895 = vpack.c.b16 %v820, %v817
  %v896 = vpack.c.b16 %v821, %v818
  %v897 = vpack.c.b16 %v825, %v822
  %v898 = vpack.c.b16 %v826, %v823
  %v899 = vpack.c.b16 %v827, %v824
  %v900 = vpack.c.b16 %v831, %v828
  %v901 = vpack.c.b16 %v832, %v829
  %v902 = vpack.c.b16 %v833, %v830
  %v903 = vpack.c.b16 %v837, %v834
  %v904 = vpack.c.b16 %v838, %v835
  %v905 = vpack.c.b16 %v839, %v836
  %v906 = vpack.c.b16 %v843, %v840
  %v907 = vpack.c.b16 %v844, %v841
  %v908 = vpack.c.b16 %v845, %v842
  %v909 = vpack.c.b16 %v849, %v846
  %v910 = vpack.c.b16 %v850, %v847
  %v911 = vpack.c.b16 %v851, %v848
  %v912 = vpack.c.b16 %v855, %v852
  %v913 = vpack.c.b16 %v856, %v853
  %v914 = vpack.c.b16 %v857, %v854
  %v915 = vpack.c.b16 %v861, %v858
  %v916 = vpack.c.b16 %v862, %v859
  %v917 = vpack.c.b16 %v863, %v860
  %v918 = vpack.c.b16 %v867, %v864
  %v919 = vpack.c.b16 %v868, %v865
  %v920 = vpack.c.b16 %v869, %v866
  %v921 = vpack.c.b16 %v873, %v870
  %v922 = vpack.c.b16 %v874, %v871
  %v923 = vpack.c.b16 %v875, %v872
  %972 = vmatprep.subr.bf16.mxu0 %v898
  %973 = vmatpush1.bf16.msra.mxu0 %v897
  %974 = vmatprep.subr.bf16.mxu0 %v895
  %975 = vmatpush1.bf16.msra.mxu0 %v894
  %976 = vmatprep.subr.bf16.mxu0 %v892
  %977 = vmatpush1.bf16.msra.mxu0 %v891
  %978 = vmatprep.subr.bf16.mxu0 %v889
  %979 = vmatpush1.bf16.msra.mxu0 %v888
  %980 = vmatprep.subr.bf16.mxu0 %v886
  %981 = vmatpush1.bf16.msra.mxu0 %v885
  %982 = vmatprep.subr.bf16.mxu0 %v883
  %983 = vmatpush1.bf16.msra.mxu0 %v882
  %984 = vmatprep.subr.bf16.mxu0 %v880
  %985 = vmatpush1.bf16.msra.mxu0 %v879
  %986 = vmatprep.subr.bf16.mxu0 %v877
  %987 = vmatpush1.bf16.msra.mxu0 %v876
  %988 = vmatprep.subr.bf16.mxu0 %v922
  %989 = vmatpush2.bf16.msra.mxu0 %v921
  %990 = vmatprep.subr.bf16.mxu0 %v919
  %991 = vmatpush2.bf16.msra.mxu0 %v918
  %992 = vmatprep.subr.bf16.mxu0 %v916
  %993 = vmatpush2.bf16.msra.mxu0 %v915
  %994 = vmatprep.subr.bf16.mxu0 %v913
  %995 = vmatpush2.bf16.msra.mxu0 %v912
  %996 = vmatprep.subr.bf16.mxu0 %v910
  %997 = vmatpush2.bf16.msra.mxu0 %v909
  %998 = vmatprep.subr.bf16.mxu0 %v907
  %999 = vmatpush2.bf16.msra.mxu0 %v906
  %1000 = vmatprep.subr.bf16.mxu0 %v904
  %1001 = vmatpush2.bf16.msra.mxu0 %v903
  %1002 = vmatprep.subr.bf16.mxu0 %v901
  %1003 = vmatpush2.bf16.msra.mxu0 %v900
  %1004 = vmatprep.mubr.bf16.mxu0 %v709
  %1005 = vmatmul.mubr.bf16.gmra.mxu0 %v708
  %v1006 = vpop.f32.mrf.mxu0
  %v1007 = vadd.f32 0.0, %v1006
  %v1008 = vpop.f32.mrf.mxu0
  %v1009 = vadd.f32 0.0, %v1008
  %v1010 = vpop.f32.mrf.mxu0
  %v1011 = vadd.f32 0.0, %v1010
  %v1012 = vpop.f32.mrf.mxu0
  %v1013 = vadd.f32 0.0, %v1012
  %1014 = vmatprep.mubr.bf16.mxu0 %v711
  %1015 = vmatmul.mubr.bf16.gmra.mxu0 %v710
  %v1016 = vpop.f32.mrf.mxu0
  %v1017 = vadd.f32 0.0, %v1016
  %v1018 = vpop.f32.mrf.mxu0
  %v1019 = vadd.f32 0.0, %v1018
  %v1020 = vpop.f32.mrf.mxu0
  %v1021 = vadd.f32 0.0, %v1020
  %v1022 = vpop.f32.mrf.mxu0
  %v1023 = vadd.f32 0.0, %v1022
  %1024 = vdwg.mxu0
  %1025 = vmatprep.subr.bf16.mxu0 0
  %1026 = vmatpush1.bf16.msra.mxu0 %v899
  %1027 = vmatprep.subr.bf16.mxu0 0
  %1028 = vmatpush1.bf16.msra.mxu0 %v896
  %1029 = vmatprep.subr.bf16.mxu0 0
  %1030 = vmatpush1.bf16.msra.mxu0 %v893
  %1031 = vmatprep.subr.bf16.mxu0 0
  %1032 = vmatpush1.bf16.msra.mxu0 %v890
  %1033 = vmatprep.subr.bf16.mxu0 0
  %1034 = vmatpush1.bf16.msra.mxu0 %v887
  %1035 = vmatprep.subr.bf16.mxu0 0
  %1036 = vmatpush1.bf16.msra.mxu0 %v884
  %1037 = vmatprep.subr.bf16.mxu0 0
  %1038 = vmatpush1.bf16.msra.mxu0 %v881
  %1039 = vmatprep.subr.bf16.mxu0 0
  %1040 = vmatpush1.bf16.msra.mxu0 %v878
  %1041 = vmatprep.subr.bf16.mxu0 0
  %1042 = vmatpush2.bf16.msra.mxu0 %v923
  %1043 = vmatprep.subr.bf16.mxu0 0
  %1044 = vmatpush2.bf16.msra.mxu0 %v920
  %1045 = vmatprep.subr.bf16.mxu0 0
  %1046 = vmatpush2.bf16.msra.mxu0 %v917
  %1047 = vmatprep.subr.bf16.mxu0 0
  %1048 = vmatpush2.bf16.msra.mxu0 %v914
  %1049 = vmatprep.subr.bf16.mxu0 0
  %1050 = vmatpush2.bf16.msra.mxu0 %v911
  %1051 = vmatprep.subr.bf16.mxu0 0
  %1052 = vmatpush2.bf16.msra.mxu0 %v908
  %1053 = vmatprep.subr.bf16.mxu0 0
  %1054 = vmatpush2.bf16.msra.mxu0 %v905
  %1055 = vmatprep.subr.bf16.mxu0 0
  %1056 = vmatpush2.bf16.msra.mxu0 %v902
  %1057 = vmatprep.mubr.bf16.mxu0 %v709
  %1058 = vmatmul.mubr.bf16.gmra.mxu0 %v708
  %v1059 = vpop.f32.mrf.mxu0
  %v1060 = vadd.f32 0.0, %v1059
  %v1061 = vpop.f32.mrf.mxu0
  %v1062 = vpop.f32.mrf.mxu0
  %v1063 = vadd.f32 0.0, %v1062
  %v1064 = vpop.f32.mrf.mxu0
  %1065 = vmatprep.mubr.bf16.mxu0 %v711
  %1066 = vmatmul.mubr.bf16.gmra.mxu0 %v710
  %v1067 = vpop.f32.mrf.mxu0
  %v1068 = vadd.f32 0.0, %v1067
  %v1069 = vpop.f32.mrf.mxu0
  %v1070 = vpop.f32.mrf.mxu0
  %v1071 = vadd.f32 0.0, %v1070
  %v1072 = vpop.f32.mrf.mxu0
  %1073 = vdwg.mxu0
  %v1074 = vadd.f32 %v561, %v1007
  %v1075 = vadd.f32 %v563, %v1009
  %v1076 = vadd.f32 %v614, %v1060
  %v1077 = vadd.f32 %v565, %v1011
  %v1078 = vadd.f32 %v567, %v1013
  %v1079 = vadd.f32 %v617, %v1063
  %v1080 = vadd.f32 %v571, %v1017
  %v1081 = vadd.f32 %v573, %v1019
  %v1082 = vadd.f32 %v622, %v1068
  %v1083 = vadd.f32 %v575, %v1021
  %v1084 = vadd.f32 %v577, %v1023
  %v1085 = vadd.f32 %v625, %v1071
  %v1086 = vld [vmem:[%s3] sm:$0xff]
  %v1087 = vld [vmem:[%s3 + $0x8] sm:$0xff]
  %v1088 = vld [vmem:[%s3 + $0x10] sm:$0xff]
  %v1089 = vld [vmem:[%s3 + $0x18] sm:$0xff]
  %v1090 = vld [vmem:[%s7] sm:$0xff]
  %v1091 = vld [vmem:[%s7 + $0x8] sm:$0xf]
  %v1092 = vld [vmem:[%s7 + $0xc] sm:$0xff]
  %v1093 = vld [vmem:[%s7 + $0x14] sm:$0xf]
  %v1094 = vld [vmem:[%s7 + $0x18] sm:$0xff]
  %v1095 = vld [vmem:[%s7 + $0x20] sm:$0xf]
  %v1096 = vld [vmem:[%s7 + $0x24] sm:$0xff]
  %v1097 = vld [vmem:[%s7 + $0x2c] sm:$0xf]
  %v1098 = vld [vmem:[%s7 + $0x30] sm:$0xff]
  %v1099 = vld [vmem:[%s7 + $0x38] sm:$0xf]
  %v1100 = vld [vmem:[%s7 + $0x3c] sm:$0xff]
  %v1101 = vld [vmem:[%s7 + $0x44] sm:$0xf]
  %v1102 = vld [vmem:[%s7 + $0x48] sm:$0xff]
  %v1103 = vld [vmem:[%s7 + $0x50] sm:$0xf]
  %v1104 = vld [vmem:[%s7 + $0x54] sm:$0xff]
  %v1105 = vld [vmem:[%s7 + $0x5c] sm:$0xf]
  %v1106 = vld [vmem:[%s7 + $0x60] sm:$0xff]
  %v1107 = vld [vmem:[%s7 + $0x68] sm:$0xf]
  %v1108 = vld [vmem:[%s7 + $0x6c] sm:$0xff]
  %v1109 = vld [vmem:[%s7 + $0x74] sm:$0xf]
  %v1110 = vld [vmem:[%s7 + $0x78] sm:$0xff]
  %v1111 = vld [vmem:[%s7 + $0x80] sm:$0xf]
  %v1112 = vld [vmem:[%s7 + $0x84] sm:$0xff]
  %v1113 = vld [vmem:[%s7 + $0x8c] sm:$0xf]
  %v1114 = vld [vmem:[%s7 + $0x90] sm:$0xff]
  %v1115 = vld [vmem:[%s7 + $0x98] sm:$0xf]
  %v1116 = vld [vmem:[%s7 + $0x9c] sm:$0xff]
  %v1117 = vld [vmem:[%s7 + $0xa4] sm:$0xf]
  %v1118 = vld [vmem:[%s7 + $0xa8] sm:$0xff]
  %v1119 = vld [vmem:[%s7 + $0xb0] sm:$0xf]
  %v1120 = vld [vmem:[%s7 + $0xb4] sm:$0xff]
  %v1121 = vld [vmem:[%s7 + $0xbc] sm:$0xf]
  %v1122 = vld [vmem:[%s7 + $0xc0] sm:$0xff]
  %v1123 = vld [vmem:[%s7 + $0xc8] sm:$0xf]
  %v1124 = vld [vmem:[%s7 + $0xcc] sm:$0xff]
  %v1125 = vld [vmem:[%s7 + $0xd4] sm:$0xf]
  %v1126 = vld [vmem:[%s7 + $0xd8] sm:$0xff]
  %v1127 = vld [vmem:[%s7 + $0xe0] sm:$0xf]
  %v1128 = vld [vmem:[%s7 + $0xe4] sm:$0xff]
  %v1129 = vld [vmem:[%s7 + $0xec] sm:$0xf]
  %v1130 = vld [vmem:[%s7 + $0xf0] sm:$0xff]
  %v1131 = vld [vmem:[%s7 + $0xf8] sm:$0xf]
  %v1132 = vld [vmem:[%s7 + $0xfc] sm:$0xff]
  %v1133 = vld [vmem:[%s7 + $0x104] sm:$0xf]
  %v1134 = vld [vmem:[%s7 + $0x108] sm:$0xff]
  %v1135 = vld [vmem:[%s7 + $0x110] sm:$0xf]
  %v1136 = vld [vmem:[%s7 + $0x114] sm:$0xff]
  %v1137 = vld [vmem:[%s7 + $0x11c] sm:$0xf]
  %v1138 = vld [vmem:[%s7 + $0x120] sm:$0xff]
  %v1139 = vld [vmem:[%s7 + $0x128] sm:$0xf]
  %v1140 = vld [vmem:[%s7 + $0x12c] sm:$0xff]
  %v1141 = vld [vmem:[%s7 + $0x134] sm:$0xf]
  %v1142 = vld [vmem:[%s7 + $0x138] sm:$0xff]
  %v1143 = vld [vmem:[%s7 + $0x140] sm:$0xf]
  %v1144 = vld [vmem:[%s7 + $0x144] sm:$0xff]
  %v1145 = vld [vmem:[%s7 + $0x14c] sm:$0xf]
  %v1146 = vld [vmem:[%s7 + $0x150] sm:$0xff]
  %v1147 = vld [vmem:[%s7 + $0x158] sm:$0xf]
  %v1148 = vld [vmem:[%s7 + $0x15c] sm:$0xff]
  %v1149 = vld [vmem:[%s7 + $0x164] sm:$0xf]
  %v1150 = vld [vmem:[%s7 + $0x168] sm:$0xff]
  %v1151 = vld [vmem:[%s7 + $0x170] sm:$0xf]
  %v1152 = vld [vmem:[%s7 + $0x174] sm:$0xff]
  %v1153 = vld [vmem:[%s7 + $0x17c] sm:$0xf]
  %v1158 = vunpack.c.l.b16 %v1086
  %v1159 = vunpack.c.h.b16 %v1086
  %v1160 = vunpack.c.l.b16 %v1087
  %v1161 = vunpack.c.h.b16 %v1087
  %v1162 = vunpack.c.l.b16 %v1088
  %v1163 = vunpack.c.h.b16 %v1088
  %v1164 = vunpack.c.l.b16 %v1089
  %v1165 = vunpack.c.h.b16 %v1089
  %v1166 = vpack.c.b16 %v1160, %v1158
  %v1167 = vpack.c.b16 %v1161, %v1159
  %v1168 = vpack.c.b16 %v1164, %v1162
  %v1169 = vpack.c.b16 %v1165, %v1163
  %v1238 = vunpack.c.l.b16 %v1090
  %v1239 = vunpack.c.h.b16 %v1090
  %v1240 = vunpack.c.l.b16 %v1091
  %v1241 = vunpack.c.l.b16 %v1092
  %v1242 = vunpack.c.h.b16 %v1092
  %v1243 = vunpack.c.l.b16 %v1093
  %v1244 = vunpack.c.l.b16 %v1094
  %v1245 = vunpack.c.h.b16 %v1094
  %v1246 = vunpack.c.l.b16 %v1095
  %v1247 = vunpack.c.l.b16 %v1096
  %v1248 = vunpack.c.h.b16 %v1096
  %v1249 = vunpack.c.l.b16 %v1097
  %v1250 = vunpack.c.l.b16 %v1098
  %v1251 = vunpack.c.h.b16 %v1098
  %v1252 = vunpack.c.l.b16 %v1099
  %v1253 = vunpack.c.l.b16 %v1100
  %v1254 = vunpack.c.h.b16 %v1100
  %v1255 = vunpack.c.l.b16 %v1101
  %v1256 = vunpack.c.l.b16 %v1102
  %v1257 = vunpack.c.h.b16 %v1102
  %v1258 = vunpack.c.l.b16 %v1103
  %v1259 = vunpack.c.l.b16 %v1104
  %v1260 = vunpack.c.h.b16 %v1104
  %v1261 = vunpack.c.l.b16 %v1105
  %v1262 = vunpack.c.l.b16 %v1106
  %v1263 = vunpack.c.h.b16 %v1106
  %v1264 = vunpack.c.l.b16 %v1107
  %v1265 = vunpack.c.l.b16 %v1108
  %v1266 = vunpack.c.h.b16 %v1108
  %v1267 = vunpack.c.l.b16 %v1109
  %v1268 = vunpack.c.l.b16 %v1110
  %v1269 = vunpack.c.h.b16 %v1110
  %v1270 = vunpack.c.l.b16 %v1111
  %v1271 = vunpack.c.l.b16 %v1112
  %v1272 = vunpack.c.h.b16 %v1112
  %v1273 = vunpack.c.l.b16 %v1113
  %v1274 = vunpack.c.l.b16 %v1114
  %v1275 = vunpack.c.h.b16 %v1114
  %v1276 = vunpack.c.l.b16 %v1115
  %v1277 = vunpack.c.l.b16 %v1116
  %v1278 = vunpack.c.h.b16 %v1116
  %v1279 = vunpack.c.l.b16 %v1117
  %v1280 = vunpack.c.l.b16 %v1118
  %v1281 = vunpack.c.h.b16 %v1118
  %v1282 = vunpack.c.l.b16 %v1119
  %v1283 = vunpack.c.l.b16 %v1120
  %v1284 = vunpack.c.h.b16 %v1120
  %v1285 = vunpack.c.l.b16 %v1121
  %v1286 = vunpack.c.l.b16 %v1122
  %v1287 = vunpack.c.h.b16 %v1122
  %v1288 = vunpack.c.l.b16 %v1123
  %v1289 = vunpack.c.l.b16 %v1124
  %v1290 = vunpack.c.h.b16 %v1124
  %v1291 = vunpack.c.l.b16 %v1125
  %v1292 = vunpack.c.l.b16 %v1126
  %v1293 = vunpack.c.h.b16 %v1126
  %v1294 = vunpack.c.l.b16 %v1127
  %v1295 = vunpack.c.l.b16 %v1128
  %v1296 = vunpack.c.h.b16 %v1128
  %v1297 = vunpack.c.l.b16 %v1129
  %v1298 = vunpack.c.l.b16 %v1130
  %v1299 = vunpack.c.h.b16 %v1130
  %v1300 = vunpack.c.l.b16 %v1131
  %v1301 = vunpack.c.l.b16 %v1132
  %v1302 = vunpack.c.h.b16 %v1132
  %v1303 = vunpack.c.l.b16 %v1133
  %v1304 = vunpack.c.l.b16 %v1134
  %v1305 = vunpack.c.h.b16 %v1134
  %v1306 = vunpack.c.l.b16 %v1135
  %v1307 = vunpack.c.l.b16 %v1136
  %v1308 = vunpack.c.h.b16 %v1136
  %v1309 = vunpack.c.l.b16 %v1137
  %v1310 = vunpack.c.l.b16 %v1138
  %v1311 = vunpack.c.h.b16 %v1138
  %v1312 = vunpack.c.l.b16 %v1139
  %v1313 = vunpack.c.l.b16 %v1140
  %v1314 = vunpack.c.h.b16 %v1140
  %v1315 = vunpack.c.l.b16 %v1141
  %v1316 = vunpack.c.l.b16 %v1142
  %v1317 = vunpack.c.h.b16 %v1142
  %v1318 = vunpack.c.l.b16 %v1143
  %v1319 = vunpack.c.l.b16 %v1144
  %v1320 = vunpack.c.h.b16 %v1144
  %v1321 = vunpack.c.l.b16 %v1145
  %v1322 = vunpack.c.l.b16 %v1146
  %v1323 = vunpack.c.h.b16 %v1146
  %v1324 = vunpack.c.l.b16 %v1147
  %v1325 = vunpack.c.l.b16 %v1148
  %v1326 = vunpack.c.h.b16 %v1148
  %v1327 = vunpack.c.l.b16 %v1149
  %v1328 = vunpack.c.l.b16 %v1150
  %v1329 = vunpack.c.h.b16 %v1150
  %v1330 = vunpack.c.l.b16 %v1151
  %v1331 = vunpack.c.l.b16 %v1152
  %v1332 = vunpack.c.h.b16 %v1152
  %v1333 = vunpack.c.l.b16 %v1153
  %v1334 = vpack.c.b16 %v1241, %v1238
  %v1335 = vpack.c.b16 %v1242, %v1239
  %v1336 = vpack.c.b16 %v1243, %v1240
  %v1337 = vpack.c.b16 %v1247, %v1244
  %v1338 = vpack.c.b16 %v1248, %v1245
  %v1339 = vpack.c.b16 %v1249, %v1246
  %v1340 = vpack.c.b16 %v1253, %v1250
  %v1341 = vpack.c.b16 %v1254, %v1251
  %v1342 = vpack.c.b16 %v1255, %v1252
  %v1343 = vpack.c.b16 %v1259, %v1256
  %v1344 = vpack.c.b16 %v1260, %v1257
  %v1345 = vpack.c.b16 %v1261, %v1258
  %v1346 = vpack.c.b16 %v1265, %v1262
  %v1347 = vpack.c.b16 %v1266, %v1263
  %v1348 = vpack.c.b16 %v1267, %v1264
  %v1349 = vpack.c.b16 %v1271, %v1268
  %v1350 = vpack.c.b16 %v1272, %v1269
  %v1351 = vpack.c.b16 %v1273, %v1270
  %v1352 = vpack.c.b16 %v1277, %v1274
  %v1353 = vpack.c.b16 %v1278, %v1275
  %v1354 = vpack.c.b16 %v1279, %v1276
  %v1355 = vpack.c.b16 %v1283, %v1280
  %v1356 = vpack.c.b16 %v1284, %v1281
  %v1357 = vpack.c.b16 %v1285, %v1282
  %v1358 = vpack.c.b16 %v1289, %v1286
  %v1359 = vpack.c.b16 %v1290, %v1287
  %v1360 = vpack.c.b16 %v1291, %v1288
  %v1361 = vpack.c.b16 %v1295, %v1292
  %v1362 = vpack.c.b16 %v1296, %v1293
  %v1363 = vpack.c.b16 %v1297, %v1294
  %v1364 = vpack.c.b16 %v1301, %v1298
  %v1365 = vpack.c.b16 %v1302, %v1299
  %v1366 = vpack.c.b16 %v1303, %v1300
  %v1367 = vpack.c.b16 %v1307, %v1304
  %v1368 = vpack.c.b16 %v1308, %v1305
  %v1369 = vpack.c.b16 %v1309, %v1306
  %v1370 = vpack.c.b16 %v1313, %v1310
  %v1371 = vpack.c.b16 %v1314, %v1311
  %v1372 = vpack.c.b16 %v1315, %v1312
  %v1373 = vpack.c.b16 %v1319, %v1316
  %v1374 = vpack.c.b16 %v1320, %v1317
  %v1375 = vpack.c.b16 %v1321, %v1318
  %v1376 = vpack.c.b16 %v1325, %v1322
  %v1377 = vpack.c.b16 %v1326, %v1323
  %v1378 = vpack.c.b16 %v1327, %v1324
  %v1379 = vpack.c.b16 %v1331, %v1328
  %v1380 = vpack.c.b16 %v1332, %v1329
  %v1381 = vpack.c.b16 %v1333, %v1330
  %1430 = vmatprep.subr.bf16.mxu0 %v1356
  %1431 = vmatpush1.bf16.msra.mxu0 %v1355
  %1432 = vmatprep.subr.bf16.mxu0 %v1353
  %1433 = vmatpush1.bf16.msra.mxu0 %v1352
  %1434 = vmatprep.subr.bf16.mxu0 %v1350
  %1435 = vmatpush1.bf16.msra.mxu0 %v1349
  %1436 = vmatprep.subr.bf16.mxu0 %v1347
  %1437 = vmatpush1.bf16.msra.mxu0 %v1346
  %1438 = vmatprep.subr.bf16.mxu0 %v1344
  %1439 = vmatpush1.bf16.msra.mxu0 %v1343
  %1440 = vmatprep.subr.bf16.mxu0 %v1341
  %1441 = vmatpush1.bf16.msra.mxu0 %v1340
  %1442 = vmatprep.subr.bf16.mxu0 %v1338
  %1443 = vmatpush1.bf16.msra.mxu0 %v1337
  %1444 = vmatprep.subr.bf16.mxu0 %v1335
  %1445 = vmatpush1.bf16.msra.mxu0 %v1334
  %1446 = vmatprep.subr.bf16.mxu0 %v1380
  %1447 = vmatpush2.bf16.msra.mxu0 %v1379
  %1448 = vmatprep.subr.bf16.mxu0 %v1377
  %1449 = vmatpush2.bf16.msra.mxu0 %v1376
  %1450 = vmatprep.subr.bf16.mxu0 %v1374
  %1451 = vmatpush2.bf16.msra.mxu0 %v1373
  %1452 = vmatprep.subr.bf16.mxu0 %v1371
  %1453 = vmatpush2.bf16.msra.mxu0 %v1370
  %1454 = vmatprep.subr.bf16.mxu0 %v1368
  %1455 = vmatpush2.bf16.msra.mxu0 %v1367
  %1456 = vmatprep.subr.bf16.mxu0 %v1365
  %1457 = vmatpush2.bf16.msra.mxu0 %v1364
  %1458 = vmatprep.subr.bf16.mxu0 %v1362
  %1459 = vmatpush2.bf16.msra.mxu0 %v1361
  %1460 = vmatprep.subr.bf16.mxu0 %v1359
  %1461 = vmatpush2.bf16.msra.mxu0 %v1358
  %1462 = vmatprep.mubr.bf16.mxu0 %v1167
  %1463 = vmatmul.mubr.bf16.gmra.mxu0 %v1166
  %v1464 = vpop.f32.mrf.mxu0
  %v1465 = vadd.f32 0.0, %v1464
  %v1466 = vpop.f32.mrf.mxu0
  %v1467 = vadd.f32 0.0, %v1466
  %v1468 = vpop.f32.mrf.mxu0
  %v1469 = vadd.f32 0.0, %v1468
  %v1470 = vpop.f32.mrf.mxu0
  %v1471 = vadd.f32 0.0, %v1470
  %1472 = vmatprep.mubr.bf16.mxu0 %v1169
  %1473 = vmatmul.mubr.bf16.gmra.mxu0 %v1168
  %v1474 = vpop.f32.mrf.mxu0
  %v1475 = vadd.f32 0.0, %v1474
  %v1476 = vpop.f32.mrf.mxu0
  %v1477 = vadd.f32 0.0, %v1476
  %v1478 = vpop.f32.mrf.mxu0
  %v1479 = vadd.f32 0.0, %v1478
  %v1480 = vpop.f32.mrf.mxu0
  %v1481 = vadd.f32 0.0, %v1480
  %1482 = vdwg.mxu0
  %1483 = vmatprep.subr.bf16.mxu0 0
  %1484 = vmatpush1.bf16.msra.mxu0 %v1357
  %1485 = vmatprep.subr.bf16.mxu0 0
  %1486 = vmatpush1.bf16.msra.mxu0 %v1354
  %1487 = vmatprep.subr.bf16.mxu0 0
  %1488 = vmatpush1.bf16.msra.mxu0 %v1351
  %1489 = vmatprep.subr.bf16.mxu0 0
  %1490 = vmatpush1.bf16.msra.mxu0 %v1348
  %1491 = vmatprep.subr.bf16.mxu0 0
  %1492 = vmatpush1.bf16.msra.mxu0 %v1345
  %1493 = vmatprep.subr.bf16.mxu0 0
  %1494 = vmatpush1.bf16.msra.mxu0 %v1342
  %1495 = vmatprep.subr.bf16.mxu0 0
  %1496 = vmatpush1.bf16.msra.mxu0 %v1339
  %1497 = vmatprep.subr.bf16.mxu0 0
  %1498 = vmatpush1.bf16.msra.mxu0 %v1336
  %1499 = vmatprep.subr.bf16.mxu0 0
  %1500 = vmatpush2.bf16.msra.mxu0 %v1381
  %1501 = vmatprep.subr.bf16.mxu0 0
  %1502 = vmatpush2.bf16.msra.mxu0 %v1378
  %1503 = vmatprep.subr.bf16.mxu0 0
  %1504 = vmatpush2.bf16.msra.mxu0 %v1375
  %1505 = vmatprep.subr.bf16.mxu0 0
  %1506 = vmatpush2.bf16.msra.mxu0 %v1372
  %1507 = vmatprep.subr.bf16.mxu0 0
  %1508 = vmatpush2.bf16.msra.mxu0 %v1369
  %1509 = vmatprep.subr.bf16.mxu0 0
  %1510 = vmatpush2.bf16.msra.mxu0 %v1366
  %1511 = vmatprep.subr.bf16.mxu0 0
  %1512 = vmatpush2.bf16.msra.mxu0 %v1363
  %1513 = vmatprep.subr.bf16.mxu0 0
  %1514 = vmatpush2.bf16.msra.mxu0 %v1360
  %1515 = vmatprep.mubr.bf16.mxu0 %v1167
  %1516 = vmatmul.mubr.bf16.gmra.mxu0 %v1166
  %v1517 = vpop.f32.mrf.mxu0
  %v1518 = vadd.f32 0.0, %v1517
  %v1519 = vpop.f32.mrf.mxu0
  %v1520 = vpop.f32.mrf.mxu0
  %v1521 = vadd.f32 0.0, %v1520
  %v1522 = vpop.f32.mrf.mxu0
  %1523 = vmatprep.mubr.bf16.mxu0 %v1169
  %1524 = vmatmul.mubr.bf16.gmra.mxu0 %v1168
  %v1525 = vpop.f32.mrf.mxu0
  %v1526 = vadd.f32 0.0, %v1525
  %v1527 = vpop.f32.mrf.mxu0
  %v1528 = vpop.f32.mrf.mxu0
  %v1529 = vadd.f32 0.0, %v1528
  %v1530 = vpop.f32.mrf.mxu0
  %1531 = vdwg.mxu0
  %v1532 = vadd.f32 %v1074, %v1465
  %v1533 = vadd.f32 %v1075, %v1467
  %v1534 = vadd.f32 %v1076, %v1518
  %v1535 = vadd.f32 %v1077, %v1469
  %v1536 = vadd.f32 %v1078, %v1471
  %v1537 = vadd.f32 %v1079, %v1521
  %v1538 = vadd.f32 %v1080, %v1475
  %v1539 = vadd.f32 %v1081, %v1477
  %v1540 = vadd.f32 %v1082, %v1526
  %v1541 = vadd.f32 %v1083, %v1479
  %v1542 = vadd.f32 %v1084, %v1481
  %v1543 = vadd.f32 %v1085, %v1529
  %v1544 = vld [vmem:[%s8] sm:$0x7]
  %v1546 = vlaneseq
  %v1547 = vshrl.u32 %v1546, 7
  %v1548 = vsub.s32 0, %v1547
  %v1549 = vrot.slane %v1544, %v1548
  %v1550 = vlaneseq
  %v1551 = vshrl.u32 %v1550, 7
  %v1552 = vsub.s32 1, %v1551
  %v1553 = vrot.slane %v1544, %v1552
  %v1554 = vlaneseq
  %v1555 = vshrl.u32 %v1554, 7
  %v1556 = vsub.s32 2, %v1555
  %v1557 = vrot.slane %v1544, %v1556
  %v1561 = vadd.f32 %v1532, %v1549
  %v1562 = vadd.f32 %v1533, %v1553
  %v1563 = vadd.f32 %v1534, %v1557
  %v1564 = vadd.f32 %v1535, %v1549
  %v1565 = vadd.f32 %v1536, %v1553
  %v1566 = vadd.f32 %v1537, %v1557
  %v1567 = vadd.f32 %v1538, %v1549
  %v1568 = vadd.f32 %v1539, %v1553
  %v1569 = vadd.f32 %v1540, %v1557
  %v1570 = vadd.f32 %v1541, %v1549
  %v1571 = vadd.f32 %v1542, %v1553
  %v1572 = vadd.f32 %v1543, %v1557
  %vm1573 = vcmp.ge.f32.partialorder %v1561, 0.0
  %vm1574 = vcmp.ge.f32.partialorder %v1562, 0.0
  %vm1575 = vcmp.ge.f32.partialorder %v1563, 0.0
  %vm1576 = vcmp.ge.f32.partialorder %v1564, 0.0
  %vm1577 = vcmp.ge.f32.partialorder %v1565, 0.0
  %vm1578 = vcmp.ge.f32.partialorder %v1566, 0.0
  %vm1579 = vcmp.ge.f32.partialorder %v1567, 0.0
  %vm1580 = vcmp.ge.f32.partialorder %v1568, 0.0
  %vm1581 = vcmp.ge.f32.partialorder %v1569, 0.0
  %vm1582 = vcmp.ge.f32.partialorder %v1570, 0.0
  %vm1583 = vcmp.ge.f32.partialorder %v1571, 0.0
  %vm1584 = vcmp.ge.f32.partialorder %v1572, 0.0
  %v1585 = vmul.f32 %v1561, 0.01
  %v1586 = vmul.f32 %v1562, 0.01
  %v1587 = vmul.f32 %v1563, 0.01
  %v1588 = vmul.f32 %v1564, 0.01
  %v1589 = vmul.f32 %v1565, 0.01
  %v1590 = vmul.f32 %v1566, 0.01
  %v1591 = vmul.f32 %v1567, 0.01
  %v1592 = vmul.f32 %v1568, 0.01
  %v1593 = vmul.f32 %v1569, 0.01
  %v1594 = vmul.f32 %v1570, 0.01
  %v1595 = vmul.f32 %v1571, 0.01
  %v1596 = vmul.f32 %v1572, 0.01
  %v1597 = vsel %vm1573, %v1561, %v1585
  %v1598 = vsel %vm1574, %v1562, %v1586
  %v1599 = vsel %vm1575, %v1563, %v1587
  %v1600 = vsel %vm1576, %v1564, %v1588
  %v1601 = vsel %vm1577, %v1565, %v1589
  %v1602 = vsel %vm1578, %v1566, %v1590
  %v1603 = vsel %vm1579, %v1567, %v1591
  %v1604 = vsel %vm1580, %v1568, %v1592
  %v1605 = vsel %vm1581, %v1569, %v1593
  %v1606 = vsel %vm1582, %v1570, %v1594
  %v1607 = vsel %vm1583, %v1571, %v1595
  %v1608 = vsel %vm1584, %v1572, %v1596
  %v1609 = vpack.c.bf16 %v1600, %v1597
  %v1610 = vpack.c.bf16 %v1601, %v1598
  %v1611 = vpack.c.bf16 %v1602, %v1599
  %v1612 = vpack.c.bf16 %v1606, %v1603
  %v1613 = vpack.c.bf16 %v1607, %v1604
  %v1614 = vpack.c.bf16 %v1608, %v1605
  %v1615 = vld [vmem:[%s9] sm:$0xff]
  %v1616 = vld [vmem:[%s9 + $0x8] sm:$0xff]
  %v1617 = vld [vmem:[%s9 + $0x10] sm:$0xff]
  %v1618 = vld [vmem:[%s9 + $0x18] sm:$0xff]
  %v1619 = vld [vmem:[%s9 + $0x20] sm:$0xff]
  %v1620 = vld [vmem:[%s9 + $0x28] sm:$0xff]
  %v1621 = vld [vmem:[%s9 + $0x30] sm:$0xff]
  %v1622 = vld [vmem:[%s9 + $0x38] sm:$0xff]
  %v1623 = vld [vmem:[%s9 + $0x40] sm:$0xff]
  %v1624 = vld [vmem:[%s9 + $0x48] sm:$0xff]
  %v1625 = vld [vmem:[%s9 + $0x50] sm:$0xff]
  %v1626 = vld [vmem:[%s9 + $0x58] sm:$0xff]
  %v1627 = vld [vmem:[%s9 + $0x60] sm:$0xff]
  %v1628 = vld [vmem:[%s9 + $0x68] sm:$0xff]
  %v1629 = vld [vmem:[%s9 + $0x70] sm:$0xff]
  %v1630 = vld [vmem:[%s9 + $0x78] sm:$0xff]
  %v1631 = vld [vmem:[%s9 + $0x80] sm:$0xff]
  %v1632 = vld [vmem:[%s9 + $0x88] sm:$0xff]
  %v1633 = vld [vmem:[%s9 + $0x90] sm:$0xff]
  %v1634 = vld [vmem:[%s9 + $0x98] sm:$0xff]
  %v1635 = vld [vmem:[%s9 + $0xa0] sm:$0xff]
  %v1636 = vld [vmem:[%s9 + $0xa8] sm:$0xff]
  %v1637 = vld [vmem:[%s9 + $0xb0] sm:$0xff]
  %v1638 = vld [vmem:[%s9 + $0xb8] sm:$0xff]
  %v1639 = vld [vmem:[%s9 + $0xc0] sm:$0xff]
  %v1640 = vld [vmem:[%s9 + $0xc8] sm:$0xff]
  %v1641 = vld [vmem:[%s9 + $0xd0] sm:$0xff]
  %v1642 = vld [vmem:[%s9 + $0xd8] sm:$0xff]
  %v1643 = vld [vmem:[%s9 + $0xe0] sm:$0xff]
  %v1644 = vld [vmem:[%s9 + $0xe8] sm:$0xff]
  %v1645 = vld [vmem:[%s9 + $0xf0] sm:$0xff]
  %v1646 = vld [vmem:[%s9 + $0xf8] sm:$0xff]
  %v1647 = vld [vmem:[%s9 + $0x100] sm:$0xff]
  %v1648 = vld [vmem:[%s9 + $0x108] sm:$0xff]
  %v1649 = vld [vmem:[%s9 + $0x110] sm:$0xff]
  %v1650 = vld [vmem:[%s9 + $0x118] sm:$0xff]
  %v1651 = vld [vmem:[%s9 + $0x120] sm:$0xff]
  %v1652 = vld [vmem:[%s9 + $0x128] sm:$0xff]
  %v1653 = vld [vmem:[%s9 + $0x130] sm:$0xff]
  %v1654 = vld [vmem:[%s9 + $0x138] sm:$0xff]
  %v1655 = vld [vmem:[%s9 + $0x140] sm:$0xff]
  %v1656 = vld [vmem:[%s9 + $0x148] sm:$0xff]
  %v1657 = vld [vmem:[%s9 + $0x150] sm:$0xff]
  %v1658 = vld [vmem:[%s9 + $0x158] sm:$0xff]
  %v1659 = vld [vmem:[%s9 + $0x160] sm:$0xff]
  %v1660 = vld [vmem:[%s9 + $0x168] sm:$0xff]
  %v1661 = vld [vmem:[%s9 + $0x170] sm:$0xff]
  %v1662 = vld [vmem:[%s9 + $0x178] sm:$0xff]
  %v1663 = vld [vmem:[%s10] sm:$0x3]
  %v1665 = vlaneseq
  %v1666 = vshrl.u32 %v1665, 7
  %v1667 = vsub.s32 0, %v1666
  %v1668 = vrot.slane %v1663, %v1667
  %v1669 = vlaneseq
  %v1670 = vshrl.u32 %v1669, 7
  %v1671 = vsub.s32 1, %v1670
  %v1672 = vrot.slane %v1663, %v1671
  %v1723 = vunpack.c.l.b16 %v1615
  %v1724 = vunpack.c.h.b16 %v1615
  %v1725 = vunpack.c.l.b16 %v1616
  %v1726 = vunpack.c.h.b16 %v1616
  %v1727 = vunpack.c.l.b16 %v1617
  %v1728 = vunpack.c.h.b16 %v1617
  %v1729 = vunpack.c.l.b16 %v1618
  %v1730 = vunpack.c.h.b16 %v1618
  %v1731 = vunpack.c.l.b16 %v1619
  %v1732 = vunpack.c.h.b16 %v1619
  %v1733 = vunpack.c.l.b16 %v1620
  %v1734 = vunpack.c.h.b16 %v1620
  %v1735 = vunpack.c.l.b16 %v1621
  %v1736 = vunpack.c.h.b16 %v1621
  %v1737 = vunpack.c.l.b16 %v1622
  %v1738 = vunpack.c.h.b16 %v1622
  %v1739 = vunpack.c.l.b16 %v1623
  %v1740 = vunpack.c.h.b16 %v1623
  %v1741 = vunpack.c.l.b16 %v1624
  %v1742 = vunpack.c.h.b16 %v1624
  %v1743 = vunpack.c.l.b16 %v1625
  %v1744 = vunpack.c.h.b16 %v1625
  %v1745 = vunpack.c.l.b16 %v1626
  %v1746 = vunpack.c.h.b16 %v1626
  %v1747 = vunpack.c.l.b16 %v1627
  %v1748 = vunpack.c.h.b16 %v1627
  %v1749 = vunpack.c.l.b16 %v1628
  %v1750 = vunpack.c.h.b16 %v1628
  %v1751 = vunpack.c.l.b16 %v1629
  %v1752 = vunpack.c.h.b16 %v1629
  %v1753 = vunpack.c.l.b16 %v1630
  %v1754 = vunpack.c.h.b16 %v1630
  %v1755 = vunpack.c.l.b16 %v1631
  %v1756 = vunpack.c.h.b16 %v1631
  %v1757 = vunpack.c.l.b16 %v1632
  %v1758 = vunpack.c.h.b16 %v1632
  %v1759 = vunpack.c.l.b16 %v1633
  %v1760 = vunpack.c.h.b16 %v1633
  %v1761 = vunpack.c.l.b16 %v1634
  %v1762 = vunpack.c.h.b16 %v1634
  %v1763 = vunpack.c.l.b16 %v1635
  %v1764 = vunpack.c.h.b16 %v1635
  %v1765 = vunpack.c.l.b16 %v1636
  %v1766 = vunpack.c.h.b16 %v1636
  %v1767 = vunpack.c.l.b16 %v1637
  %v1768 = vunpack.c.h.b16 %v1637
  %v1769 = vunpack.c.l.b16 %v1638
  %v1770 = vunpack.c.h.b16 %v1638
  %v1771 = vunpack.c.l.b16 %v1639
  %v1772 = vunpack.c.h.b16 %v1639
  %v1773 = vunpack.c.l.b16 %v1640
  %v1774 = vunpack.c.h.b16 %v1640
  %v1775 = vunpack.c.l.b16 %v1641
  %v1776 = vunpack.c.h.b16 %v1641
  %v1777 = vunpack.c.l.b16 %v1642
  %v1778 = vunpack.c.h.b16 %v1642
  %v1779 = vunpack.c.l.b16 %v1643
  %v1780 = vunpack.c.h.b16 %v1643
  %v1781 = vunpack.c.l.b16 %v1644
  %v1782 = vunpack.c.h.b16 %v1644
  %v1783 = vunpack.c.l.b16 %v1645
  %v1784 = vunpack.c.h.b16 %v1645
  %v1785 = vunpack.c.l.b16 %v1646
  %v1786 = vunpack.c.h.b16 %v1646
  %v1787 = vunpack.c.l.b16 %v1647
  %v1788 = vunpack.c.h.b16 %v1647
  %v1789 = vunpack.c.l.b16 %v1648
  %v1790 = vunpack.c.h.b16 %v1648
  %v1791 = vunpack.c.l.b16 %v1649
  %v1792 = vunpack.c.h.b16 %v1649
  %v1793 = vunpack.c.l.b16 %v1650
  %v1794 = vunpack.c.h.b16 %v1650
  %v1795 = vunpack.c.l.b16 %v1651
  %v1796 = vunpack.c.h.b16 %v1651
  %v1797 = vunpack.c.l.b16 %v1652
  %v1798 = vunpack.c.h.b16 %v1652
  %v1799 = vunpack.c.l.b16 %v1653
  %v1800 = vunpack.c.h.b16 %v1653
  %v1801 = vunpack.c.l.b16 %v1654
  %v1802 = vunpack.c.h.b16 %v1654
  %v1803 = vunpack.c.l.b16 %v1655
  %v1804 = vunpack.c.h.b16 %v1655
  %v1805 = vunpack.c.l.b16 %v1656
  %v1806 = vunpack.c.h.b16 %v1656
  %v1807 = vunpack.c.l.b16 %v1657
  %v1808 = vunpack.c.h.b16 %v1657
  %v1809 = vunpack.c.l.b16 %v1658
  %v1810 = vunpack.c.h.b16 %v1658
  %v1811 = vunpack.c.l.b16 %v1659
  %v1812 = vunpack.c.h.b16 %v1659
  %v1813 = vunpack.c.l.b16 %v1660
  %v1814 = vunpack.c.h.b16 %v1660
  %v1815 = vunpack.c.l.b16 %v1661
  %v1816 = vunpack.c.h.b16 %v1661
  %v1817 = vunpack.c.l.b16 %v1662
  %v1818 = vunpack.c.h.b16 %v1662
  %v1819 = vpack.c.b16 %v1725, %v1723
  %v1820 = vpack.c.b16 %v1726, %v1724
  %v1821 = vpack.c.b16 %v1729, %v1727
  %v1822 = vpack.c.b16 %v1730, %v1728
  %v1823 = vpack.c.b16 %v1733, %v1731
  %v1824 = vpack.c.b16 %v1734, %v1732
  %v1825 = vpack.c.b16 %v1737, %v1735
  %v1826 = vpack.c.b16 %v1738, %v1736
  %v1827 = vpack.c.b16 %v1741, %v1739
  %v1828 = vpack.c.b16 %v1742, %v1740
  %v1829 = vpack.c.b16 %v1745, %v1743
  %v1830 = vpack.c.b16 %v1746, %v1744
  %v1831 = vpack.c.b16 %v1749, %v1747
  %v1832 = vpack.c.b16 %v1750, %v1748
  %v1833 = vpack.c.b16 %v1753, %v1751
  %v1834 = vpack.c.b16 %v1754, %v1752
  %v1835 = vpack.c.b16 %v1757, %v1755
  %v1836 = vpack.c.b16 %v1758, %v1756
  %v1837 = vpack.c.b16 %v1761, %v1759
  %v1838 = vpack.c.b16 %v1762, %v1760
  %v1839 = vpack.c.b16 %v1765, %v1763
  %v1840 = vpack.c.b16 %v1766, %v1764
  %v1841 = vpack.c.b16 %v1769, %v1767
  %v1842 = vpack.c.b16 %v1770, %v1768
  %v1843 = vpack.c.b16 %v1773, %v1771
  %v1844 = vpack.c.b16 %v1774, %v1772
  %v1845 = vpack.c.b16 %v1777, %v1775
  %v1846 = vpack.c.b16 %v1778, %v1776
  %v1847 = vpack.c.b16 %v1781, %v1779
  %v1848 = vpack.c.b16 %v1782, %v1780
  %v1849 = vpack.c.b16 %v1785, %v1783
  %v1850 = vpack.c.b16 %v1786, %v1784
  %v1851 = vpack.c.b16 %v1789, %v1787
  %v1852 = vpack.c.b16 %v1790, %v1788
  %v1853 = vpack.c.b16 %v1793, %v1791
  %v1854 = vpack.c.b16 %v1794, %v1792
  %v1855 = vpack.c.b16 %v1797, %v1795
  %v1856 = vpack.c.b16 %v1798, %v1796
  %v1857 = vpack.c.b16 %v1801, %v1799
  %v1858 = vpack.c.b16 %v1802, %v1800
  %v1859 = vpack.c.b16 %v1805, %v1803
  %v1860 = vpack.c.b16 %v1806, %v1804
  %v1861 = vpack.c.b16 %v1809, %v1807
  %v1862 = vpack.c.b16 %v1810, %v1808
  %v1863 = vpack.c.b16 %v1813, %v1811
  %v1864 = vpack.c.b16 %v1814, %v1812
  %v1865 = vpack.c.b16 %v1817, %v1815
  %v1866 = vpack.c.b16 %v1818, %v1816
  %1915 = vmatprep.subr.bf16.mxu0 %v1834
  %1916 = vmatpush1.bf16.msra.mxu0 %v1833
  %1917 = vmatprep.subr.bf16.mxu0 %v1832
  %1918 = vmatpush1.bf16.msra.mxu0 %v1831
  %1919 = vmatprep.subr.bf16.mxu0 %v1830
  %1920 = vmatpush1.bf16.msra.mxu0 %v1829
  %1921 = vmatprep.subr.bf16.mxu0 %v1828
  %1922 = vmatpush1.bf16.msra.mxu0 %v1827
  %1923 = vmatprep.subr.bf16.mxu0 %v1826
  %1924 = vmatpush1.bf16.msra.mxu0 %v1825
  %1925 = vmatprep.subr.bf16.mxu0 %v1824
  %1926 = vmatpush1.bf16.msra.mxu0 %v1823
  %1927 = vmatprep.subr.bf16.mxu0 %v1822
  %1928 = vmatpush1.bf16.msra.mxu0 %v1821
  %1929 = vmatprep.subr.bf16.mxu0 %v1820
  %1930 = vmatpush1.bf16.msra.mxu0 %v1819
  %1931 = vmatprep.subr.bf16.mxu0 %v1850
  %1932 = vmatpush2.bf16.msra.mxu0 %v1849
  %1933 = vmatprep.subr.bf16.mxu0 %v1848
  %1934 = vmatpush2.bf16.msra.mxu0 %v1847
  %1935 = vmatprep.subr.bf16.mxu0 %v1846
  %1936 = vmatpush2.bf16.msra.mxu0 %v1845
  %1937 = vmatprep.subr.bf16.mxu0 %v1844
  %1938 = vmatpush2.bf16.msra.mxu0 %v1843
  %1939 = vmatprep.subr.bf16.mxu0 %v1842
  %1940 = vmatpush2.bf16.msra.mxu0 %v1841
  %1941 = vmatprep.subr.bf16.mxu0 %v1840
  %1942 = vmatpush2.bf16.msra.mxu0 %v1839
  %1943 = vmatprep.subr.bf16.mxu0 %v1838
  %1944 = vmatpush2.bf16.msra.mxu0 %v1837
  %1945 = vmatprep.subr.bf16.mxu0 %v1836
  %1946 = vmatpush2.bf16.msra.mxu0 %v1835
  %1947 = vmatprep.mubr.bf16.mxu0 %v1610
  %1948 = vmatmul.mubr.bf16.gmra.mxu0 %v1609
  %v1949 = vpop.f32.mrf.mxu0
  %v1950 = vadd.f32 %v1668, %v1949
  %v1951 = vpop.f32.mrf.mxu0
  %v1952 = vadd.f32 %v1672, %v1951
  %v1953 = vpop.f32.mrf.mxu0
  %v1954 = vadd.f32 %v1668, %v1953
  %v1955 = vpop.f32.mrf.mxu0
  %v1956 = vadd.f32 %v1672, %v1955
  %1957 = vmatprep.mubr.bf16.mxu0 %v1613
  %1958 = vmatmul.mubr.bf16.gmra.mxu0 %v1612
  %v1959 = vpop.f32.mrf.mxu0
  %v1960 = vadd.f32 %v1668, %v1959
  %v1961 = vpop.f32.mrf.mxu0
  %v1962 = vadd.f32 %v1672, %v1961
  %v1963 = vpop.f32.mrf.mxu0
  %v1964 = vadd.f32 %v1668, %v1963
  %v1965 = vpop.f32.mrf.mxu0
  %v1966 = vadd.f32 %v1672, %v1965
  %1967 = vdwg.mxu0
  %1968 = vmatprep.subr.bf16.mxu0 %v1866
  %1969 = vmatpush1.bf16.msra.mxu0 %v1865
  %1970 = vmatprep.subr.bf16.mxu0 %v1864
  %1971 = vmatpush1.bf16.msra.mxu0 %v1863
  %1972 = vmatprep.subr.bf16.mxu0 %v1862
  %1973 = vmatpush1.bf16.msra.mxu0 %v1861
  %1974 = vmatprep.subr.bf16.mxu0 %v1860
  %1975 = vmatpush1.bf16.msra.mxu0 %v1859
  %1976 = vmatprep.subr.bf16.mxu0 %v1858
  %1977 = vmatpush1.bf16.msra.mxu0 %v1857
  %1978 = vmatprep.subr.bf16.mxu0 %v1856
  %1979 = vmatpush1.bf16.msra.mxu0 %v1855
  %1980 = vmatprep.subr.bf16.mxu0 %v1854
  %1981 = vmatpush1.bf16.msra.mxu0 %v1853
  %1982 = vmatprep.subr.bf16.mxu0 %v1852
  %1983 = vmatpush1.bf16.msra.mxu0 %v1851
  %1984 = vmatprep.subr.bf16.mxu0 0
  %1985 = vmatpush2.bf16.msra.mxu0 0
  %1986 = vmatprep.subr.bf16.mxu0 0
  %1987 = vmatpush2.bf16.msra.mxu0 0
  %1988 = vmatprep.subr.bf16.mxu0 0
  %1989 = vmatpush2.bf16.msra.mxu0 0
  %1990 = vmatprep.subr.bf16.mxu0 0
  %1991 = vmatpush2.bf16.msra.mxu0 0
  %1992 = vmatprep.subr.bf16.mxu0 0
  %1993 = vmatpush2.bf16.msra.mxu0 0
  %1994 = vmatprep.subr.bf16.mxu0 0
  %1995 = vmatpush2.bf16.msra.mxu0 0
  %1996 = vmatprep.subr.bf16.mxu0 0
  %1997 = vmatpush2.bf16.msra.mxu0 0
  %1998 = vmatprep.subr.bf16.mxu0 0
  %1999 = vmatpush2.bf16.msra.mxu0 0
  %2000 = vmatprep.mubr.bf16.mxu0 0
  %2001 = vmatmul.mubr.bf16.gmra.mxu0 %v1611
  %v2002 = vpop.f32.mrf.mxu0
  %v2003 = vadd.f32 %v1950, %v2002
  %v2004 = vpop.f32.mrf.mxu0
  %v2005 = vadd.f32 %v1952, %v2004
  %v2006 = vpop.f32.mrf.mxu0
  %v2007 = vadd.f32 %v1954, %v2006
  %v2008 = vpop.f32.mrf.mxu0
  %v2009 = vadd.f32 %v1956, %v2008
  %2010 = vmatprep.mubr.bf16.mxu0 0
  %2011 = vmatmul.mubr.bf16.gmra.mxu0 %v1614
  %v2012 = vpop.f32.mrf.mxu0
  %v2013 = vadd.f32 %v1960, %v2012
  %v2014 = vpop.f32.mrf.mxu0
  %v2015 = vadd.f32 %v1962, %v2014
  %v2016 = vpop.f32.mrf.mxu0
  %v2017 = vadd.f32 %v1964, %v2016
  %v2018 = vpop.f32.mrf.mxu0
  %v2019 = vadd.f32 %v1966, %v2018
  %2020 = vdwg.mxu0
  %vm2021 = vcmp.ge.f32.partialorder %v2003, 0.0
  %vm2022 = vcmp.ge.f32.partialorder %v2005, 0.0
  %vm2023 = vcmp.ge.f32.partialorder %v2007, 0.0
  %vm2024 = vcmp.ge.f32.partialorder %v2009, 0.0
  %vm2025 = vcmp.ge.f32.partialorder %v2013, 0.0
  %vm2026 = vcmp.ge.f32.partialorder %v2015, 0.0
  %vm2027 = vcmp.ge.f32.partialorder %v2017, 0.0
  %vm2028 = vcmp.ge.f32.partialorder %v2019, 0.0
  %v2029 = vmul.f32 %v2003, 0.01
  %v2030 = vmul.f32 %v2005, 0.01
  %v2031 = vmul.f32 %v2007, 0.01
  %v2032 = vmul.f32 %v2009, 0.01
  %v2033 = vmul.f32 %v2013, 0.01
  %v2034 = vmul.f32 %v2015, 0.01
  %v2035 = vmul.f32 %v2017, 0.01
  %v2036 = vmul.f32 %v2019, 0.01
  %v2037 = vsel %vm2021, %v2003, %v2029
  %v2038 = vsel %vm2022, %v2005, %v2030
  %v2039 = vsel %vm2023, %v2007, %v2031
  %v2040 = vsel %vm2024, %v2009, %v2032
  %v2041 = vsel %vm2025, %v2013, %v2033
  %v2042 = vsel %vm2026, %v2015, %v2034
  %v2043 = vsel %vm2027, %v2017, %v2035
  %v2044 = vsel %vm2028, %v2019, %v2036
  %v2045 = vpack.c.bf16 %v2039, %v2037
  %v2046 = vpack.c.bf16 %v2040, %v2038
  %v2047 = vpack.c.bf16 %v2043, %v2041
  %v2048 = vpack.c.bf16 %v2044, %v2042
  %v2053 = vunpack.c.l.b16 %v2045
  %v2054 = vunpack.c.l.b16 %v2046
  %v2055 = vunpack.c.h.b16 %v2045
  %v2056 = vunpack.c.h.b16 %v2046
  %v2057 = vunpack.c.l.b16 %v2047
  %v2058 = vunpack.c.l.b16 %v2048
  %v2059 = vunpack.c.h.b16 %v2047
  %v2060 = vunpack.c.h.b16 %v2048
  %v2061 = vpack.c.b16 %v2054, %v2053
  %v2062 = vpack.c.b16 %v2056, %v2055
  %v2063 = vpack.c.b16 %v2058, %v2057
  %v2064 = vpack.c.b16 %v2060, %v2059
  %2069 = vst [vmem:[%s11] sm:$0xff] %v2061
  %2070 = vst [vmem:[%s11 + $0x8] sm:$0xff] %v2062
  %2071 = vst [vmem:[%s11 + $0x10] sm:$0xff] %v2063
  %2072 = vst [vmem:[%s11 + $0x18] sm:$0xff] %v2064
  // Predicated region
  $region46: #{edge_model_forward.8} parent=0 // pred_check
    _
  $region47: #{edge_model_forward.8} parent=0 // pred_check_branch
    %2074 = sbr.rel (0) target = $region49
  $region48: #{edge_model_forward.8} parent=0 // pred_region
    _
  $region49: #{edge_model_forward.8} parent=0 // pred_fallthru
    _
  // Predicated region
  $region50: #{edge_model_forward.8} parent=0 // pred_check
    _
  $region51: #{edge_model_forward.8} parent=0 // pred_check_branch
    %2076 = sbr.rel (0) target = $region53
  $region52: #{edge_model_forward.8} parent=0 // pred_region
    _
  $region53: #{edge_model_forward.8} parent=0 // pred_fallthru
    _

// kernel: edge_model_forward.9
$region0: #{edge_model_forward.9}
  #allocation0 [shape = 'u32[]', space=smem, size = 0x4, offset = 0x4, fixed_abs, tag = 'smem constant byte address 0x4 - core index']
  #allocation1 [shape = 'u32[144,128]{1,0:T(1,128)}', space=vmem, size = 0x12000, scoped, tag = 'internal scratch']
  %s0 = inlined_call_operand.vmem [shape: f32[2,778], index: 0, kind: input, shape index: {}]
  %s1 = inlined_call_operand.vmem [shape: f32[778,128], index: 1, kind: input, shape index: {}]
  %s2 = inlined_call_operand.vmem [shape: f32[1,128], index: 2, kind: input, shape index: {}]
  %s3 = inlined_call_operand.vmem [shape: f32[128,2], index: 3, kind: input, shape index: {}]
  %s4 = inlined_call_operand.vmem [shape: f32[1,2], index: 4, kind: input, shape index: {}]
  %s5 = inlined_call_operand.vmem [shape: f32[1,2], index: 5, kind: input, shape index: {}]
  %s6 = inlined_call_operand.vmem [shape: f32[1,2], index: 6, kind: input, shape index: {}]
  %s7 = inlined_call_operand.hbm [shape: f32[2,2], index: 7, kind: output, shape index: {}]
  %s8 = sld [smem:[#allocation0]]
  $region38: #{edge_model_forward.9} parent=0
    _
  %s10 = ssub.s32 1, %s8
  %s11 = scalar_select 0, %s10, %s8
  $region1: #{edge_model_forward.9} parent=0
    #allocation2 [shape = 'u8[1024]{0}', space=vmem, size = 0x400, scoped, tag = 'output window, operand 0, single buffered']
    #allocation3 [shape = 's32[1]{0}', space=sflag, size = 0x4, scoped, tag = 'scoped memory for edge_model_forward.9']
    %12 = vsyncpa [#allocation3], 0
    // Predicated region
    $region2: #{edge_model_forward.9} parent=1 // pred_check
      _
    $region3: #{edge_model_forward.9} parent=1 // pred_check_branch
      %14 = sbr.rel (0) target = $region5
    $region4: #{edge_model_forward.9} parent=1 // pred_region
      _
    $region5: #{edge_model_forward.9} parent=1 // pred_fallthru
      _
    // Predicated region
    $region6: #{edge_model_forward.9} parent=1 // pred_check
      _
    $region7: #{edge_model_forward.9} parent=1 // pred_check_branch
      %16 = sbr.rel (0) target = $region9
    $region8: #{edge_model_forward.9} parent=1 // pred_region
      _
    $region9: #{edge_model_forward.9} parent=1 // pred_fallthru
      _
    // Predicated region
    $region10: #{edge_model_forward.9} parent=1 // pred_check
      _
    $region11: #{edge_model_forward.9} parent=1 // pred_check_branch
      %18 = sbr.rel (0) target = $region13
    $region12: #{edge_model_forward.9} parent=1 // pred_region
      _
    $region13: #{edge_model_forward.9} parent=1 // pred_fallthru
      _
    // Predicated region
    $region14: #{edge_model_forward.9} parent=1 // pred_check
      _
    $region15: #{edge_model_forward.9} parent=1 // pred_check_branch
      %20 = sbr.rel (0) target = $region17
    $region16: #{edge_model_forward.9} parent=1 // pred_region
      _
    $region17: #{edge_model_forward.9} parent=1 // pred_fallthru
      _
    // Predicated region
    $region18: #{edge_model_forward.9} parent=1 // pred_check
      _
    $region19: #{edge_model_forward.9} parent=1 // pred_check_branch
      %22 = sbr.rel (0) target = $region21
    $region20: #{edge_model_forward.9} parent=1 // pred_region
      _
    $region21: #{edge_model_forward.9} parent=1 // pred_fallthru
      _
    // Predicated region
    $region22: #{edge_model_forward.9} parent=1 // pred_check
      _
    $region23: #{edge_model_forward.9} parent=1 // pred_check_branch
      %24 = sbr.rel (0) target = $region25
    $region24: #{edge_model_forward.9} parent=1 // pred_region
      _
    $region25: #{edge_model_forward.9} parent=1 // pred_fallthru
      _
    // Predicated region
    $region26: #{edge_model_forward.9} parent=1 // pred_check
      _
    $region27: #{edge_model_forward.9} parent=1 // pred_check_branch
      %26 = sbr.rel (0) target = $region29
    $region28: #{edge_model_forward.9} parent=1 // pred_region
      _
    $region29: #{edge_model_forward.9} parent=1 // pred_fallthru
      _
    %v27 = vld [vmem:[%s0] sm:$0xff]
    %v28 = vld [vmem:[%s0 + $0x8] sm:$0x3f]
    %v29 = vld [vmem:[%s1] sm:$0xff]
    %v30 = vld [vmem:[%s1 + $0x8] sm:$0xff]
    %v31 = vld [vmem:[%s1 + $0x10] sm:$0xff]
    %v32 = vld [vmem:[%s1 + $0x18] sm:$0xff]
    %v33 = vld [vmem:[%s1 + $0x20] sm:$0xff]
    %v34 = vld [vmem:[%s1 + $0x28] sm:$0xff]
    %v35 = vld [vmem:[%s1 + $0x30] sm:$0xff]
    %v36 = vld [vmem:[%s1 + $0x38] sm:$0xff]
    %v37 = vld [vmem:[%s1 + $0x40] sm:$0xff]
    %v38 = vld [vmem:[%s1 + $0x48] sm:$0xff]
    %v39 = vld [vmem:[%s1 + $0x50] sm:$0xff]
    %v40 = vld [vmem:[%s1 + $0x58] sm:$0xff]
    %v41 = vld [vmem:[%s1 + $0x60] sm:$0xff]
    %v42 = vld [vmem:[%s1 + $0x68] sm:$0xff]
    %v43 = vld [vmem:[%s1 + $0x70] sm:$0xff]
    %v44 = vld [vmem:[%s1 + $0x78] sm:$0xff]
    %v45 = vld [vmem:[%s1 + $0x80] sm:$0xff]
    %v46 = vld [vmem:[%s1 + $0x88] sm:$0xff]
    %v47 = vld [vmem:[%s1 + $0x90] sm:$0xff]
    %v48 = vld [vmem:[%s1 + $0x98] sm:$0xff]
    %v49 = vld [vmem:[%s1 + $0xa0] sm:$0xff]
    %v50 = vld [vmem:[%s1 + $0xa8] sm:$0xff]
    %v51 = vld [vmem:[%s1 + $0xb0] sm:$0xff]
    %v52 = vld [vmem:[%s1 + $0xb8] sm:$0xff]
    %v53 = vld [vmem:[%s1 + $0xc0] sm:$0xff]
    %v54 = vld [vmem:[%s1 + $0xc8] sm:$0xff]
    %v55 = vld [vmem:[%s1 + $0xd0] sm:$0xff]
    %v56 = vld [vmem:[%s1 + $0xd8] sm:$0xff]
    %v57 = vld [vmem:[%s1 + $0xe0] sm:$0xff]
    %v58 = vld [vmem:[%s1 + $0xe8] sm:$0xff]
    %v59 = vld [vmem:[%s1 + $0xf0] sm:$0xff]
    %v60 = vld [vmem:[%s1 + $0xf8] sm:$0xff]
    %v61 = vld [vmem:[%s1 + $0x100] sm:$0xff]
    %v62 = vld [vmem:[%s1 + $0x108] sm:$0xff]
    %v63 = vld [vmem:[%s1 + $0x110] sm:$0xff]
    %v64 = vld [vmem:[%s1 + $0x118] sm:$0xff]
    %v65 = vld [vmem:[%s1 + $0x120] sm:$0xff]
    %v66 = vld [vmem:[%s1 + $0x128] sm:$0xff]
    %v67 = vld [vmem:[%s1 + $0x130] sm:$0xff]
    %v68 = vld [vmem:[%s1 + $0x138] sm:$0xff]
    %v69 = vld [vmem:[%s1 + $0x140] sm:$0xff]
    %v70 = vld [vmem:[%s1 + $0x148] sm:$0xff]
    %v71 = vld [vmem:[%s1 + $0x150] sm:$0xff]
    %v72 = vld [vmem:[%s1 + $0x158] sm:$0xff]
    %v73 = vld [vmem:[%s1 + $0x160] sm:$0xff]
    %v74 = vld [vmem:[%s1 + $0x168] sm:$0xff]
    %v75 = vld [vmem:[%s1 + $0x170] sm:$0xff]
    %v76 = vld [vmem:[%s1 + $0x178] sm:$0xff]
    %v77 = vld [vmem:[%s1 + $0x180] sm:$0xff]
    %v78 = vld [vmem:[%s1 + $0x188] sm:$0xff]
    %v79 = vld [vmem:[%s1 + $0x190] sm:$0xff]
    %v80 = vld [vmem:[%s1 + $0x198] sm:$0xff]
    %v81 = vld [vmem:[%s1 + $0x1a0] sm:$0xff]
    %v82 = vld [vmem:[%s1 + $0x1a8] sm:$0xff]
    %v83 = vld [vmem:[%s1 + $0x1b0] sm:$0xff]
    %v84 = vld [vmem:[%s1 + $0x1b8] sm:$0xff]
    %v85 = vld [vmem:[%s1 + $0x1c0] sm:$0xff]
    %v86 = vld [vmem:[%s1 + $0x1c8] sm:$0xff]
    %v87 = vld [vmem:[%s1 + $0x1d0] sm:$0xff]
    %v88 = vld [vmem:[%s1 + $0x1d8] sm:$0xff]
    %v89 = vld [vmem:[%s1 + $0x1e0] sm:$0xff]
    %v90 = vld [vmem:[%s1 + $0x1e8] sm:$0xff]
    %v91 = vld [vmem:[%s1 + $0x1f0] sm:$0xff]
    %v92 = vld [vmem:[%s1 + $0x1f8] sm:$0xff]
    %v93 = vld [vmem:[%s1 + $0x200] sm:$0xff]
    %v94 = vld [vmem:[%s1 + $0x208] sm:$0xff]
    %v95 = vld [vmem:[%s1 + $0x210] sm:$0xff]
    %v96 = vld [vmem:[%s1 + $0x218] sm:$0xff]
    %v97 = vld [vmem:[%s1 + $0x220] sm:$0xff]
    %v98 = vld [vmem:[%s1 + $0x228] sm:$0xff]
    %v99 = vld [vmem:[%s1 + $0x230] sm:$0xff]
    %v100 = vld [vmem:[%s1 + $0x238] sm:$0xff]
    %v101 = vld [vmem:[%s1 + $0x240] sm:$0xff]
    %v102 = vld [vmem:[%s1 + $0x248] sm:$0xff]
    %v103 = vld [vmem:[%s1 + $0x250] sm:$0xff]
    %v104 = vld [vmem:[%s1 + $0x258] sm:$0xff]
    %v105 = vld [vmem:[%s1 + $0x260] sm:$0xff]
    %v106 = vld [vmem:[%s1 + $0x268] sm:$0xff]
    %v107 = vld [vmem:[%s1 + $0x270] sm:$0xff]
    %v108 = vld [vmem:[%s1 + $0x278] sm:$0xff]
    %v109 = vld [vmem:[%s1 + $0x280] sm:$0xff]
    %v110 = vld [vmem:[%s1 + $0x288] sm:$0xff]
    %v111 = vld [vmem:[%s1 + $0x290] sm:$0xff]
    %v112 = vld [vmem:[%s1 + $0x298] sm:$0xff]
    %v113 = vld [vmem:[%s1 + $0x2a0] sm:$0xff]
    %v114 = vld [vmem:[%s1 + $0x2a8] sm:$0xff]
    %v115 = vld [vmem:[%s1 + $0x2b0] sm:$0xff]
    %v116 = vld [vmem:[%s1 + $0x2b8] sm:$0xff]
    %v117 = vld [vmem:[%s1 + $0x2c0] sm:$0xff]
    %v118 = vld [vmem:[%s1 + $0x2c8] sm:$0xff]
    %v119 = vld [vmem:[%s1 + $0x2d0] sm:$0xff]
    %v120 = vld [vmem:[%s1 + $0x2d8] sm:$0xff]
    %v121 = vld [vmem:[%s1 + $0x2e0] sm:$0xff]
    %v122 = vld [vmem:[%s1 + $0x2e8] sm:$0xff]
    %v123 = vld [vmem:[%s1 + $0x2f0] sm:$0xff]
    %v124 = vld [vmem:[%s1 + $0x2f8] sm:$0xff]
    %v125 = vld [vmem:[%s1 + $0x300] sm:$0xff]
    %v126 = vld [vmem:[%s1 + $0x308] sm:$0x3]
    %v127 = vld [vmem:[%s2] sm:$0x1]
    %v129 = vlaneseq
    %v130 = vshrl.u32 %v129, 7
    %v131 = vsub.s32 0, %v130
    %v132 = vrot.slane %v127, %v131
    %v136 = vcombine.high %v27, %v27
    %v138 = vunpack.c.l.s4 1983009808
    %v139 = vunpack.c.0.s8 %v138
    %v140 = vlaneseq
    %v141 = vshrl.u32 %v140, 7
    %v142 = vsub.s32 %v139, %v141
    %v143 = vrot.slane %v27, %v142
    %v145 = vunpack.c.l.s4 1983009808
    %v146 = vunpack.c.0.s8 %v145
    %v147 = vlaneseq
    %v148 = vshrl.u32 %v147, 7
    %v149 = vsub.s32 %v146, %v148
    %v150 = vrot.slane %v136, %v149
    %v151 = vcombine.high %v143, %v143
    %v152 = vcombine.high %v150, %v150
    %v153 = vcombine.high %v28, %v28
    %v155 = vunpack.c.l.s4 1983009808
    %v156 = vunpack.c.0.s8 %v155
    %v157 = vlaneseq
    %v158 = vshrl.u32 %v157, 7
    %v159 = vsub.s32 %v156, %v158
    %v160 = vrot.slane %v28, %v159
    %v162 = vunpack.c.l.s4 1983009808
    %v163 = vunpack.c.0.s8 %v162
    %v164 = vlaneseq
    %v165 = vshrl.u32 %v164, 7
    %v166 = vsub.s32 %v163, %v165
    %v167 = vrot.slane %v153, %v166
    %v168 = vcombine.high %v160, %v160
    %vm175 = vcmask 80896
    %v176 = vsel %vm175, %v167, 0
    %vm178 = vcmask 1041408
    %v180 = vsel %vm178, %v126, 0
    %182 = vmatprep.subr.mxu0 0.0
    %183 = vmatpush1.msra.mxu0 %v44
    %184 = vmatprep.subr.mxu0 0.0
    %185 = vmatpush1.msra.mxu0 %v43
    %186 = vmatprep.subr.mxu0 0.0
    %187 = vmatpush1.msra.mxu0 %v42
    %188 = vmatprep.subr.mxu0 0.0
    %189 = vmatpush1.msra.mxu0 %v41
    %190 = vmatprep.subr.mxu0 0.0
    %191 = vmatpush1.msra.mxu0 %v40
    %192 = vmatprep.subr.mxu0 0.0
    %193 = vmatpush1.msra.mxu0 %v39
    %194 = vmatprep.subr.mxu0 0.0
    %195 = vmatpush1.msra.mxu0 %v38
    %196 = vmatprep.subr.mxu0 0.0
    %197 = vmatpush1.msra.mxu0 %v37
    %198 = vmatprep.subr.mxu0 0.0
    %199 = vmatpush1.msra.mxu0 %v36
    %200 = vmatprep.subr.mxu0 0.0
    %201 = vmatpush1.msra.mxu0 %v35
    %202 = vmatprep.subr.mxu0 0.0
    %203 = vmatpush1.msra.mxu0 %v34
    %204 = vmatprep.subr.mxu0 0.0
    %205 = vmatpush1.msra.mxu0 %v33
    %206 = vmatprep.subr.mxu0 0.0
    %207 = vmatpush1.msra.mxu0 %v32
    %208 = vmatprep.subr.mxu0 0.0
    %209 = vmatpush1.msra.mxu0 %v31
    %210 = vmatprep.subr.mxu0 0.0
    %211 = vmatpush1.msra.mxu0 %v30
    %212 = vmatprep.subr.mxu0 0.0
    %213 = vmatpush1.msra.mxu0 %v29
    %214 = vmatprep.subr.mxu0 0.0
    %215 = vmatpush2.msra.mxu0 %v60
    %216 = vmatprep.subr.mxu0 0.0
    %217 = vmatpush2.msra.mxu0 %v59
    %218 = vmatprep.subr.mxu0 0.0
    %219 = vmatpush2.msra.mxu0 %v58
    %220 = vmatprep.subr.mxu0 0.0
    %221 = vmatpush2.msra.mxu0 %v57
    %222 = vmatprep.subr.mxu0 0.0
    %223 = vmatpush2.msra.mxu0 %v56
    %224 = vmatprep.subr.mxu0 0.0
    %225 = vmatpush2.msra.mxu0 %v55
    %226 = vmatprep.subr.mxu0 0.0
    %227 = vmatpush2.msra.mxu0 %v54
    %228 = vmatprep.subr.mxu0 0.0
    %229 = vmatpush2.msra.mxu0 %v53
    %230 = vmatprep.subr.mxu0 0.0
    %231 = vmatpush2.msra.mxu0 %v52
    %232 = vmatprep.subr.mxu0 0.0
    %233 = vmatpush2.msra.mxu0 %v51
    %234 = vmatprep.subr.mxu0 0.0
    %235 = vmatpush2.msra.mxu0 %v50
    %236 = vmatprep.subr.mxu0 0.0
    %237 = vmatpush2.msra.mxu0 %v49
    %238 = vmatprep.subr.mxu0 0.0
    %239 = vmatpush2.msra.mxu0 %v48
    %240 = vmatprep.subr.mxu0 0.0
    %241 = vmatpush2.msra.mxu0 %v47
    %242 = vmatprep.subr.mxu0 0.0
    %243 = vmatpush2.msra.mxu0 %v46
    %244 = vmatprep.subr.mxu0 0.0
    %245 = vmatpush2.msra.mxu0 %v45
    %246 = vmatprep.mubr.f32.mxu0 %v151
    %247 = vmatmul.mubr.f32.gmra.mxu0 %v143
    %v248 = vpop.f32.mrf.mxu0
    %v249 = vadd.f32 %v132, %v248
    %v250 = vpop.f32.mrf.mxu0
    %251 = vdwg.mxu0
    %252 = vmatprep.subr.mxu0 0.0
    %253 = vmatpush1.msra.mxu0 %v76
    %254 = vmatprep.subr.mxu0 0.0
    %255 = vmatpush1.msra.mxu0 %v75
    %256 = vmatprep.subr.mxu0 0.0
    %257 = vmatpush1.msra.mxu0 %v74
    %258 = vmatprep.subr.mxu0 0.0
    %259 = vmatpush1.msra.mxu0 %v73
    %260 = vmatprep.subr.mxu0 0.0
    %261 = vmatpush1.msra.mxu0 %v72
    %262 = vmatprep.subr.mxu0 0.0
    %263 = vmatpush1.msra.mxu0 %v71
    %264 = vmatprep.subr.mxu0 0.0
    %265 = vmatpush1.msra.mxu0 %v70
    %266 = vmatprep.subr.mxu0 0.0
    %267 = vmatpush1.msra.mxu0 %v69
    %268 = vmatprep.subr.mxu0 0.0
    %269 = vmatpush1.msra.mxu0 %v68
    %270 = vmatprep.subr.mxu0 0.0
    %271 = vmatpush1.msra.mxu0 %v67
    %272 = vmatprep.subr.mxu0 0.0
    %273 = vmatpush1.msra.mxu0 %v66
    %274 = vmatprep.subr.mxu0 0.0
    %275 = vmatpush1.msra.mxu0 %v65
    %276 = vmatprep.subr.mxu0 0.0
    %277 = vmatpush1.msra.mxu0 %v64
    %278 = vmatprep.subr.mxu0 0.0
    %279 = vmatpush1.msra.mxu0 %v63
    %280 = vmatprep.subr.mxu0 0.0
    %281 = vmatpush1.msra.mxu0 %v62
    %282 = vmatprep.subr.mxu0 0.0
    %283 = vmatpush1.msra.mxu0 %v61
    %284 = vmatprep.subr.mxu0 0.0
    %285 = vmatpush2.msra.mxu0 %v92
    %286 = vmatprep.subr.mxu0 0.0
    %287 = vmatpush2.msra.mxu0 %v91
    %288 = vmatprep.subr.mxu0 0.0
    %289 = vmatpush2.msra.mxu0 %v90
    %290 = vmatprep.subr.mxu0 0.0
    %291 = vmatpush2.msra.mxu0 %v89
    %292 = vmatprep.subr.mxu0 0.0
    %293 = vmatpush2.msra.mxu0 %v88
    %294 = vmatprep.subr.mxu0 0.0
    %295 = vmatpush2.msra.mxu0 %v87
    %296 = vmatprep.subr.mxu0 0.0
    %297 = vmatpush2.msra.mxu0 %v86
    %298 = vmatprep.subr.mxu0 0.0
    %299 = vmatpush2.msra.mxu0 %v85
    %300 = vmatprep.subr.mxu0 0.0
    %301 = vmatpush2.msra.mxu0 %v84
    %302 = vmatprep.subr.mxu0 0.0
    %303 = vmatpush2.msra.mxu0 %v83
    %304 = vmatprep.subr.mxu0 0.0
    %305 = vmatpush2.msra.mxu0 %v82
    %306 = vmatprep.subr.mxu0 0.0
    %307 = vmatpush2.msra.mxu0 %v81
    %308 = vmatprep.subr.mxu0 0.0
    %309 = vmatpush2.msra.mxu0 %v80
    %310 = vmatprep.subr.mxu0 0.0
    %311 = vmatpush2.msra.mxu0 %v79
    %312 = vmatprep.subr.mxu0 0.0
    %313 = vmatpush2.msra.mxu0 %v78
    %314 = vmatprep.subr.mxu0 0.0
    %315 = vmatpush2.msra.mxu0 %v77
    %316 = vmatprep.mubr.f32.mxu0 %v152
    %317 = vmatmul.mubr.f32.gmra.mxu0 %v150
    %v318 = vpop.f32.mrf.mxu0
    %v319 = vadd.f32 %v249, %v318
    %v320 = vpop.f32.mrf.mxu0
    %321 = vdwg.mxu0
    %322 = vmatprep.subr.mxu0 0.0
    %323 = vmatpush1.msra.mxu0 %v108
    %324 = vmatprep.subr.mxu0 0.0
    %325 = vmatpush1.msra.mxu0 %v107
    %326 = vmatprep.subr.mxu0 0.0
    %327 = vmatpush1.msra.mxu0 %v106
    %328 = vmatprep.subr.mxu0 0.0
    %329 = vmatpush1.msra.mxu0 %v105
    %330 = vmatprep.subr.mxu0 0.0
    %331 = vmatpush1.msra.mxu0 %v104
    %332 = vmatprep.subr.mxu0 0.0
    %333 = vmatpush1.msra.mxu0 %v103
    %334 = vmatprep.subr.mxu0 0.0
    %335 = vmatpush1.msra.mxu0 %v102
    %336 = vmatprep.subr.mxu0 0.0
    %337 = vmatpush1.msra.mxu0 %v101
    %338 = vmatprep.subr.mxu0 0.0
    %339 = vmatpush1.msra.mxu0 %v100
    %340 = vmatprep.subr.mxu0 0.0
    %341 = vmatpush1.msra.mxu0 %v99
    %342 = vmatprep.subr.mxu0 0.0
    %343 = vmatpush1.msra.mxu0 %v98
    %344 = vmatprep.subr.mxu0 0.0
    %345 = vmatpush1.msra.mxu0 %v97
    %346 = vmatprep.subr.mxu0 0.0
    %347 = vmatpush1.msra.mxu0 %v96
    %348 = vmatprep.subr.mxu0 0.0
    %349 = vmatpush1.msra.mxu0 %v95
    %350 = vmatprep.subr.mxu0 0.0
    %351 = vmatpush1.msra.mxu0 %v94
    %352 = vmatprep.subr.mxu0 0.0
    %353 = vmatpush1.msra.mxu0 %v93
    %354 = vmatprep.subr.mxu0 0.0
    %355 = vmatpush2.msra.mxu0 %v124
    %356 = vmatprep.subr.mxu0 0.0
    %357 = vmatpush2.msra.mxu0 %v123
    %358 = vmatprep.subr.mxu0 0.0
    %359 = vmatpush2.msra.mxu0 %v122
    %360 = vmatprep.subr.mxu0 0.0
    %361 = vmatpush2.msra.mxu0 %v121
    %362 = vmatprep.subr.mxu0 0.0
    %363 = vmatpush2.msra.mxu0 %v120
    %364 = vmatprep.subr.mxu0 0.0
    %365 = vmatpush2.msra.mxu0 %v119
    %366 = vmatprep.subr.mxu0 0.0
    %367 = vmatpush2.msra.mxu0 %v118
    %368 = vmatprep.subr.mxu0 0.0
    %369 = vmatpush2.msra.mxu0 %v117
    %370 = vmatprep.subr.mxu0 0.0
    %371 = vmatpush2.msra.mxu0 %v116
    %372 = vmatprep.subr.mxu0 0.0
    %373 = vmatpush2.msra.mxu0 %v115
    %374 = vmatprep.subr.mxu0 0.0
    %375 = vmatpush2.msra.mxu0 %v114
    %376 = vmatprep.subr.mxu0 0.0
    %377 = vmatpush2.msra.mxu0 %v113
    %378 = vmatprep.subr.mxu0 0.0
    %379 = vmatpush2.msra.mxu0 %v112
    %380 = vmatprep.subr.mxu0 0.0
    %381 = vmatpush2.msra.mxu0 %v111
    %382 = vmatprep.subr.mxu0 0.0
    %383 = vmatpush2.msra.mxu0 %v110
    %384 = vmatprep.subr.mxu0 0.0
    %385 = vmatpush2.msra.mxu0 %v109
    %386 = vmatprep.mubr.f32.mxu0 %v168
    %387 = vmatmul.mubr.f32.gmra.mxu0 %v160
    %v388 = vpop.f32.mrf.mxu0
    %v389 = vadd.f32 %v319, %v388
    %v390 = vpop.f32.mrf.mxu0
    %391 = vdwg.mxu0
    %392 = vmatprep.subr.mxu0 0.0
    %393 = vmatpush1.msra.mxu0 0.0
    %394 = vmatprep.subr.mxu0 0.0
    %395 = vmatpush1.msra.mxu0 0.0
    %396 = vmatprep.subr.mxu0 0.0
    %397 = vmatpush1.msra.mxu0 0.0
    %398 = vmatprep.subr.mxu0 0.0
    %399 = vmatpush1.msra.mxu0 0.0
    %400 = vmatprep.subr.mxu0 0.0
    %401 = vmatpush1.msra.mxu0 0.0
    %402 = vmatprep.subr.mxu0 0.0
    %403 = vmatpush1.msra.mxu0 0.0
    %404 = vmatprep.subr.mxu0 0.0
    %405 = vmatpush1.msra.mxu0 0.0
    %406 = vmatprep.subr.mxu0 0.0
    %407 = vmatpush1.msra.mxu0 0.0
    %408 = vmatprep.subr.mxu0 0.0
    %409 = vmatpush1.msra.mxu0 0.0
    %410 = vmatprep.subr.mxu0 0.0
    %411 = vmatpush1.msra.mxu0 0.0
    %412 = vmatprep.subr.mxu0 0.0
    %413 = vmatpush1.msra.mxu0 0.0
    %414 = vmatprep.subr.mxu0 0.0
    %415 = vmatpush1.msra.mxu0 0.0
    %416 = vmatprep.subr.mxu0 0.0
    %417 = vmatpush1.msra.mxu0 0.0
    %418 = vmatprep.subr.mxu0 0.0
    %419 = vmatpush1.msra.mxu0 0.0
    %420 = vmatprep.subr.mxu0 0.0
    %421 = vmatpush1.msra.mxu0 %v180
    %422 = vmatprep.subr.mxu0 0.0
    %423 = vmatpush1.msra.mxu0 %v125
    %424 = vmatprep.subr.mxu0 0.0
    %425 = vmatpush2.msra.mxu0 0.0
    %426 = vmatprep.subr.mxu0 0.0
    %427 = vmatpush2.msra.mxu0 0.0
    %428 = vmatprep.subr.mxu0 0.0
    %429 = vmatpush2.msra.mxu0 0.0
    %430 = vmatprep.subr.mxu0 0.0
    %431 = vmatpush2.msra.mxu0 0.0
    %432 = vmatprep.subr.mxu0 0.0
    %433 = vmatpush2.msra.mxu0 0.0
    %434 = vmatprep.subr.mxu0 0.0
    %435 = vmatpush2.msra.mxu0 0.0
    %436 = vmatprep.subr.mxu0 0.0
    %437 = vmatpush2.msra.mxu0 0.0
    %438 = vmatprep.subr.mxu0 0.0
    %439 = vmatpush2.msra.mxu0 0.0
    %440 = vmatprep.subr.mxu0 0.0
    %441 = vmatpush2.msra.mxu0 0.0
    %442 = vmatprep.subr.mxu0 0.0
    %443 = vmatpush2.msra.mxu0 0.0
    %444 = vmatprep.subr.mxu0 0.0
    %445 = vmatpush2.msra.mxu0 0.0
    %446 = vmatprep.subr.mxu0 0.0
    %447 = vmatpush2.msra.mxu0 0.0
    %448 = vmatprep.subr.mxu0 0.0
    %449 = vmatpush2.msra.mxu0 0.0
    %450 = vmatprep.subr.mxu0 0.0
    %451 = vmatpush2.msra.mxu0 0.0
    %452 = vmatprep.subr.mxu0 0.0
    %453 = vmatpush2.msra.mxu0 0.0
    %454 = vmatprep.subr.mxu0 0.0
    %455 = vmatpush2.msra.mxu0 0.0
    %456 = vmatprep.mubr.f32.mxu0 0.0
    %457 = vmatmul.mubr.f32.gmra.mxu0 %v176
    %v458 = vpop.f32.mrf.mxu0
    %v459 = vadd.f32 %v389, %v458
    %v460 = vpop.f32.mrf.mxu0
    %461 = vdwg.mxu0
    %vm462 = vcmp.ge.f32.partialorder %v459, 0.0
    %v463 = vmul.f32 %v459, 0.01
    %v464 = vsel %vm462, %v459, %v463
    %v465 = vld [vmem:[%s3] sm:$0xff]
    %v466 = vld [vmem:[%s3 + $0x8] sm:$0xff]
    %v467 = vld [vmem:[%s3 + $0x10] sm:$0xff]
    %v468 = vld [vmem:[%s3 + $0x18] sm:$0xff]
    %v469 = vld [vmem:[%s3 + $0x20] sm:$0xff]
    %v470 = vld [vmem:[%s3 + $0x28] sm:$0xff]
    %v471 = vld [vmem:[%s3 + $0x30] sm:$0xff]
    %v472 = vld [vmem:[%s3 + $0x38] sm:$0xff]
    %v473 = vld [vmem:[%s3 + $0x40] sm:$0xff]
    %v474 = vld [vmem:[%s3 + $0x48] sm:$0xff]
    %v475 = vld [vmem:[%s3 + $0x50] sm:$0xff]
    %v476 = vld [vmem:[%s3 + $0x58] sm:$0xff]
    %v477 = vld [vmem:[%s3 + $0x60] sm:$0xff]
    %v478 = vld [vmem:[%s3 + $0x68] sm:$0xff]
    %v479 = vld [vmem:[%s3 + $0x70] sm:$0xff]
    %v480 = vld [vmem:[%s3 + $0x78] sm:$0xff]
    %v481 = vld [vmem:[%s4] sm:$0x1]
    %v483 = vlaneseq
    %v484 = vshrl.u32 %v483, 7
    %v485 = vsub.s32 0, %v484
    %v486 = vrot.slane %v481, %v485
    %488 = vmatprep.subr.mxu0 0.0
    %489 = vmatpush1.msra.mxu0 %v480
    %490 = vmatprep.subr.mxu0 0.0
    %491 = vmatpush1.msra.mxu0 %v479
    %492 = vmatprep.subr.mxu0 0.0
    %493 = vmatpush1.msra.mxu0 %v478
    %494 = vmatprep.subr.mxu0 0.0
    %495 = vmatpush1.msra.mxu0 %v477
    %496 = vmatprep.subr.mxu0 0.0
    %497 = vmatpush1.msra.mxu0 %v476
    %498 = vmatprep.subr.mxu0 0.0
    %499 = vmatpush1.msra.mxu0 %v475
    %500 = vmatprep.subr.mxu0 0.0
    %501 = vmatpush1.msra.mxu0 %v474
    %502 = vmatprep.subr.mxu0 0.0
    %503 = vmatpush1.msra.mxu0 %v473
    %504 = vmatprep.subr.mxu0 0.0
    %505 = vmatpush1.msra.mxu0 %v472
    %506 = vmatprep.subr.mxu0 0.0
    %507 = vmatpush1.msra.mxu0 %v471
    %508 = vmatprep.subr.mxu0 0.0
    %509 = vmatpush1.msra.mxu0 %v470
    %510 = vmatprep.subr.mxu0 0.0
    %511 = vmatpush1.msra.mxu0 %v469
    %512 = vmatprep.subr.mxu0 0.0
    %513 = vmatpush1.msra.mxu0 %v468
    %514 = vmatprep.subr.mxu0 0.0
    %515 = vmatpush1.msra.mxu0 %v467
    %516 = vmatprep.subr.mxu0 0.0
    %517 = vmatpush1.msra.mxu0 %v466
    %518 = vmatprep.subr.mxu0 0.0
    %519 = vmatpush1.msra.mxu0 %v465
    %520 = vmatprep.subr.mxu0 0.0
    %521 = vmatpush2.msra.mxu0 0.0
    %522 = vmatprep.subr.mxu0 0.0
    %523 = vmatpush2.msra.mxu0 0.0
    %524 = vmatprep.subr.mxu0 0.0
    %525 = vmatpush2.msra.mxu0 0.0
    %526 = vmatprep.subr.mxu0 0.0
    %527 = vmatpush2.msra.mxu0 0.0
    %528 = vmatprep.subr.mxu0 0.0
    %529 = vmatpush2.msra.mxu0 0.0
    %530 = vmatprep.subr.mxu0 0.0
    %531 = vmatpush2.msra.mxu0 0.0
    %532 = vmatprep.subr.mxu0 0.0
    %533 = vmatpush2.msra.mxu0 0.0
    %534 = vmatprep.subr.mxu0 0.0
    %535 = vmatpush2.msra.mxu0 0.0
    %536 = vmatprep.subr.mxu0 0.0
    %537 = vmatpush2.msra.mxu0 0.0
    %538 = vmatprep.subr.mxu0 0.0
    %539 = vmatpush2.msra.mxu0 0.0
    %540 = vmatprep.subr.mxu0 0.0
    %541 = vmatpush2.msra.mxu0 0.0
    %542 = vmatprep.subr.mxu0 0.0
    %543 = vmatpush2.msra.mxu0 0.0
    %544 = vmatprep.subr.mxu0 0.0
    %545 = vmatpush2.msra.mxu0 0.0
    %546 = vmatprep.subr.mxu0 0.0
    %547 = vmatpush2.msra.mxu0 0.0
    %548 = vmatprep.subr.mxu0 0.0
    %549 = vmatpush2.msra.mxu0 0.0
    %550 = vmatprep.subr.mxu0 0.0
    %551 = vmatpush2.msra.mxu0 0.0
    %552 = vmatprep.mubr.f32.mxu0 0.0
    %553 = vmatmul.mubr.f32.gmra.mxu0 %v464
    %v554 = vpop.f32.mrf.mxu0
    %v555 = vadd.f32 %v486, %v554
    %v556 = vpop.f32.mrf.mxu0
    %557 = vdwg.mxu0
    %vm558 = vcmask 9216
    %v559 = vsel %vm558, %v555, 0.0
    %v560 = vrot.slane %v559, 4
    %v561 = vadd.f32 %v559, %v560
    %v562 = vrot.slane %v561, 2
    %v563 = vadd.f32 %v561, %v562
    %v564 = vrot.slane %v563, 1
    %v565 = vadd.f32 %v563, %v564
    %v566 = vrcp.pop 2.0
    %v567 = vmul.f32 %v565, %v566
    %v568 = vsub.f32 %v555, %v567
    %v569 = vmul.f32 %v568, %v568
    %v570 = vsel %vm558, %v569, 0.0
    %v571 = vrot.slane %v570, 4
    %v572 = vadd.f32 %v570, %v571
    %v573 = vrot.slane %v572, 2
    %v574 = vadd.f32 %v572, %v573
    %v575 = vrot.slane %v574, 1
    %v576 = vadd.f32 %v574, %v575
    %v577 = vmul.f32 %v576, %v566
    %v578 = vadd.f32 %v577, 1e-05
    %v579 = vrsqrt.pop %v578
    %v580 = vmul.f32 %v568, %v579
    %v581 = vld [vmem:[%s5] sm:$0x1]
    %v583 = vlaneseq
    %v584 = vshrl.u32 %v583, 7
    %v585 = vsub.s32 0, %v584
    %v586 = vrot.slane %v581, %v585
    %v588 = vmul.f32 %v580, %v586
    %v589 = vld [vmem:[%s6] sm:$0x1]
    %v591 = vlaneseq
    %v592 = vshrl.u32 %v591, 7
    %v593 = vsub.s32 0, %v592
    %v594 = vrot.slane %v589, %v593
    %v596 = vadd.f32 %v588, %v594
    %vm597 = vcmp.ge.f32.partialorder %v596, 0.0
    %v598 = vmul.f32 %v596, 0.01
    %v599 = vsel %vm597, %v596, %v598
    %600 = vst.msk [vmem:[#allocation2] sm:$0x3] %vm558, %v599
    // Predicated region
    $region30: #{edge_model_forward.9} parent=1 // pred_check
      _
    $region31: #{edge_model_forward.9} parent=1 // pred_check_branch
      %602 = sbr.rel (0) target = $region33
    $region32: #{edge_model_forward.9} parent=1 // pred_region
      %s604 = ssub.s32 32, 32
      %605 = vsyncadd [#allocation3], %s604
      %s607 = sshll.u32 [#allocation2], 4
      %s608 = int_to_ptr.vmem [resolvable:$true] %s607
      %610 = dma.vmem_to_hbm [thread:$0]  %s608, 32, %s7, [#allocation3]
    $region33: #{edge_model_forward.9} parent=1 // pred_fallthru
      _
    // Predicated region
    $region34: #{edge_model_forward.9} parent=1 // pred_check
      _
    $region35: #{edge_model_forward.9} parent=1 // pred_check_branch
      %612 = sbr.rel (0) target = $region37
    $region36: #{edge_model_forward.9} parent=1 // pred_region
      %613 = dma.done [#allocation3], 32
    $region37: #{edge_model_forward.9} parent=1 // pred_fallthru
      _
    %614 = vsyncpa [#allocation3], 1

// kernel: edge_model_forward.6
$region0: #{edge_model_forward.6}
  #allocation0 [shape = 'u32[]', space=smem, size = 0x4, offset = 0x4, fixed_abs, tag = 'smem constant byte address 0x4 - core index']
  #allocation1 [shape = 'u32[144,128]{1,0:T(1,128)}', space=vmem, size = 0x12000, scoped, tag = 'internal scratch']
  %s0 = inlined_call_operand.vmem [shape: bf16[32,256], index: 0, kind: input, shape index: {}]
  %s1 = inlined_call_operand.vmem [shape: bf16[256,256], index: 1, kind: input, shape index: {}]
  %s2 = inlined_call_operand.vmem [shape: bf16[256,384], index: 2, kind: input, shape index: {}]
  %s3 = inlined_call_operand.vmem [shape: bf16[256,384], index: 3, kind: input, shape index: {}]
  %s4 = inlined_call_operand.vmem [shape: f32[1,384], index: 4, kind: input, shape index: {}]
  %s5 = inlined_call_operand.vmem [shape: bf16[384,256], index: 5, kind: input, shape index: {}]
  %s6 = inlined_call_operand.vmem [shape: f32[1,256], index: 6, kind: input, shape index: {}]
  %s7 = inlined_call_operand.vmem [shape: bf16[32,256], index: 7, kind: output, shape index: {}]
  %s8 = sld [smem:[#allocation0]]
  $region38: #{edge_model_forward.6} parent=0
    _
  %s10 = ssub.s32 1, %s8
  %s11 = scalar_select 0, %s10, %s8
  // Predicated region
  $region2: #{edge_model_forward.6} parent=0 // pred_check
    _
  $region3: #{edge_model_forward.6} parent=0 // pred_check_branch
    %13 = sbr.rel (0) target = $region5
  $region4: #{edge_model_forward.6} parent=0 // pred_region
    _
  $region5: #{edge_model_forward.6} parent=0 // pred_fallthru
    _
  // Predicated region
  $region6: #{edge_model_forward.6} parent=0 // pred_check
    _
  $region7: #{edge_model_forward.6} parent=0 // pred_check_branch
    %15 = sbr.rel (0) target = $region9
  $region8: #{edge_model_forward.6} parent=0 // pred_region
    _
  $region9: #{edge_model_forward.6} parent=0 // pred_fallthru
    _
  // Predicated region
  $region10: #{edge_model_forward.6} parent=0 // pred_check
    _
  $region11: #{edge_model_forward.6} parent=0 // pred_check_branch
    %17 = sbr.rel (0) target = $region13
  $region12: #{edge_model_forward.6} parent=0 // pred_region
    _
  $region13: #{edge_model_forward.6} parent=0 // pred_fallthru
    _
  // Predicated region
  $region14: #{edge_model_forward.6} parent=0 // pred_check
    _
  $region15: #{edge_model_forward.6} parent=0 // pred_check_branch
    %19 = sbr.rel (0) target = $region17
  $region16: #{edge_model_forward.6} parent=0 // pred_region
    _
  $region17: #{edge_model_forward.6} parent=0 // pred_fallthru
    _
  // Predicated region
  $region18: #{edge_model_forward.6} parent=0 // pred_check
    _
  $region19: #{edge_model_forward.6} parent=0 // pred_check_branch
    %21 = sbr.rel (0) target = $region21
  $region20: #{edge_model_forward.6} parent=0 // pred_region
    _
  $region21: #{edge_model_forward.6} parent=0 // pred_fallthru
    _
  // Predicated region
  $region22: #{edge_model_forward.6} parent=0 // pred_check
    _
  $region23: #{edge_model_forward.6} parent=0 // pred_check_branch
    %23 = sbr.rel (0) target = $region25
  $region24: #{edge_model_forward.6} parent=0 // pred_region
    _
  $region25: #{edge_model_forward.6} parent=0 // pred_fallthru
    _
  // Predicated region
  $region26: #{edge_model_forward.6} parent=0 // pred_check
    _
  $region27: #{edge_model_forward.6} parent=0 // pred_check_branch
    %25 = sbr.rel (0) target = $region29
  $region28: #{edge_model_forward.6} parent=0 // pred_region
    _
  $region29: #{edge_model_forward.6} parent=0 // pred_fallthru
    _
  %v27 = vld [vmem:[%s0] sm:$0xff]
  %v28 = vld [vmem:[%s0 + $0x8] sm:$0xff]
  %v29 = vld [vmem:[%s0 + $0x10] sm:$0xff]
  %v30 = vld [vmem:[%s0 + $0x18] sm:$0xff]
  %v31 = vld [vmem:[%s2] sm:$0xff]
  %v32 = vld [vmem:[%s2 + $0x8] sm:$0xf]
  %v33 = vld [vmem:[%s2 + $0xc] sm:$0xff]
  %v34 = vld [vmem:[%s2 + $0x14] sm:$0xf]
  %v35 = vld [vmem:[%s2 + $0x18] sm:$0xff]
  %v36 = vld [vmem:[%s2 + $0x20] sm:$0xf]
  %v37 = vld [vmem:[%s2 + $0x24] sm:$0xff]
  %v38 = vld [vmem:[%s2 + $0x2c] sm:$0xf]
  %v39 = vld [vmem:[%s2 + $0x30] sm:$0xff]
  %v40 = vld [vmem:[%s2 + $0x38] sm:$0xf]
  %v41 = vld [vmem:[%s2 + $0x3c] sm:$0xff]
  %v42 = vld [vmem:[%s2 + $0x44] sm:$0xf]
  %v43 = vld [vmem:[%s2 + $0x48] sm:$0xff]
  %v44 = vld [vmem:[%s2 + $0x50] sm:$0xf]
  %v45 = vld [vmem:[%s2 + $0x54] sm:$0xff]
  %v46 = vld [vmem:[%s2 + $0x5c] sm:$0xf]
  %v47 = vld [vmem:[%s2 + $0x60] sm:$0xff]
  %v48 = vld [vmem:[%s2 + $0x68] sm:$0xf]
  %v49 = vld [vmem:[%s2 + $0x6c] sm:$0xff]
  %v50 = vld [vmem:[%s2 + $0x74] sm:$0xf]
  %v51 = vld [vmem:[%s2 + $0x78] sm:$0xff]
  %v52 = vld [vmem:[%s2 + $0x80] sm:$0xf]
  %v53 = vld [vmem:[%s2 + $0x84] sm:$0xff]
  %v54 = vld [vmem:[%s2 + $0x8c] sm:$0xf]
  %v55 = vld [vmem:[%s2 + $0x90] sm:$0xff]
  %v56 = vld [vmem:[%s2 + $0x98] sm:$0xf]
  %v57 = vld [vmem:[%s2 + $0x9c] sm:$0xff]
  %v58 = vld [vmem:[%s2 + $0xa4] sm:$0xf]
  %v59 = vld [vmem:[%s2 + $0xa8] sm:$0xff]
  %v60 = vld [vmem:[%s2 + $0xb0] sm:$0xf]
  %v61 = vld [vmem:[%s2 + $0xb4] sm:$0xff]
  %v62 = vld [vmem:[%s2 + $0xbc] sm:$0xf]
  %v63 = vld [vmem:[%s2 + $0xc0] sm:$0xff]
  %v64 = vld [vmem:[%s2 + $0xc8] sm:$0xf]
  %v65 = vld [vmem:[%s2 + $0xcc] sm:$0xff]
  %v66 = vld [vmem:[%s2 + $0xd4] sm:$0xf]
  %v67 = vld [vmem:[%s2 + $0xd8] sm:$0xff]
  %v68 = vld [vmem:[%s2 + $0xe0] sm:$0xf]
  %v69 = vld [vmem:[%s2 + $0xe4] sm:$0xff]
  %v70 = vld [vmem:[%s2 + $0xec] sm:$0xf]
  %v71 = vld [vmem:[%s2 + $0xf0] sm:$0xff]
  %v72 = vld [vmem:[%s2 + $0xf8] sm:$0xf]
  %v73 = vld [vmem:[%s2 + $0xfc] sm:$0xff]
  %v74 = vld [vmem:[%s2 + $0x104] sm:$0xf]
  %v75 = vld [vmem:[%s2 + $0x108] sm:$0xff]
  %v76 = vld [vmem:[%s2 + $0x110] sm:$0xf]
  %v77 = vld [vmem:[%s2 + $0x114] sm:$0xff]
  %v78 = vld [vmem:[%s2 + $0x11c] sm:$0xf]
  %v79 = vld [vmem:[%s2 + $0x120] sm:$0xff]
  %v80 = vld [vmem:[%s2 + $0x128] sm:$0xf]
  %v81 = vld [vmem:[%s2 + $0x12c] sm:$0xff]
  %v82 = vld [vmem:[%s2 + $0x134] sm:$0xf]
  %v83 = vld [vmem:[%s2 + $0x138] sm:$0xff]
  %v84 = vld [vmem:[%s2 + $0x140] sm:$0xf]
  %v85 = vld [vmem:[%s2 + $0x144] sm:$0xff]
  %v86 = vld [vmem:[%s2 + $0x14c] sm:$0xf]
  %v87 = vld [vmem:[%s2 + $0x150] sm:$0xff]
  %v88 = vld [vmem:[%s2 + $0x158] sm:$0xf]
  %v89 = vld [vmem:[%s2 + $0x15c] sm:$0xff]
  %v90 = vld [vmem:[%s2 + $0x164] sm:$0xf]
  %v91 = vld [vmem:[%s2 + $0x168] sm:$0xff]
  %v92 = vld [vmem:[%s2 + $0x170] sm:$0xf]
  %v93 = vld [vmem:[%s2 + $0x174] sm:$0xff]
  %v94 = vld [vmem:[%s2 + $0x17c] sm:$0xf]
  %v95 = vld [vmem:[%s4] sm:$0x7]
  %v97 = vlaneseq
  %v98 = vshrl.u32 %v97, 7
  %v99 = vsub.s32 0, %v98
  %v100 = vrot.slane %v95, %v99
  %v101 = vlaneseq
  %v102 = vshrl.u32 %v101, 7
  %v103 = vsub.s32 1, %v102
  %v104 = vrot.slane %v95, %v103
  %v105 = vlaneseq
  %v106 = vshrl.u32 %v105, 7
  %v107 = vsub.s32 2, %v106
  %v108 = vrot.slane %v95, %v107
  %v116 = vunpack.c.l.b16 %v27
  %v117 = vunpack.c.h.b16 %v27
  %v118 = vunpack.c.l.b16 %v28
  %v119 = vunpack.c.h.b16 %v28
  %v120 = vunpack.c.l.b16 %v29
  %v121 = vunpack.c.h.b16 %v29
  %v122 = vunpack.c.l.b16 %v30
  %v123 = vunpack.c.h.b16 %v30
  %v124 = vpack.c.b16 %v118, %v116
  %v125 = vpack.c.b16 %v119, %v117
  %v126 = vpack.c.b16 %v122, %v120
  %v127 = vpack.c.b16 %v123, %v121
  %v196 = vunpack.c.l.b16 %v31
  %v197 = vunpack.c.h.b16 %v31
  %v198 = vunpack.c.l.b16 %v32
  %v199 = vunpack.c.l.b16 %v33
  %v200 = vunpack.c.h.b16 %v33
  %v201 = vunpack.c.l.b16 %v34
  %v202 = vunpack.c.l.b16 %v35
  %v203 = vunpack.c.h.b16 %v35
  %v204 = vunpack.c.l.b16 %v36
  %v205 = vunpack.c.l.b16 %v37
  %v206 = vunpack.c.h.b16 %v37
  %v207 = vunpack.c.l.b16 %v38
  %v208 = vunpack.c.l.b16 %v39
  %v209 = vunpack.c.h.b16 %v39
  %v210 = vunpack.c.l.b16 %v40
  %v211 = vunpack.c.l.b16 %v41
  %v212 = vunpack.c.h.b16 %v41
  %v213 = vunpack.c.l.b16 %v42
  %v214 = vunpack.c.l.b16 %v43
  %v215 = vunpack.c.h.b16 %v43
  %v216 = vunpack.c.l.b16 %v44
  %v217 = vunpack.c.l.b16 %v45
  %v218 = vunpack.c.h.b16 %v45
  %v219 = vunpack.c.l.b16 %v46
  %v220 = vunpack.c.l.b16 %v47
  %v221 = vunpack.c.h.b16 %v47
  %v222 = vunpack.c.l.b16 %v48
  %v223 = vunpack.c.l.b16 %v49
  %v224 = vunpack.c.h.b16 %v49
  %v225 = vunpack.c.l.b16 %v50
  %v226 = vunpack.c.l.b16 %v51
  %v227 = vunpack.c.h.b16 %v51
  %v228 = vunpack.c.l.b16 %v52
  %v229 = vunpack.c.l.b16 %v53
  %v230 = vunpack.c.h.b16 %v53
  %v231 = vunpack.c.l.b16 %v54
  %v232 = vunpack.c.l.b16 %v55
  %v233 = vunpack.c.h.b16 %v55
  %v234 = vunpack.c.l.b16 %v56
  %v235 = vunpack.c.l.b16 %v57
  %v236 = vunpack.c.h.b16 %v57
  %v237 = vunpack.c.l.b16 %v58
  %v238 = vunpack.c.l.b16 %v59
  %v239 = vunpack.c.h.b16 %v59
  %v240 = vunpack.c.l.b16 %v60
  %v241 = vunpack.c.l.b16 %v61
  %v242 = vunpack.c.h.b16 %v61
  %v243 = vunpack.c.l.b16 %v62
  %v244 = vunpack.c.l.b16 %v63
  %v245 = vunpack.c.h.b16 %v63
  %v246 = vunpack.c.l.b16 %v64
  %v247 = vunpack.c.l.b16 %v65
  %v248 = vunpack.c.h.b16 %v65
  %v249 = vunpack.c.l.b16 %v66
  %v250 = vunpack.c.l.b16 %v67
  %v251 = vunpack.c.h.b16 %v67
  %v252 = vunpack.c.l.b16 %v68
  %v253 = vunpack.c.l.b16 %v69
  %v254 = vunpack.c.h.b16 %v69
  %v255 = vunpack.c.l.b16 %v70
  %v256 = vunpack.c.l.b16 %v71
  %v257 = vunpack.c.h.b16 %v71
  %v258 = vunpack.c.l.b16 %v72
  %v259 = vunpack.c.l.b16 %v73
  %v260 = vunpack.c.h.b16 %v73
  %v261 = vunpack.c.l.b16 %v74
  %v262 = vunpack.c.l.b16 %v75
  %v263 = vunpack.c.h.b16 %v75
  %v264 = vunpack.c.l.b16 %v76
  %v265 = vunpack.c.l.b16 %v77
  %v266 = vunpack.c.h.b16 %v77
  %v267 = vunpack.c.l.b16 %v78
  %v268 = vunpack.c.l.b16 %v79
  %v269 = vunpack.c.h.b16 %v79
  %v270 = vunpack.c.l.b16 %v80
  %v271 = vunpack.c.l.b16 %v81
  %v272 = vunpack.c.h.b16 %v81
  %v273 = vunpack.c.l.b16 %v82
  %v274 = vunpack.c.l.b16 %v83
  %v275 = vunpack.c.h.b16 %v83
  %v276 = vunpack.c.l.b16 %v84
  %v277 = vunpack.c.l.b16 %v85
  %v278 = vunpack.c.h.b16 %v85
  %v279 = vunpack.c.l.b16 %v86
  %v280 = vunpack.c.l.b16 %v87
  %v281 = vunpack.c.h.b16 %v87
  %v282 = vunpack.c.l.b16 %v88
  %v283 = vunpack.c.l.b16 %v89
  %v284 = vunpack.c.h.b16 %v89
  %v285 = vunpack.c.l.b16 %v90
  %v286 = vunpack.c.l.b16 %v91
  %v287 = vunpack.c.h.b16 %v91
  %v288 = vunpack.c.l.b16 %v92
  %v289 = vunpack.c.l.b16 %v93
  %v290 = vunpack.c.h.b16 %v93
  %v291 = vunpack.c.l.b16 %v94
  %v292 = vpack.c.b16 %v199, %v196
  %v293 = vpack.c.b16 %v200, %v197
  %v294 = vpack.c.b16 %v201, %v198
  %v295 = vpack.c.b16 %v205, %v202
  %v296 = vpack.c.b16 %v206, %v203
  %v297 = vpack.c.b16 %v207, %v204
  %v298 = vpack.c.b16 %v211, %v208
  %v299 = vpack.c.b16 %v212, %v209
  %v300 = vpack.c.b16 %v213, %v210
  %v301 = vpack.c.b16 %v217, %v214
  %v302 = vpack.c.b16 %v218, %v215
  %v303 = vpack.c.b16 %v219, %v216
  %v304 = vpack.c.b16 %v223, %v220
  %v305 = vpack.c.b16 %v224, %v221
  %v306 = vpack.c.b16 %v225, %v222
  %v307 = vpack.c.b16 %v229, %v226
  %v308 = vpack.c.b16 %v230, %v227
  %v309 = vpack.c.b16 %v231, %v228
  %v310 = vpack.c.b16 %v235, %v232
  %v311 = vpack.c.b16 %v236, %v233
  %v312 = vpack.c.b16 %v237, %v234
  %v313 = vpack.c.b16 %v241, %v238
  %v314 = vpack.c.b16 %v242, %v239
  %v315 = vpack.c.b16 %v243, %v240
  %v316 = vpack.c.b16 %v247, %v244
  %v317 = vpack.c.b16 %v248, %v245
  %v318 = vpack.c.b16 %v249, %v246
  %v319 = vpack.c.b16 %v253, %v250
  %v320 = vpack.c.b16 %v254, %v251
  %v321 = vpack.c.b16 %v255, %v252
  %v322 = vpack.c.b16 %v259, %v256
  %v323 = vpack.c.b16 %v260, %v257
  %v324 = vpack.c.b16 %v261, %v258
  %v325 = vpack.c.b16 %v265, %v262
  %v326 = vpack.c.b16 %v266, %v263
  %v327 = vpack.c.b16 %v267, %v264
  %v328 = vpack.c.b16 %v271, %v268
  %v329 = vpack.c.b16 %v272, %v269
  %v330 = vpack.c.b16 %v273, %v270
  %v331 = vpack.c.b16 %v277, %v274
  %v332 = vpack.c.b16 %v278, %v275
  %v333 = vpack.c.b16 %v279, %v276
  %v334 = vpack.c.b16 %v283, %v280
  %v335 = vpack.c.b16 %v284, %v281
  %v336 = vpack.c.b16 %v285, %v282
  %v337 = vpack.c.b16 %v289, %v286
  %v338 = vpack.c.b16 %v290, %v287
  %v339 = vpack.c.b16 %v291, %v288
  %388 = vmatprep.subr.bf16.mxu0 %v314
  %389 = vmatpush1.bf16.msra.mxu0 %v313
  %390 = vmatprep.subr.bf16.mxu0 %v311
  %391 = vmatpush1.bf16.msra.mxu0 %v310
  %392 = vmatprep.subr.bf16.mxu0 %v308
  %393 = vmatpush1.bf16.msra.mxu0 %v307
  %394 = vmatprep.subr.bf16.mxu0 %v305
  %395 = vmatpush1.bf16.msra.mxu0 %v304
  %396 = vmatprep.subr.bf16.mxu0 %v302
  %397 = vmatpush1.bf16.msra.mxu0 %v301
  %398 = vmatprep.subr.bf16.mxu0 %v299
  %399 = vmatpush1.bf16.msra.mxu0 %v298
  %400 = vmatprep.subr.bf16.mxu0 %v296
  %401 = vmatpush1.bf16.msra.mxu0 %v295
  %402 = vmatprep.subr.bf16.mxu0 %v293
  %403 = vmatpush1.bf16.msra.mxu0 %v292
  %404 = vmatprep.subr.bf16.mxu0 %v338
  %405 = vmatpush2.bf16.msra.mxu0 %v337
  %406 = vmatprep.subr.bf16.mxu0 %v335
  %407 = vmatpush2.bf16.msra.mxu0 %v334
  %408 = vmatprep.subr.bf16.mxu0 %v332
  %409 = vmatpush2.bf16.msra.mxu0 %v331
  %410 = vmatprep.subr.bf16.mxu0 %v329
  %411 = vmatpush2.bf16.msra.mxu0 %v328
  %412 = vmatprep.subr.bf16.mxu0 %v326
  %413 = vmatpush2.bf16.msra.mxu0 %v325
  %414 = vmatprep.subr.bf16.mxu0 %v323
  %415 = vmatpush2.bf16.msra.mxu0 %v322
  %416 = vmatprep.subr.bf16.mxu0 %v320
  %417 = vmatpush2.bf16.msra.mxu0 %v319
  %418 = vmatprep.subr.bf16.mxu0 %v317
  %419 = vmatpush2.bf16.msra.mxu0 %v316
  %420 = vmatprep.mubr.bf16.mxu0 %v125
  %421 = vmatmul.mubr.bf16.gmra.mxu0 %v124
  %v422 = vpop.f32.mrf.mxu0
  %v423 = vadd.f32 %v100, %v422
  %v424 = vpop.f32.mrf.mxu0
  %v425 = vadd.f32 %v104, %v424
  %v426 = vpop.f32.mrf.mxu0
  %v427 = vadd.f32 %v100, %v426
  %v428 = vpop.f32.mrf.mxu0
  %v429 = vadd.f32 %v104, %v428
  %430 = vmatprep.mubr.bf16.mxu0 %v127
  %431 = vmatmul.mubr.bf16.gmra.mxu0 %v126
  %v432 = vpop.f32.mrf.mxu0
  %v433 = vadd.f32 %v100, %v432
  %v434 = vpop.f32.mrf.mxu0
  %v435 = vadd.f32 %v104, %v434
  %v436 = vpop.f32.mrf.mxu0
  %v437 = vadd.f32 %v100, %v436
  %v438 = vpop.f32.mrf.mxu0
  %v439 = vadd.f32 %v104, %v438
  %440 = vdwg.mxu0
  %441 = vmatprep.subr.bf16.mxu0 0
  %442 = vmatpush1.bf16.msra.mxu0 %v315
  %443 = vmatprep.subr.bf16.mxu0 0
  %444 = vmatpush1.bf16.msra.mxu0 %v312
  %445 = vmatprep.subr.bf16.mxu0 0
  %446 = vmatpush1.bf16.msra.mxu0 %v309
  %447 = vmatprep.subr.bf16.mxu0 0
  %448 = vmatpush1.bf16.msra.mxu0 %v306
  %449 = vmatprep.subr.bf16.mxu0 0
  %450 = vmatpush1.bf16.msra.mxu0 %v303
  %451 = vmatprep.subr.bf16.mxu0 0
  %452 = vmatpush1.bf16.msra.mxu0 %v300
  %453 = vmatprep.subr.bf16.mxu0 0
  %454 = vmatpush1.bf16.msra.mxu0 %v297
  %455 = vmatprep.subr.bf16.mxu0 0
  %456 = vmatpush1.bf16.msra.mxu0 %v294
  %457 = vmatprep.subr.bf16.mxu0 0
  %458 = vmatpush2.bf16.msra.mxu0 %v339
  %459 = vmatprep.subr.bf16.mxu0 0
  %460 = vmatpush2.bf16.msra.mxu0 %v336
  %461 = vmatprep.subr.bf16.mxu0 0
  %462 = vmatpush2.bf16.msra.mxu0 %v333
  %463 = vmatprep.subr.bf16.mxu0 0
  %464 = vmatpush2.bf16.msra.mxu0 %v330
  %465 = vmatprep.subr.bf16.mxu0 0
  %466 = vmatpush2.bf16.msra.mxu0 %v327
  %467 = vmatprep.subr.bf16.mxu0 0
  %468 = vmatpush2.bf16.msra.mxu0 %v324
  %469 = vmatprep.subr.bf16.mxu0 0
  %470 = vmatpush2.bf16.msra.mxu0 %v321
  %471 = vmatprep.subr.bf16.mxu0 0
  %472 = vmatpush2.bf16.msra.mxu0 %v318
  %473 = vmatprep.mubr.bf16.mxu0 %v125
  %474 = vmatmul.mubr.bf16.gmra.mxu0 %v124
  %v475 = vpop.f32.mrf.mxu0
  %v476 = vadd.f32 %v108, %v475
  %v477 = vpop.f32.mrf.mxu0
  %v478 = vpop.f32.mrf.mxu0
  %v479 = vadd.f32 %v108, %v478
  %v480 = vpop.f32.mrf.mxu0
  %481 = vmatprep.mubr.bf16.mxu0 %v127
  %482 = vmatmul.mubr.bf16.gmra.mxu0 %v126
  %v483 = vpop.f32.mrf.mxu0
  %v484 = vadd.f32 %v108, %v483
  %v485 = vpop.f32.mrf.mxu0
  %v486 = vpop.f32.mrf.mxu0
  %v487 = vadd.f32 %v108, %v486
  %v488 = vpop.f32.mrf.mxu0
  %489 = vdwg.mxu0
  %v490 = vld [vmem:[%s1] sm:$0xff]
  %v491 = vld [vmem:[%s1 + $0x8] sm:$0xff]
  %v492 = vld [vmem:[%s1 + $0x10] sm:$0xff]
  %v493 = vld [vmem:[%s1 + $0x18] sm:$0xff]
  %v494 = vld [vmem:[%s1 + $0x20] sm:$0xff]
  %v495 = vld [vmem:[%s1 + $0x28] sm:$0xff]
  %v496 = vld [vmem:[%s1 + $0x30] sm:$0xff]
  %v497 = vld [vmem:[%s1 + $0x38] sm:$0xff]
  %v498 = vld [vmem:[%s1 + $0x40] sm:$0xff]
  %v499 = vld [vmem:[%s1 + $0x48] sm:$0xff]
  %v500 = vld [vmem:[%s1 + $0x50] sm:$0xff]
  %v501 = vld [vmem:[%s1 + $0x58] sm:$0xff]
  %v502 = vld [vmem:[%s1 + $0x60] sm:$0xff]
  %v503 = vld [vmem:[%s1 + $0x68] sm:$0xff]
  %v504 = vld [vmem:[%s1 + $0x70] sm:$0xff]
  %v505 = vld [vmem:[%s1 + $0x78] sm:$0xff]
  %v506 = vld [vmem:[%s1 + $0x80] sm:$0xff]
  %v507 = vld [vmem:[%s1 + $0x88] sm:$0xff]
  %v508 = vld [vmem:[%s1 + $0x90] sm:$0xff]
  %v509 = vld [vmem:[%s1 + $0x98] sm:$0xff]
  %v510 = vld [vmem:[%s1 + $0xa0] sm:$0xff]
  %v511 = vld [vmem:[%s1 + $0xa8] sm:$0xff]
  %v512 = vld [vmem:[%s1 + $0xb0] sm:$0xff]
  %v513 = vld [vmem:[%s1 + $0xb8] sm:$0xff]
  %v514 = vld [vmem:[%s1 + $0xc0] sm:$0xff]
  %v515 = vld [vmem:[%s1 + $0xc8] sm:$0xff]
  %v516 = vld [vmem:[%s1 + $0xd0] sm:$0xff]
  %v517 = vld [vmem:[%s1 + $0xd8] sm:$0xff]
  %v518 = vld [vmem:[%s1 + $0xe0] sm:$0xff]
  %v519 = vld [vmem:[%s1 + $0xe8] sm:$0xff]
  %v520 = vld [vmem:[%s1 + $0xf0] sm:$0xff]
  %v521 = vld [vmem:[%s1 + $0xf8] sm:$0xff]
  %v522 = vld [vmem:[%s3] sm:$0xff]
  %v523 = vld [vmem:[%s3 + $0x8] sm:$0xf]
  %v524 = vld [vmem:[%s3 + $0xc] sm:$0xff]
  %v525 = vld [vmem:[%s3 + $0x14] sm:$0xf]
  %v526 = vld [vmem:[%s3 + $0x18] sm:$0xff]
  %v527 = vld [vmem:[%s3 + $0x20] sm:$0xf]
  %v528 = vld [vmem:[%s3 + $0x24] sm:$0xff]
  %v529 = vld [vmem:[%s3 + $0x2c] sm:$0xf]
  %v530 = vld [vmem:[%s3 + $0x30] sm:$0xff]
  %v531 = vld [vmem:[%s3 + $0x38] sm:$0xf]
  %v532 = vld [vmem:[%s3 + $0x3c] sm:$0xff]
  %v533 = vld [vmem:[%s3 + $0x44] sm:$0xf]
  %v534 = vld [vmem:[%s3 + $0x48] sm:$0xff]
  %v535 = vld [vmem:[%s3 + $0x50] sm:$0xf]
  %v536 = vld [vmem:[%s3 + $0x54] sm:$0xff]
  %v537 = vld [vmem:[%s3 + $0x5c] sm:$0xf]
  %v538 = vld [vmem:[%s3 + $0x60] sm:$0xff]
  %v539 = vld [vmem:[%s3 + $0x68] sm:$0xf]
  %v540 = vld [vmem:[%s3 + $0x6c] sm:$0xff]
  %v541 = vld [vmem:[%s3 + $0x74] sm:$0xf]
  %v542 = vld [vmem:[%s3 + $0x78] sm:$0xff]
  %v543 = vld [vmem:[%s3 + $0x80] sm:$0xf]
  %v544 = vld [vmem:[%s3 + $0x84] sm:$0xff]
  %v545 = vld [vmem:[%s3 + $0x8c] sm:$0xf]
  %v546 = vld [vmem:[%s3 + $0x90] sm:$0xff]
  %v547 = vld [vmem:[%s3 + $0x98] sm:$0xf]
  %v548 = vld [vmem:[%s3 + $0x9c] sm:$0xff]
  %v549 = vld [vmem:[%s3 + $0xa4] sm:$0xf]
  %v550 = vld [vmem:[%s3 + $0xa8] sm:$0xff]
  %v551 = vld [vmem:[%s3 + $0xb0] sm:$0xf]
  %v552 = vld [vmem:[%s3 + $0xb4] sm:$0xff]
  %v553 = vld [vmem:[%s3 + $0xbc] sm:$0xf]
  %v554 = vld [vmem:[%s3 + $0xc0] sm:$0xff]
  %v555 = vld [vmem:[%s3 + $0xc8] sm:$0xf]
  %v556 = vld [vmem:[%s3 + $0xcc] sm:$0xff]
  %v557 = vld [vmem:[%s3 + $0xd4] sm:$0xf]
  %v558 = vld [vmem:[%s3 + $0xd8] sm:$0xff]
  %v559 = vld [vmem:[%s3 + $0xe0] sm:$0xf]
  %v560 = vld [vmem:[%s3 + $0xe4] sm:$0xff]
  %v561 = vld [vmem:[%s3 + $0xec] sm:$0xf]
  %v562 = vld [vmem:[%s3 + $0xf0] sm:$0xff]
  %v563 = vld [vmem:[%s3 + $0xf8] sm:$0xf]
  %v564 = vld [vmem:[%s3 + $0xfc] sm:$0xff]
  %v565 = vld [vmem:[%s3 + $0x104] sm:$0xf]
  %v566 = vld [vmem:[%s3 + $0x108] sm:$0xff]
  %v567 = vld [vmem:[%s3 + $0x110] sm:$0xf]
  %v568 = vld [vmem:[%s3 + $0x114] sm:$0xff]
  %v569 = vld [vmem:[%s3 + $0x11c] sm:$0xf]
  %v570 = vld [vmem:[%s3 + $0x120] sm:$0xff]
  %v571 = vld [vmem:[%s3 + $0x128] sm:$0xf]
  %v572 = vld [vmem:[%s3 + $0x12c] sm:$0xff]
  %v573 = vld [vmem:[%s3 + $0x134] sm:$0xf]
  %v574 = vld [vmem:[%s3 + $0x138] sm:$0xff]
  %v575 = vld [vmem:[%s3 + $0x140] sm:$0xf]
  %v576 = vld [vmem:[%s3 + $0x144] sm:$0xff]
  %v577 = vld [vmem:[%s3 + $0x14c] sm:$0xf]
  %v578 = vld [vmem:[%s3 + $0x150] sm:$0xff]
  %v579 = vld [vmem:[%s3 + $0x158] sm:$0xf]
  %v580 = vld [vmem:[%s3 + $0x15c] sm:$0xff]
  %v581 = vld [vmem:[%s3 + $0x164] sm:$0xf]
  %v582 = vld [vmem:[%s3 + $0x168] sm:$0xff]
  %v583 = vld [vmem:[%s3 + $0x170] sm:$0xf]
  %v584 = vld [vmem:[%s3 + $0x174] sm:$0xff]
  %v585 = vld [vmem:[%s3 + $0x17c] sm:$0xf]
  %v618 = vunpack.c.l.b16 %v490
  %v619 = vunpack.c.h.b16 %v490
  %v620 = vunpack.c.l.b16 %v491
  %v621 = vunpack.c.h.b16 %v491
  %v622 = vunpack.c.l.b16 %v492
  %v623 = vunpack.c.h.b16 %v492
  %v624 = vunpack.c.l.b16 %v493
  %v625 = vunpack.c.h.b16 %v493
  %v626 = vunpack.c.l.b16 %v494
  %v627 = vunpack.c.h.b16 %v494
  %v628 = vunpack.c.l.b16 %v495
  %v629 = vunpack.c.h.b16 %v495
  %v630 = vunpack.c.l.b16 %v496
  %v631 = vunpack.c.h.b16 %v496
  %v632 = vunpack.c.l.b16 %v497
  %v633 = vunpack.c.h.b16 %v497
  %v634 = vunpack.c.l.b16 %v498
  %v635 = vunpack.c.h.b16 %v498
  %v636 = vunpack.c.l.b16 %v499
  %v637 = vunpack.c.h.b16 %v499
  %v638 = vunpack.c.l.b16 %v500
  %v639 = vunpack.c.h.b16 %v500
  %v640 = vunpack.c.l.b16 %v501
  %v641 = vunpack.c.h.b16 %v501
  %v642 = vunpack.c.l.b16 %v502
  %v643 = vunpack.c.h.b16 %v502
  %v644 = vunpack.c.l.b16 %v503
  %v645 = vunpack.c.h.b16 %v503
  %v646 = vunpack.c.l.b16 %v504
  %v647 = vunpack.c.h.b16 %v504
  %v648 = vunpack.c.l.b16 %v505
  %v649 = vunpack.c.h.b16 %v505
  %v650 = vunpack.c.l.b16 %v506
  %v651 = vunpack.c.h.b16 %v506
  %v652 = vunpack.c.l.b16 %v507
  %v653 = vunpack.c.h.b16 %v507
  %v654 = vunpack.c.l.b16 %v508
  %v655 = vunpack.c.h.b16 %v508
  %v656 = vunpack.c.l.b16 %v509
  %v657 = vunpack.c.h.b16 %v509
  %v658 = vunpack.c.l.b16 %v510
  %v659 = vunpack.c.h.b16 %v510
  %v660 = vunpack.c.l.b16 %v511
  %v661 = vunpack.c.h.b16 %v511
  %v662 = vunpack.c.l.b16 %v512
  %v663 = vunpack.c.h.b16 %v512
  %v664 = vunpack.c.l.b16 %v513
  %v665 = vunpack.c.h.b16 %v513
  %v666 = vunpack.c.l.b16 %v514
  %v667 = vunpack.c.h.b16 %v514
  %v668 = vunpack.c.l.b16 %v515
  %v669 = vunpack.c.h.b16 %v515
  %v670 = vunpack.c.l.b16 %v516
  %v671 = vunpack.c.h.b16 %v516
  %v672 = vunpack.c.l.b16 %v517
  %v673 = vunpack.c.h.b16 %v517
  %v674 = vunpack.c.l.b16 %v518
  %v675 = vunpack.c.h.b16 %v518
  %v676 = vunpack.c.l.b16 %v519
  %v677 = vunpack.c.h.b16 %v519
  %v678 = vunpack.c.l.b16 %v520
  %v679 = vunpack.c.h.b16 %v520
  %v680 = vunpack.c.l.b16 %v521
  %v681 = vunpack.c.h.b16 %v521
  %v682 = vpack.c.b16 %v620, %v618
  %v683 = vpack.c.b16 %v621, %v619
  %v684 = vpack.c.b16 %v624, %v622
  %v685 = vpack.c.b16 %v625, %v623
  %v686 = vpack.c.b16 %v628, %v626
  %v687 = vpack.c.b16 %v629, %v627
  %v688 = vpack.c.b16 %v632, %v630
  %v689 = vpack.c.b16 %v633, %v631
  %v690 = vpack.c.b16 %v636, %v634
  %v691 = vpack.c.b16 %v637, %v635
  %v692 = vpack.c.b16 %v640, %v638
  %v693 = vpack.c.b16 %v641, %v639
  %v694 = vpack.c.b16 %v644, %v642
  %v695 = vpack.c.b16 %v645, %v643
  %v696 = vpack.c.b16 %v648, %v646
  %v697 = vpack.c.b16 %v649, %v647
  %v698 = vpack.c.b16 %v652, %v650
  %v699 = vpack.c.b16 %v653, %v651
  %v700 = vpack.c.b16 %v656, %v654
  %v701 = vpack.c.b16 %v657, %v655
  %v702 = vpack.c.b16 %v660, %v658
  %v703 = vpack.c.b16 %v661, %v659
  %v704 = vpack.c.b16 %v664, %v662
  %v705 = vpack.c.b16 %v665, %v663
  %v706 = vpack.c.b16 %v668, %v666
  %v707 = vpack.c.b16 %v669, %v667
  %v708 = vpack.c.b16 %v672, %v670
  %v709 = vpack.c.b16 %v673, %v671
  %v710 = vpack.c.b16 %v676, %v674
  %v711 = vpack.c.b16 %v677, %v675
  %v712 = vpack.c.b16 %v680, %v678
  %v713 = vpack.c.b16 %v681, %v679
  %v810 = vunpack.c.l.b16 %v522
  %v811 = vunpack.c.h.b16 %v522
  %v812 = vunpack.c.l.b16 %v523
  %v813 = vunpack.c.l.b16 %v524
  %v814 = vunpack.c.h.b16 %v524
  %v815 = vunpack.c.l.b16 %v525
  %v816 = vunpack.c.l.b16 %v526
  %v817 = vunpack.c.h.b16 %v526
  %v818 = vunpack.c.l.b16 %v527
  %v819 = vunpack.c.l.b16 %v528
  %v820 = vunpack.c.h.b16 %v528
  %v821 = vunpack.c.l.b16 %v529
  %v822 = vunpack.c.l.b16 %v530
  %v823 = vunpack.c.h.b16 %v530
  %v824 = vunpack.c.l.b16 %v531
  %v825 = vunpack.c.l.b16 %v532
  %v826 = vunpack.c.h.b16 %v532
  %v827 = vunpack.c.l.b16 %v533
  %v828 = vunpack.c.l.b16 %v534
  %v829 = vunpack.c.h.b16 %v534
  %v830 = vunpack.c.l.b16 %v535
  %v831 = vunpack.c.l.b16 %v536
  %v832 = vunpack.c.h.b16 %v536
  %v833 = vunpack.c.l.b16 %v537
  %v834 = vunpack.c.l.b16 %v538
  %v835 = vunpack.c.h.b16 %v538
  %v836 = vunpack.c.l.b16 %v539
  %v837 = vunpack.c.l.b16 %v540
  %v838 = vunpack.c.h.b16 %v540
  %v839 = vunpack.c.l.b16 %v541
  %v840 = vunpack.c.l.b16 %v542
  %v841 = vunpack.c.h.b16 %v542
  %v842 = vunpack.c.l.b16 %v543
  %v843 = vunpack.c.l.b16 %v544
  %v844 = vunpack.c.h.b16 %v544
  %v845 = vunpack.c.l.b16 %v545
  %v846 = vunpack.c.l.b16 %v546
  %v847 = vunpack.c.h.b16 %v546
  %v848 = vunpack.c.l.b16 %v547
  %v849 = vunpack.c.l.b16 %v548
  %v850 = vunpack.c.h.b16 %v548
  %v851 = vunpack.c.l.b16 %v549
  %v852 = vunpack.c.l.b16 %v550
  %v853 = vunpack.c.h.b16 %v550
  %v854 = vunpack.c.l.b16 %v551
  %v855 = vunpack.c.l.b16 %v552
  %v856 = vunpack.c.h.b16 %v552
  %v857 = vunpack.c.l.b16 %v553
  %v858 = vunpack.c.l.b16 %v554
  %v859 = vunpack.c.h.b16 %v554
  %v860 = vunpack.c.l.b16 %v555
  %v861 = vunpack.c.l.b16 %v556
  %v862 = vunpack.c.h.b16 %v556
  %v863 = vunpack.c.l.b16 %v557
  %v864 = vunpack.c.l.b16 %v558
  %v865 = vunpack.c.h.b16 %v558
  %v866 = vunpack.c.l.b16 %v559
  %v867 = vunpack.c.l.b16 %v560
  %v868 = vunpack.c.h.b16 %v560
  %v869 = vunpack.c.l.b16 %v561
  %v870 = vunpack.c.l.b16 %v562
  %v871 = vunpack.c.h.b16 %v562
  %v872 = vunpack.c.l.b16 %v563
  %v873 = vunpack.c.l.b16 %v564
  %v874 = vunpack.c.h.b16 %v564
  %v875 = vunpack.c.l.b16 %v565
  %v876 = vunpack.c.l.b16 %v566
  %v877 = vunpack.c.h.b16 %v566
  %v878 = vunpack.c.l.b16 %v567
  %v879 = vunpack.c.l.b16 %v568
  %v880 = vunpack.c.h.b16 %v568
  %v881 = vunpack.c.l.b16 %v569
  %v882 = vunpack.c.l.b16 %v570
  %v883 = vunpack.c.h.b16 %v570
  %v884 = vunpack.c.l.b16 %v571
  %v885 = vunpack.c.l.b16 %v572
  %v886 = vunpack.c.h.b16 %v572
  %v887 = vunpack.c.l.b16 %v573
  %v888 = vunpack.c.l.b16 %v574
  %v889 = vunpack.c.h.b16 %v574
  %v890 = vunpack.c.l.b16 %v575
  %v891 = vunpack.c.l.b16 %v576
  %v892 = vunpack.c.h.b16 %v576
  %v893 = vunpack.c.l.b16 %v577
  %v894 = vunpack.c.l.b16 %v578
  %v895 = vunpack.c.h.b16 %v578
  %v896 = vunpack.c.l.b16 %v579
  %v897 = vunpack.c.l.b16 %v580
  %v898 = vunpack.c.h.b16 %v580
  %v899 = vunpack.c.l.b16 %v581
  %v900 = vunpack.c.l.b16 %v582
  %v901 = vunpack.c.h.b16 %v582
  %v902 = vunpack.c.l.b16 %v583
  %v903 = vunpack.c.l.b16 %v584
  %v904 = vunpack.c.h.b16 %v584
  %v905 = vunpack.c.l.b16 %v585
  %v906 = vpack.c.b16 %v813, %v810
  %v907 = vpack.c.b16 %v814, %v811
  %v908 = vpack.c.b16 %v815, %v812
  %v909 = vpack.c.b16 %v819, %v816
  %v910 = vpack.c.b16 %v820, %v817
  %v911 = vpack.c.b16 %v821, %v818
  %v912 = vpack.c.b16 %v825, %v822
  %v913 = vpack.c.b16 %v826, %v823
  %v914 = vpack.c.b16 %v827, %v824
  %v915 = vpack.c.b16 %v831, %v828
  %v916 = vpack.c.b16 %v832, %v829
  %v917 = vpack.c.b16 %v833, %v830
  %v918 = vpack.c.b16 %v837, %v834
  %v919 = vpack.c.b16 %v838, %v835
  %v920 = vpack.c.b16 %v839, %v836
  %v921 = vpack.c.b16 %v843, %v840
  %v922 = vpack.c.b16 %v844, %v841
  %v923 = vpack.c.b16 %v845, %v842
  %v924 = vpack.c.b16 %v849, %v846
  %v925 = vpack.c.b16 %v850, %v847
  %v926 = vpack.c.b16 %v851, %v848
  %v927 = vpack.c.b16 %v855, %v852
  %v928 = vpack.c.b16 %v856, %v853
  %v929 = vpack.c.b16 %v857, %v854
  %v930 = vpack.c.b16 %v861, %v858
  %v931 = vpack.c.b16 %v862, %v859
  %v932 = vpack.c.b16 %v863, %v860
  %v933 = vpack.c.b16 %v867, %v864
  %v934 = vpack.c.b16 %v868, %v865
  %v935 = vpack.c.b16 %v869, %v866
  %v936 = vpack.c.b16 %v873, %v870
  %v937 = vpack.c.b16 %v874, %v871
  %v938 = vpack.c.b16 %v875, %v872
  %v939 = vpack.c.b16 %v879, %v876
  %v940 = vpack.c.b16 %v880, %v877
  %v941 = vpack.c.b16 %v881, %v878
  %v942 = vpack.c.b16 %v885, %v882
  %v943 = vpack.c.b16 %v886, %v883
  %v944 = vpack.c.b16 %v887, %v884
  %v945 = vpack.c.b16 %v891, %v888
  %v946 = vpack.c.b16 %v892, %v889
  %v947 = vpack.c.b16 %v893, %v890
  %v948 = vpack.c.b16 %v897, %v894
  %v949 = vpack.c.b16 %v898, %v895
  %v950 = vpack.c.b16 %v899, %v896
  %v951 = vpack.c.b16 %v903, %v900
  %v952 = vpack.c.b16 %v904, %v901
  %v953 = vpack.c.b16 %v905, %v902
  %1002 = vmatprep.subr.bf16.mxu0 %v928
  %1003 = vmatpush1.bf16.msra.mxu0 %v927
  %1004 = vmatprep.subr.bf16.mxu0 %v925
  %1005 = vmatpush1.bf16.msra.mxu0 %v924
  %1006 = vmatprep.subr.bf16.mxu0 %v922
  %1007 = vmatpush1.bf16.msra.mxu0 %v921
  %1008 = vmatprep.subr.bf16.mxu0 %v919
  %1009 = vmatpush1.bf16.msra.mxu0 %v918
  %1010 = vmatprep.subr.bf16.mxu0 %v916
  %1011 = vmatpush1.bf16.msra.mxu0 %v915
  %1012 = vmatprep.subr.bf16.mxu0 %v913
  %1013 = vmatpush1.bf16.msra.mxu0 %v912
  %1014 = vmatprep.subr.bf16.mxu0 %v910
  %1015 = vmatpush1.bf16.msra.mxu0 %v909
  %1016 = vmatprep.subr.bf16.mxu0 %v907
  %1017 = vmatpush1.bf16.msra.mxu0 %v906
  %1018 = vmatprep.subr.bf16.mxu0 %v952
  %1019 = vmatpush2.bf16.msra.mxu0 %v951
  %1020 = vmatprep.subr.bf16.mxu0 %v949
  %1021 = vmatpush2.bf16.msra.mxu0 %v948
  %1022 = vmatprep.subr.bf16.mxu0 %v946
  %1023 = vmatpush2.bf16.msra.mxu0 %v945
  %1024 = vmatprep.subr.bf16.mxu0 %v943
  %1025 = vmatpush2.bf16.msra.mxu0 %v942
  %1026 = vmatprep.subr.bf16.mxu0 %v940
  %1027 = vmatpush2.bf16.msra.mxu0 %v939
  %1028 = vmatprep.subr.bf16.mxu0 %v937
  %1029 = vmatpush2.bf16.msra.mxu0 %v936
  %1030 = vmatprep.subr.bf16.mxu0 %v934
  %1031 = vmatpush2.bf16.msra.mxu0 %v933
  %1032 = vmatprep.subr.bf16.mxu0 %v931
  %1033 = vmatpush2.bf16.msra.mxu0 %v930
  %1034 = vmatprep.mubr.bf16.mxu0 %v683
  %1035 = vmatmul.mubr.bf16.gmra.mxu0 %v682
  %v1036 = vpop.f32.mrf.mxu0
  %v1037 = vadd.f32 0.0, %v1036
  %v1038 = vpop.f32.mrf.mxu0
  %v1039 = vadd.f32 0.0, %v1038
  %v1040 = vpop.f32.mrf.mxu0
  %v1041 = vadd.f32 0.0, %v1040
  %v1042 = vpop.f32.mrf.mxu0
  %v1043 = vadd.f32 0.0, %v1042
  %1044 = vmatprep.mubr.bf16.mxu0 %v685
  %1045 = vmatmul.mubr.bf16.gmra.mxu0 %v684
  %v1046 = vpop.f32.mrf.mxu0
  %v1047 = vadd.f32 0.0, %v1046
  %v1048 = vpop.f32.mrf.mxu0
  %v1049 = vadd.f32 0.0, %v1048
  %v1050 = vpop.f32.mrf.mxu0
  %v1051 = vadd.f32 0.0, %v1050
  %v1052 = vpop.f32.mrf.mxu0
  %v1053 = vadd.f32 0.0, %v1052
  %1054 = vmatprep.mubr.bf16.mxu0 %v687
  %1055 = vmatmul.mubr.bf16.gmra.mxu0 %v686
  %v1056 = vpop.f32.mrf.mxu0
  %v1057 = vadd.f32 0.0, %v1056
  %v1058 = vpop.f32.mrf.mxu0
  %v1059 = vadd.f32 0.0, %v1058
  %v1060 = vpop.f32.mrf.mxu0
  %v1061 = vadd.f32 0.0, %v1060
  %v1062 = vpop.f32.mrf.mxu0
  %v1063 = vadd.f32 0.0, %v1062
  %1064 = vmatprep.mubr.bf16.mxu0 %v689
  %1065 = vmatmul.mubr.bf16.gmra.mxu0 %v688
  %v1066 = vpop.f32.mrf.mxu0
  %v1067 = vadd.f32 0.0, %v1066
  %v1068 = vpop.f32.mrf.mxu0
  %v1069 = vadd.f32 0.0, %v1068
  %v1070 = vpop.f32.mrf.mxu0
  %v1071 = vadd.f32 0.0, %v1070
  %v1072 = vpop.f32.mrf.mxu0
  %v1073 = vadd.f32 0.0, %v1072
  %1074 = vmatprep.mubr.bf16.mxu0 %v691
  %1075 = vmatmul.mubr.bf16.gmra.mxu0 %v690
  %v1076 = vpop.f32.mrf.mxu0
  %v1077 = vadd.f32 0.0, %v1076
  %v1078 = vpop.f32.mrf.mxu0
  %v1079 = vadd.f32 0.0, %v1078
  %v1080 = vpop.f32.mrf.mxu0
  %v1081 = vadd.f32 0.0, %v1080
  %v1082 = vpop.f32.mrf.mxu0
  %v1083 = vadd.f32 0.0, %v1082
  %1084 = vmatprep.mubr.bf16.mxu0 %v693
  %1085 = vmatmul.mubr.bf16.gmra.mxu0 %v692
  %v1086 = vpop.f32.mrf.mxu0
  %v1087 = vadd.f32 0.0, %v1086
  %v1088 = vpop.f32.mrf.mxu0
  %v1089 = vadd.f32 0.0, %v1088
  %v1090 = vpop.f32.mrf.mxu0
  %v1091 = vadd.f32 0.0, %v1090
  %v1092 = vpop.f32.mrf.mxu0
  %v1093 = vadd.f32 0.0, %v1092
  %1094 = vmatprep.mubr.bf16.mxu0 %v695
  %1095 = vmatmul.mubr.bf16.gmra.mxu0 %v694
  %v1096 = vpop.f32.mrf.mxu0
  %v1097 = vadd.f32 0.0, %v1096
  %v1098 = vpop.f32.mrf.mxu0
  %v1099 = vadd.f32 0.0, %v1098
  %v1100 = vpop.f32.mrf.mxu0
  %v1101 = vadd.f32 0.0, %v1100
  %v1102 = vpop.f32.mrf.mxu0
  %v1103 = vadd.f32 0.0, %v1102
  %1104 = vmatprep.mubr.bf16.mxu0 %v697
  %1105 = vmatmul.mubr.bf16.gmra.mxu0 %v696
  %v1106 = vpop.f32.mrf.mxu0
  %v1107 = vadd.f32 0.0, %v1106
  %v1108 = vpop.f32.mrf.mxu0
  %v1109 = vadd.f32 0.0, %v1108
  %v1110 = vpop.f32.mrf.mxu0
  %v1111 = vadd.f32 0.0, %v1110
  %v1112 = vpop.f32.mrf.mxu0
  %v1113 = vadd.f32 0.0, %v1112
  %1114 = vmatprep.mubr.bf16.mxu0 %v699
  %1115 = vmatmul.mubr.bf16.gmra.mxu0 %v698
  %v1116 = vpop.f32.mrf.mxu0
  %v1117 = vadd.f32 0.0, %v1116
  %v1118 = vpop.f32.mrf.mxu0
  %v1119 = vadd.f32 0.0, %v1118
  %v1120 = vpop.f32.mrf.mxu0
  %v1121 = vadd.f32 0.0, %v1120
  %v1122 = vpop.f32.mrf.mxu0
  %v1123 = vadd.f32 0.0, %v1122
  %1124 = vmatprep.mubr.bf16.mxu0 %v701
  %1125 = vmatmul.mubr.bf16.gmra.mxu0 %v700
  %v1126 = vpop.f32.mrf.mxu0
  %v1127 = vadd.f32 0.0, %v1126
  %v1128 = vpop.f32.mrf.mxu0
  %v1129 = vadd.f32 0.0, %v1128
  %v1130 = vpop.f32.mrf.mxu0
  %v1131 = vadd.f32 0.0, %v1130
  %v1132 = vpop.f32.mrf.mxu0
  %v1133 = vadd.f32 0.0, %v1132
  %1134 = vmatprep.mubr.bf16.mxu0 %v703
  %1135 = vmatmul.mubr.bf16.gmra.mxu0 %v702
  %v1136 = vpop.f32.mrf.mxu0
  %v1137 = vadd.f32 0.0, %v1136
  %v1138 = vpop.f32.mrf.mxu0
  %v1139 = vadd.f32 0.0, %v1138
  %v1140 = vpop.f32.mrf.mxu0
  %v1141 = vadd.f32 0.0, %v1140
  %v1142 = vpop.f32.mrf.mxu0
  %v1143 = vadd.f32 0.0, %v1142
  %1144 = vmatprep.mubr.bf16.mxu0 %v705
  %1145 = vmatmul.mubr.bf16.gmra.mxu0 %v704
  %v1146 = vpop.f32.mrf.mxu0
  %v1147 = vadd.f32 0.0, %v1146
  %v1148 = vpop.f32.mrf.mxu0
  %v1149 = vadd.f32 0.0, %v1148
  %v1150 = vpop.f32.mrf.mxu0
  %v1151 = vadd.f32 0.0, %v1150
  %v1152 = vpop.f32.mrf.mxu0
  %v1153 = vadd.f32 0.0, %v1152
  %1154 = vmatprep.mubr.bf16.mxu0 %v707
  %1155 = vmatmul.mubr.bf16.gmra.mxu0 %v706
  %v1156 = vpop.f32.mrf.mxu0
  %v1157 = vadd.f32 0.0, %v1156
  %v1158 = vpop.f32.mrf.mxu0
  %v1159 = vadd.f32 0.0, %v1158
  %v1160 = vpop.f32.mrf.mxu0
  %v1161 = vadd.f32 0.0, %v1160
  %v1162 = vpop.f32.mrf.mxu0
  %v1163 = vadd.f32 0.0, %v1162
  %1164 = vmatprep.mubr.bf16.mxu0 %v709
  %1165 = vmatmul.mubr.bf16.gmra.mxu0 %v708
  %v1166 = vpop.f32.mrf.mxu0
  %v1167 = vadd.f32 0.0, %v1166
  %v1168 = vpop.f32.mrf.mxu0
  %v1169 = vadd.f32 0.0, %v1168
  %v1170 = vpop.f32.mrf.mxu0
  %v1171 = vadd.f32 0.0, %v1170
  %v1172 = vpop.f32.mrf.mxu0
  %v1173 = vadd.f32 0.0, %v1172
  %1174 = vmatprep.mubr.bf16.mxu0 %v711
  %1175 = vmatmul.mubr.bf16.gmra.mxu0 %v710
  %v1176 = vpop.f32.mrf.mxu0
  %v1177 = vadd.f32 0.0, %v1176
  %v1178 = vpop.f32.mrf.mxu0
  %v1179 = vadd.f32 0.0, %v1178
  %v1180 = vpop.f32.mrf.mxu0
  %v1181 = vadd.f32 0.0, %v1180
  %v1182 = vpop.f32.mrf.mxu0
  %v1183 = vadd.f32 0.0, %v1182
  %1184 = vmatprep.mubr.bf16.mxu0 %v713
  %1185 = vmatmul.mubr.bf16.gmra.mxu0 %v712
  %v1186 = vpop.f32.mrf.mxu0
  %v1187 = vadd.f32 0.0, %v1186
  %v1188 = vpop.f32.mrf.mxu0
  %v1189 = vadd.f32 0.0, %v1188
  %v1190 = vpop.f32.mrf.mxu0
  %v1191 = vadd.f32 0.0, %v1190
  %v1192 = vpop.f32.mrf.mxu0
  %v1193 = vadd.f32 0.0, %v1192
  %1194 = vdwg.mxu0
  %1195 = vmatprep.subr.bf16.mxu0 0
  %1196 = vmatpush1.bf16.msra.mxu0 %v929
  %1197 = vmatprep.subr.bf16.mxu0 0
  %1198 = vmatpush1.bf16.msra.mxu0 %v926
  %1199 = vmatprep.subr.bf16.mxu0 0
  %1200 = vmatpush1.bf16.msra.mxu0 %v923
  %1201 = vmatprep.subr.bf16.mxu0 0
  %1202 = vmatpush1.bf16.msra.mxu0 %v920
  %1203 = vmatprep.subr.bf16.mxu0 0
  %1204 = vmatpush1.bf16.msra.mxu0 %v917
  %1205 = vmatprep.subr.bf16.mxu0 0
  %1206 = vmatpush1.bf16.msra.mxu0 %v914
  %1207 = vmatprep.subr.bf16.mxu0 0
  %1208 = vmatpush1.bf16.msra.mxu0 %v911
  %1209 = vmatprep.subr.bf16.mxu0 0
  %1210 = vmatpush1.bf16.msra.mxu0 %v908
  %1211 = vmatprep.subr.bf16.mxu0 0
  %1212 = vmatpush2.bf16.msra.mxu0 %v953
  %1213 = vmatprep.subr.bf16.mxu0 0
  %1214 = vmatpush2.bf16.msra.mxu0 %v950
  %1215 = vmatprep.subr.bf16.mxu0 0
  %1216 = vmatpush2.bf16.msra.mxu0 %v947
  %1217 = vmatprep.subr.bf16.mxu0 0
  %1218 = vmatpush2.bf16.msra.mxu0 %v944
  %1219 = vmatprep.subr.bf16.mxu0 0
  %1220 = vmatpush2.bf16.msra.mxu0 %v941
  %1221 = vmatprep.subr.bf16.mxu0 0
  %1222 = vmatpush2.bf16.msra.mxu0 %v938
  %1223 = vmatprep.subr.bf16.mxu0 0
  %1224 = vmatpush2.bf16.msra.mxu0 %v935
  %1225 = vmatprep.subr.bf16.mxu0 0
  %1226 = vmatpush2.bf16.msra.mxu0 %v932
  %1227 = vmatprep.mubr.bf16.mxu0 %v683
  %1228 = vmatmul.mubr.bf16.gmra.mxu0 %v682
  %v1229 = vpop.f32.mrf.mxu0
  %v1230 = vadd.f32 0.0, %v1229
  %v1231 = vpop.f32.mrf.mxu0
  %v1232 = vpop.f32.mrf.mxu0
  %v1233 = vadd.f32 0.0, %v1232
  %v1234 = vpop.f32.mrf.mxu0
  %1235 = vmatprep.mubr.bf16.mxu0 %v685
  %1236 = vmatmul.mubr.bf16.gmra.mxu0 %v684
  %v1237 = vpop.f32.mrf.mxu0
  %v1238 = vadd.f32 0.0, %v1237
  %v1239 = vpop.f32.mrf.mxu0
  %v1240 = vpop.f32.mrf.mxu0
  %v1241 = vadd.f32 0.0, %v1240
  %v1242 = vpop.f32.mrf.mxu0
  %1243 = vmatprep.mubr.bf16.mxu0 %v687
  %1244 = vmatmul.mubr.bf16.gmra.mxu0 %v686
  %v1245 = vpop.f32.mrf.mxu0
  %v1246 = vadd.f32 0.0, %v1245
  %v1247 = vpop.f32.mrf.mxu0
  %v1248 = vpop.f32.mrf.mxu0
  %v1249 = vadd.f32 0.0, %v1248
  %v1250 = vpop.f32.mrf.mxu0
  %1251 = vmatprep.mubr.bf16.mxu0 %v689
  %1252 = vmatmul.mubr.bf16.gmra.mxu0 %v688
  %v1253 = vpop.f32.mrf.mxu0
  %v1254 = vadd.f32 0.0, %v1253
  %v1255 = vpop.f32.mrf.mxu0
  %v1256 = vpop.f32.mrf.mxu0
  %v1257 = vadd.f32 0.0, %v1256
  %v1258 = vpop.f32.mrf.mxu0
  %1259 = vmatprep.mubr.bf16.mxu0 %v691
  %1260 = vmatmul.mubr.bf16.gmra.mxu0 %v690
  %v1261 = vpop.f32.mrf.mxu0
  %v1262 = vadd.f32 0.0, %v1261
  %v1263 = vpop.f32.mrf.mxu0
  %v1264 = vpop.f32.mrf.mxu0
  %v1265 = vadd.f32 0.0, %v1264
  %v1266 = vpop.f32.mrf.mxu0
  %1267 = vmatprep.mubr.bf16.mxu0 %v693
  %1268 = vmatmul.mubr.bf16.gmra.mxu0 %v692
  %v1269 = vpop.f32.mrf.mxu0
  %v1270 = vadd.f32 0.0, %v1269
  %v1271 = vpop.f32.mrf.mxu0
  %v1272 = vpop.f32.mrf.mxu0
  %v1273 = vadd.f32 0.0, %v1272
  %v1274 = vpop.f32.mrf.mxu0
  %1275 = vmatprep.mubr.bf16.mxu0 %v695
  %1276 = vmatmul.mubr.bf16.gmra.mxu0 %v694
  %v1277 = vpop.f32.mrf.mxu0
  %v1278 = vadd.f32 0.0, %v1277
  %v1279 = vpop.f32.mrf.mxu0
  %v1280 = vpop.f32.mrf.mxu0
  %v1281 = vadd.f32 0.0, %v1280
  %v1282 = vpop.f32.mrf.mxu0
  %1283 = vmatprep.mubr.bf16.mxu0 %v697
  %1284 = vmatmul.mubr.bf16.gmra.mxu0 %v696
  %v1285 = vpop.f32.mrf.mxu0
  %v1286 = vadd.f32 0.0, %v1285
  %v1287 = vpop.f32.mrf.mxu0
  %v1288 = vpop.f32.mrf.mxu0
  %v1289 = vadd.f32 0.0, %v1288
  %v1290 = vpop.f32.mrf.mxu0
  %1291 = vmatprep.mubr.bf16.mxu0 %v699
  %1292 = vmatmul.mubr.bf16.gmra.mxu0 %v698
  %v1293 = vpop.f32.mrf.mxu0
  %v1294 = vadd.f32 0.0, %v1293
  %v1295 = vpop.f32.mrf.mxu0
  %v1296 = vpop.f32.mrf.mxu0
  %v1297 = vadd.f32 0.0, %v1296
  %v1298 = vpop.f32.mrf.mxu0
  %1299 = vmatprep.mubr.bf16.mxu0 %v701
  %1300 = vmatmul.mubr.bf16.gmra.mxu0 %v700
  %v1301 = vpop.f32.mrf.mxu0
  %v1302 = vadd.f32 0.0, %v1301
  %v1303 = vpop.f32.mrf.mxu0
  %v1304 = vpop.f32.mrf.mxu0
  %v1305 = vadd.f32 0.0, %v1304
  %v1306 = vpop.f32.mrf.mxu0
  %1307 = vmatprep.mubr.bf16.mxu0 %v703
  %1308 = vmatmul.mubr.bf16.gmra.mxu0 %v702
  %v1309 = vpop.f32.mrf.mxu0
  %v1310 = vadd.f32 0.0, %v1309
  %v1311 = vpop.f32.mrf.mxu0
  %v1312 = vpop.f32.mrf.mxu0
  %v1313 = vadd.f32 0.0, %v1312
  %v1314 = vpop.f32.mrf.mxu0
  %1315 = vmatprep.mubr.bf16.mxu0 %v705
  %1316 = vmatmul.mubr.bf16.gmra.mxu0 %v704
  %v1317 = vpop.f32.mrf.mxu0
  %v1318 = vadd.f32 0.0, %v1317
  %v1319 = vpop.f32.mrf.mxu0
  %v1320 = vpop.f32.mrf.mxu0
  %v1321 = vadd.f32 0.0, %v1320
  %v1322 = vpop.f32.mrf.mxu0
  %1323 = vmatprep.mubr.bf16.mxu0 %v707
  %1324 = vmatmul.mubr.bf16.gmra.mxu0 %v706
  %v1325 = vpop.f32.mrf.mxu0
  %v1326 = vadd.f32 0.0, %v1325
  %v1327 = vpop.f32.mrf.mxu0
  %v1328 = vpop.f32.mrf.mxu0
  %v1329 = vadd.f32 0.0, %v1328
  %v1330 = vpop.f32.mrf.mxu0
  %1331 = vmatprep.mubr.bf16.mxu0 %v709
  %1332 = vmatmul.mubr.bf16.gmra.mxu0 %v708
  %v1333 = vpop.f32.mrf.mxu0
  %v1334 = vadd.f32 0.0, %v1333
  %v1335 = vpop.f32.mrf.mxu0
  %v1336 = vpop.f32.mrf.mxu0
  %v1337 = vadd.f32 0.0, %v1336
  %v1338 = vpop.f32.mrf.mxu0
  %1339 = vmatprep.mubr.bf16.mxu0 %v711
  %1340 = vmatmul.mubr.bf16.gmra.mxu0 %v710
  %v1341 = vpop.f32.mrf.mxu0
  %v1342 = vadd.f32 0.0, %v1341
  %v1343 = vpop.f32.mrf.mxu0
  %v1344 = vpop.f32.mrf.mxu0
  %v1345 = vadd.f32 0.0, %v1344
  %v1346 = vpop.f32.mrf.mxu0
  %1347 = vmatprep.mubr.bf16.mxu0 %v713
  %1348 = vmatmul.mubr.bf16.gmra.mxu0 %v712
  %v1349 = vpop.f32.mrf.mxu0
  %v1350 = vadd.f32 0.0, %v1349
  %v1351 = vpop.f32.mrf.mxu0
  %v1352 = vpop.f32.mrf.mxu0
  %v1353 = vadd.f32 0.0, %v1352
  %v1354 = vpop.f32.mrf.mxu0
  %1355 = vdwg.mxu0
  %v1368 = vcombine.low %v423, %v425
  %v1369 = vcombine.high %v423, %v425
  %v1370 = vcombine.high %v476, %v476
  %v1372 = vunpack.c.l.s4 1966171168
  %v1373 = vunpack.c.0.s8 %v1372
  %v1374 = vlaneseq
  %v1375 = vshrl.u32 %v1374, 7
  %v1376 = vsub.s32 %v1373, %v1375
  %v1377 = vrot.slane %v1368, %v1376
  %v1379 = vunpack.c.l.s4 1966171168
  %v1380 = vunpack.c.0.s8 %v1379
  %v1381 = vlaneseq
  %v1382 = vshrl.u32 %v1381, 7
  %v1383 = vsub.s32 %v1380, %v1382
  %v1384 = vrot.slane %v1369, %v1383
  %v1386 = vunpack.c.l.s4 1966171168
  %v1387 = vunpack.c.0.s8 %v1386
  %v1388 = vlaneseq
  %v1389 = vshrl.u32 %v1388, 7
  %v1390 = vsub.s32 %v1387, %v1389
  %v1391 = vrot.slane %v476, %v1390
  %v1393 = vunpack.c.l.s4 1966171168
  %v1394 = vunpack.c.0.s8 %v1393
  %v1395 = vlaneseq
  %v1396 = vshrl.u32 %v1395, 7
  %v1397 = vsub.s32 %v1394, %v1396
  %v1398 = vrot.slane %v1370, %v1397
  %v1399 = vcombine.low %v1377, %v1391
  %v1400 = vcombine.high %v1377, %v1391
  %v1401 = vcombine.low %v1384, %v1398
  %v1402 = vcombine.high %v1384, %v1398
  %v1404 = vunpack.c.l.s4 1966171168
  %v1405 = vunpack.c.0.s8 %v1404
  %v1406 = vlaneseq
  %v1407 = vshrl.u32 %v1406, 7
  %v1408 = vsub.s32 %v1405, %v1407
  %v1409 = vrot.slane %v1399, %v1408
  %v1411 = vunpack.c.l.s4 1966171168
  %v1412 = vunpack.c.0.s8 %v1411
  %v1413 = vlaneseq
  %v1414 = vshrl.u32 %v1413, 7
  %v1415 = vsub.s32 %v1412, %v1414
  %v1416 = vrot.slane %v1401, %v1415
  %v1418 = vunpack.c.l.s4 1966171168
  %v1419 = vunpack.c.0.s8 %v1418
  %v1420 = vlaneseq
  %v1421 = vshrl.u32 %v1420, 7
  %v1422 = vsub.s32 %v1419, %v1421
  %v1423 = vrot.slane %v1400, %v1422
  %v1425 = vunpack.c.l.s4 1966171168
  %v1426 = vunpack.c.0.s8 %v1425
  %v1427 = vlaneseq
  %v1428 = vshrl.u32 %v1427, 7
  %v1429 = vsub.s32 %v1426, %v1428
  %v1430 = vrot.slane %v1402, %v1429
  %v1431 = vcombine.high %v1409, %v1409
  %v1432 = vcombine.high %v1416, %v1416
  %v1433 = vcombine.high %v1423, %v1423
  %v1434 = vcombine.high %v1430, %v1430
  %v1435 = vcombine.low %v427, %v429
  %v1436 = vcombine.high %v427, %v429
  %v1437 = vcombine.high %v479, %v479
  %v1439 = vunpack.c.l.s4 1966171168
  %v1440 = vunpack.c.0.s8 %v1439
  %v1441 = vlaneseq
  %v1442 = vshrl.u32 %v1441, 7
  %v1443 = vsub.s32 %v1440, %v1442
  %v1444 = vrot.slane %v1435, %v1443
  %v1446 = vunpack.c.l.s4 1966171168
  %v1447 = vunpack.c.0.s8 %v1446
  %v1448 = vlaneseq
  %v1449 = vshrl.u32 %v1448, 7
  %v1450 = vsub.s32 %v1447, %v1449
  %v1451 = vrot.slane %v1436, %v1450
  %v1453 = vunpack.c.l.s4 1966171168
  %v1454 = vunpack.c.0.s8 %v1453
  %v1455 = vlaneseq
  %v1456 = vshrl.u32 %v1455, 7
  %v1457 = vsub.s32 %v1454, %v1456
  %v1458 = vrot.slane %v479, %v1457
  %v1460 = vunpack.c.l.s4 1966171168
  %v1461 = vunpack.c.0.s8 %v1460
  %v1462 = vlaneseq
  %v1463 = vshrl.u32 %v1462, 7
  %v1464 = vsub.s32 %v1461, %v1463
  %v1465 = vrot.slane %v1437, %v1464
  %v1466 = vcombine.low %v1444, %v1458
  %v1467 = vcombine.high %v1444, %v1458
  %v1468 = vcombine.low %v1451, %v1465
  %v1469 = vcombine.high %v1451, %v1465
  %v1471 = vunpack.c.l.s4 1966171168
  %v1472 = vunpack.c.0.s8 %v1471
  %v1473 = vlaneseq
  %v1474 = vshrl.u32 %v1473, 7
  %v1475 = vsub.s32 %v1472, %v1474
  %v1476 = vrot.slane %v1466, %v1475
  %v1478 = vunpack.c.l.s4 1966171168
  %v1479 = vunpack.c.0.s8 %v1478
  %v1480 = vlaneseq
  %v1481 = vshrl.u32 %v1480, 7
  %v1482 = vsub.s32 %v1479, %v1481
  %v1483 = vrot.slane %v1468, %v1482
  %v1485 = vunpack.c.l.s4 1966171168
  %v1486 = vunpack.c.0.s8 %v1485
  %v1487 = vlaneseq
  %v1488 = vshrl.u32 %v1487, 7
  %v1489 = vsub.s32 %v1486, %v1488
  %v1490 = vrot.slane %v1467, %v1489
  %v1492 = vunpack.c.l.s4 1966171168
  %v1493 = vunpack.c.0.s8 %v1492
  %v1494 = vlaneseq
  %v1495 = vshrl.u32 %v1494, 7
  %v1496 = vsub.s32 %v1493, %v1495
  %v1497 = vrot.slane %v1469, %v1496
  %v1498 = vcombine.high %v1476, %v1476
  %v1499 = vcombine.high %v1483, %v1483
  %v1500 = vcombine.high %v1490, %v1490
  %v1501 = vcombine.high %v1497, %v1497
  %v1502 = vcombine.low %v433, %v435
  %v1503 = vcombine.high %v433, %v435
  %v1504 = vcombine.high %v484, %v484
  %v1506 = vunpack.c.l.s4 1966171168
  %v1507 = vunpack.c.0.s8 %v1506
  %v1508 = vlaneseq
  %v1509 = vshrl.u32 %v1508, 7
  %v1510 = vsub.s32 %v1507, %v1509
  %v1511 = vrot.slane %v1502, %v1510
  %v1513 = vunpack.c.l.s4 1966171168
  %v1514 = vunpack.c.0.s8 %v1513
  %v1515 = vlaneseq
  %v1516 = vshrl.u32 %v1515, 7
  %v1517 = vsub.s32 %v1514, %v1516
  %v1518 = vrot.slane %v1503, %v1517
  %v1520 = vunpack.c.l.s4 1966171168
  %v1521 = vunpack.c.0.s8 %v1520
  %v1522 = vlaneseq
  %v1523 = vshrl.u32 %v1522, 7
  %v1524 = vsub.s32 %v1521, %v1523
  %v1525 = vrot.slane %v484, %v1524
  %v1527 = vunpack.c.l.s4 1966171168
  %v1528 = vunpack.c.0.s8 %v1527
  %v1529 = vlaneseq
  %v1530 = vshrl.u32 %v1529, 7
  %v1531 = vsub.s32 %v1528, %v1530
  %v1532 = vrot.slane %v1504, %v1531
  %v1533 = vcombine.low %v1511, %v1525
  %v1534 = vcombine.high %v1511, %v1525
  %v1535 = vcombine.low %v1518, %v1532
  %v1536 = vcombine.high %v1518, %v1532
  %v1538 = vunpack.c.l.s4 1966171168
  %v1539 = vunpack.c.0.s8 %v1538
  %v1540 = vlaneseq
  %v1541 = vshrl.u32 %v1540, 7
  %v1542 = vsub.s32 %v1539, %v1541
  %v1543 = vrot.slane %v1533, %v1542
  %v1545 = vunpack.c.l.s4 1966171168
  %v1546 = vunpack.c.0.s8 %v1545
  %v1547 = vlaneseq
  %v1548 = vshrl.u32 %v1547, 7
  %v1549 = vsub.s32 %v1546, %v1548
  %v1550 = vrot.slane %v1535, %v1549
  %v1552 = vunpack.c.l.s4 1966171168
  %v1553 = vunpack.c.0.s8 %v1552
  %v1554 = vlaneseq
  %v1555 = vshrl.u32 %v1554, 7
  %v1556 = vsub.s32 %v1553, %v1555
  %v1557 = vrot.slane %v1534, %v1556
  %v1559 = vunpack.c.l.s4 1966171168
  %v1560 = vunpack.c.0.s8 %v1559
  %v1561 = vlaneseq
  %v1562 = vshrl.u32 %v1561, 7
  %v1563 = vsub.s32 %v1560, %v1562
  %v1564 = vrot.slane %v1536, %v1563
  %v1565 = vcombine.high %v1543, %v1543
  %v1566 = vcombine.high %v1550, %v1550
  %v1567 = vcombine.high %v1557, %v1557
  %v1568 = vcombine.high %v1564, %v1564
  %v1569 = vcombine.low %v437, %v439
  %v1570 = vcombine.high %v437, %v439
  %v1571 = vcombine.high %v487, %v487
  %v1573 = vunpack.c.l.s4 1966171168
  %v1574 = vunpack.c.0.s8 %v1573
  %v1575 = vlaneseq
  %v1576 = vshrl.u32 %v1575, 7
  %v1577 = vsub.s32 %v1574, %v1576
  %v1578 = vrot.slane %v1569, %v1577
  %v1580 = vunpack.c.l.s4 1966171168
  %v1581 = vunpack.c.0.s8 %v1580
  %v1582 = vlaneseq
  %v1583 = vshrl.u32 %v1582, 7
  %v1584 = vsub.s32 %v1581, %v1583
  %v1585 = vrot.slane %v1570, %v1584
  %v1587 = vunpack.c.l.s4 1966171168
  %v1588 = vunpack.c.0.s8 %v1587
  %v1589 = vlaneseq
  %v1590 = vshrl.u32 %v1589, 7
  %v1591 = vsub.s32 %v1588, %v1590
  %v1592 = vrot.slane %v487, %v1591
  %v1594 = vunpack.c.l.s4 1966171168
  %v1595 = vunpack.c.0.s8 %v1594
  %v1596 = vlaneseq
  %v1597 = vshrl.u32 %v1596, 7
  %v1598 = vsub.s32 %v1595, %v1597
  %v1599 = vrot.slane %v1571, %v1598
  %v1600 = vcombine.low %v1578, %v1592
  %v1601 = vcombine.high %v1578, %v1592
  %v1602 = vcombine.low %v1585, %v1599
  %v1603 = vcombine.high %v1585, %v1599
  %v1605 = vunpack.c.l.s4 1966171168
  %v1606 = vunpack.c.0.s8 %v1605
  %v1607 = vlaneseq
  %v1608 = vshrl.u32 %v1607, 7
  %v1609 = vsub.s32 %v1606, %v1608
  %v1610 = vrot.slane %v1600, %v1609
  %v1612 = vunpack.c.l.s4 1966171168
  %v1613 = vunpack.c.0.s8 %v1612
  %v1614 = vlaneseq
  %v1615 = vshrl.u32 %v1614, 7
  %v1616 = vsub.s32 %v1613, %v1615
  %v1617 = vrot.slane %v1602, %v1616
  %v1619 = vunpack.c.l.s4 1966171168
  %v1620 = vunpack.c.0.s8 %v1619
  %v1621 = vlaneseq
  %v1622 = vshrl.u32 %v1621, 7
  %v1623 = vsub.s32 %v1620, %v1622
  %v1624 = vrot.slane %v1601, %v1623
  %v1626 = vunpack.c.l.s4 1966171168
  %v1627 = vunpack.c.0.s8 %v1626
  %v1628 = vlaneseq
  %v1629 = vshrl.u32 %v1628, 7
  %v1630 = vsub.s32 %v1627, %v1629
  %v1631 = vrot.slane %v1603, %v1630
  %v1632 = vcombine.high %v1610, %v1610
  %v1633 = vcombine.high %v1617, %v1617
  %v1634 = vcombine.high %v1624, %v1624
  %v1635 = vcombine.high %v1631, %v1631
  %v1636 = vlaneseq
  %v1637 = vshrl.u32 %v1636, 7
  %v1638 = vsub.s32 0, %v1637
  %v1639 = vrot.slane %v1409, %v1638
  %v1640 = vlaneseq
  %v1641 = vshrl.u32 %v1640, 7
  %v1642 = vsub.s32 1, %v1641
  %v1643 = vrot.slane %v1409, %v1642
  %v1644 = vlaneseq
  %v1645 = vshrl.u32 %v1644, 7
  %v1646 = vsub.s32 2, %v1645
  %v1647 = vrot.slane %v1409, %v1646
  %v1648 = vlaneseq
  %v1649 = vshrl.u32 %v1648, 7
  %v1650 = vsub.s32 0, %v1649
  %v1651 = vrot.slane %v1423, %v1650
  %v1652 = vlaneseq
  %v1653 = vshrl.u32 %v1652, 7
  %v1654 = vsub.s32 1, %v1653
  %v1655 = vrot.slane %v1423, %v1654
  %v1656 = vlaneseq
  %v1657 = vshrl.u32 %v1656, 7
  %v1658 = vsub.s32 2, %v1657
  %v1659 = vrot.slane %v1423, %v1658
  %v1660 = vlaneseq
  %v1661 = vshrl.u32 %v1660, 7
  %v1662 = vsub.s32 0, %v1661
  %v1663 = vrot.slane %v1431, %v1662
  %v1664 = vlaneseq
  %v1665 = vshrl.u32 %v1664, 7
  %v1666 = vsub.s32 1, %v1665
  %v1667 = vrot.slane %v1431, %v1666
  %v1668 = vlaneseq
  %v1669 = vshrl.u32 %v1668, 7
  %v1670 = vsub.s32 2, %v1669
  %v1671 = vrot.slane %v1431, %v1670
  %v1672 = vlaneseq
  %v1673 = vshrl.u32 %v1672, 7
  %v1674 = vsub.s32 0, %v1673
  %v1675 = vrot.slane %v1433, %v1674
  %v1676 = vlaneseq
  %v1677 = vshrl.u32 %v1676, 7
  %v1678 = vsub.s32 1, %v1677
  %v1679 = vrot.slane %v1433, %v1678
  %v1680 = vlaneseq
  %v1681 = vshrl.u32 %v1680, 7
  %v1682 = vsub.s32 2, %v1681
  %v1683 = vrot.slane %v1433, %v1682
  %v1684 = vlaneseq
  %v1685 = vshrl.u32 %v1684, 7
  %v1686 = vsub.s32 0, %v1685
  %v1687 = vrot.slane %v1416, %v1686
  %v1688 = vlaneseq
  %v1689 = vshrl.u32 %v1688, 7
  %v1690 = vsub.s32 1, %v1689
  %v1691 = vrot.slane %v1416, %v1690
  %v1692 = vlaneseq
  %v1693 = vshrl.u32 %v1692, 7
  %v1694 = vsub.s32 2, %v1693
  %v1695 = vrot.slane %v1416, %v1694
  %v1696 = vlaneseq
  %v1697 = vshrl.u32 %v1696, 7
  %v1698 = vsub.s32 0, %v1697
  %v1699 = vrot.slane %v1430, %v1698
  %v1700 = vlaneseq
  %v1701 = vshrl.u32 %v1700, 7
  %v1702 = vsub.s32 1, %v1701
  %v1703 = vrot.slane %v1430, %v1702
  %v1704 = vlaneseq
  %v1705 = vshrl.u32 %v1704, 7
  %v1706 = vsub.s32 2, %v1705
  %v1707 = vrot.slane %v1430, %v1706
  %v1708 = vlaneseq
  %v1709 = vshrl.u32 %v1708, 7
  %v1710 = vsub.s32 0, %v1709
  %v1711 = vrot.slane %v1432, %v1710
  %v1712 = vlaneseq
  %v1713 = vshrl.u32 %v1712, 7
  %v1714 = vsub.s32 1, %v1713
  %v1715 = vrot.slane %v1432, %v1714
  %v1716 = vlaneseq
  %v1717 = vshrl.u32 %v1716, 7
  %v1718 = vsub.s32 2, %v1717
  %v1719 = vrot.slane %v1432, %v1718
  %v1720 = vlaneseq
  %v1721 = vshrl.u32 %v1720, 7
  %v1722 = vsub.s32 0, %v1721
  %v1723 = vrot.slane %v1434, %v1722
  %v1724 = vlaneseq
  %v1725 = vshrl.u32 %v1724, 7
  %v1726 = vsub.s32 1, %v1725
  %v1727 = vrot.slane %v1434, %v1726
  %v1728 = vlaneseq
  %v1729 = vshrl.u32 %v1728, 7
  %v1730 = vsub.s32 2, %v1729
  %v1731 = vrot.slane %v1434, %v1730
  %v1732 = vlaneseq
  %v1733 = vshrl.u32 %v1732, 7
  %v1734 = vsub.s32 0, %v1733
  %v1735 = vrot.slane %v1476, %v1734
  %v1736 = vlaneseq
  %v1737 = vshrl.u32 %v1736, 7
  %v1738 = vsub.s32 1, %v1737
  %v1739 = vrot.slane %v1476, %v1738
  %v1740 = vlaneseq
  %v1741 = vshrl.u32 %v1740, 7
  %v1742 = vsub.s32 2, %v1741
  %v1743 = vrot.slane %v1476, %v1742
  %v1744 = vlaneseq
  %v1745 = vshrl.u32 %v1744, 7
  %v1746 = vsub.s32 0, %v1745
  %v1747 = vrot.slane %v1490, %v1746
  %v1748 = vlaneseq
  %v1749 = vshrl.u32 %v1748, 7
  %v1750 = vsub.s32 1, %v1749
  %v1751 = vrot.slane %v1490, %v1750
  %v1752 = vlaneseq
  %v1753 = vshrl.u32 %v1752, 7
  %v1754 = vsub.s32 2, %v1753
  %v1755 = vrot.slane %v1490, %v1754
  %v1756 = vlaneseq
  %v1757 = vshrl.u32 %v1756, 7
  %v1758 = vsub.s32 0, %v1757
  %v1759 = vrot.slane %v1498, %v1758
  %v1760 = vlaneseq
  %v1761 = vshrl.u32 %v1760, 7
  %v1762 = vsub.s32 1, %v1761
  %v1763 = vrot.slane %v1498, %v1762
  %v1764 = vlaneseq
  %v1765 = vshrl.u32 %v1764, 7
  %v1766 = vsub.s32 2, %v1765
  %v1767 = vrot.slane %v1498, %v1766
  %v1768 = vlaneseq
  %v1769 = vshrl.u32 %v1768, 7
  %v1770 = vsub.s32 0, %v1769
  %v1771 = vrot.slane %v1500, %v1770
  %v1772 = vlaneseq
  %v1773 = vshrl.u32 %v1772, 7
  %v1774 = vsub.s32 1, %v1773
  %v1775 = vrot.slane %v1500, %v1774
  %v1776 = vlaneseq
  %v1777 = vshrl.u32 %v1776, 7
  %v1778 = vsub.s32 2, %v1777
  %v1779 = vrot.slane %v1500, %v1778
  %v1780 = vlaneseq
  %v1781 = vshrl.u32 %v1780, 7
  %v1782 = vsub.s32 0, %v1781
  %v1783 = vrot.slane %v1483, %v1782
  %v1784 = vlaneseq
  %v1785 = vshrl.u32 %v1784, 7
  %v1786 = vsub.s32 1, %v1785
  %v1787 = vrot.slane %v1483, %v1786
  %v1788 = vlaneseq
  %v1789 = vshrl.u32 %v1788, 7
  %v1790 = vsub.s32 2, %v1789
  %v1791 = vrot.slane %v1483, %v1790
  %v1792 = vlaneseq
  %v1793 = vshrl.u32 %v1792, 7
  %v1794 = vsub.s32 0, %v1793
  %v1795 = vrot.slane %v1497, %v1794
  %v1796 = vlaneseq
  %v1797 = vshrl.u32 %v1796, 7
  %v1798 = vsub.s32 1, %v1797
  %v1799 = vrot.slane %v1497, %v1798
  %v1800 = vlaneseq
  %v1801 = vshrl.u32 %v1800, 7
  %v1802 = vsub.s32 2, %v1801
  %v1803 = vrot.slane %v1497, %v1802
  %v1804 = vlaneseq
  %v1805 = vshrl.u32 %v1804, 7
  %v1806 = vsub.s32 0, %v1805
  %v1807 = vrot.slane %v1499, %v1806
  %v1808 = vlaneseq
  %v1809 = vshrl.u32 %v1808, 7
  %v1810 = vsub.s32 1, %v1809
  %v1811 = vrot.slane %v1499, %v1810
  %v1812 = vlaneseq
  %v1813 = vshrl.u32 %v1812, 7
  %v1814 = vsub.s32 2, %v1813
  %v1815 = vrot.slane %v1499, %v1814
  %v1816 = vlaneseq
  %v1817 = vshrl.u32 %v1816, 7
  %v1818 = vsub.s32 0, %v1817
  %v1819 = vrot.slane %v1501, %v1818
  %v1820 = vlaneseq
  %v1821 = vshrl.u32 %v1820, 7
  %v1822 = vsub.s32 1, %v1821
  %v1823 = vrot.slane %v1501, %v1822
  %v1824 = vlaneseq
  %v1825 = vshrl.u32 %v1824, 7
  %v1826 = vsub.s32 2, %v1825
  %v1827 = vrot.slane %v1501, %v1826
  %v1828 = vlaneseq
  %v1829 = vshrl.u32 %v1828, 7
  %v1830 = vsub.s32 0, %v1829
  %v1831 = vrot.slane %v1543, %v1830
  %v1832 = vlaneseq
  %v1833 = vshrl.u32 %v1832, 7
  %v1834 = vsub.s32 1, %v1833
  %v1835 = vrot.slane %v1543, %v1834
  %v1836 = vlaneseq
  %v1837 = vshrl.u32 %v1836, 7
  %v1838 = vsub.s32 2, %v1837
  %v1839 = vrot.slane %v1543, %v1838
  %v1840 = vlaneseq
  %v1841 = vshrl.u32 %v1840, 7
  %v1842 = vsub.s32 0, %v1841
  %v1843 = vrot.slane %v1557, %v1842
  %v1844 = vlaneseq
  %v1845 = vshrl.u32 %v1844, 7
  %v1846 = vsub.s32 1, %v1845
  %v1847 = vrot.slane %v1557, %v1846
  %v1848 = vlaneseq
  %v1849 = vshrl.u32 %v1848, 7
  %v1850 = vsub.s32 2, %v1849
  %v1851 = vrot.slane %v1557, %v1850
  %v1852 = vlaneseq
  %v1853 = vshrl.u32 %v1852, 7
  %v1854 = vsub.s32 0, %v1853
  %v1855 = vrot.slane %v1565, %v1854
  %v1856 = vlaneseq
  %v1857 = vshrl.u32 %v1856, 7
  %v1858 = vsub.s32 1, %v1857
  %v1859 = vrot.slane %v1565, %v1858
  %v1860 = vlaneseq
  %v1861 = vshrl.u32 %v1860, 7
  %v1862 = vsub.s32 2, %v1861
  %v1863 = vrot.slane %v1565, %v1862
  %v1864 = vlaneseq
  %v1865 = vshrl.u32 %v1864, 7
  %v1866 = vsub.s32 0, %v1865
  %v1867 = vrot.slane %v1567, %v1866
  %v1868 = vlaneseq
  %v1869 = vshrl.u32 %v1868, 7
  %v1870 = vsub.s32 1, %v1869
  %v1871 = vrot.slane %v1567, %v1870
  %v1872 = vlaneseq
  %v1873 = vshrl.u32 %v1872, 7
  %v1874 = vsub.s32 2, %v1873
  %v1875 = vrot.slane %v1567, %v1874
  %v1876 = vlaneseq
  %v1877 = vshrl.u32 %v1876, 7
  %v1878 = vsub.s32 0, %v1877
  %v1879 = vrot.slane %v1550, %v1878
  %v1880 = vlaneseq
  %v1881 = vshrl.u32 %v1880, 7
  %v1882 = vsub.s32 1, %v1881
  %v1883 = vrot.slane %v1550, %v1882
  %v1884 = vlaneseq
  %v1885 = vshrl.u32 %v1884, 7
  %v1886 = vsub.s32 2, %v1885
  %v1887 = vrot.slane %v1550, %v1886
  %v1888 = vlaneseq
  %v1889 = vshrl.u32 %v1888, 7
  %v1890 = vsub.s32 0, %v1889
  %v1891 = vrot.slane %v1564, %v1890
  %v1892 = vlaneseq
  %v1893 = vshrl.u32 %v1892, 7
  %v1894 = vsub.s32 1, %v1893
  %v1895 = vrot.slane %v1564, %v1894
  %v1896 = vlaneseq
  %v1897 = vshrl.u32 %v1896, 7
  %v1898 = vsub.s32 2, %v1897
  %v1899 = vrot.slane %v1564, %v1898
  %v1900 = vlaneseq
  %v1901 = vshrl.u32 %v1900, 7
  %v1902 = vsub.s32 0, %v1901
  %v1903 = vrot.slane %v1566, %v1902
  %v1904 = vlaneseq
  %v1905 = vshrl.u32 %v1904, 7
  %v1906 = vsub.s32 1, %v1905
  %v1907 = vrot.slane %v1566, %v1906
  %v1908 = vlaneseq
  %v1909 = vshrl.u32 %v1908, 7
  %v1910 = vsub.s32 2, %v1909
  %v1911 = vrot.slane %v1566, %v1910
  %v1912 = vlaneseq
  %v1913 = vshrl.u32 %v1912, 7
  %v1914 = vsub.s32 0, %v1913
  %v1915 = vrot.slane %v1568, %v1914
  %v1916 = vlaneseq
  %v1917 = vshrl.u32 %v1916, 7
  %v1918 = vsub.s32 1, %v1917
  %v1919 = vrot.slane %v1568, %v1918
  %v1920 = vlaneseq
  %v1921 = vshrl.u32 %v1920, 7
  %v1922 = vsub.s32 2, %v1921
  %v1923 = vrot.slane %v1568, %v1922
  %v1924 = vlaneseq
  %v1925 = vshrl.u32 %v1924, 7
  %v1926 = vsub.s32 0, %v1925
  %v1927 = vrot.slane %v1610, %v1926
  %v1928 = vlaneseq
  %v1929 = vshrl.u32 %v1928, 7
  %v1930 = vsub.s32 1, %v1929
  %v1931 = vrot.slane %v1610, %v1930
  %v1932 = vlaneseq
  %v1933 = vshrl.u32 %v1932, 7
  %v1934 = vsub.s32 2, %v1933
  %v1935 = vrot.slane %v1610, %v1934
  %v1936 = vlaneseq
  %v1937 = vshrl.u32 %v1936, 7
  %v1938 = vsub.s32 0, %v1937
  %v1939 = vrot.slane %v1624, %v1938
  %v1940 = vlaneseq
  %v1941 = vshrl.u32 %v1940, 7
  %v1942 = vsub.s32 1, %v1941
  %v1943 = vrot.slane %v1624, %v1942
  %v1944 = vlaneseq
  %v1945 = vshrl.u32 %v1944, 7
  %v1946 = vsub.s32 2, %v1945
  %v1947 = vrot.slane %v1624, %v1946
  %v1948 = vlaneseq
  %v1949 = vshrl.u32 %v1948, 7
  %v1950 = vsub.s32 0, %v1949
  %v1951 = vrot.slane %v1632, %v1950
  %v1952 = vlaneseq
  %v1953 = vshrl.u32 %v1952, 7
  %v1954 = vsub.s32 1, %v1953
  %v1955 = vrot.slane %v1632, %v1954
  %v1956 = vlaneseq
  %v1957 = vshrl.u32 %v1956, 7
  %v1958 = vsub.s32 2, %v1957
  %v1959 = vrot.slane %v1632, %v1958
  %v1960 = vlaneseq
  %v1961 = vshrl.u32 %v1960, 7
  %v1962 = vsub.s32 0, %v1961
  %v1963 = vrot.slane %v1634, %v1962
  %v1964 = vlaneseq
  %v1965 = vshrl.u32 %v1964, 7
  %v1966 = vsub.s32 1, %v1965
  %v1967 = vrot.slane %v1634, %v1966
  %v1968 = vlaneseq
  %v1969 = vshrl.u32 %v1968, 7
  %v1970 = vsub.s32 2, %v1969
  %v1971 = vrot.slane %v1634, %v1970
  %v1972 = vlaneseq
  %v1973 = vshrl.u32 %v1972, 7
  %v1974 = vsub.s32 0, %v1973
  %v1975 = vrot.slane %v1617, %v1974
  %v1976 = vlaneseq
  %v1977 = vshrl.u32 %v1976, 7
  %v1978 = vsub.s32 1, %v1977
  %v1979 = vrot.slane %v1617, %v1978
  %v1980 = vlaneseq
  %v1981 = vshrl.u32 %v1980, 7
  %v1982 = vsub.s32 2, %v1981
  %v1983 = vrot.slane %v1617, %v1982
  %v1984 = vlaneseq
  %v1985 = vshrl.u32 %v1984, 7
  %v1986 = vsub.s32 0, %v1985
  %v1987 = vrot.slane %v1631, %v1986
  %v1988 = vlaneseq
  %v1989 = vshrl.u32 %v1988, 7
  %v1990 = vsub.s32 1, %v1989
  %v1991 = vrot.slane %v1631, %v1990
  %v1992 = vlaneseq
  %v1993 = vshrl.u32 %v1992, 7
  %v1994 = vsub.s32 2, %v1993
  %v1995 = vrot.slane %v1631, %v1994
  %v1996 = vlaneseq
  %v1997 = vshrl.u32 %v1996, 7
  %v1998 = vsub.s32 0, %v1997
  %v1999 = vrot.slane %v1633, %v1998
  %v2000 = vlaneseq
  %v2001 = vshrl.u32 %v2000, 7
  %v2002 = vsub.s32 1, %v2001
  %v2003 = vrot.slane %v1633, %v2002
  %v2004 = vlaneseq
  %v2005 = vshrl.u32 %v2004, 7
  %v2006 = vsub.s32 2, %v2005
  %v2007 = vrot.slane %v1633, %v2006
  %v2008 = vlaneseq
  %v2009 = vshrl.u32 %v2008, 7
  %v2010 = vsub.s32 0, %v2009
  %v2011 = vrot.slane %v1635, %v2010
  %v2012 = vlaneseq
  %v2013 = vshrl.u32 %v2012, 7
  %v2014 = vsub.s32 1, %v2013
  %v2015 = vrot.slane %v1635, %v2014
  %v2016 = vlaneseq
  %v2017 = vshrl.u32 %v2016, 7
  %v2018 = vsub.s32 2, %v2017
  %v2019 = vrot.slane %v1635, %v2018
  %v2116 = vadd.f32 %v1037, %v1639
  %v2117 = vadd.f32 %v1039, %v1643
  %v2118 = vadd.f32 %v1230, %v1647
  %v2119 = vadd.f32 %v1041, %v1651
  %v2120 = vadd.f32 %v1043, %v1655
  %v2121 = vadd.f32 %v1233, %v1659
  %v2122 = vadd.f32 %v1047, %v1663
  %v2123 = vadd.f32 %v1049, %v1667
  %v2124 = vadd.f32 %v1238, %v1671
  %v2125 = vadd.f32 %v1051, %v1675
  %v2126 = vadd.f32 %v1053, %v1679
  %v2127 = vadd.f32 %v1241, %v1683
  %v2128 = vadd.f32 %v1057, %v1687
  %v2129 = vadd.f32 %v1059, %v1691
  %v2130 = vadd.f32 %v1246, %v1695
  %v2131 = vadd.f32 %v1061, %v1699
  %v2132 = vadd.f32 %v1063, %v1703
  %v2133 = vadd.f32 %v1249, %v1707
  %v2134 = vadd.f32 %v1067, %v1711
  %v2135 = vadd.f32 %v1069, %v1715
  %v2136 = vadd.f32 %v1254, %v1719
  %v2137 = vadd.f32 %v1071, %v1723
  %v2138 = vadd.f32 %v1073, %v1727
  %v2139 = vadd.f32 %v1257, %v1731
  %v2140 = vadd.f32 %v1077, %v1735
  %v2141 = vadd.f32 %v1079, %v1739
  %v2142 = vadd.f32 %v1262, %v1743
  %v2143 = vadd.f32 %v1081, %v1747
  %v2144 = vadd.f32 %v1083, %v1751
  %v2145 = vadd.f32 %v1265, %v1755
  %v2146 = vadd.f32 %v1087, %v1759
  %v2147 = vadd.f32 %v1089, %v1763
  %v2148 = vadd.f32 %v1270, %v1767
  %v2149 = vadd.f32 %v1091, %v1771
  %v2150 = vadd.f32 %v1093, %v1775
  %v2151 = vadd.f32 %v1273, %v1779
  %v2152 = vadd.f32 %v1097, %v1783
  %v2153 = vadd.f32 %v1099, %v1787
  %v2154 = vadd.f32 %v1278, %v1791
  %v2155 = vadd.f32 %v1101, %v1795
  %v2156 = vadd.f32 %v1103, %v1799
  %v2157 = vadd.f32 %v1281, %v1803
  %v2158 = vadd.f32 %v1107, %v1807
  %v2159 = vadd.f32 %v1109, %v1811
  %v2160 = vadd.f32 %v1286, %v1815
  %v2161 = vadd.f32 %v1111, %v1819
  %v2162 = vadd.f32 %v1113, %v1823
  %v2163 = vadd.f32 %v1289, %v1827
  %v2164 = vadd.f32 %v1117, %v1831
  %v2165 = vadd.f32 %v1119, %v1835
  %v2166 = vadd.f32 %v1294, %v1839
  %v2167 = vadd.f32 %v1121, %v1843
  %v2168 = vadd.f32 %v1123, %v1847
  %v2169 = vadd.f32 %v1297, %v1851
  %v2170 = vadd.f32 %v1127, %v1855
  %v2171 = vadd.f32 %v1129, %v1859
  %v2172 = vadd.f32 %v1302, %v1863
  %v2173 = vadd.f32 %v1131, %v1867
  %v2174 = vadd.f32 %v1133, %v1871
  %v2175 = vadd.f32 %v1305, %v1875
  %v2176 = vadd.f32 %v1137, %v1879
  %v2177 = vadd.f32 %v1139, %v1883
  %v2178 = vadd.f32 %v1310, %v1887
  %v2179 = vadd.f32 %v1141, %v1891
  %v2180 = vadd.f32 %v1143, %v1895
  %v2181 = vadd.f32 %v1313, %v1899
  %v2182 = vadd.f32 %v1147, %v1903
  %v2183 = vadd.f32 %v1149, %v1907
  %v2184 = vadd.f32 %v1318, %v1911
  %v2185 = vadd.f32 %v1151, %v1915
  %v2186 = vadd.f32 %v1153, %v1919
  %v2187 = vadd.f32 %v1321, %v1923
  %v2188 = vadd.f32 %v1157, %v1927
  %v2189 = vadd.f32 %v1159, %v1931
  %v2190 = vadd.f32 %v1326, %v1935
  %v2191 = vadd.f32 %v1161, %v1939
  %v2192 = vadd.f32 %v1163, %v1943
  %v2193 = vadd.f32 %v1329, %v1947
  %v2194 = vadd.f32 %v1167, %v1951
  %v2195 = vadd.f32 %v1169, %v1955
  %v2196 = vadd.f32 %v1334, %v1959
  %v2197 = vadd.f32 %v1171, %v1963
  %v2198 = vadd.f32 %v1173, %v1967
  %v2199 = vadd.f32 %v1337, %v1971
  %v2200 = vadd.f32 %v1177, %v1975
  %v2201 = vadd.f32 %v1179, %v1979
  %v2202 = vadd.f32 %v1342, %v1983
  %v2203 = vadd.f32 %v1181, %v1987
  %v2204 = vadd.f32 %v1183, %v1991
  %v2205 = vadd.f32 %v1345, %v1995
  %v2206 = vadd.f32 %v1187, %v1999
  %v2207 = vadd.f32 %v1189, %v2003
  %v2208 = vadd.f32 %v1350, %v2007
  %v2209 = vadd.f32 %v1191, %v2011
  %v2210 = vadd.f32 %v1193, %v2015
  %v2211 = vadd.f32 %v1353, %v2019
  %vm2212 = vcmp.ge.f32.partialorder %v2116, 0.0
  %vm2213 = vcmp.ge.f32.partialorder %v2117, 0.0
  %vm2214 = vcmp.ge.f32.partialorder %v2118, 0.0
  %vm2215 = vcmp.ge.f32.partialorder %v2119, 0.0
  %vm2216 = vcmp.ge.f32.partialorder %v2120, 0.0
  %vm2217 = vcmp.ge.f32.partialorder %v2121, 0.0
  %vm2218 = vcmp.ge.f32.partialorder %v2122, 0.0
  %vm2219 = vcmp.ge.f32.partialorder %v2123, 0.0
  %vm2220 = vcmp.ge.f32.partialorder %v2124, 0.0
  %vm2221 = vcmp.ge.f32.partialorder %v2125, 0.0
  %vm2222 = vcmp.ge.f32.partialorder %v2126, 0.0
  %vm2223 = vcmp.ge.f32.partialorder %v2127, 0.0
  %vm2224 = vcmp.ge.f32.partialorder %v2128, 0.0
  %vm2225 = vcmp.ge.f32.partialorder %v2129, 0.0
  %vm2226 = vcmp.ge.f32.partialorder %v2130, 0.0
  %vm2227 = vcmp.ge.f32.partialorder %v2131, 0.0
  %vm2228 = vcmp.ge.f32.partialorder %v2132, 0.0
  %vm2229 = vcmp.ge.f32.partialorder %v2133, 0.0
  %vm2230 = vcmp.ge.f32.partialorder %v2134, 0.0
  %vm2231 = vcmp.ge.f32.partialorder %v2135, 0.0
  %vm2232 = vcmp.ge.f32.partialorder %v2136, 0.0
  %vm2233 = vcmp.ge.f32.partialorder %v2137, 0.0
  %vm2234 = vcmp.ge.f32.partialorder %v2138, 0.0
  %vm2235 = vcmp.ge.f32.partialorder %v2139, 0.0
  %vm2236 = vcmp.ge.f32.partialorder %v2140, 0.0
  %vm2237 = vcmp.ge.f32.partialorder %v2141, 0.0
  %vm2238 = vcmp.ge.f32.partialorder %v2142, 0.0
  %vm2239 = vcmp.ge.f32.partialorder %v2143, 0.0
  %vm2240 = vcmp.ge.f32.partialorder %v2144, 0.0
  %vm2241 = vcmp.ge.f32.partialorder %v2145, 0.0
  %vm2242 = vcmp.ge.f32.partialorder %v2146, 0.0
  %vm2243 = vcmp.ge.f32.partialorder %v2147, 0.0
  %vm2244 = vcmp.ge.f32.partialorder %v2148, 0.0
  %vm2245 = vcmp.ge.f32.partialorder %v2149, 0.0
  %vm2246 = vcmp.ge.f32.partialorder %v2150, 0.0
  %vm2247 = vcmp.ge.f32.partialorder %v2151, 0.0
  %vm2248 = vcmp.ge.f32.partialorder %v2152, 0.0
  %vm2249 = vcmp.ge.f32.partialorder %v2153, 0.0
  %vm2250 = vcmp.ge.f32.partialorder %v2154, 0.0
  %vm2251 = vcmp.ge.f32.partialorder %v2155, 0.0
  %vm2252 = vcmp.ge.f32.partialorder %v2156, 0.0
  %vm2253 = vcmp.ge.f32.partialorder %v2157, 0.0
  %vm2254 = vcmp.ge.f32.partialorder %v2158, 0.0
  %vm2255 = vcmp.ge.f32.partialorder %v2159, 0.0
  %vm2256 = vcmp.ge.f32.partialorder %v2160, 0.0
  %vm2257 = vcmp.ge.f32.partialorder %v2161, 0.0
  %vm2258 = vcmp.ge.f32.partialorder %v2162, 0.0
  %vm2259 = vcmp.ge.f32.partialorder %v2163, 0.0
  %vm2260 = vcmp.ge.f32.partialorder %v2164, 0.0
  %vm2261 = vcmp.ge.f32.partialorder %v2165, 0.0
  %vm2262 = vcmp.ge.f32.partialorder %v2166, 0.0
  %vm2263 = vcmp.ge.f32.partialorder %v2167, 0.0
  %vm2264 = vcmp.ge.f32.partialorder %v2168, 0.0
  %vm2265 = vcmp.ge.f32.partialorder %v2169, 0.0
  %vm2266 = vcmp.ge.f32.partialorder %v2170, 0.0
  %vm2267 = vcmp.ge.f32.partialorder %v2171, 0.0
  %vm2268 = vcmp.ge.f32.partialorder %v2172, 0.0
  %vm2269 = vcmp.ge.f32.partialorder %v2173, 0.0
  %vm2270 = vcmp.ge.f32.partialorder %v2174, 0.0
  %vm2271 = vcmp.ge.f32.partialorder %v2175, 0.0
  %vm2272 = vcmp.ge.f32.partialorder %v2176, 0.0
  %vm2273 = vcmp.ge.f32.partialorder %v2177, 0.0
  %vm2274 = vcmp.ge.f32.partialorder %v2178, 0.0
  %vm2275 = vcmp.ge.f32.partialorder %v2179, 0.0
  %vm2276 = vcmp.ge.f32.partialorder %v2180, 0.0
  %vm2277 = vcmp.ge.f32.partialorder %v2181, 0.0
  %vm2278 = vcmp.ge.f32.partialorder %v2182, 0.0
  %vm2279 = vcmp.ge.f32.partialorder %v2183, 0.0
  %vm2280 = vcmp.ge.f32.partialorder %v2184, 0.0
  %vm2281 = vcmp.ge.f32.partialorder %v2185, 0.0
  %vm2282 = vcmp.ge.f32.partialorder %v2186, 0.0
  %vm2283 = vcmp.ge.f32.partialorder %v2187, 0.0
  %vm2284 = vcmp.ge.f32.partialorder %v2188, 0.0
  %vm2285 = vcmp.ge.f32.partialorder %v2189, 0.0
  %vm2286 = vcmp.ge.f32.partialorder %v2190, 0.0
  %vm2287 = vcmp.ge.f32.partialorder %v2191, 0.0
  %vm2288 = vcmp.ge.f32.partialorder %v2192, 0.0
  %vm2289 = vcmp.ge.f32.partialorder %v2193, 0.0
  %vm2290 = vcmp.ge.f32.partialorder %v2194, 0.0
  %vm2291 = vcmp.ge.f32.partialorder %v2195, 0.0
  %vm2292 = vcmp.ge.f32.partialorder %v2196, 0.0
  %vm2293 = vcmp.ge.f32.partialorder %v2197, 0.0
  %vm2294 = vcmp.ge.f32.partialorder %v2198, 0.0
  %vm2295 = vcmp.ge.f32.partialorder %v2199, 0.0
  %vm2296 = vcmp.ge.f32.partialorder %v2200, 0.0
  %vm2297 = vcmp.ge.f32.partialorder %v2201, 0.0
  %vm2298 = vcmp.ge.f32.partialorder %v2202, 0.0
  %vm2299 = vcmp.ge.f32.partialorder %v2203, 0.0
  %vm2300 = vcmp.ge.f32.partialorder %v2204, 0.0
  %vm2301 = vcmp.ge.f32.partialorder %v2205, 0.0
  %vm2302 = vcmp.ge.f32.partialorder %v2206, 0.0
  %vm2303 = vcmp.ge.f32.partialorder %v2207, 0.0
  %vm2304 = vcmp.ge.f32.partialorder %v2208, 0.0
  %vm2305 = vcmp.ge.f32.partialorder %v2209, 0.0
  %vm2306 = vcmp.ge.f32.partialorder %v2210, 0.0
  %vm2307 = vcmp.ge.f32.partialorder %v2211, 0.0
  %v2308 = vmul.f32 %v2116, 0.01
  %v2309 = vmul.f32 %v2117, 0.01
  %v2310 = vmul.f32 %v2118, 0.01
  %v2311 = vmul.f32 %v2119, 0.01
  %v2312 = vmul.f32 %v2120, 0.01
  %v2313 = vmul.f32 %v2121, 0.01
  %v2314 = vmul.f32 %v2122, 0.01
  %v2315 = vmul.f32 %v2123, 0.01
  %v2316 = vmul.f32 %v2124, 0.01
  %v2317 = vmul.f32 %v2125, 0.01
  %v2318 = vmul.f32 %v2126, 0.01
  %v2319 = vmul.f32 %v2127, 0.01
  %v2320 = vmul.f32 %v2128, 0.01
  %v2321 = vmul.f32 %v2129, 0.01
  %v2322 = vmul.f32 %v2130, 0.01
  %v2323 = vmul.f32 %v2131, 0.01
  %v2324 = vmul.f32 %v2132, 0.01
  %v2325 = vmul.f32 %v2133, 0.01
  %v2326 = vmul.f32 %v2134, 0.01
  %v2327 = vmul.f32 %v2135, 0.01
  %v2328 = vmul.f32 %v2136, 0.01
  %v2329 = vmul.f32 %v2137, 0.01
  %v2330 = vmul.f32 %v2138, 0.01
  %v2331 = vmul.f32 %v2139, 0.01
  %v2332 = vmul.f32 %v2140, 0.01
  %v2333 = vmul.f32 %v2141, 0.01
  %v2334 = vmul.f32 %v2142, 0.01
  %v2335 = vmul.f32 %v2143, 0.01
  %v2336 = vmul.f32 %v2144, 0.01
  %v2337 = vmul.f32 %v2145, 0.01
  %v2338 = vmul.f32 %v2146, 0.01
  %v2339 = vmul.f32 %v2147, 0.01
  %v2340 = vmul.f32 %v2148, 0.01
  %v2341 = vmul.f32 %v2149, 0.01
  %v2342 = vmul.f32 %v2150, 0.01
  %v2343 = vmul.f32 %v2151, 0.01
  %v2344 = vmul.f32 %v2152, 0.01
  %v2345 = vmul.f32 %v2153, 0.01
  %v2346 = vmul.f32 %v2154, 0.01
  %v2347 = vmul.f32 %v2155, 0.01
  %v2348 = vmul.f32 %v2156, 0.01
  %v2349 = vmul.f32 %v2157, 0.01
  %v2350 = vmul.f32 %v2158, 0.01
  %v2351 = vmul.f32 %v2159, 0.01
  %v2352 = vmul.f32 %v2160, 0.01
  %v2353 = vmul.f32 %v2161, 0.01
  %v2354 = vmul.f32 %v2162, 0.01
  %v2355 = vmul.f32 %v2163, 0.01
  %v2356 = vmul.f32 %v2164, 0.01
  %v2357 = vmul.f32 %v2165, 0.01
  %v2358 = vmul.f32 %v2166, 0.01
  %v2359 = vmul.f32 %v2167, 0.01
  %v2360 = vmul.f32 %v2168, 0.01
  %v2361 = vmul.f32 %v2169, 0.01
  %v2362 = vmul.f32 %v2170, 0.01
  %v2363 = vmul.f32 %v2171, 0.01
  %v2364 = vmul.f32 %v2172, 0.01
  %v2365 = vmul.f32 %v2173, 0.01
  %v2366 = vmul.f32 %v2174, 0.01
  %v2367 = vmul.f32 %v2175, 0.01
  %v2368 = vmul.f32 %v2176, 0.01
  %v2369 = vmul.f32 %v2177, 0.01
  %v2370 = vmul.f32 %v2178, 0.01
  %v2371 = vmul.f32 %v2179, 0.01
  %v2372 = vmul.f32 %v2180, 0.01
  %v2373 = vmul.f32 %v2181, 0.01
  %v2374 = vmul.f32 %v2182, 0.01
  %v2375 = vmul.f32 %v2183, 0.01
  %v2376 = vmul.f32 %v2184, 0.01
  %v2377 = vmul.f32 %v2185, 0.01
  %v2378 = vmul.f32 %v2186, 0.01
  %v2379 = vmul.f32 %v2187, 0.01
  %v2380 = vmul.f32 %v2188, 0.01
  %v2381 = vmul.f32 %v2189, 0.01
  %v2382 = vmul.f32 %v2190, 0.01
  %v2383 = vmul.f32 %v2191, 0.01
  %v2384 = vmul.f32 %v2192, 0.01
  %v2385 = vmul.f32 %v2193, 0.01
  %v2386 = vmul.f32 %v2194, 0.01
  %v2387 = vmul.f32 %v2195, 0.01
  %v2388 = vmul.f32 %v2196, 0.01
  %v2389 = vmul.f32 %v2197, 0.01
  %v2390 = vmul.f32 %v2198, 0.01
  %v2391 = vmul.f32 %v2199, 0.01
  %v2392 = vmul.f32 %v2200, 0.01
  %v2393 = vmul.f32 %v2201, 0.01
  %v2394 = vmul.f32 %v2202, 0.01
  %v2395 = vmul.f32 %v2203, 0.01
  %v2396 = vmul.f32 %v2204, 0.01
  %v2397 = vmul.f32 %v2205, 0.01
  %v2398 = vmul.f32 %v2206, 0.01
  %v2399 = vmul.f32 %v2207, 0.01
  %v2400 = vmul.f32 %v2208, 0.01
  %v2401 = vmul.f32 %v2209, 0.01
  %v2402 = vmul.f32 %v2210, 0.01
  %v2403 = vmul.f32 %v2211, 0.01
  %v2404 = vsel %vm2212, %v2116, %v2308
  %v2405 = vsel %vm2213, %v2117, %v2309
  %v2406 = vsel %vm2214, %v2118, %v2310
  %v2407 = vsel %vm2215, %v2119, %v2311
  %v2408 = vsel %vm2216, %v2120, %v2312
  %v2409 = vsel %vm2217, %v2121, %v2313
  %v2410 = vsel %vm2218, %v2122, %v2314
  %v2411 = vsel %vm2219, %v2123, %v2315
  %v2412 = vsel %vm2220, %v2124, %v2316
  %v2413 = vsel %vm2221, %v2125, %v2317
  %v2414 = vsel %vm2222, %v2126, %v2318
  %v2415 = vsel %vm2223, %v2127, %v2319
  %v2416 = vsel %vm2224, %v2128, %v2320
  %v2417 = vsel %vm2225, %v2129, %v2321
  %v2418 = vsel %vm2226, %v2130, %v2322
  %v2419 = vsel %vm2227, %v2131, %v2323
  %v2420 = vsel %vm2228, %v2132, %v2324
  %v2421 = vsel %vm2229, %v2133, %v2325
  %v2422 = vsel %vm2230, %v2134, %v2326
  %v2423 = vsel %vm2231, %v2135, %v2327
  %v2424 = vsel %vm2232, %v2136, %v2328
  %v2425 = vsel %vm2233, %v2137, %v2329
  %v2426 = vsel %vm2234, %v2138, %v2330
  %v2427 = vsel %vm2235, %v2139, %v2331
  %v2428 = vsel %vm2236, %v2140, %v2332
  %v2429 = vsel %vm2237, %v2141, %v2333
  %v2430 = vsel %vm2238, %v2142, %v2334
  %v2431 = vsel %vm2239, %v2143, %v2335
  %v2432 = vsel %vm2240, %v2144, %v2336
  %v2433 = vsel %vm2241, %v2145, %v2337
  %v2434 = vsel %vm2242, %v2146, %v2338
  %v2435 = vsel %vm2243, %v2147, %v2339
  %v2436 = vsel %vm2244, %v2148, %v2340
  %v2437 = vsel %vm2245, %v2149, %v2341
  %v2438 = vsel %vm2246, %v2150, %v2342
  %v2439 = vsel %vm2247, %v2151, %v2343
  %v2440 = vsel %vm2248, %v2152, %v2344
  %v2441 = vsel %vm2249, %v2153, %v2345
  %v2442 = vsel %vm2250, %v2154, %v2346
  %v2443 = vsel %vm2251, %v2155, %v2347
  %v2444 = vsel %vm2252, %v2156, %v2348
  %v2445 = vsel %vm2253, %v2157, %v2349
  %v2446 = vsel %vm2254, %v2158, %v2350
  %v2447 = vsel %vm2255, %v2159, %v2351
  %v2448 = vsel %vm2256, %v2160, %v2352
  %v2449 = vsel %vm2257, %v2161, %v2353
  %v2450 = vsel %vm2258, %v2162, %v2354
  %v2451 = vsel %vm2259, %v2163, %v2355
  %v2452 = vsel %vm2260, %v2164, %v2356
  %v2453 = vsel %vm2261, %v2165, %v2357
  %v2454 = vsel %vm2262, %v2166, %v2358
  %v2455 = vsel %vm2263, %v2167, %v2359
  %v2456 = vsel %vm2264, %v2168, %v2360
  %v2457 = vsel %vm2265, %v2169, %v2361
  %v2458 = vsel %vm2266, %v2170, %v2362
  %v2459 = vsel %vm2267, %v2171, %v2363
  %v2460 = vsel %vm2268, %v2172, %v2364
  %v2461 = vsel %vm2269, %v2173, %v2365
  %v2462 = vsel %vm2270, %v2174, %v2366
  %v2463 = vsel %vm2271, %v2175, %v2367
  %v2464 = vsel %vm2272, %v2176, %v2368
  %v2465 = vsel %vm2273, %v2177, %v2369
  %v2466 = vsel %vm2274, %v2178, %v2370
  %v2467 = vsel %vm2275, %v2179, %v2371
  %v2468 = vsel %vm2276, %v2180, %v2372
  %v2469 = vsel %vm2277, %v2181, %v2373
  %v2470 = vsel %vm2278, %v2182, %v2374
  %v2471 = vsel %vm2279, %v2183, %v2375
  %v2472 = vsel %vm2280, %v2184, %v2376
  %v2473 = vsel %vm2281, %v2185, %v2377
  %v2474 = vsel %vm2282, %v2186, %v2378
  %v2475 = vsel %vm2283, %v2187, %v2379
  %v2476 = vsel %vm2284, %v2188, %v2380
  %v2477 = vsel %vm2285, %v2189, %v2381
  %v2478 = vsel %vm2286, %v2190, %v2382
  %v2479 = vsel %vm2287, %v2191, %v2383
  %v2480 = vsel %vm2288, %v2192, %v2384
  %v2481 = vsel %vm2289, %v2193, %v2385
  %v2482 = vsel %vm2290, %v2194, %v2386
  %v2483 = vsel %vm2291, %v2195, %v2387
  %v2484 = vsel %vm2292, %v2196, %v2388
  %v2485 = vsel %vm2293, %v2197, %v2389
  %v2486 = vsel %vm2294, %v2198, %v2390
  %v2487 = vsel %vm2295, %v2199, %v2391
  %v2488 = vsel %vm2296, %v2200, %v2392
  %v2489 = vsel %vm2297, %v2201, %v2393
  %v2490 = vsel %vm2298, %v2202, %v2394
  %v2491 = vsel %vm2299, %v2203, %v2395
  %v2492 = vsel %vm2300, %v2204, %v2396
  %v2493 = vsel %vm2301, %v2205, %v2397
  %v2494 = vsel %vm2302, %v2206, %v2398
  %v2495 = vsel %vm2303, %v2207, %v2399
  %v2496 = vsel %vm2304, %v2208, %v2400
  %v2497 = vsel %vm2305, %v2209, %v2401
  %v2498 = vsel %vm2306, %v2210, %v2402
  %v2499 = vsel %vm2307, %v2211, %v2403
  %v2500 = vpack.c.bf16 %v2407, %v2404
  %v2501 = vpack.c.bf16 %v2408, %v2405
  %v2502 = vpack.c.bf16 %v2409, %v2406
  %v2503 = vpack.c.bf16 %v2413, %v2410
  %v2504 = vpack.c.bf16 %v2414, %v2411
  %v2505 = vpack.c.bf16 %v2415, %v2412
  %v2506 = vpack.c.bf16 %v2419, %v2416
  %v2507 = vpack.c.bf16 %v2420, %v2417
  %v2508 = vpack.c.bf16 %v2421, %v2418
  %v2509 = vpack.c.bf16 %v2425, %v2422
  %v2510 = vpack.c.bf16 %v2426, %v2423
  %v2511 = vpack.c.bf16 %v2427, %v2424
  %v2512 = vpack.c.bf16 %v2431, %v2428
  %v2513 = vpack.c.bf16 %v2432, %v2429
  %v2514 = vpack.c.bf16 %v2433, %v2430
  %v2515 = vpack.c.bf16 %v2437, %v2434
  %v2516 = vpack.c.bf16 %v2438, %v2435
  %v2517 = vpack.c.bf16 %v2439, %v2436
  %v2518 = vpack.c.bf16 %v2443, %v2440
  %v2519 = vpack.c.bf16 %v2444, %v2441
  %v2520 = vpack.c.bf16 %v2445, %v2442
  %v2521 = vpack.c.bf16 %v2449, %v2446
  %v2522 = vpack.c.bf16 %v2450, %v2447
  %v2523 = vpack.c.bf16 %v2451, %v2448
  %v2524 = vpack.c.bf16 %v2455, %v2452
  %v2525 = vpack.c.bf16 %v2456, %v2453
  %v2526 = vpack.c.bf16 %v2457, %v2454
  %v2527 = vpack.c.bf16 %v2461, %v2458
  %v2528 = vpack.c.bf16 %v2462, %v2459
  %v2529 = vpack.c.bf16 %v2463, %v2460
  %v2530 = vpack.c.bf16 %v2467, %v2464
  %v2531 = vpack.c.bf16 %v2468, %v2465
  %v2532 = vpack.c.bf16 %v2469, %v2466
  %v2533 = vpack.c.bf16 %v2473, %v2470
  %v2534 = vpack.c.bf16 %v2474, %v2471
  %v2535 = vpack.c.bf16 %v2475, %v2472
  %v2536 = vpack.c.bf16 %v2479, %v2476
  %v2537 = vpack.c.bf16 %v2480, %v2477
  %v2538 = vpack.c.bf16 %v2481, %v2478
  %v2539 = vpack.c.bf16 %v2485, %v2482
  %v2540 = vpack.c.bf16 %v2486, %v2483
  %v2541 = vpack.c.bf16 %v2487, %v2484
  %v2542 = vpack.c.bf16 %v2491, %v2488
  %v2543 = vpack.c.bf16 %v2492, %v2489
  %v2544 = vpack.c.bf16 %v2493, %v2490
  %v2545 = vpack.c.bf16 %v2497, %v2494
  %v2546 = vpack.c.bf16 %v2498, %v2495
  %v2547 = vpack.c.bf16 %v2499, %v2496
  %v2548 = vld [vmem:[%s5] sm:$0xff]
  %v2549 = vld [vmem:[%s5 + $0x8] sm:$0xff]
  %v2550 = vld [vmem:[%s5 + $0x10] sm:$0xff]
  %v2551 = vld [vmem:[%s5 + $0x18] sm:$0xff]
  %v2552 = vld [vmem:[%s5 + $0x20] sm:$0xff]
  %v2553 = vld [vmem:[%s5 + $0x28] sm:$0xff]
  %v2554 = vld [vmem:[%s5 + $0x30] sm:$0xff]
  %v2555 = vld [vmem:[%s5 + $0x38] sm:$0xff]
  %v2556 = vld [vmem:[%s5 + $0x40] sm:$0xff]
  %v2557 = vld [vmem:[%s5 + $0x48] sm:$0xff]
  %v2558 = vld [vmem:[%s5 + $0x50] sm:$0xff]
  %v2559 = vld [vmem:[%s5 + $0x58] sm:$0xff]
  %v2560 = vld [vmem:[%s5 + $0x60] sm:$0xff]
  %v2561 = vld [vmem:[%s5 + $0x68] sm:$0xff]
  %v2562 = vld [vmem:[%s5 + $0x70] sm:$0xff]
  %v2563 = vld [vmem:[%s5 + $0x78] sm:$0xff]
  %v2564 = vld [vmem:[%s5 + $0x80] sm:$0xff]
  %v2565 = vld [vmem:[%s5 + $0x88] sm:$0xff]
  %v2566 = vld [vmem:[%s5 + $0x90] sm:$0xff]
  %v2567 = vld [vmem:[%s5 + $0x98] sm:$0xff]
  %v2568 = vld [vmem:[%s5 + $0xa0] sm:$0xff]
  %v2569 = vld [vmem:[%s5 + $0xa8] sm:$0xff]
  %v2570 = vld [vmem:[%s5 + $0xb0] sm:$0xff]
  %v2571 = vld [vmem:[%s5 + $0xb8] sm:$0xff]
  %v2572 = vld [vmem:[%s5 + $0xc0] sm:$0xff]
  %v2573 = vld [vmem:[%s5 + $0xc8] sm:$0xff]
  %v2574 = vld [vmem:[%s5 + $0xd0] sm:$0xff]
  %v2575 = vld [vmem:[%s5 + $0xd8] sm:$0xff]
  %v2576 = vld [vmem:[%s5 + $0xe0] sm:$0xff]
  %v2577 = vld [vmem:[%s5 + $0xe8] sm:$0xff]
  %v2578 = vld [vmem:[%s5 + $0xf0] sm:$0xff]
  %v2579 = vld [vmem:[%s5 + $0xf8] sm:$0xff]
  %v2580 = vld [vmem:[%s5 + $0x100] sm:$0xff]
  %v2581 = vld [vmem:[%s5 + $0x108] sm:$0xff]
  %v2582 = vld [vmem:[%s5 + $0x110] sm:$0xff]
  %v2583 = vld [vmem:[%s5 + $0x118] sm:$0xff]
  %v2584 = vld [vmem:[%s5 + $0x120] sm:$0xff]
  %v2585 = vld [vmem:[%s5 + $0x128] sm:$0xff]
  %v2586 = vld [vmem:[%s5 + $0x130] sm:$0xff]
  %v2587 = vld [vmem:[%s5 + $0x138] sm:$0xff]
  %v2588 = vld [vmem:[%s5 + $0x140] sm:$0xff]
  %v2589 = vld [vmem:[%s5 + $0x148] sm:$0xff]
  %v2590 = vld [vmem:[%s5 + $0x150] sm:$0xff]
  %v2591 = vld [vmem:[%s5 + $0x158] sm:$0xff]
  %v2592 = vld [vmem:[%s5 + $0x160] sm:$0xff]
  %v2593 = vld [vmem:[%s5 + $0x168] sm:$0xff]
  %v2594 = vld [vmem:[%s5 + $0x170] sm:$0xff]
  %v2595 = vld [vmem:[%s5 + $0x178] sm:$0xff]
  %v2596 = vld [vmem:[%s6] sm:$0x3]
  %v2598 = vlaneseq
  %v2599 = vshrl.u32 %v2598, 7
  %v2600 = vsub.s32 0, %v2599
  %v2601 = vrot.slane %v2596, %v2600
  %v2602 = vlaneseq
  %v2603 = vshrl.u32 %v2602, 7
  %v2604 = vsub.s32 1, %v2603
  %v2605 = vrot.slane %v2596, %v2604
  %v2656 = vunpack.c.l.b16 %v2548
  %v2657 = vunpack.c.h.b16 %v2548
  %v2658 = vunpack.c.l.b16 %v2549
  %v2659 = vunpack.c.h.b16 %v2549
  %v2660 = vunpack.c.l.b16 %v2550
  %v2661 = vunpack.c.h.b16 %v2550
  %v2662 = vunpack.c.l.b16 %v2551
  %v2663 = vunpack.c.h.b16 %v2551
  %v2664 = vunpack.c.l.b16 %v2552
  %v2665 = vunpack.c.h.b16 %v2552
  %v2666 = vunpack.c.l.b16 %v2553
  %v2667 = vunpack.c.h.b16 %v2553
  %v2668 = vunpack.c.l.b16 %v2554
  %v2669 = vunpack.c.h.b16 %v2554
  %v2670 = vunpack.c.l.b16 %v2555
  %v2671 = vunpack.c.h.b16 %v2555
  %v2672 = vunpack.c.l.b16 %v2556
  %v2673 = vunpack.c.h.b16 %v2556
  %v2674 = vunpack.c.l.b16 %v2557
  %v2675 = vunpack.c.h.b16 %v2557
  %v2676 = vunpack.c.l.b16 %v2558
  %v2677 = vunpack.c.h.b16 %v2558
  %v2678 = vunpack.c.l.b16 %v2559
  %v2679 = vunpack.c.h.b16 %v2559
  %v2680 = vunpack.c.l.b16 %v2560
  %v2681 = vunpack.c.h.b16 %v2560
  %v2682 = vunpack.c.l.b16 %v2561
  %v2683 = vunpack.c.h.b16 %v2561
  %v2684 = vunpack.c.l.b16 %v2562
  %v2685 = vunpack.c.h.b16 %v2562
  %v2686 = vunpack.c.l.b16 %v2563
  %v2687 = vunpack.c.h.b16 %v2563
  %v2688 = vunpack.c.l.b16 %v2564
  %v2689 = vunpack.c.h.b16 %v2564
  %v2690 = vunpack.c.l.b16 %v2565
  %v2691 = vunpack.c.h.b16 %v2565
  %v2692 = vunpack.c.l.b16 %v2566
  %v2693 = vunpack.c.h.b16 %v2566
  %v2694 = vunpack.c.l.b16 %v2567
  %v2695 = vunpack.c.h.b16 %v2567
  %v2696 = vunpack.c.l.b16 %v2568
  %v2697 = vunpack.c.h.b16 %v2568
  %v2698 = vunpack.c.l.b16 %v2569
  %v2699 = vunpack.c.h.b16 %v2569
  %v2700 = vunpack.c.l.b16 %v2570
  %v2701 = vunpack.c.h.b16 %v2570
  %v2702 = vunpack.c.l.b16 %v2571
  %v2703 = vunpack.c.h.b16 %v2571
  %v2704 = vunpack.c.l.b16 %v2572
  %v2705 = vunpack.c.h.b16 %v2572
  %v2706 = vunpack.c.l.b16 %v2573
  %v2707 = vunpack.c.h.b16 %v2573
  %v2708 = vunpack.c.l.b16 %v2574
  %v2709 = vunpack.c.h.b16 %v2574
  %v2710 = vunpack.c.l.b16 %v2575
  %v2711 = vunpack.c.h.b16 %v2575
  %v2712 = vunpack.c.l.b16 %v2576
  %v2713 = vunpack.c.h.b16 %v2576
  %v2714 = vunpack.c.l.b16 %v2577
  %v2715 = vunpack.c.h.b16 %v2577
  %v2716 = vunpack.c.l.b16 %v2578
  %v2717 = vunpack.c.h.b16 %v2578
  %v2718 = vunpack.c.l.b16 %v2579
  %v2719 = vunpack.c.h.b16 %v2579
  %v2720 = vunpack.c.l.b16 %v2580
  %v2721 = vunpack.c.h.b16 %v2580
  %v2722 = vunpack.c.l.b16 %v2581
  %v2723 = vunpack.c.h.b16 %v2581
  %v2724 = vunpack.c.l.b16 %v2582
  %v2725 = vunpack.c.h.b16 %v2582
  %v2726 = vunpack.c.l.b16 %v2583
  %v2727 = vunpack.c.h.b16 %v2583
  %v2728 = vunpack.c.l.b16 %v2584
  %v2729 = vunpack.c.h.b16 %v2584
  %v2730 = vunpack.c.l.b16 %v2585
  %v2731 = vunpack.c.h.b16 %v2585
  %v2732 = vunpack.c.l.b16 %v2586
  %v2733 = vunpack.c.h.b16 %v2586
  %v2734 = vunpack.c.l.b16 %v2587
  %v2735 = vunpack.c.h.b16 %v2587
  %v2736 = vunpack.c.l.b16 %v2588
  %v2737 = vunpack.c.h.b16 %v2588
  %v2738 = vunpack.c.l.b16 %v2589
  %v2739 = vunpack.c.h.b16 %v2589
  %v2740 = vunpack.c.l.b16 %v2590
  %v2741 = vunpack.c.h.b16 %v2590
  %v2742 = vunpack.c.l.b16 %v2591
  %v2743 = vunpack.c.h.b16 %v2591
  %v2744 = vunpack.c.l.b16 %v2592
  %v2745 = vunpack.c.h.b16 %v2592
  %v2746 = vunpack.c.l.b16 %v2593
  %v2747 = vunpack.c.h.b16 %v2593
  %v2748 = vunpack.c.l.b16 %v2594
  %v2749 = vunpack.c.h.b16 %v2594
  %v2750 = vunpack.c.l.b16 %v2595
  %v2751 = vunpack.c.h.b16 %v2595
  %v2752 = vpack.c.b16 %v2658, %v2656
  %v2753 = vpack.c.b16 %v2659, %v2657
  %v2754 = vpack.c.b16 %v2662, %v2660
  %v2755 = vpack.c.b16 %v2663, %v2661
  %v2756 = vpack.c.b16 %v2666, %v2664
  %v2757 = vpack.c.b16 %v2667, %v2665
  %v2758 = vpack.c.b16 %v2670, %v2668
  %v2759 = vpack.c.b16 %v2671, %v2669
  %v2760 = vpack.c.b16 %v2674, %v2672
  %v2761 = vpack.c.b16 %v2675, %v2673
  %v2762 = vpack.c.b16 %v2678, %v2676
  %v2763 = vpack.c.b16 %v2679, %v2677
  %v2764 = vpack.c.b16 %v2682, %v2680
  %v2765 = vpack.c.b16 %v2683, %v2681
  %v2766 = vpack.c.b16 %v2686, %v2684
  %v2767 = vpack.c.b16 %v2687, %v2685
  %v2768 = vpack.c.b16 %v2690, %v2688
  %v2769 = vpack.c.b16 %v2691, %v2689
  %v2770 = vpack.c.b16 %v2694, %v2692
  %v2771 = vpack.c.b16 %v2695, %v2693
  %v2772 = vpack.c.b16 %v2698, %v2696
  %v2773 = vpack.c.b16 %v2699, %v2697
  %v2774 = vpack.c.b16 %v2702, %v2700
  %v2775 = vpack.c.b16 %v2703, %v2701
  %v2776 = vpack.c.b16 %v2706, %v2704
  %v2777 = vpack.c.b16 %v2707, %v2705
  %v2778 = vpack.c.b16 %v2710, %v2708
  %v2779 = vpack.c.b16 %v2711, %v2709
  %v2780 = vpack.c.b16 %v2714, %v2712
  %v2781 = vpack.c.b16 %v2715, %v2713
  %v2782 = vpack.c.b16 %v2718, %v2716
  %v2783 = vpack.c.b16 %v2719, %v2717
  %v2784 = vpack.c.b16 %v2722, %v2720
  %v2785 = vpack.c.b16 %v2723, %v2721
  %v2786 = vpack.c.b16 %v2726, %v2724
  %v2787 = vpack.c.b16 %v2727, %v2725
  %v2788 = vpack.c.b16 %v2730, %v2728
  %v2789 = vpack.c.b16 %v2731, %v2729
  %v2790 = vpack.c.b16 %v2734, %v2732
  %v2791 = vpack.c.b16 %v2735, %v2733
  %v2792 = vpack.c.b16 %v2738, %v2736
  %v2793 = vpack.c.b16 %v2739, %v2737
  %v2794 = vpack.c.b16 %v2742, %v2740
  %v2795 = vpack.c.b16 %v2743, %v2741
  %v2796 = vpack.c.b16 %v2746, %v2744
  %v2797 = vpack.c.b16 %v2747, %v2745
  %v2798 = vpack.c.b16 %v2750, %v2748
  %v2799 = vpack.c.b16 %v2751, %v2749
  %2848 = vmatprep.subr.bf16.mxu0 %v2767
  %2849 = vmatpush1.bf16.msra.mxu0 %v2766
  %2850 = vmatprep.subr.bf16.mxu0 %v2765
  %2851 = vmatpush1.bf16.msra.mxu0 %v2764
  %2852 = vmatprep.subr.bf16.mxu0 %v2763
  %2853 = vmatpush1.bf16.msra.mxu0 %v2762
  %2854 = vmatprep.subr.bf16.mxu0 %v2761
  %2855 = vmatpush1.bf16.msra.mxu0 %v2760
  %2856 = vmatprep.subr.bf16.mxu0 %v2759
  %2857 = vmatpush1.bf16.msra.mxu0 %v2758
  %2858 = vmatprep.subr.bf16.mxu0 %v2757
  %2859 = vmatpush1.bf16.msra.mxu0 %v2756
  %2860 = vmatprep.subr.bf16.mxu0 %v2755
  %2861 = vmatpush1.bf16.msra.mxu0 %v2754
  %2862 = vmatprep.subr.bf16.mxu0 %v2753
  %2863 = vmatpush1.bf16.msra.mxu0 %v2752
  %2864 = vmatprep.subr.bf16.mxu0 %v2783
  %2865 = vmatpush2.bf16.msra.mxu0 %v2782
  %2866 = vmatprep.subr.bf16.mxu0 %v2781
  %2867 = vmatpush2.bf16.msra.mxu0 %v2780
  %2868 = vmatprep.subr.bf16.mxu0 %v2779
  %2869 = vmatpush2.bf16.msra.mxu0 %v2778
  %2870 = vmatprep.subr.bf16.mxu0 %v2777
  %2871 = vmatpush2.bf16.msra.mxu0 %v2776
  %2872 = vmatprep.subr.bf16.mxu0 %v2775
  %2873 = vmatpush2.bf16.msra.mxu0 %v2774
  %2874 = vmatprep.subr.bf16.mxu0 %v2773
  %2875 = vmatpush2.bf16.msra.mxu0 %v2772
  %2876 = vmatprep.subr.bf16.mxu0 %v2771
  %2877 = vmatpush2.bf16.msra.mxu0 %v2770
  %2878 = vmatprep.subr.bf16.mxu0 %v2769
  %2879 = vmatpush2.bf16.msra.mxu0 %v2768
  %2880 = vmatprep.mubr.bf16.mxu0 %v2501
  %2881 = vmatmul.mubr.bf16.gmra.mxu0 %v2500
  %v2882 = vpop.f32.mrf.mxu0
  %v2883 = vadd.f32 %v2601, %v2882
  %v2884 = vpop.f32.mrf.mxu0
  %v2885 = vadd.f32 %v2605, %v2884
  %v2886 = vpop.f32.mrf.mxu0
  %v2887 = vadd.f32 %v2601, %v2886
  %v2888 = vpop.f32.mrf.mxu0
  %v2889 = vadd.f32 %v2605, %v2888
  %2890 = vmatprep.mubr.bf16.mxu0 %v2504
  %2891 = vmatmul.mubr.bf16.gmra.mxu0 %v2503
  %v2892 = vpop.f32.mrf.mxu0
  %v2893 = vadd.f32 %v2601, %v2892
  %v2894 = vpop.f32.mrf.mxu0
  %v2895 = vadd.f32 %v2605, %v2894
  %v2896 = vpop.f32.mrf.mxu0
  %v2897 = vadd.f32 %v2601, %v2896
  %v2898 = vpop.f32.mrf.mxu0
  %v2899 = vadd.f32 %v2605, %v2898
  %2900 = vmatprep.mubr.bf16.mxu0 %v2507
  %2901 = vmatmul.mubr.bf16.gmra.mxu0 %v2506
  %v2902 = vpop.f32.mrf.mxu0
  %v2903 = vadd.f32 %v2601, %v2902
  %v2904 = vpop.f32.mrf.mxu0
  %v2905 = vadd.f32 %v2605, %v2904
  %v2906 = vpop.f32.mrf.mxu0
  %v2907 = vadd.f32 %v2601, %v2906
  %v2908 = vpop.f32.mrf.mxu0
  %v2909 = vadd.f32 %v2605, %v2908
  %2910 = vmatprep.mubr.bf16.mxu0 %v2510
  %2911 = vmatmul.mubr.bf16.gmra.mxu0 %v2509
  %v2912 = vpop.f32.mrf.mxu0
  %v2913 = vadd.f32 %v2601, %v2912
  %v2914 = vpop.f32.mrf.mxu0
  %v2915 = vadd.f32 %v2605, %v2914
  %v2916 = vpop.f32.mrf.mxu0
  %v2917 = vadd.f32 %v2601, %v2916
  %v2918 = vpop.f32.mrf.mxu0
  %v2919 = vadd.f32 %v2605, %v2918
  %2920 = vmatprep.mubr.bf16.mxu0 %v2513
  %2921 = vmatmul.mubr.bf16.gmra.mxu0 %v2512
  %v2922 = vpop.f32.mrf.mxu0
  %v2923 = vadd.f32 %v2601, %v2922
  %v2924 = vpop.f32.mrf.mxu0
  %v2925 = vadd.f32 %v2605, %v2924
  %v2926 = vpop.f32.mrf.mxu0
  %v2927 = vadd.f32 %v2601, %v2926
  %v2928 = vpop.f32.mrf.mxu0
  %v2929 = vadd.f32 %v2605, %v2928
  %2930 = vmatprep.mubr.bf16.mxu0 %v2516
  %2931 = vmatmul.mubr.bf16.gmra.mxu0 %v2515
  %v2932 = vpop.f32.mrf.mxu0
  %v2933 = vadd.f32 %v2601, %v2932
  %v2934 = vpop.f32.mrf.mxu0
  %v2935 = vadd.f32 %v2605, %v2934
  %v2936 = vpop.f32.mrf.mxu0
  %v2937 = vadd.f32 %v2601, %v2936
  %v2938 = vpop.f32.mrf.mxu0
  %v2939 = vadd.f32 %v2605, %v2938
  %2940 = vmatprep.mubr.bf16.mxu0 %v2519
  %2941 = vmatmul.mubr.bf16.gmra.mxu0 %v2518
  %v2942 = vpop.f32.mrf.mxu0
  %v2943 = vadd.f32 %v2601, %v2942
  %v2944 = vpop.f32.mrf.mxu0
  %v2945 = vadd.f32 %v2605, %v2944
  %v2946 = vpop.f32.mrf.mxu0
  %v2947 = vadd.f32 %v2601, %v2946
  %v2948 = vpop.f32.mrf.mxu0
  %v2949 = vadd.f32 %v2605, %v2948
  %2950 = vmatprep.mubr.bf16.mxu0 %v2522
  %2951 = vmatmul.mubr.bf16.gmra.mxu0 %v2521
  %v2952 = vpop.f32.mrf.mxu0
  %v2953 = vadd.f32 %v2601, %v2952
  %v2954 = vpop.f32.mrf.mxu0
  %v2955 = vadd.f32 %v2605, %v2954
  %v2956 = vpop.f32.mrf.mxu0
  %v2957 = vadd.f32 %v2601, %v2956
  %v2958 = vpop.f32.mrf.mxu0
  %v2959 = vadd.f32 %v2605, %v2958
  %2960 = vmatprep.mubr.bf16.mxu0 %v2525
  %2961 = vmatmul.mubr.bf16.gmra.mxu0 %v2524
  %v2962 = vpop.f32.mrf.mxu0
  %v2963 = vadd.f32 %v2601, %v2962
  %v2964 = vpop.f32.mrf.mxu0
  %v2965 = vadd.f32 %v2605, %v2964
  %v2966 = vpop.f32.mrf.mxu0
  %v2967 = vadd.f32 %v2601, %v2966
  %v2968 = vpop.f32.mrf.mxu0
  %v2969 = vadd.f32 %v2605, %v2968
  %2970 = vmatprep.mubr.bf16.mxu0 %v2528
  %2971 = vmatmul.mubr.bf16.gmra.mxu0 %v2527
  %v2972 = vpop.f32.mrf.mxu0
  %v2973 = vadd.f32 %v2601, %v2972
  %v2974 = vpop.f32.mrf.mxu0
  %v2975 = vadd.f32 %v2605, %v2974
  %v2976 = vpop.f32.mrf.mxu0
  %v2977 = vadd.f32 %v2601, %v2976
  %v2978 = vpop.f32.mrf.mxu0
  %v2979 = vadd.f32 %v2605, %v2978
  %2980 = vmatprep.mubr.bf16.mxu0 %v2531
  %2981 = vmatmul.mubr.bf16.gmra.mxu0 %v2530
  %v2982 = vpop.f32.mrf.mxu0
  %v2983 = vadd.f32 %v2601, %v2982
  %v2984 = vpop.f32.mrf.mxu0
  %v2985 = vadd.f32 %v2605, %v2984
  %v2986 = vpop.f32.mrf.mxu0
  %v2987 = vadd.f32 %v2601, %v2986
  %v2988 = vpop.f32.mrf.mxu0
  %v2989 = vadd.f32 %v2605, %v2988
  %2990 = vmatprep.mubr.bf16.mxu0 %v2534
  %2991 = vmatmul.mubr.bf16.gmra.mxu0 %v2533
  %v2992 = vpop.f32.mrf.mxu0
  %v2993 = vadd.f32 %v2601, %v2992
  %v2994 = vpop.f32.mrf.mxu0
  %v2995 = vadd.f32 %v2605, %v2994
  %v2996 = vpop.f32.mrf.mxu0
  %v2997 = vadd.f32 %v2601, %v2996
  %v2998 = vpop.f32.mrf.mxu0
  %v2999 = vadd.f32 %v2605, %v2998
  %3000 = vmatprep.mubr.bf16.mxu0 %v2537
  %3001 = vmatmul.mubr.bf16.gmra.mxu0 %v2536
  %v3002 = vpop.f32.mrf.mxu0
  %v3003 = vadd.f32 %v2601, %v3002
  %v3004 = vpop.f32.mrf.mxu0
  %v3005 = vadd.f32 %v2605, %v3004
  %v3006 = vpop.f32.mrf.mxu0
  %v3007 = vadd.f32 %v2601, %v3006
  %v3008 = vpop.f32.mrf.mxu0
  %v3009 = vadd.f32 %v2605, %v3008
  %3010 = vmatprep.mubr.bf16.mxu0 %v2540
  %3011 = vmatmul.mubr.bf16.gmra.mxu0 %v2539
  %v3012 = vpop.f32.mrf.mxu0
  %v3013 = vadd.f32 %v2601, %v3012
  %v3014 = vpop.f32.mrf.mxu0
  %v3015 = vadd.f32 %v2605, %v3014
  %v3016 = vpop.f32.mrf.mxu0
  %v3017 = vadd.f32 %v2601, %v3016
  %v3018 = vpop.f32.mrf.mxu0
  %v3019 = vadd.f32 %v2605, %v3018
  %3020 = vmatprep.mubr.bf16.mxu0 %v2543
  %3021 = vmatmul.mubr.bf16.gmra.mxu0 %v2542
  %v3022 = vpop.f32.mrf.mxu0
  %v3023 = vadd.f32 %v2601, %v3022
  %v3024 = vpop.f32.mrf.mxu0
  %v3025 = vadd.f32 %v2605, %v3024
  %v3026 = vpop.f32.mrf.mxu0
  %v3027 = vadd.f32 %v2601, %v3026
  %v3028 = vpop.f32.mrf.mxu0
  %v3029 = vadd.f32 %v2605, %v3028
  %3030 = vmatprep.mubr.bf16.mxu0 %v2546
  %3031 = vmatmul.mubr.bf16.gmra.mxu0 %v2545
  %v3032 = vpop.f32.mrf.mxu0
  %v3033 = vadd.f32 %v2601, %v3032
  %v3034 = vpop.f32.mrf.mxu0
  %v3035 = vadd.f32 %v2605, %v3034
  %v3036 = vpop.f32.mrf.mxu0
  %v3037 = vadd.f32 %v2601, %v3036
  %v3038 = vpop.f32.mrf.mxu0
  %v3039 = vadd.f32 %v2605, %v3038
  %3040 = vdwg.mxu0
  %3041 = vmatprep.subr.bf16.mxu0 %v2799
  %3042 = vmatpush1.bf16.msra.mxu0 %v2798
  %3043 = vmatprep.subr.bf16.mxu0 %v2797
  %3044 = vmatpush1.bf16.msra.mxu0 %v2796
  %3045 = vmatprep.subr.bf16.mxu0 %v2795
  %3046 = vmatpush1.bf16.msra.mxu0 %v2794
  %3047 = vmatprep.subr.bf16.mxu0 %v2793
  %3048 = vmatpush1.bf16.msra.mxu0 %v2792
  %3049 = vmatprep.subr.bf16.mxu0 %v2791
  %3050 = vmatpush1.bf16.msra.mxu0 %v2790
  %3051 = vmatprep.subr.bf16.mxu0 %v2789
  %3052 = vmatpush1.bf16.msra.mxu0 %v2788
  %3053 = vmatprep.subr.bf16.mxu0 %v2787
  %3054 = vmatpush1.bf16.msra.mxu0 %v2786
  %3055 = vmatprep.subr.bf16.mxu0 %v2785
  %3056 = vmatpush1.bf16.msra.mxu0 %v2784
  %3057 = vmatprep.subr.bf16.mxu0 0
  %3058 = vmatpush2.bf16.msra.mxu0 0
  %3059 = vmatprep.subr.bf16.mxu0 0
  %3060 = vmatpush2.bf16.msra.mxu0 0
  %3061 = vmatprep.subr.bf16.mxu0 0
  %3062 = vmatpush2.bf16.msra.mxu0 0
  %3063 = vmatprep.subr.bf16.mxu0 0
  %3064 = vmatpush2.bf16.msra.mxu0 0
  %3065 = vmatprep.subr.bf16.mxu0 0
  %3066 = vmatpush2.bf16.msra.mxu0 0
  %3067 = vmatprep.subr.bf16.mxu0 0
  %3068 = vmatpush2.bf16.msra.mxu0 0
  %3069 = vmatprep.subr.bf16.mxu0 0
  %3070 = vmatpush2.bf16.msra.mxu0 0
  %3071 = vmatprep.subr.bf16.mxu0 0
  %3072 = vmatpush2.bf16.msra.mxu0 0
  %3073 = vmatprep.mubr.bf16.mxu0 0
  %3074 = vmatmul.mubr.bf16.gmra.mxu0 %v2502
  %v3075 = vpop.f32.mrf.mxu0
  %v3076 = vadd.f32 %v2883, %v3075
  %v3077 = vpop.f32.mrf.mxu0
  %v3078 = vadd.f32 %v2885, %v3077
  %v3079 = vpop.f32.mrf.mxu0
  %v3080 = vadd.f32 %v2887, %v3079
  %v3081 = vpop.f32.mrf.mxu0
  %v3082 = vadd.f32 %v2889, %v3081
  %3083 = vmatprep.mubr.bf16.mxu0 0
  %3084 = vmatmul.mubr.bf16.gmra.mxu0 %v2505
  %v3085 = vpop.f32.mrf.mxu0
  %v3086 = vadd.f32 %v2893, %v3085
  %v3087 = vpop.f32.mrf.mxu0
  %v3088 = vadd.f32 %v2895, %v3087
  %v3089 = vpop.f32.mrf.mxu0
  %v3090 = vadd.f32 %v2897, %v3089
  %v3091 = vpop.f32.mrf.mxu0
  %v3092 = vadd.f32 %v2899, %v3091
  %3093 = vmatprep.mubr.bf16.mxu0 0
  %3094 = vmatmul.mubr.bf16.gmra.mxu0 %v2508
  %v3095 = vpop.f32.mrf.mxu0
  %v3096 = vadd.f32 %v2903, %v3095
  %v3097 = vpop.f32.mrf.mxu0
  %v3098 = vadd.f32 %v2905, %v3097
  %v3099 = vpop.f32.mrf.mxu0
  %v3100 = vadd.f32 %v2907, %v3099
  %v3101 = vpop.f32.mrf.mxu0
  %v3102 = vadd.f32 %v2909, %v3101
  %3103 = vmatprep.mubr.bf16.mxu0 0
  %3104 = vmatmul.mubr.bf16.gmra.mxu0 %v2511
  %v3105 = vpop.f32.mrf.mxu0
  %v3106 = vadd.f32 %v2913, %v3105
  %v3107 = vpop.f32.mrf.mxu0
  %v3108 = vadd.f32 %v2915, %v3107
  %v3109 = vpop.f32.mrf.mxu0
  %v3110 = vadd.f32 %v2917, %v3109
  %v3111 = vpop.f32.mrf.mxu0
  %v3112 = vadd.f32 %v2919, %v3111
  %3113 = vmatprep.mubr.bf16.mxu0 0
  %3114 = vmatmul.mubr.bf16.gmra.mxu0 %v2514
  %v3115 = vpop.f32.mrf.mxu0
  %v3116 = vadd.f32 %v2923, %v3115
  %v3117 = vpop.f32.mrf.mxu0
  %v3118 = vadd.f32 %v2925, %v3117
  %v3119 = vpop.f32.mrf.mxu0
  %v3120 = vadd.f32 %v2927, %v3119
  %v3121 = vpop.f32.mrf.mxu0
  %v3122 = vadd.f32 %v2929, %v3121
  %3123 = vmatprep.mubr.bf16.mxu0 0
  %3124 = vmatmul.mubr.bf16.gmra.mxu0 %v2517
  %v3125 = vpop.f32.mrf.mxu0
  %v3126 = vadd.f32 %v2933, %v3125
  %v3127 = vpop.f32.mrf.mxu0
  %v3128 = vadd.f32 %v2935, %v3127
  %v3129 = vpop.f32.mrf.mxu0
  %v3130 = vadd.f32 %v2937, %v3129
  %v3131 = vpop.f32.mrf.mxu0
  %v3132 = vadd.f32 %v2939, %v3131
  %3133 = vmatprep.mubr.bf16.mxu0 0
  %3134 = vmatmul.mubr.bf16.gmra.mxu0 %v2520
  %v3135 = vpop.f32.mrf.mxu0
  %v3136 = vadd.f32 %v2943, %v3135
  %v3137 = vpop.f32.mrf.mxu0
  %v3138 = vadd.f32 %v2945, %v3137
  %v3139 = vpop.f32.mrf.mxu0
  %v3140 = vadd.f32 %v2947, %v3139
  %v3141 = vpop.f32.mrf.mxu0
  %v3142 = vadd.f32 %v2949, %v3141
  %3143 = vmatprep.mubr.bf16.mxu0 0
  %3144 = vmatmul.mubr.bf16.gmra.mxu0 %v2523
  %v3145 = vpop.f32.mrf.mxu0
  %v3146 = vadd.f32 %v2953, %v3145
  %v3147 = vpop.f32.mrf.mxu0
  %v3148 = vadd.f32 %v2955, %v3147
  %v3149 = vpop.f32.mrf.mxu0
  %v3150 = vadd.f32 %v2957, %v3149
  %v3151 = vpop.f32.mrf.mxu0
  %v3152 = vadd.f32 %v2959, %v3151
  %3153 = vmatprep.mubr.bf16.mxu0 0
  %3154 = vmatmul.mubr.bf16.gmra.mxu0 %v2526
  %v3155 = vpop.f32.mrf.mxu0
  %v3156 = vadd.f32 %v2963, %v3155
  %v3157 = vpop.f32.mrf.mxu0
  %v3158 = vadd.f32 %v2965, %v3157
  %v3159 = vpop.f32.mrf.mxu0
  %v3160 = vadd.f32 %v2967, %v3159
  %v3161 = vpop.f32.mrf.mxu0
  %v3162 = vadd.f32 %v2969, %v3161
  %3163 = vmatprep.mubr.bf16.mxu0 0
  %3164 = vmatmul.mubr.bf16.gmra.mxu0 %v2529
  %v3165 = vpop.f32.mrf.mxu0
  %v3166 = vadd.f32 %v2973, %v3165
  %v3167 = vpop.f32.mrf.mxu0
  %v3168 = vadd.f32 %v2975, %v3167
  %v3169 = vpop.f32.mrf.mxu0
  %v3170 = vadd.f32 %v2977, %v3169
  %v3171 = vpop.f32.mrf.mxu0
  %v3172 = vadd.f32 %v2979, %v3171
  %3173 = vmatprep.mubr.bf16.mxu0 0
  %3174 = vmatmul.mubr.bf16.gmra.mxu0 %v2532
  %v3175 = vpop.f32.mrf.mxu0
  %v3176 = vadd.f32 %v2983, %v3175
  %v3177 = vpop.f32.mrf.mxu0
  %v3178 = vadd.f32 %v2985, %v3177
  %v3179 = vpop.f32.mrf.mxu0
  %v3180 = vadd.f32 %v2987, %v3179
  %v3181 = vpop.f32.mrf.mxu0
  %v3182 = vadd.f32 %v2989, %v3181
  %3183 = vmatprep.mubr.bf16.mxu0 0
  %3184 = vmatmul.mubr.bf16.gmra.mxu0 %v2535
  %v3185 = vpop.f32.mrf.mxu0
  %v3186 = vadd.f32 %v2993, %v3185
  %v3187 = vpop.f32.mrf.mxu0
  %v3188 = vadd.f32 %v2995, %v3187
  %v3189 = vpop.f32.mrf.mxu0
  %v3190 = vadd.f32 %v2997, %v3189
  %v3191 = vpop.f32.mrf.mxu0
  %v3192 = vadd.f32 %v2999, %v3191
  %3193 = vmatprep.mubr.bf16.mxu0 0
  %3194 = vmatmul.mubr.bf16.gmra.mxu0 %v2538
  %v3195 = vpop.f32.mrf.mxu0
  %v3196 = vadd.f32 %v3003, %v3195
  %v3197 = vpop.f32.mrf.mxu0
  %v3198 = vadd.f32 %v3005, %v3197
  %v3199 = vpop.f32.mrf.mxu0
  %v3200 = vadd.f32 %v3007, %v3199
  %v3201 = vpop.f32.mrf.mxu0
  %v3202 = vadd.f32 %v3009, %v3201
  %3203 = vmatprep.mubr.bf16.mxu0 0
  %3204 = vmatmul.mubr.bf16.gmra.mxu0 %v2541
  %v3205 = vpop.f32.mrf.mxu0
  %v3206 = vadd.f32 %v3013, %v3205
  %v3207 = vpop.f32.mrf.mxu0
  %v3208 = vadd.f32 %v3015, %v3207
  %v3209 = vpop.f32.mrf.mxu0
  %v3210 = vadd.f32 %v3017, %v3209
  %v3211 = vpop.f32.mrf.mxu0
  %v3212 = vadd.f32 %v3019, %v3211
  %3213 = vmatprep.mubr.bf16.mxu0 0
  %3214 = vmatmul.mubr.bf16.gmra.mxu0 %v2544
  %v3215 = vpop.f32.mrf.mxu0
  %v3216 = vadd.f32 %v3023, %v3215
  %v3217 = vpop.f32.mrf.mxu0
  %v3218 = vadd.f32 %v3025, %v3217
  %v3219 = vpop.f32.mrf.mxu0
  %v3220 = vadd.f32 %v3027, %v3219
  %v3221 = vpop.f32.mrf.mxu0
  %v3222 = vadd.f32 %v3029, %v3221
  %3223 = vmatprep.mubr.bf16.mxu0 0
  %3224 = vmatmul.mubr.bf16.gmra.mxu0 %v2547
  %v3225 = vpop.f32.mrf.mxu0
  %v3226 = vadd.f32 %v3033, %v3225
  %v3227 = vpop.f32.mrf.mxu0
  %v3228 = vadd.f32 %v3035, %v3227
  %v3229 = vpop.f32.mrf.mxu0
  %v3230 = vadd.f32 %v3037, %v3229
  %v3231 = vpop.f32.mrf.mxu0
  %v3232 = vadd.f32 %v3039, %v3231
  %3233 = vdwg.mxu0
  %v3234 = vrot.slane %v3076, 4
  %v3235 = vmax.f32 %v3076, %v3234
  %v3236 = vrot.slane %v3235, 2
  %v3237 = vmax.f32 %v3235, %v3236
  %v3238 = vrot.slane %v3237, 1
  %v3239 = vmax.f32 %v3237, %v3238
  %v3240 = vrot.slane %v3078, 4
  %v3241 = vmax.f32 %v3078, %v3240
  %v3242 = vrot.slane %v3241, 2
  %v3243 = vmax.f32 %v3241, %v3242
  %v3244 = vrot.slane %v3243, 1
  %v3245 = vmax.f32 %v3243, %v3244
  %v3246 = vrot.slane %v3080, 4
  %v3247 = vmax.f32 %v3080, %v3246
  %v3248 = vrot.slane %v3247, 2
  %v3249 = vmax.f32 %v3247, %v3248
  %v3250 = vrot.slane %v3249, 1
  %v3251 = vmax.f32 %v3249, %v3250
  %v3252 = vrot.slane %v3082, 4
  %v3253 = vmax.f32 %v3082, %v3252
  %v3254 = vrot.slane %v3253, 2
  %v3255 = vmax.f32 %v3253, %v3254
  %v3256 = vrot.slane %v3255, 1
  %v3257 = vmax.f32 %v3255, %v3256
  %v3258 = vrot.slane %v3086, 4
  %v3259 = vmax.f32 %v3086, %v3258
  %v3260 = vrot.slane %v3259, 2
  %v3261 = vmax.f32 %v3259, %v3260
  %v3262 = vrot.slane %v3261, 1
  %v3263 = vmax.f32 %v3261, %v3262
  %v3264 = vrot.slane %v3088, 4
  %v3265 = vmax.f32 %v3088, %v3264
  %v3266 = vrot.slane %v3265, 2
  %v3267 = vmax.f32 %v3265, %v3266
  %v3268 = vrot.slane %v3267, 1
  %v3269 = vmax.f32 %v3267, %v3268
  %v3270 = vrot.slane %v3090, 4
  %v3271 = vmax.f32 %v3090, %v3270
  %v3272 = vrot.slane %v3271, 2
  %v3273 = vmax.f32 %v3271, %v3272
  %v3274 = vrot.slane %v3273, 1
  %v3275 = vmax.f32 %v3273, %v3274
  %v3276 = vrot.slane %v3092, 4
  %v3277 = vmax.f32 %v3092, %v3276
  %v3278 = vrot.slane %v3277, 2
  %v3279 = vmax.f32 %v3277, %v3278
  %v3280 = vrot.slane %v3279, 1
  %v3281 = vmax.f32 %v3279, %v3280
  %v3282 = vrot.slane %v3096, 4
  %v3283 = vmax.f32 %v3096, %v3282
  %v3284 = vrot.slane %v3283, 2
  %v3285 = vmax.f32 %v3283, %v3284
  %v3286 = vrot.slane %v3285, 1
  %v3287 = vmax.f32 %v3285, %v3286
  %v3288 = vrot.slane %v3098, 4
  %v3289 = vmax.f32 %v3098, %v3288
  %v3290 = vrot.slane %v3289, 2
  %v3291 = vmax.f32 %v3289, %v3290
  %v3292 = vrot.slane %v3291, 1
  %v3293 = vmax.f32 %v3291, %v3292
  %v3294 = vrot.slane %v3100, 4
  %v3295 = vmax.f32 %v3100, %v3294
  %v3296 = vrot.slane %v3295, 2
  %v3297 = vmax.f32 %v3295, %v3296
  %v3298 = vrot.slane %v3297, 1
  %v3299 = vmax.f32 %v3297, %v3298
  %v3300 = vrot.slane %v3102, 4
  %v3301 = vmax.f32 %v3102, %v3300
  %v3302 = vrot.slane %v3301, 2
  %v3303 = vmax.f32 %v3301, %v3302
  %v3304 = vrot.slane %v3303, 1
  %v3305 = vmax.f32 %v3303, %v3304
  %v3306 = vrot.slane %v3106, 4
  %v3307 = vmax.f32 %v3106, %v3306
  %v3308 = vrot.slane %v3307, 2
  %v3309 = vmax.f32 %v3307, %v3308
  %v3310 = vrot.slane %v3309, 1
  %v3311 = vmax.f32 %v3309, %v3310
  %v3312 = vrot.slane %v3108, 4
  %v3313 = vmax.f32 %v3108, %v3312
  %v3314 = vrot.slane %v3313, 2
  %v3315 = vmax.f32 %v3313, %v3314
  %v3316 = vrot.slane %v3315, 1
  %v3317 = vmax.f32 %v3315, %v3316
  %v3318 = vrot.slane %v3110, 4
  %v3319 = vmax.f32 %v3110, %v3318
  %v3320 = vrot.slane %v3319, 2
  %v3321 = vmax.f32 %v3319, %v3320
  %v3322 = vrot.slane %v3321, 1
  %v3323 = vmax.f32 %v3321, %v3322
  %v3324 = vrot.slane %v3112, 4
  %v3325 = vmax.f32 %v3112, %v3324
  %v3326 = vrot.slane %v3325, 2
  %v3327 = vmax.f32 %v3325, %v3326
  %v3328 = vrot.slane %v3327, 1
  %v3329 = vmax.f32 %v3327, %v3328
  %v3330 = vrot.slane %v3116, 4
  %v3331 = vmax.f32 %v3116, %v3330
  %v3332 = vrot.slane %v3331, 2
  %v3333 = vmax.f32 %v3331, %v3332
  %v3334 = vrot.slane %v3333, 1
  %v3335 = vmax.f32 %v3333, %v3334
  %v3336 = vrot.slane %v3118, 4
  %v3337 = vmax.f32 %v3118, %v3336
  %v3338 = vrot.slane %v3337, 2
  %v3339 = vmax.f32 %v3337, %v3338
  %v3340 = vrot.slane %v3339, 1
  %v3341 = vmax.f32 %v3339, %v3340
  %v3342 = vrot.slane %v3120, 4
  %v3343 = vmax.f32 %v3120, %v3342
  %v3344 = vrot.slane %v3343, 2
  %v3345 = vmax.f32 %v3343, %v3344
  %v3346 = vrot.slane %v3345, 1
  %v3347 = vmax.f32 %v3345, %v3346
  %v3348 = vrot.slane %v3122, 4
  %v3349 = vmax.f32 %v3122, %v3348
  %v3350 = vrot.slane %v3349, 2
  %v3351 = vmax.f32 %v3349, %v3350
  %v3352 = vrot.slane %v3351, 1
  %v3353 = vmax.f32 %v3351, %v3352
  %v3354 = vrot.slane %v3126, 4
  %v3355 = vmax.f32 %v3126, %v3354
  %v3356 = vrot.slane %v3355, 2
  %v3357 = vmax.f32 %v3355, %v3356
  %v3358 = vrot.slane %v3357, 1
  %v3359 = vmax.f32 %v3357, %v3358
  %v3360 = vrot.slane %v3128, 4
  %v3361 = vmax.f32 %v3128, %v3360
  %v3362 = vrot.slane %v3361, 2
  %v3363 = vmax.f32 %v3361, %v3362
  %v3364 = vrot.slane %v3363, 1
  %v3365 = vmax.f32 %v3363, %v3364
  %v3366 = vrot.slane %v3130, 4
  %v3367 = vmax.f32 %v3130, %v3366
  %v3368 = vrot.slane %v3367, 2
  %v3369 = vmax.f32 %v3367, %v3368
  %v3370 = vrot.slane %v3369, 1
  %v3371 = vmax.f32 %v3369, %v3370
  %v3372 = vrot.slane %v3132, 4
  %v3373 = vmax.f32 %v3132, %v3372
  %v3374 = vrot.slane %v3373, 2
  %v3375 = vmax.f32 %v3373, %v3374
  %v3376 = vrot.slane %v3375, 1
  %v3377 = vmax.f32 %v3375, %v3376
  %v3378 = vrot.slane %v3136, 4
  %v3379 = vmax.f32 %v3136, %v3378
  %v3380 = vrot.slane %v3379, 2
  %v3381 = vmax.f32 %v3379, %v3380
  %v3382 = vrot.slane %v3381, 1
  %v3383 = vmax.f32 %v3381, %v3382
  %v3384 = vrot.slane %v3138, 4
  %v3385 = vmax.f32 %v3138, %v3384
  %v3386 = vrot.slane %v3385, 2
  %v3387 = vmax.f32 %v3385, %v3386
  %v3388 = vrot.slane %v3387, 1
  %v3389 = vmax.f32 %v3387, %v3388
  %v3390 = vrot.slane %v3140, 4
  %v3391 = vmax.f32 %v3140, %v3390
  %v3392 = vrot.slane %v3391, 2
  %v3393 = vmax.f32 %v3391, %v3392
  %v3394 = vrot.slane %v3393, 1
  %v3395 = vmax.f32 %v3393, %v3394
  %v3396 = vrot.slane %v3142, 4
  %v3397 = vmax.f32 %v3142, %v3396
  %v3398 = vrot.slane %v3397, 2
  %v3399 = vmax.f32 %v3397, %v3398
  %v3400 = vrot.slane %v3399, 1
  %v3401 = vmax.f32 %v3399, %v3400
  %v3402 = vrot.slane %v3146, 4
  %v3403 = vmax.f32 %v3146, %v3402
  %v3404 = vrot.slane %v3403, 2
  %v3405 = vmax.f32 %v3403, %v3404
  %v3406 = vrot.slane %v3405, 1
  %v3407 = vmax.f32 %v3405, %v3406
  %v3408 = vrot.slane %v3148, 4
  %v3409 = vmax.f32 %v3148, %v3408
  %v3410 = vrot.slane %v3409, 2
  %v3411 = vmax.f32 %v3409, %v3410
  %v3412 = vrot.slane %v3411, 1
  %v3413 = vmax.f32 %v3411, %v3412
  %v3414 = vrot.slane %v3150, 4
  %v3415 = vmax.f32 %v3150, %v3414
  %v3416 = vrot.slane %v3415, 2
  %v3417 = vmax.f32 %v3415, %v3416
  %v3418 = vrot.slane %v3417, 1
  %v3419 = vmax.f32 %v3417, %v3418
  %v3420 = vrot.slane %v3152, 4
  %v3421 = vmax.f32 %v3152, %v3420
  %v3422 = vrot.slane %v3421, 2
  %v3423 = vmax.f32 %v3421, %v3422
  %v3424 = vrot.slane %v3423, 1
  %v3425 = vmax.f32 %v3423, %v3424
  %v3426 = vrot.slane %v3156, 4
  %v3427 = vmax.f32 %v3156, %v3426
  %v3428 = vrot.slane %v3427, 2
  %v3429 = vmax.f32 %v3427, %v3428
  %v3430 = vrot.slane %v3429, 1
  %v3431 = vmax.f32 %v3429, %v3430
  %v3432 = vrot.slane %v3158, 4
  %v3433 = vmax.f32 %v3158, %v3432
  %v3434 = vrot.slane %v3433, 2
  %v3435 = vmax.f32 %v3433, %v3434
  %v3436 = vrot.slane %v3435, 1
  %v3437 = vmax.f32 %v3435, %v3436
  %v3438 = vrot.slane %v3160, 4
  %v3439 = vmax.f32 %v3160, %v3438
  %v3440 = vrot.slane %v3439, 2
  %v3441 = vmax.f32 %v3439, %v3440
  %v3442 = vrot.slane %v3441, 1
  %v3443 = vmax.f32 %v3441, %v3442
  %v3444 = vrot.slane %v3162, 4
  %v3445 = vmax.f32 %v3162, %v3444
  %v3446 = vrot.slane %v3445, 2
  %v3447 = vmax.f32 %v3445, %v3446
  %v3448 = vrot.slane %v3447, 1
  %v3449 = vmax.f32 %v3447, %v3448
  %v3450 = vrot.slane %v3166, 4
  %v3451 = vmax.f32 %v3166, %v3450
  %v3452 = vrot.slane %v3451, 2
  %v3453 = vmax.f32 %v3451, %v3452
  %v3454 = vrot.slane %v3453, 1
  %v3455 = vmax.f32 %v3453, %v3454
  %v3456 = vrot.slane %v3168, 4
  %v3457 = vmax.f32 %v3168, %v3456
  %v3458 = vrot.slane %v3457, 2
  %v3459 = vmax.f32 %v3457, %v3458
  %v3460 = vrot.slane %v3459, 1
  %v3461 = vmax.f32 %v3459, %v3460
  %v3462 = vrot.slane %v3170, 4
  %v3463 = vmax.f32 %v3170, %v3462
  %v3464 = vrot.slane %v3463, 2
  %v3465 = vmax.f32 %v3463, %v3464
  %v3466 = vrot.slane %v3465, 1
  %v3467 = vmax.f32 %v3465, %v3466
  %v3468 = vrot.slane %v3172, 4
  %v3469 = vmax.f32 %v3172, %v3468
  %v3470 = vrot.slane %v3469, 2
  %v3471 = vmax.f32 %v3469, %v3470
  %v3472 = vrot.slane %v3471, 1
  %v3473 = vmax.f32 %v3471, %v3472
  %v3474 = vrot.slane %v3176, 4
  %v3475 = vmax.f32 %v3176, %v3474
  %v3476 = vrot.slane %v3475, 2
  %v3477 = vmax.f32 %v3475, %v3476
  %v3478 = vrot.slane %v3477, 1
  %v3479 = vmax.f32 %v3477, %v3478
  %v3480 = vrot.slane %v3178, 4
  %v3481 = vmax.f32 %v3178, %v3480
  %v3482 = vrot.slane %v3481, 2
  %v3483 = vmax.f32 %v3481, %v3482
  %v3484 = vrot.slane %v3483, 1
  %v3485 = vmax.f32 %v3483, %v3484
  %v3486 = vrot.slane %v3180, 4
  %v3487 = vmax.f32 %v3180, %v3486
  %v3488 = vrot.slane %v3487, 2
  %v3489 = vmax.f32 %v3487, %v3488
  %v3490 = vrot.slane %v3489, 1
  %v3491 = vmax.f32 %v3489, %v3490
  %v3492 = vrot.slane %v3182, 4
  %v3493 = vmax.f32 %v3182, %v3492
  %v3494 = vrot.slane %v3493, 2
  %v3495 = vmax.f32 %v3493, %v3494
  %v3496 = vrot.slane %v3495, 1
  %v3497 = vmax.f32 %v3495, %v3496
  %v3498 = vrot.slane %v3186, 4
  %v3499 = vmax.f32 %v3186, %v3498
  %v3500 = vrot.slane %v3499, 2
  %v3501 = vmax.f32 %v3499, %v3500
  %v3502 = vrot.slane %v3501, 1
  %v3503 = vmax.f32 %v3501, %v3502
  %v3504 = vrot.slane %v3188, 4
  %v3505 = vmax.f32 %v3188, %v3504
  %v3506 = vrot.slane %v3505, 2
  %v3507 = vmax.f32 %v3505, %v3506
  %v3508 = vrot.slane %v3507, 1
  %v3509 = vmax.f32 %v3507, %v3508
  %v3510 = vrot.slane %v3190, 4
  %v3511 = vmax.f32 %v3190, %v3510
  %v3512 = vrot.slane %v3511, 2
  %v3513 = vmax.f32 %v3511, %v3512
  %v3514 = vrot.slane %v3513, 1
  %v3515 = vmax.f32 %v3513, %v3514
  %v3516 = vrot.slane %v3192, 4
  %v3517 = vmax.f32 %v3192, %v3516
  %v3518 = vrot.slane %v3517, 2
  %v3519 = vmax.f32 %v3517, %v3518
  %v3520 = vrot.slane %v3519, 1
  %v3521 = vmax.f32 %v3519, %v3520
  %v3522 = vrot.slane %v3196, 4
  %v3523 = vmax.f32 %v3196, %v3522
  %v3524 = vrot.slane %v3523, 2
  %v3525 = vmax.f32 %v3523, %v3524
  %v3526 = vrot.slane %v3525, 1
  %v3527 = vmax.f32 %v3525, %v3526
  %v3528 = vrot.slane %v3198, 4
  %v3529 = vmax.f32 %v3198, %v3528
  %v3530 = vrot.slane %v3529, 2
  %v3531 = vmax.f32 %v3529, %v3530
  %v3532 = vrot.slane %v3531, 1
  %v3533 = vmax.f32 %v3531, %v3532
  %v3534 = vrot.slane %v3200, 4
  %v3535 = vmax.f32 %v3200, %v3534
  %v3536 = vrot.slane %v3535, 2
  %v3537 = vmax.f32 %v3535, %v3536
  %v3538 = vrot.slane %v3537, 1
  %v3539 = vmax.f32 %v3537, %v3538
  %v3540 = vrot.slane %v3202, 4
  %v3541 = vmax.f32 %v3202, %v3540
  %v3542 = vrot.slane %v3541, 2
  %v3543 = vmax.f32 %v3541, %v3542
  %v3544 = vrot.slane %v3543, 1
  %v3545 = vmax.f32 %v3543, %v3544
  %v3546 = vrot.slane %v3206, 4
  %v3547 = vmax.f32 %v3206, %v3546
  %v3548 = vrot.slane %v3547, 2
  %v3549 = vmax.f32 %v3547, %v3548
  %v3550 = vrot.slane %v3549, 1
  %v3551 = vmax.f32 %v3549, %v3550
  %v3552 = vrot.slane %v3208, 4
  %v3553 = vmax.f32 %v3208, %v3552
  %v3554 = vrot.slane %v3553, 2
  %v3555 = vmax.f32 %v3553, %v3554
  %v3556 = vrot.slane %v3555, 1
  %v3557 = vmax.f32 %v3555, %v3556
  %v3558 = vrot.slane %v3210, 4
  %v3559 = vmax.f32 %v3210, %v3558
  %v3560 = vrot.slane %v3559, 2
  %v3561 = vmax.f32 %v3559, %v3560
  %v3562 = vrot.slane %v3561, 1
  %v3563 = vmax.f32 %v3561, %v3562
  %v3564 = vrot.slane %v3212, 4
  %v3565 = vmax.f32 %v3212, %v3564
  %v3566 = vrot.slane %v3565, 2
  %v3567 = vmax.f32 %v3565, %v3566
  %v3568 = vrot.slane %v3567, 1
  %v3569 = vmax.f32 %v3567, %v3568
  %v3570 = vrot.slane %v3216, 4
  %v3571 = vmax.f32 %v3216, %v3570
  %v3572 = vrot.slane %v3571, 2
  %v3573 = vmax.f32 %v3571, %v3572
  %v3574 = vrot.slane %v3573, 1
  %v3575 = vmax.f32 %v3573, %v3574
  %v3576 = vrot.slane %v3218, 4
  %v3577 = vmax.f32 %v3218, %v3576
  %v3578 = vrot.slane %v3577, 2
  %v3579 = vmax.f32 %v3577, %v3578
  %v3580 = vrot.slane %v3579, 1
  %v3581 = vmax.f32 %v3579, %v3580
  %v3582 = vrot.slane %v3220, 4
  %v3583 = vmax.f32 %v3220, %v3582
  %v3584 = vrot.slane %v3583, 2
  %v3585 = vmax.f32 %v3583, %v3584
  %v3586 = vrot.slane %v3585, 1
  %v3587 = vmax.f32 %v3585, %v3586
  %v3588 = vrot.slane %v3222, 4
  %v3589 = vmax.f32 %v3222, %v3588
  %v3590 = vrot.slane %v3589, 2
  %v3591 = vmax.f32 %v3589, %v3590
  %v3592 = vrot.slane %v3591, 1
  %v3593 = vmax.f32 %v3591, %v3592
  %v3594 = vrot.slane %v3226, 4
  %v3595 = vmax.f32 %v3226, %v3594
  %v3596 = vrot.slane %v3595, 2
  %v3597 = vmax.f32 %v3595, %v3596
  %v3598 = vrot.slane %v3597, 1
  %v3599 = vmax.f32 %v3597, %v3598
  %v3600 = vrot.slane %v3228, 4
  %v3601 = vmax.f32 %v3228, %v3600
  %v3602 = vrot.slane %v3601, 2
  %v3603 = vmax.f32 %v3601, %v3602
  %v3604 = vrot.slane %v3603, 1
  %v3605 = vmax.f32 %v3603, %v3604
  %v3606 = vrot.slane %v3230, 4
  %v3607 = vmax.f32 %v3230, %v3606
  %v3608 = vrot.slane %v3607, 2
  %v3609 = vmax.f32 %v3607, %v3608
  %v3610 = vrot.slane %v3609, 1
  %v3611 = vmax.f32 %v3609, %v3610
  %v3612 = vrot.slane %v3232, 4
  %v3613 = vmax.f32 %v3232, %v3612
  %v3614 = vrot.slane %v3613, 2
  %v3615 = vmax.f32 %v3613, %v3614
  %v3616 = vrot.slane %v3615, 1
  %v3617 = vmax.f32 %v3615, %v3616
  %vm3618 = vcmp.ge.f32.partialorder %v3239, 0.0
  %vm3619 = vcmp.ge.f32.partialorder %v3245, 0.0
  %vm3620 = vcmp.ge.f32.partialorder %v3251, 0.0
  %vm3621 = vcmp.ge.f32.partialorder %v3257, 0.0
  %vm3622 = vcmp.ge.f32.partialorder %v3263, 0.0
  %vm3623 = vcmp.ge.f32.partialorder %v3269, 0.0
  %vm3624 = vcmp.ge.f32.partialorder %v3275, 0.0
  %vm3625 = vcmp.ge.f32.partialorder %v3281, 0.0
  %vm3626 = vcmp.ge.f32.partialorder %v3287, 0.0
  %vm3627 = vcmp.ge.f32.partialorder %v3293, 0.0
  %vm3628 = vcmp.ge.f32.partialorder %v3299, 0.0
  %vm3629 = vcmp.ge.f32.partialorder %v3305, 0.0
  %vm3630 = vcmp.ge.f32.partialorder %v3311, 0.0
  %vm3631 = vcmp.ge.f32.partialorder %v3317, 0.0
  %vm3632 = vcmp.ge.f32.partialorder %v3323, 0.0
  %vm3633 = vcmp.ge.f32.partialorder %v3329, 0.0
  %vm3634 = vcmp.ge.f32.partialorder %v3335, 0.0
  %vm3635 = vcmp.ge.f32.partialorder %v3341, 0.0
  %vm3636 = vcmp.ge.f32.partialorder %v3347, 0.0
  %vm3637 = vcmp.ge.f32.partialorder %v3353, 0.0
  %vm3638 = vcmp.ge.f32.partialorder %v3359, 0.0
  %vm3639 = vcmp.ge.f32.partialorder %v3365, 0.0
  %vm3640 = vcmp.ge.f32.partialorder %v3371, 0.0
  %vm3641 = vcmp.ge.f32.partialorder %v3377, 0.0
  %vm3642 = vcmp.ge.f32.partialorder %v3383, 0.0
  %vm3643 = vcmp.ge.f32.partialorder %v3389, 0.0
  %vm3644 = vcmp.ge.f32.partialorder %v3395, 0.0
  %vm3645 = vcmp.ge.f32.partialorder %v3401, 0.0
  %vm3646 = vcmp.ge.f32.partialorder %v3407, 0.0
  %vm3647 = vcmp.ge.f32.partialorder %v3413, 0.0
  %vm3648 = vcmp.ge.f32.partialorder %v3419, 0.0
  %vm3649 = vcmp.ge.f32.partialorder %v3425, 0.0
  %vm3650 = vcmp.ge.f32.partialorder %v3431, 0.0
  %vm3651 = vcmp.ge.f32.partialorder %v3437, 0.0
  %vm3652 = vcmp.ge.f32.partialorder %v3443, 0.0
  %vm3653 = vcmp.ge.f32.partialorder %v3449, 0.0
  %vm3654 = vcmp.ge.f32.partialorder %v3455, 0.0
  %vm3655 = vcmp.ge.f32.partialorder %v3461, 0.0
  %vm3656 = vcmp.ge.f32.partialorder %v3467, 0.0
  %vm3657 = vcmp.ge.f32.partialorder %v3473, 0.0
  %vm3658 = vcmp.ge.f32.partialorder %v3479, 0.0
  %vm3659 = vcmp.ge.f32.partialorder %v3485, 0.0
  %vm3660 = vcmp.ge.f32.partialorder %v3491, 0.0
  %vm3661 = vcmp.ge.f32.partialorder %v3497, 0.0
  %vm3662 = vcmp.ge.f32.partialorder %v3503, 0.0
  %vm3663 = vcmp.ge.f32.partialorder %v3509, 0.0
  %vm3664 = vcmp.ge.f32.partialorder %v3515, 0.0
  %vm3665 = vcmp.ge.f32.partialorder %v3521, 0.0
  %vm3666 = vcmp.ge.f32.partialorder %v3527, 0.0
  %vm3667 = vcmp.ge.f32.partialorder %v3533, 0.0
  %vm3668 = vcmp.ge.f32.partialorder %v3539, 0.0
  %vm3669 = vcmp.ge.f32.partialorder %v3545, 0.0
  %vm3670 = vcmp.ge.f32.partialorder %v3551, 0.0
  %vm3671 = vcmp.ge.f32.partialorder %v3557, 0.0
  %vm3672 = vcmp.ge.f32.partialorder %v3563, 0.0
  %vm3673 = vcmp.ge.f32.partialorder %v3569, 0.0
  %vm3674 = vcmp.ge.f32.partialorder %v3575, 0.0
  %vm3675 = vcmp.ge.f32.partialorder %v3581, 0.0
  %vm3676 = vcmp.ge.f32.partialorder %v3587, 0.0
  %vm3677 = vcmp.ge.f32.partialorder %v3593, 0.0
  %vm3678 = vcmp.ge.f32.partialorder %v3599, 0.0
  %vm3679 = vcmp.ge.f32.partialorder %v3605, 0.0
  %vm3680 = vcmp.ge.f32.partialorder %v3611, 0.0
  %vm3681 = vcmp.ge.f32.partialorder %v3617, 0.0
  %v3682 = vmul.f32 %v3239, 0.01
  %v3683 = vmul.f32 %v3245, 0.01
  %v3684 = vmul.f32 %v3251, 0.01
  %v3685 = vmul.f32 %v3257, 0.01
  %v3686 = vmul.f32 %v3263, 0.01
  %v3687 = vmul.f32 %v3269, 0.01
  %v3688 = vmul.f32 %v3275, 0.01
  %v3689 = vmul.f32 %v3281, 0.01
  %v3690 = vmul.f32 %v3287, 0.01
  %v3691 = vmul.f32 %v3293, 0.01
  %v3692 = vmul.f32 %v3299, 0.01
  %v3693 = vmul.f32 %v3305, 0.01
  %v3694 = vmul.f32 %v3311, 0.01
  %v3695 = vmul.f32 %v3317, 0.01
  %v3696 = vmul.f32 %v3323, 0.01
  %v3697 = vmul.f32 %v3329, 0.01
  %v3698 = vmul.f32 %v3335, 0.01
  %v3699 = vmul.f32 %v3341, 0.01
  %v3700 = vmul.f32 %v3347, 0.01
  %v3701 = vmul.f32 %v3353, 0.01
  %v3702 = vmul.f32 %v3359, 0.01
  %v3703 = vmul.f32 %v3365, 0.01
  %v3704 = vmul.f32 %v3371, 0.01
  %v3705 = vmul.f32 %v3377, 0.01
  %v3706 = vmul.f32 %v3383, 0.01
  %v3707 = vmul.f32 %v3389, 0.01
  %v3708 = vmul.f32 %v3395, 0.01
  %v3709 = vmul.f32 %v3401, 0.01
  %v3710 = vmul.f32 %v3407, 0.01
  %v3711 = vmul.f32 %v3413, 0.01
  %v3712 = vmul.f32 %v3419, 0.01
  %v3713 = vmul.f32 %v3425, 0.01
  %v3714 = vmul.f32 %v3431, 0.01
  %v3715 = vmul.f32 %v3437, 0.01
  %v3716 = vmul.f32 %v3443, 0.01
  %v3717 = vmul.f32 %v3449, 0.01
  %v3718 = vmul.f32 %v3455, 0.01
  %v3719 = vmul.f32 %v3461, 0.01
  %v3720 = vmul.f32 %v3467, 0.01
  %v3721 = vmul.f32 %v3473, 0.01
  %v3722 = vmul.f32 %v3479, 0.01
  %v3723 = vmul.f32 %v3485, 0.01
  %v3724 = vmul.f32 %v3491, 0.01
  %v3725 = vmul.f32 %v3497, 0.01
  %v3726 = vmul.f32 %v3503, 0.01
  %v3727 = vmul.f32 %v3509, 0.01
  %v3728 = vmul.f32 %v3515, 0.01
  %v3729 = vmul.f32 %v3521, 0.01
  %v3730 = vmul.f32 %v3527, 0.01
  %v3731 = vmul.f32 %v3533, 0.01
  %v3732 = vmul.f32 %v3539, 0.01
  %v3733 = vmul.f32 %v3545, 0.01
  %v3734 = vmul.f32 %v3551, 0.01
  %v3735 = vmul.f32 %v3557, 0.01
  %v3736 = vmul.f32 %v3563, 0.01
  %v3737 = vmul.f32 %v3569, 0.01
  %v3738 = vmul.f32 %v3575, 0.01
  %v3739 = vmul.f32 %v3581, 0.01
  %v3740 = vmul.f32 %v3587, 0.01
  %v3741 = vmul.f32 %v3593, 0.01
  %v3742 = vmul.f32 %v3599, 0.01
  %v3743 = vmul.f32 %v3605, 0.01
  %v3744 = vmul.f32 %v3611, 0.01
  %v3745 = vmul.f32 %v3617, 0.01
  %v3746 = vsel %vm3618, %v3239, %v3682
  %v3747 = vsel %vm3619, %v3245, %v3683
  %v3748 = vsel %vm3620, %v3251, %v3684
  %v3749 = vsel %vm3621, %v3257, %v3685
  %v3750 = vsel %vm3622, %v3263, %v3686
  %v3751 = vsel %vm3623, %v3269, %v3687
  %v3752 = vsel %vm3624, %v3275, %v3688
  %v3753 = vsel %vm3625, %v3281, %v3689
  %v3754 = vsel %vm3626, %v3287, %v3690
  %v3755 = vsel %vm3627, %v3293, %v3691
  %v3756 = vsel %vm3628, %v3299, %v3692
  %v3757 = vsel %vm3629, %v3305, %v3693
  %v3758 = vsel %vm3630, %v3311, %v3694
  %v3759 = vsel %vm3631, %v3317, %v3695
  %v3760 = vsel %vm3632, %v3323, %v3696
  %v3761 = vsel %vm3633, %v3329, %v3697
  %v3762 = vsel %vm3634, %v3335, %v3698
  %v3763 = vsel %vm3635, %v3341, %v3699
  %v3764 = vsel %vm3636, %v3347, %v3700
  %v3765 = vsel %vm3637, %v3353, %v3701
  %v3766 = vsel %vm3638, %v3359, %v3702
  %v3767 = vsel %vm3639, %v3365, %v3703
  %v3768 = vsel %vm3640, %v3371, %v3704
  %v3769 = vsel %vm3641, %v3377, %v3705
  %v3770 = vsel %vm3642, %v3383, %v3706
  %v3771 = vsel %vm3643, %v3389, %v3707
  %v3772 = vsel %vm3644, %v3395, %v3708
  %v3773 = vsel %vm3645, %v3401, %v3709
  %v3774 = vsel %vm3646, %v3407, %v3710
  %v3775 = vsel %vm3647, %v3413, %v3711
  %v3776 = vsel %vm3648, %v3419, %v3712
  %v3777 = vsel %vm3649, %v3425, %v3713
  %v3778 = vsel %vm3650, %v3431, %v3714
  %v3779 = vsel %vm3651, %v3437, %v3715
  %v3780 = vsel %vm3652, %v3443, %v3716
  %v3781 = vsel %vm3653, %v3449, %v3717
  %v3782 = vsel %vm3654, %v3455, %v3718
  %v3783 = vsel %vm3655, %v3461, %v3719
  %v3784 = vsel %vm3656, %v3467, %v3720
  %v3785 = vsel %vm3657, %v3473, %v3721
  %v3786 = vsel %vm3658, %v3479, %v3722
  %v3787 = vsel %vm3659, %v3485, %v3723
  %v3788 = vsel %vm3660, %v3491, %v3724
  %v3789 = vsel %vm3661, %v3497, %v3725
  %v3790 = vsel %vm3662, %v3503, %v3726
  %v3791 = vsel %vm3663, %v3509, %v3727
  %v3792 = vsel %vm3664, %v3515, %v3728
  %v3793 = vsel %vm3665, %v3521, %v3729
  %v3794 = vsel %vm3666, %v3527, %v3730
  %v3795 = vsel %vm3667, %v3533, %v3731
  %v3796 = vsel %vm3668, %v3539, %v3732
  %v3797 = vsel %vm3669, %v3545, %v3733
  %v3798 = vsel %vm3670, %v3551, %v3734
  %v3799 = vsel %vm3671, %v3557, %v3735
  %v3800 = vsel %vm3672, %v3563, %v3736
  %v3801 = vsel %vm3673, %v3569, %v3737
  %v3802 = vsel %vm3674, %v3575, %v3738
  %v3803 = vsel %vm3675, %v3581, %v3739
  %v3804 = vsel %vm3676, %v3587, %v3740
  %v3805 = vsel %vm3677, %v3593, %v3741
  %v3806 = vsel %vm3678, %v3599, %v3742
  %v3807 = vsel %vm3679, %v3605, %v3743
  %v3808 = vsel %vm3680, %v3611, %v3744
  %v3809 = vsel %vm3681, %v3617, %v3745
  %v3810 = vpack.c.bf16 %v3746, %v3746
  %v3811 = vpack.c.bf16 %v3747, %v3747
  %v3812 = vpack.c.bf16 %v3748, %v3748
  %v3813 = vpack.c.bf16 %v3749, %v3749
  %v3814 = vpack.c.bf16 %v3750, %v3750
  %v3815 = vpack.c.bf16 %v3751, %v3751
  %v3816 = vpack.c.bf16 %v3752, %v3752
  %v3817 = vpack.c.bf16 %v3753, %v3753
  %v3818 = vpack.c.bf16 %v3754, %v3754
  %v3819 = vpack.c.bf16 %v3755, %v3755
  %v3820 = vpack.c.bf16 %v3756, %v3756
  %v3821 = vpack.c.bf16 %v3757, %v3757
  %v3822 = vpack.c.bf16 %v3758, %v3758
  %v3823 = vpack.c.bf16 %v3759, %v3759
  %v3824 = vpack.c.bf16 %v3760, %v3760
  %v3825 = vpack.c.bf16 %v3761, %v3761
  %v3826 = vpack.c.bf16 %v3762, %v3762
  %v3827 = vpack.c.bf16 %v3763, %v3763
  %v3828 = vpack.c.bf16 %v3764, %v3764
  %v3829 = vpack.c.bf16 %v3765, %v3765
  %v3830 = vpack.c.bf16 %v3766, %v3766
  %v3831 = vpack.c.bf16 %v3767, %v3767
  %v3832 = vpack.c.bf16 %v3768, %v3768
  %v3833 = vpack.c.bf16 %v3769, %v3769
  %v3834 = vpack.c.bf16 %v3770, %v3770
  %v3835 = vpack.c.bf16 %v3771, %v3771
  %v3836 = vpack.c.bf16 %v3772, %v3772
  %v3837 = vpack.c.bf16 %v3773, %v3773
  %v3838 = vpack.c.bf16 %v3774, %v3774
  %v3839 = vpack.c.bf16 %v3775, %v3775
  %v3840 = vpack.c.bf16 %v3776, %v3776
  %v3841 = vpack.c.bf16 %v3777, %v3777
  %v3842 = vpack.c.bf16 %v3778, %v3778
  %v3843 = vpack.c.bf16 %v3779, %v3779
  %v3844 = vpack.c.bf16 %v3780, %v3780
  %v3845 = vpack.c.bf16 %v3781, %v3781
  %v3846 = vpack.c.bf16 %v3782, %v3782
  %v3847 = vpack.c.bf16 %v3783, %v3783
  %v3848 = vpack.c.bf16 %v3784, %v3784
  %v3849 = vpack.c.bf16 %v3785, %v3785
  %v3850 = vpack.c.bf16 %v3786, %v3786
  %v3851 = vpack.c.bf16 %v3787, %v3787
  %v3852 = vpack.c.bf16 %v3788, %v3788
  %v3853 = vpack.c.bf16 %v3789, %v3789
  %v3854 = vpack.c.bf16 %v3790, %v3790
  %v3855 = vpack.c.bf16 %v3791, %v3791
  %v3856 = vpack.c.bf16 %v3792, %v3792
  %v3857 = vpack.c.bf16 %v3793, %v3793
  %v3858 = vpack.c.bf16 %v3794, %v3794
  %v3859 = vpack.c.bf16 %v3795, %v3795
  %v3860 = vpack.c.bf16 %v3796, %v3796
  %v3861 = vpack.c.bf16 %v3797, %v3797
  %v3862 = vpack.c.bf16 %v3798, %v3798
  %v3863 = vpack.c.bf16 %v3799, %v3799
  %v3864 = vpack.c.bf16 %v3800, %v3800
  %v3865 = vpack.c.bf16 %v3801, %v3801
  %v3866 = vpack.c.bf16 %v3802, %v3802
  %v3867 = vpack.c.bf16 %v3803, %v3803
  %v3868 = vpack.c.bf16 %v3804, %v3804
  %v3869 = vpack.c.bf16 %v3805, %v3805
  %v3870 = vpack.c.bf16 %v3806, %v3806
  %v3871 = vpack.c.bf16 %v3807, %v3807
  %v3872 = vpack.c.bf16 %v3808, %v3808
  %v3873 = vpack.c.bf16 %v3809, %v3809
  %v3938 = vunpack.c.l.b16 %v3810
  %v3939 = vunpack.c.l.b16 %v3811
  %v3940 = vunpack.c.l.b16 %v3812
  %v3941 = vunpack.c.l.b16 %v3813
  %v3942 = vunpack.c.l.b16 %v3814
  %v3943 = vunpack.c.l.b16 %v3815
  %v3944 = vunpack.c.l.b16 %v3816
  %v3945 = vunpack.c.l.b16 %v3817
  %v3946 = vunpack.c.l.b16 %v3818
  %v3947 = vunpack.c.l.b16 %v3819
  %v3948 = vunpack.c.l.b16 %v3820
  %v3949 = vunpack.c.l.b16 %v3821
  %v3950 = vunpack.c.l.b16 %v3822
  %v3951 = vunpack.c.l.b16 %v3823
  %v3952 = vunpack.c.l.b16 %v3824
  %v3953 = vunpack.c.l.b16 %v3825
  %v3954 = vunpack.c.l.b16 %v3826
  %v3955 = vunpack.c.l.b16 %v3827
  %v3956 = vunpack.c.l.b16 %v3828
  %v3957 = vunpack.c.l.b16 %v3829
  %v3958 = vunpack.c.l.b16 %v3830
  %v3959 = vunpack.c.l.b16 %v3831
  %v3960 = vunpack.c.l.b16 %v3832
  %v3961 = vunpack.c.l.b16 %v3833
  %v3962 = vunpack.c.l.b16 %v3834
  %v3963 = vunpack.c.l.b16 %v3835
  %v3964 = vunpack.c.l.b16 %v3836
  %v3965 = vunpack.c.l.b16 %v3837
  %v3966 = vunpack.c.l.b16 %v3838
  %v3967 = vunpack.c.l.b16 %v3839
  %v3968 = vunpack.c.l.b16 %v3840
  %v3969 = vunpack.c.l.b16 %v3841
  %v3970 = vunpack.c.l.b16 %v3842
  %v3971 = vunpack.c.l.b16 %v3843
  %v3972 = vunpack.c.l.b16 %v3844
  %v3973 = vunpack.c.l.b16 %v3845
  %v3974 = vunpack.c.l.b16 %v3846
  %v3975 = vunpack.c.l.b16 %v3847
  %v3976 = vunpack.c.l.b16 %v3848
  %v3977 = vunpack.c.l.b16 %v3849
  %v3978 = vunpack.c.l.b16 %v3850
  %v3979 = vunpack.c.l.b16 %v3851
  %v3980 = vunpack.c.l.b16 %v3852
  %v3981 = vunpack.c.l.b16 %v3853
  %v3982 = vunpack.c.l.b16 %v3854
  %v3983 = vunpack.c.l.b16 %v3855
  %v3984 = vunpack.c.l.b16 %v3856
  %v3985 = vunpack.c.l.b16 %v3857
  %v3986 = vunpack.c.l.b16 %v3858
  %v3987 = vunpack.c.l.b16 %v3859
  %v3988 = vunpack.c.l.b16 %v3860
  %v3989 = vunpack.c.l.b16 %v3861
  %v3990 = vunpack.c.l.b16 %v3862
  %v3991 = vunpack.c.l.b16 %v3863
  %v3992 = vunpack.c.l.b16 %v3864
  %v3993 = vunpack.c.l.b16 %v3865
  %v3994 = vunpack.c.l.b16 %v3866
  %v3995 = vunpack.c.l.b16 %v3867
  %v3996 = vunpack.c.l.b16 %v3868
  %v3997 = vunpack.c.l.b16 %v3869
  %v3998 = vunpack.c.l.b16 %v3870
  %v3999 = vunpack.c.l.b16 %v3871
  %v4000 = vunpack.c.l.b16 %v3872
  %v4001 = vunpack.c.l.b16 %v3873
  %v4002 = vpack.c.b16 %v3939, %v3938
  %v4003 = vpack.c.b16 %v3941, %v3940
  %v4004 = vpack.c.b16 %v3943, %v3942
  %v4005 = vpack.c.b16 %v3945, %v3944
  %v4006 = vpack.c.b16 %v3947, %v3946
  %v4007 = vpack.c.b16 %v3949, %v3948
  %v4008 = vpack.c.b16 %v3951, %v3950
  %v4009 = vpack.c.b16 %v3953, %v3952
  %v4010 = vpack.c.b16 %v3955, %v3954
  %v4011 = vpack.c.b16 %v3957, %v3956
  %v4012 = vpack.c.b16 %v3959, %v3958
  %v4013 = vpack.c.b16 %v3961, %v3960
  %v4014 = vpack.c.b16 %v3963, %v3962
  %v4015 = vpack.c.b16 %v3965, %v3964
  %v4016 = vpack.c.b16 %v3967, %v3966
  %v4017 = vpack.c.b16 %v3969, %v3968
  %v4018 = vpack.c.b16 %v3971, %v3970
  %v4019 = vpack.c.b16 %v3973, %v3972
  %v4020 = vpack.c.b16 %v3975, %v3974
  %v4021 = vpack.c.b16 %v3977, %v3976
  %v4022 = vpack.c.b16 %v3979, %v3978
  %v4023 = vpack.c.b16 %v3981, %v3980
  %v4024 = vpack.c.b16 %v3983, %v3982
  %v4025 = vpack.c.b16 %v3985, %v3984
  %v4026 = vpack.c.b16 %v3987, %v3986
  %v4027 = vpack.c.b16 %v3989, %v3988
  %v4028 = vpack.c.b16 %v3991, %v3990
  %v4029 = vpack.c.b16 %v3993, %v3992
  %v4030 = vpack.c.b16 %v3995, %v3994
  %v4031 = vpack.c.b16 %v3997, %v3996
  %v4032 = vpack.c.b16 %v3999, %v3998
  %v4033 = vpack.c.b16 %v4001, %v4000
  %v4034 = vunpack.c.l.b16 %v4002
  %v4035 = vunpack.c.h.b16 %v4002
  %v4036 = vunpack.c.l.b16 %v4003
  %v4037 = vunpack.c.h.b16 %v4003
  %v4038 = vunpack.c.l.b16 %v4004
  %v4039 = vunpack.c.h.b16 %v4004
  %v4040 = vunpack.c.l.b16 %v4005
  %v4041 = vunpack.c.h.b16 %v4005
  %v4042 = vunpack.c.l.b16 %v4006
  %v4043 = vunpack.c.h.b16 %v4006
  %v4044 = vunpack.c.l.b16 %v4007
  %v4045 = vunpack.c.h.b16 %v4007
  %v4046 = vunpack.c.l.b16 %v4008
  %v4047 = vunpack.c.h.b16 %v4008
  %v4048 = vunpack.c.l.b16 %v4009
  %v4049 = vunpack.c.h.b16 %v4009
  %v4050 = vunpack.c.l.b16 %v4010
  %v4051 = vunpack.c.h.b16 %v4010
  %v4052 = vunpack.c.l.b16 %v4011
  %v4053 = vunpack.c.h.b16 %v4011
  %v4054 = vunpack.c.l.b16 %v4012
  %v4055 = vunpack.c.h.b16 %v4012
  %v4056 = vunpack.c.l.b16 %v4013
  %v4057 = vunpack.c.h.b16 %v4013
  %v4058 = vunpack.c.l.b16 %v4014
  %v4059 = vunpack.c.h.b16 %v4014
  %v4060 = vunpack.c.l.b16 %v4015
  %v4061 = vunpack.c.h.b16 %v4015
  %v4062 = vunpack.c.l.b16 %v4016
  %v4063 = vunpack.c.h.b16 %v4016
  %v4064 = vunpack.c.l.b16 %v4017
  %v4065 = vunpack.c.h.b16 %v4017
  %v4066 = vunpack.c.l.b16 %v4018
  %v4067 = vunpack.c.h.b16 %v4018
  %v4068 = vunpack.c.l.b16 %v4019
  %v4069 = vunpack.c.h.b16 %v4019
  %v4070 = vunpack.c.l.b16 %v4020
  %v4071 = vunpack.c.h.b16 %v4020
  %v4072 = vunpack.c.l.b16 %v4021
  %v4073 = vunpack.c.h.b16 %v4021
  %v4074 = vunpack.c.l.b16 %v4022
  %v4075 = vunpack.c.h.b16 %v4022
  %v4076 = vunpack.c.l.b16 %v4023
  %v4077 = vunpack.c.h.b16 %v4023
  %v4078 = vunpack.c.l.b16 %v4024
  %v4079 = vunpack.c.h.b16 %v4024
  %v4080 = vunpack.c.l.b16 %v4025
  %v4081 = vunpack.c.h.b16 %v4025
  %v4082 = vunpack.c.l.b16 %v4026
  %v4083 = vunpack.c.h.b16 %v4026
  %v4084 = vunpack.c.l.b16 %v4027
  %v4085 = vunpack.c.h.b16 %v4027
  %v4086 = vunpack.c.l.b16 %v4028
  %v4087 = vunpack.c.h.b16 %v4028
  %v4088 = vunpack.c.l.b16 %v4029
  %v4089 = vunpack.c.h.b16 %v4029
  %v4090 = vunpack.c.l.b16 %v4030
  %v4091 = vunpack.c.h.b16 %v4030
  %v4092 = vunpack.c.l.b16 %v4031
  %v4093 = vunpack.c.h.b16 %v4031
  %v4094 = vunpack.c.l.b16 %v4032
  %v4095 = vunpack.c.h.b16 %v4032
  %v4096 = vunpack.c.l.b16 %v4033
  %v4097 = vunpack.c.h.b16 %v4033
  %vm4098 = vcmask 1041409
  %v4099 = vsel %vm4098, %v4036, %v4034
  %vm4100 = vcmask 1042434
  %v4101 = vsel %vm4100, %v4038, %v4099
  %vm4102 = vcmask 1043459
  %v4103 = vsel %vm4102, %v4040, %v4101
  %vm4104 = vcmask 1044484
  %v4105 = vsel %vm4104, %v4042, %v4103
  %vm4106 = vcmask 1045509
  %v4107 = vsel %vm4106, %v4044, %v4105
  %vm4108 = vcmask 1046534
  %v4109 = vsel %vm4108, %v4046, %v4107
  %vm4110 = vcmask 1047559
  %v4111 = vsel %vm4110, %v4048, %v4109
  %v4112 = vsel %vm4098, %v4037, %v4035
  %v4113 = vsel %vm4100, %v4039, %v4112
  %v4114 = vsel %vm4102, %v4041, %v4113
  %v4115 = vsel %vm4104, %v4043, %v4114
  %v4116 = vsel %vm4106, %v4045, %v4115
  %v4117 = vsel %vm4108, %v4047, %v4116
  %v4118 = vsel %vm4110, %v4049, %v4117
  %v4119 = vsel %vm4098, %v4052, %v4050
  %v4120 = vsel %vm4100, %v4054, %v4119
  %v4121 = vsel %vm4102, %v4056, %v4120
  %v4122 = vsel %vm4104, %v4058, %v4121
  %v4123 = vsel %vm4106, %v4060, %v4122
  %v4124 = vsel %vm4108, %v4062, %v4123
  %v4125 = vsel %vm4110, %v4064, %v4124
  %v4126 = vsel %vm4098, %v4053, %v4051
  %v4127 = vsel %vm4100, %v4055, %v4126
  %v4128 = vsel %vm4102, %v4057, %v4127
  %v4129 = vsel %vm4104, %v4059, %v4128
  %v4130 = vsel %vm4106, %v4061, %v4129
  %v4131 = vsel %vm4108, %v4063, %v4130
  %v4132 = vsel %vm4110, %v4065, %v4131
  %v4133 = vsel %vm4098, %v4068, %v4066
  %v4134 = vsel %vm4100, %v4070, %v4133
  %v4135 = vsel %vm4102, %v4072, %v4134
  %v4136 = vsel %vm4104, %v4074, %v4135
  %v4137 = vsel %vm4106, %v4076, %v4136
  %v4138 = vsel %vm4108, %v4078, %v4137
  %v4139 = vsel %vm4110, %v4080, %v4138
  %v4140 = vsel %vm4098, %v4069, %v4067
  %v4141 = vsel %vm4100, %v4071, %v4140
  %v4142 = vsel %vm4102, %v4073, %v4141
  %v4143 = vsel %vm4104, %v4075, %v4142
  %v4144 = vsel %vm4106, %v4077, %v4143
  %v4145 = vsel %vm4108, %v4079, %v4144
  %v4146 = vsel %vm4110, %v4081, %v4145
  %v4147 = vsel %vm4098, %v4084, %v4082
  %v4148 = vsel %vm4100, %v4086, %v4147
  %v4149 = vsel %vm4102, %v4088, %v4148
  %v4150 = vsel %vm4104, %v4090, %v4149
  %v4151 = vsel %vm4106, %v4092, %v4150
  %v4152 = vsel %vm4108, %v4094, %v4151
  %v4153 = vsel %vm4110, %v4096, %v4152
  %v4154 = vsel %vm4098, %v4085, %v4083
  %v4155 = vsel %vm4100, %v4087, %v4154
  %v4156 = vsel %vm4102, %v4089, %v4155
  %v4157 = vsel %vm4104, %v4091, %v4156
  %v4158 = vsel %vm4106, %v4093, %v4157
  %v4159 = vsel %vm4108, %v4095, %v4158
  %v4160 = vsel %vm4110, %v4097, %v4159
  %v4161 = vpack.c.b16 %v4118, %v4111
  %v4162 = vpack.c.b16 %v4132, %v4125
  %v4163 = vpack.c.b16 %v4146, %v4139
  %v4164 = vpack.c.b16 %v4160, %v4153
  %4169 = vst [vmem:[%s7] sm:$0xff] %v4161
  %4170 = vst [vmem:[%s7 + $0x8] sm:$0xff] %v4162
  %4171 = vst [vmem:[%s7 + $0x10] sm:$0xff] %v4163
  %4172 = vst [vmem:[%s7 + $0x18] sm:$0xff] %v4164
  // Predicated region
  $region30: #{edge_model_forward.6} parent=0 // pred_check
    _
  $region31: #{edge_model_forward.6} parent=0 // pred_check_branch
    %4174 = sbr.rel (0) target = $region33
  $region32: #{edge_model_forward.6} parent=0 // pred_region
    _
  $region33: #{edge_model_forward.6} parent=0 // pred_fallthru
    _
  // Predicated region
  $region34: #{edge_model_forward.6} parent=0 // pred_check
    _
  $region35: #{edge_model_forward.6} parent=0 // pred_check_branch
    %4176 = sbr.rel (0) target = $region37
  $region36: #{edge_model_forward.6} parent=0 // pred_region
    _
  $region37: #{edge_model_forward.6} parent=0 // pred_fallthru
    _

</llo_original>
